<compile_context>
chip_gen: v7x
topology: tpu7x:2x2x1
jax: 0.10.0
libtpu: 0.0.40
codegen_flags: <defaults>
</compile_context>

<pallas_src>
import jax
import jax.numpy as jnp
from jax.experimental import pallas as pl
from jax.experimental.pallas import tpu as pltpu

KSIZE = 4
C1, C2, C3 = 32, 64, 96
OUT_PAD = 128              # lane-dense padded output width (96 -> 128)


def _single_modal_kernel(x_ref, w1_ref, b1_ref, w2_ref, b2_ref, w3_ref, b3_ref,
                         o_ref):
    """One batch tile: x (TB, L) f32 -> o (TB, 128) f32 (96 channels + zero pad)."""
    x = x_ref[...]
    tb, l = x.shape
    t1 = l - (KSIZE - 1)
    t2 = t1 - (KSIZE - 1)
    t3 = t2 - (KSIZE - 1)

    # Layer 1: Conv1d(1 -> 32) on the VPU (contraction dim of 1 would waste the MXU).
    w1 = w1_ref[...]                                     # (32, 4) f32
    acc1 = b1_ref[...][None, :, :]                       # (1, 32, 1)
    for k in range(KSIZE):
        acc1 = acc1 + w1[None, :, k:k + 1] * x[:, None, k:k + t1]
    h1 = jnp.maximum(acc1, 0.0)                          # (TB, 32, T1) f32
    # Dropout(0.1) is the identity in eval/inference mode.

    # Layer 2: Conv1d(32 -> 64) as one MXU matmul, contraction = 4*32 = 128.
    w2 = w2_ref[...]                                     # (64, 128) bf16/f32
    h1_col = jnp.concatenate(                            # im2col: (TB, 128, T2)
        [h1[:, :, k:k + t2] for k in range(KSIZE)], axis=1)
    h2 = jnp.einsum("oc,bct->bot", w2, h1_col.astype(w2.dtype),
                    preferred_element_type=jnp.float32)
    h2 = jnp.maximum(h2 + b2_ref[...][None, :, :], 0.0)  # (TB, 64, T2) f32

    # Layer 3: Conv1d(64 -> 96) as one MXU matmul, contraction = 4*64 = 256.
    w3 = w3_ref[...]                                     # (96, 256) bf16/f32
    h2_col = jnp.concatenate(                            # im2col: (TB, 256, T3)
        [h2[:, :, k:k + t3] for k in range(KSIZE)], axis=1)
    h3 = jnp.einsum("oc,bct->bot", w3, h2_col.astype(w3.dtype),
                    preferred_element_type=jnp.float32)
    h3 = jnp.maximum(h3 + b3_ref[...][None, :, :], 0.0)  # (TB, 96, T3) f32

    # AdaptiveMaxPool1d(1) + flatten; pad 96 -> 128 so the store is lane-dense.
    feat = jnp.max(h3, axis=2)                           # (TB, 96)
    o_ref[...] = jnp.concatenate(
        [feat, jnp.zeros((tb, OUT_PAD - C3), jnp.float32)], axis=1)


def _choose_batch_tile(b_pad, l):
    """Sublane-aligned batch tile keeping one grid step within ~6 MiB of VMEM."""
    # f32 activations + im2col stacks + bf16 matmul copies, per sample:
    per_sample = 4 * l * (C1 + C2 + C3 + KSIZE * C1 + KSIZE * C2) \
        + 2 * l * (KSIZE * C1 + KSIZE * C2)
    budget = 6 * 1024 * 1024
    tb = max(8, (budget // max(per_sample, 1)) // 8 * 8)
    return int(min(tb, b_pad))


def single_modal_layers(x_ncl, params, *, use_bf16=True):
    """x_ncl: (B, 1, L) -> (B, 96), matching the PyTorch module in eval mode."""
    assert x_ncl.ndim == 3 and x_ncl.shape[1] == 1, x_ncl.shape
    b, _, l = x_ncl.shape
    if l < 3 * (KSIZE - 1) + 1:
        raise ValueError(f"L={l} too short for three valid kernel_size=4 convs")

    x = x_ncl[:, 0, :].astype(jnp.float32)               # (B, L)

    # Pad batch to a multiple of the batch tile (padded rows are discarded).
    b8 = -(-b // 8) * 8
    tb = _choose_batch_tile(b8, l)
    b_pad = -(-b8 // tb) * tb
    if b_pad != b:
        x = jnp.concatenate([x, jnp.zeros((b_pad - b, l), jnp.float32)], axis=0)
    n_tiles = b_pad // tb
    # TODO(synk): for very long L, also tile the time axis (9-sample halo + running
    # channel-max accumulator) so VMEM use is independent of L.

    # Fold the K taps into the contraction (im2col weights):
    #   w2f[o, k*32 + c] = w2[o, c, k];  w3f[o, k*64 + c] = w3[o, c, k].
    mm_dtype = jnp.bfloat16 if use_bf16 else jnp.float32
    w1f = jnp.asarray(params["w1"], jnp.float32)[:, 0, :]                    # (32, 4)
    w2f = jnp.transpose(jnp.asarray(params["w2"], jnp.float32), (0, 2, 1)) \
             .reshape(C2, KSIZE * C1).astype(mm_dtype)                       # (64, 128)
    w3f = jnp.transpose(jnp.asarray(params["w3"], jnp.float32), (0, 2, 1)) \
             .reshape(C3, KSIZE * C2).astype(mm_dtype)                       # (96, 256)
    b1 = jnp.asarray(params["b1"], jnp.float32).reshape(C1, 1)
    b2 = jnp.asarray(params["b2"], jnp.float32).reshape(C2, 1)
    b3 = jnp.asarray(params["b3"], jnp.float32).reshape(C3, 1)

    t1 = l - (KSIZE - 1)
    t2 = t1 - (KSIZE - 1)
    t3 = t2 - (KSIZE - 1)
    flops = 2 * b_pad * (C1 * KSIZE * t1 + C2 * KSIZE * C1 * t2 + C3 * KSIZE * C2 * t3)
    bytes_accessed = (x.size * 4 + w1f.size * 4
                      + w2f.size * w2f.dtype.itemsize + w3f.size * w3f.dtype.itemsize
                      + (b1.size + b2.size + b3.size) * 4 + b_pad * OUT_PAD * 4)

    def full_spec(a):
        return pl.BlockSpec(a.shape, lambda i: (0,) * a.ndim)

    out_pad = pl.pallas_call(
        _single_modal_kernel,
        out_shape=jax.ShapeDtypeStruct((b_pad, OUT_PAD), jnp.float32),
        grid=(n_tiles,),
        in_specs=[
            pl.BlockSpec((tb, l), lambda i: (i, 0)),     # x: batch-tiled
            full_spec(w1f), full_spec(b1),
            full_spec(w2f), full_spec(b2),
            full_spec(w3f), full_spec(b3),
        ],
        out_specs=pl.BlockSpec((tb, OUT_PAD), lambda i: (i, 0)),
        compiler_params=pltpu.CompilerParams(
            dimension_semantics=("parallel",),
            vmem_limit_bytes=32 * 1024 * 1024),
        cost_estimate=pl.CostEstimate(flops=int(flops), transcendentals=0,
                                      bytes_accessed=int(bytes_accessed)),
    )(x, w1f, b1, w2f, b2, w3f, b3)

    return out_pad[:b, :C3]


def init_params(key):
    """PyTorch Conv1d default init (uniform +/- 1/sqrt(fan_in)); biases shaped (C,)."""
    ks = jax.random.split(key, 6)

    def u(k, shape, fan_in):
        bound = 1.0 / jnp.sqrt(jnp.float32(fan_in))
        return jax.random.uniform(k, shape, jnp.float32, -bound, bound)

    return dict(
        w1=u(ks[0], (C1, 1, KSIZE), 1 * KSIZE),   b1=u(ks[1], (C1,), 1 * KSIZE),
        w2=u(ks[2], (C2, C1, KSIZE), C1 * KSIZE), b2=u(ks[3], (C2,), C1 * KSIZE),
        w3=u(ks[4], (C3, C2, KSIZE), C2 * KSIZE), b3=u(ks[5], (C3,), C2 * KSIZE),
    )


def ref_forward(x_ncl, p):
    """Plain-JAX reference (lax conv) for correctness checking."""
    def conv(h, w, b):
        y = jax.lax.conv_general_dilated(
            h, w, window_strides=(1,), padding="VALID",
            dimension_numbers=("NCH", "OIH", "NCH"))
        return jax.nn.relu(y + b[None, :, None])

    h = conv(x_ncl.astype(jnp.float32), p["w1"], p["b1"])
    h = conv(h, p["w2"], p["b2"])
    h = conv(h, p["w3"], p["b3"])
    return jnp.max(h, axis=2)


if __name__ == "__main__":
    key = jax.random.PRNGKey(0)
    k_param, k_x = jax.random.split(key)
    params = init_params(k_param)

    B, C_in, L = 2, 1, 32                     # small shapes; L must be >= 10
    x = jax.random.normal(k_x, (B, C_in, L), jnp.float32)

    ref = jax.block_until_ready(ref_forward(x, params))

    # Exact-precision path (f32 MXU operands): tight check vs the lax reference.
    out_f32 = jax.block_until_ready(single_modal_layers(x, params, use_bf16=False))
    assert out_f32.shape == (B, 96), out_f32.shape
    assert jnp.allclose(out_f32, ref, rtol=1e-3, atol=1e-3), "f32 kernel mismatch"

    # Default fast path: bf16 MXU operands with f32 accumulation.
    out = jax.block_until_ready(single_modal_layers(x, params))
    assert out.shape == (B, 96), out.shape
    assert jnp.allclose(out, ref, rtol=2e-2, atol=2e-2), "bf16 kernel mismatch"

    print("KERNEL_OK")
</pallas_src>

<mosaic_0001>
module attributes {stable_mosaic.version = 11 : i64} {
  func.func @_single_modal_kernel(%arg0: i32, %arg1: memref<8x32xf32, #tpu.memory_space<vmem>>, %arg2: memref<32x4xf32, #tpu.memory_space<vmem>>, %arg3: memref<32x1xf32, #tpu.memory_space<vmem>>, %arg4: memref<64x128xf32, #tpu.memory_space<vmem>>, %arg5: memref<64x1xf32, #tpu.memory_space<vmem>>, %arg6: memref<96x256xf32, #tpu.memory_space<vmem>>, %arg7: memref<96x1xf32, #tpu.memory_space<vmem>>, %arg8: memref<8x128xf32, #tpu.memory_space<vmem>>) attributes {dimension_semantics = [#tpu.dimension_semantics<parallel>], iteration_bounds = array<i64: 1>, scalar_prefetch = 0 : i64, scratch_operands = 0 : i64, tpu.core_type = #tpu.core_type<tc>, window_params = [{transform_indices = @transform_0, window_bounds = array<i64: 8, 32>}, {pipeline_mode = #tpu.pipeline_mode<synchronous>, transform_indices = @transform_1, window_bounds = array<i64: 32, 4>}, {pipeline_mode = #tpu.pipeline_mode<synchronous>, transform_indices = @transform_2, window_bounds = array<i64: 32, 1>}, {pipeline_mode = #tpu.pipeline_mode<synchronous>, transform_indices = @transform_3, window_bounds = array<i64: 64, 128>}, {pipeline_mode = #tpu.pipeline_mode<synchronous>, transform_indices = @transform_4, window_bounds = array<i64: 64, 1>}, {pipeline_mode = #tpu.pipeline_mode<synchronous>, transform_indices = @transform_5, window_bounds = array<i64: 96, 256>}, {pipeline_mode = #tpu.pipeline_mode<synchronous>, transform_indices = @transform_6, window_bounds = array<i64: 96, 1>}, {transform_indices = @transform_7, window_bounds = array<i64: 8, 128>}]} {
    %c0 = arith.constant 0 : index
    %c0_0 = arith.constant 0 : index
    %0 = vector.load %arg1[%c0, %c0_0] : memref<8x32xf32, #tpu.memory_space<vmem>>, vector<8x32xf32>
    %c0_1 = arith.constant 0 : index
    %c0_2 = arith.constant 0 : index
    %1 = vector.load %arg2[%c0_1, %c0_2] : memref<32x4xf32, #tpu.memory_space<vmem>>, vector<32x4xf32>
    %c0_3 = arith.constant 0 : index
    %c0_4 = arith.constant 0 : index
    %2 = vector.load %arg3[%c0_3, %c0_4] : memref<32x1xf32, #tpu.memory_space<vmem>>, vector<32x1xf32>
    %3 = vector.shape_cast %2 : vector<32x1xf32> to vector<1x32x1xf32>
    %4 = vector.extract_strided_slice %1 {offsets = [0, 0], sizes = [32, 1], strides = [1, 1]} : vector<32x4xf32> to vector<32x1xf32>
    %5 = vector.shape_cast %4 : vector<32x1xf32> to vector<1x32x1xf32>
    %6 = vector.extract_strided_slice %0 {offsets = [0, 0], sizes = [8, 29], strides = [1, 1]} : vector<8x32xf32> to vector<8x29xf32>
    %7 = vector.shape_cast %6 : vector<8x29xf32> to vector<8x1x29xf32>
    %8 = vector.broadcast %5 : vector<1x32x1xf32> to vector<8x32x29xf32>
    %9 = vector.broadcast %7 : vector<8x1x29xf32> to vector<8x32x29xf32>
    %10 = arith.mulf %8, %9 : vector<8x32x29xf32>
    %11 = vector.broadcast %3 : vector<1x32x1xf32> to vector<8x32x29xf32>
    %12 = arith.addf %11, %10 : vector<8x32x29xf32>
    %13 = vector.extract_strided_slice %1 {offsets = [0, 1], sizes = [32, 1], strides = [1, 1]} : vector<32x4xf32> to vector<32x1xf32>
    %14 = vector.shape_cast %13 : vector<32x1xf32> to vector<1x32x1xf32>
    %15 = vector.extract_strided_slice %0 {offsets = [0, 1], sizes = [8, 29], strides = [1, 1]} : vector<8x32xf32> to vector<8x29xf32>
    %16 = vector.shape_cast %15 : vector<8x29xf32> to vector<8x1x29xf32>
    %17 = vector.broadcast %14 : vector<1x32x1xf32> to vector<8x32x29xf32>
    %18 = vector.broadcast %16 : vector<8x1x29xf32> to vector<8x32x29xf32>
    %19 = arith.mulf %17, %18 : vector<8x32x29xf32>
    %20 = arith.addf %12, %19 : vector<8x32x29xf32>
    %21 = vector.extract_strided_slice %1 {offsets = [0, 2], sizes = [32, 1], strides = [1, 1]} : vector<32x4xf32> to vector<32x1xf32>
    %22 = vector.shape_cast %21 : vector<32x1xf32> to vector<1x32x1xf32>
    %23 = vector.extract_strided_slice %0 {offsets = [0, 2], sizes = [8, 29], strides = [1, 1]} : vector<8x32xf32> to vector<8x29xf32>
    %24 = vector.shape_cast %23 : vector<8x29xf32> to vector<8x1x29xf32>
    %25 = vector.broadcast %22 : vector<1x32x1xf32> to vector<8x32x29xf32>
    %26 = vector.broadcast %24 : vector<8x1x29xf32> to vector<8x32x29xf32>
    %27 = arith.mulf %25, %26 : vector<8x32x29xf32>
    %28 = arith.addf %20, %27 : vector<8x32x29xf32>
    %29 = vector.extract_strided_slice %1 {offsets = [0, 3], sizes = [32, 1], strides = [1, 1]} : vector<32x4xf32> to vector<32x1xf32>
    %30 = vector.shape_cast %29 : vector<32x1xf32> to vector<1x32x1xf32>
    %31 = vector.extract_strided_slice %0 {offsets = [0, 3], sizes = [8, 29], strides = [1, 1]} : vector<8x32xf32> to vector<8x29xf32>
    %32 = vector.shape_cast %31 : vector<8x29xf32> to vector<8x1x29xf32>
    %33 = vector.broadcast %30 : vector<1x32x1xf32> to vector<8x32x29xf32>
    %34 = vector.broadcast %32 : vector<8x1x29xf32> to vector<8x32x29xf32>
    %35 = arith.mulf %33, %34 : vector<8x32x29xf32>
    %36 = arith.addf %28, %35 : vector<8x32x29xf32>
    %cst = arith.constant 0.000000e+00 : f32
    %37 = vector.broadcast %cst : f32 to vector<8x32x29xf32>
    %38 = arith.maximumf %36, %37 : vector<8x32x29xf32>
    %c0_5 = arith.constant 0 : index
    %c0_6 = arith.constant 0 : index
    %39 = vector.load %arg4[%c0_5, %c0_6] : memref<64x128xf32, #tpu.memory_space<vmem>>, vector<64x128xf32>
    %40 = vector.extract_strided_slice %38 {offsets = [0, 0, 0], sizes = [8, 32, 26], strides = [1, 1, 1]} : vector<8x32x29xf32> to vector<8x32x26xf32>
    %41 = vector.extract_strided_slice %38 {offsets = [0, 0, 1], sizes = [8, 32, 26], strides = [1, 1, 1]} : vector<8x32x29xf32> to vector<8x32x26xf32>
    %42 = vector.extract_strided_slice %38 {offsets = [0, 0, 2], sizes = [8, 32, 26], strides = [1, 1, 1]} : vector<8x32x29xf32> to vector<8x32x26xf32>
    %43 = vector.extract_strided_slice %38 {offsets = [0, 0, 3], sizes = [8, 32, 26], strides = [1, 1, 1]} : vector<8x32x29xf32> to vector<8x32x26xf32>
    %44 = tpu.concatenate %40, %41, %42, %43 in 1 : vector<8x32x26xf32>, vector<8x32x26xf32>, vector<8x32x26xf32>, vector<8x32x26xf32> -> vector<8x128x26xf32>
    "tpu.trace_start"() <{level = 10 : i32, message = "oc,bct->bot"}> : () -> ()
    %cst_7 = arith.constant dense<0.000000e+00> : vector<8x26x64xf32>
    %45 = tpu.matmul %44, %39, %cst_7 {dimension_numbers = #tpu.dot_dimension_numbers<[1], [1], [0, 2], [0], [0, 0, 0, 2, 1, 0], [], []>} : vector<8x128x26xf32>, vector<64x128xf32>, vector<8x26x64xf32> -> vector<8x26x64xf32>
    %46 = tpu.transpose %45, [0, 2, 1] : vector<8x26x64xf32> -> vector<8x64x26xf32>
    "tpu.trace_stop"() : () -> ()
    %c0_8 = arith.constant 0 : index
    %c0_9 = arith.constant 0 : index
    %47 = vector.load %arg5[%c0_8, %c0_9] : memref<64x1xf32, #tpu.memory_space<vmem>>, vector<64x1xf32>
    %48 = vector.shape_cast %47 : vector<64x1xf32> to vector<1x64x1xf32>
    %49 = vector.broadcast %48 : vector<1x64x1xf32> to vector<8x64x26xf32>
    %50 = arith.addf %46, %49 : vector<8x64x26xf32>
    %cst_10 = arith.constant 0.000000e+00 : f32
    %51 = vector.broadcast %cst_10 : f32 to vector<8x64x26xf32>
    %52 = arith.maximumf %50, %51 : vector<8x64x26xf32>
    %c0_11 = arith.constant 0 : index
    %c0_12 = arith.constant 0 : index
    %53 = vector.load %arg6[%c0_11, %c0_12] : memref<96x256xf32, #tpu.memory_space<vmem>>, vector<96x256xf32>
    %54 = vector.extract_strided_slice %52 {offsets = [0, 0, 0], sizes = [8, 64, 23], strides = [1, 1, 1]} : vector<8x64x26xf32> to vector<8x64x23xf32>
    %55 = vector.extract_strided_slice %52 {offsets = [0, 0, 1], sizes = [8, 64, 23], strides = [1, 1, 1]} : vector<8x64x26xf32> to vector<8x64x23xf32>
    %56 = vector.extract_strided_slice %52 {offsets = [0, 0, 2], sizes = [8, 64, 23], strides = [1, 1, 1]} : vector<8x64x26xf32> to vector<8x64x23xf32>
    %57 = vector.extract_strided_slice %52 {offsets = [0, 0, 3], sizes = [8, 64, 23], strides = [1, 1, 1]} : vector<8x64x26xf32> to vector<8x64x23xf32>
    %58 = tpu.concatenate %54, %55, %56, %57 in 1 : vector<8x64x23xf32>, vector<8x64x23xf32>, vector<8x64x23xf32>, vector<8x64x23xf32> -> vector<8x256x23xf32>
    "tpu.trace_start"() <{level = 10 : i32, message = "oc,bct->bot"}> : () -> ()
    %cst_13 = arith.constant dense<0.000000e+00> : vector<8x23x96xf32>
    %59 = tpu.matmul %58, %53, %cst_13 {dimension_numbers = #tpu.dot_dimension_numbers<[1], [1], [0, 2], [0], [0, 0, 0, 2, 1, 0], [], []>} : vector<8x256x23xf32>, vector<96x256xf32>, vector<8x23x96xf32> -> vector<8x23x96xf32>
    %60 = tpu.transpose %59, [0, 2, 1] : vector<8x23x96xf32> -> vector<8x96x23xf32>
    "tpu.trace_stop"() : () -> ()
    %c0_14 = arith.constant 0 : index
    %c0_15 = arith.constant 0 : index
    %61 = vector.load %arg7[%c0_14, %c0_15] : memref<96x1xf32, #tpu.memory_space<vmem>>, vector<96x1xf32>
    %62 = vector.shape_cast %61 : vector<96x1xf32> to vector<1x96x1xf32>
    %63 = vector.broadcast %62 : vector<1x96x1xf32> to vector<8x96x23xf32>
    %64 = arith.addf %60, %63 : vector<8x96x23xf32>
    %cst_16 = arith.constant 0.000000e+00 : f32
    %65 = vector.broadcast %cst_16 : f32 to vector<8x96x23xf32>
    %66 = arith.maximumf %64, %65 : vector<8x96x23xf32>
    %cst_17 = arith.constant dense<0xFF800000> : vector<8x96xf32>
    %67 = vector.multi_reduction <maximumf>, %66, %cst_17 [2] : vector<8x96x23xf32> to vector<8x96xf32>
    %cst_18 = arith.constant 0.000000e+00 : f32
    %68 = vector.broadcast %cst_18 : f32 to vector<8x32xf32>
    %69 = tpu.concatenate %67, %68 in 1 : vector<8x96xf32>, vector<8x32xf32> -> vector<8x128xf32>
    %c0_19 = arith.constant 0 : index
    %c0_20 = arith.constant 0 : index
    %70 = vector.load %arg8[%c0_19, %c0_20] : memref<8x128xf32, #tpu.memory_space<vmem>>, vector<8x128xf32>
    tpu.vector_store %arg8[%c0_19, %c0_20], %69 {strides = array<i32>} : memref<8x128xf32, #tpu.memory_space<vmem>>, vector<8x128xf32>,
    return
  }
  func.func @transform_0(%arg0: i32) -> (i32, i32) {
    %c0_i32 = arith.constant 0 : i32
    %c0_i32_0 = arith.constant 0 : i32
    return %arg0, %c0_i32 : i32, i32
  }
  func.func @transform_1(%arg0: i32) -> (i32, i32) {
    %c0_i32 = arith.constant 0 : i32
    %c0_i32_0 = arith.constant 0 : i32
    %c0_i32_1 = arith.constant 0 : i32
    return %c0_i32, %c0_i32_0 : i32, i32
  }
  func.func @transform_2(%arg0: i32) -> (i32, i32) {
    %c0_i32 = arith.constant 0 : i32
    %c0_i32_0 = arith.constant 0 : i32
    %c0_i32_1 = arith.constant 0 : i32
    return %c0_i32, %c0_i32_0 : i32, i32
  }
  func.func @transform_3(%arg0: i32) -> (i32, i32) {
    %c0_i32 = arith.constant 0 : i32
    %c0_i32_0 = arith.constant 0 : i32
    %c0_i32_1 = arith.constant 0 : i32
    return %c0_i32, %c0_i32_0 : i32, i32
  }
  func.func @transform_4(%arg0: i32) -> (i32, i32) {
    %c0_i32 = arith.constant 0 : i32
    %c0_i32_0 = arith.constant 0 : i32
    %c0_i32_1 = arith.constant 0 : i32
    return %c0_i32, %c0_i32_0 : i32, i32
  }
  func.func @transform_5(%arg0: i32) -> (i32, i32) {
    %c0_i32 = arith.constant 0 : i32
    %c0_i32_0 = arith.constant 0 : i32
    %c0_i32_1 = arith.constant 0 : i32
    return %c0_i32, %c0_i32_0 : i32, i32
  }
  func.func @transform_6(%arg0: i32) -> (i32, i32) {
    %c0_i32 = arith.constant 0 : i32
    %c0_i32_0 = arith.constant 0 : i32
    %c0_i32_1 = arith.constant 0 : i32
    return %c0_i32, %c0_i32_0 : i32, i32
  }
  func.func @transform_7(%arg0: i32) -> (i32, i32) {
    %c0_i32 = arith.constant 0 : i32
    %c0_i32_0 = arith.constant 0 : i32
    return %arg0, %c0_i32 : i32, i32
  }
}

</mosaic_0001>

<llo_original>
// kernel: tpu_custom_call.1
$region0: #{tpu_custom_call.1}
  #allocation0 [shape = 'u32[]', space=smem, size = 0x4, offset = 0x4, fixed_abs, tag = 'smem constant byte address 0x4 - core index']
  #allocation1 [shape = 'u32[144,128]{1,0:T(1,128)}', space=vmem, size = 0x12000, scoped, tag = 'internal scratch']
  %s0 = inlined_call_operand.vmem [shape: f32[8,32], index: 0, kind: input, shape index: {}]
  %s1 = inlined_call_operand.vmem [shape: f32[32,4], index: 1, kind: input, shape index: {}]
  %s2 = inlined_call_operand.vmem [shape: f32[32,1], index: 2, kind: input, shape index: {}]
  %s3 = inlined_call_operand.hbm [shape: f32[64,128], index: 3, kind: input, shape index: {}]
  %s4 = inlined_call_operand.vmem [shape: f32[64,1], index: 4, kind: input, shape index: {}]
  %s5 = inlined_call_operand.vmem [shape: f32[96,256], index: 5, kind: input, shape index: {}]
  %s6 = inlined_call_operand.vmem [shape: f32[96,1], index: 6, kind: input, shape index: {}]
  %s7 = inlined_call_operand.hbm [shape: f32[8,128], index: 7, kind: output, shape index: {}]
  %s8 = sld [smem:[#allocation0]]
  $region42: #{tpu_custom_call.1} parent=0
    _
  %s10 = ssub.s32 1, %s8
  %s11 = scalar_select 0, %s10, %s8
  $region1: #{tpu_custom_call.1} parent=0
    #allocation2 [shape = 'u8[32768]{0}', space=vmem, size = 0x8000, scoped, tag = 'input window, operand 3, single buffered']
    #allocation3 [shape = 's32[1]{0}', space=sflag, size = 0x4, scoped, tag = 'scoped memory for tpu_custom_call.1']
    #allocation4 [shape = 's32[1]{0}', space=sflag, size = 0x4, scoped, tag = 'scoped memory for tpu_custom_call.1']
    #allocation5 [shape = 'u8[4096]{0}', space=vmem, size = 0x1000, scoped, tag = 'output window, operand 0, single buffered']
    %12 = vsyncpa [#allocation3], 0
    %13 = vsyncpa [#allocation4], 0
    // Predicated region
    $region2: #{tpu_custom_call.1} parent=1 // pred_check
      _
    $region3: #{tpu_custom_call.1} parent=1 // pred_check_branch
      %15 = sbr.rel (0) target = $region5
    $region4: #{tpu_custom_call.1} parent=1 // pred_region
      _
    $region5: #{tpu_custom_call.1} parent=1 // pred_fallthru
      _
    // Predicated region
    $region6: #{tpu_custom_call.1} parent=1 // pred_check
      _
    $region7: #{tpu_custom_call.1} parent=1 // pred_check_branch
      %17 = sbr.rel (0) target = $region9
    $region8: #{tpu_custom_call.1} parent=1 // pred_region
      _
    $region9: #{tpu_custom_call.1} parent=1 // pred_fallthru
      _
    // Predicated region
    $region10: #{tpu_custom_call.1} parent=1 // pred_check
      _
    $region11: #{tpu_custom_call.1} parent=1 // pred_check_branch
      %19 = sbr.rel (0) target = $region13
    $region12: #{tpu_custom_call.1} parent=1 // pred_region
      _
    $region13: #{tpu_custom_call.1} parent=1 // pred_fallthru
      _
    // Predicated region
    $region14: #{tpu_custom_call.1} parent=1 // pred_check
      _
    $region15: #{tpu_custom_call.1} parent=1 // pred_check_branch
      %21 = sbr.rel (0) target = $region17
    $region16: #{tpu_custom_call.1} parent=1 // pred_region
      %s23 = ssub.s32 1024, 1024
      %24 = vsyncadd [#allocation3], %s23
      %s25 = sshll.u32 [#allocation2], 4
      %s26 = int_to_ptr.vmem [resolvable:$true] %s25
      %31 = dma.hbm_to_vmem [thread:$0]  %s3, 1024, %s26, [#allocation3], 128, 128, 8
    $region17: #{tpu_custom_call.1} parent=1 // pred_fallthru
      _
    // Predicated region
    $region18: #{tpu_custom_call.1} parent=1 // pred_check
      _
    $region19: #{tpu_custom_call.1} parent=1 // pred_check_branch
      %33 = sbr.rel (0) target = $region21
    $region20: #{tpu_custom_call.1} parent=1 // pred_region
      _
    $region21: #{tpu_custom_call.1} parent=1 // pred_fallthru
      _
    // Predicated region
    $region22: #{tpu_custom_call.1} parent=1 // pred_check
      _
    $region23: #{tpu_custom_call.1} parent=1 // pred_check_branch
      %35 = sbr.rel (0) target = $region25
    $region24: #{tpu_custom_call.1} parent=1 // pred_region
      _
    $region25: #{tpu_custom_call.1} parent=1 // pred_fallthru
      _
    // Predicated region
    $region26: #{tpu_custom_call.1} parent=1 // pred_check
      _
    $region27: #{tpu_custom_call.1} parent=1 // pred_check_branch
      %37 = sbr.rel (0) target = $region29
    $region28: #{tpu_custom_call.1} parent=1 // pred_region
      _
    $region29: #{tpu_custom_call.1} parent=1 // pred_fallthru
      _
    // Predicated region
    $region30: #{tpu_custom_call.1} parent=1 // pred_check
      _
    $region31: #{tpu_custom_call.1} parent=1 // pred_check_branch
      %39 = sbr.rel (0) target = $region33
    $region32: #{tpu_custom_call.1} parent=1 // pred_region
      %40 = dma.done [#allocation3], 1024
    $region33: #{tpu_custom_call.1} parent=1 // pred_fallthru
      _
    %v41 = vld [vmem:[%s0] sm:$0xff]
    %v42 = vld [vmem:[%s1] sm:$0xff]
    %v43 = vld [vmem:[%s1 + $0x8] sm:$0xff]
    %v44 = vld [vmem:[%s1 + $0x10] sm:$0xff]
    %v45 = vld [vmem:[%s1 + $0x18] sm:$0xff]
    %v46 = vld [vmem:[%s2] sm:$0xff]
    %v47 = vld [vmem:[%s2 + $0x8] sm:$0xff]
    %v48 = vld [vmem:[%s2 + $0x10] sm:$0xff]
    %v49 = vld [vmem:[%s2 + $0x18] sm:$0xff]
    %v51 = vcombine.high %v41, %v41
    %v53 = vunpack.c.l.s4 1966171168
    %v54 = vunpack.c.0.s8 %v53
    %v55 = vlaneseq
    %v56 = vshrl.u32 %v55, 7
    %v57 = vsub.s32 %v54, %v56
    %v58 = vrot.slane %v41, %v57
    %v60 = vunpack.c.l.s4 1966171168
    %v61 = vunpack.c.0.s8 %v60
    %v62 = vlaneseq
    %v63 = vshrl.u32 %v62, 7
    %v64 = vsub.s32 %v61, %v63
    %v65 = vrot.slane %v51, %v64
    %v66 = vcombine.high %v58, %v58
    %v67 = vcombine.high %v65, %v65
    %v69 = vunpack.c.l.s4 1966171168
    %v70 = vunpack.c.0.s8 %v69
    %v71 = vlaneseq
    %v72 = vshrl.u32 %v71, 7
    %v73 = vsub.s32 %v70, %v72
    %v74 = vrot.slane %v58, %v73
    %v76 = vunpack.c.l.s4 1966171168
    %v77 = vunpack.c.0.s8 %v76
    %v78 = vlaneseq
    %v79 = vshrl.u32 %v78, 7
    %v80 = vsub.s32 %v77, %v79
    %v81 = vrot.slane %v65, %v80
    %v83 = vunpack.c.l.s4 1966171168
    %v84 = vunpack.c.0.s8 %v83
    %v85 = vlaneseq
    %v86 = vshrl.u32 %v85, 7
    %v87 = vsub.s32 %v84, %v86
    %v88 = vrot.slane %v66, %v87
    %v90 = vunpack.c.l.s4 1966171168
    %v91 = vunpack.c.0.s8 %v90
    %v92 = vlaneseq
    %v93 = vshrl.u32 %v92, 7
    %v94 = vsub.s32 %v91, %v93
    %v95 = vrot.slane %v67, %v94
    %v96 = vcombine.high %v74, %v74
    %v97 = vcombine.high %v81, %v81
    %v98 = vcombine.high %v88, %v88
    %v99 = vcombine.high %v95, %v95
    %101 = vset.pattern.permute.xlu0 0
    %102 = vperm.xlu0 %101, %v42
    %v103 = vpop.permute.xlu0 %102
    %106 = vset.pattern.permute.xlu0 0
    %107 = vperm.xlu0 %106, %v43
    %v108 = vpop.permute.xlu0 %107
    %111 = vset.pattern.permute.xlu0 0
    %112 = vperm.xlu0 %111, %v44
    %v113 = vpop.permute.xlu0 %112
    %116 = vset.pattern.permute.xlu0 0
    %117 = vperm.xlu0 %116, %v45
    %v118 = vpop.permute.xlu0 %117
    %v120 = vlaneseq
    %v121 = vshrl.u32 %v120, 7
    %v122 = vsub.s32 0, %v121
    %v123 = vrot.slane %v74, %v122
    %v124 = vlaneseq
    %v125 = vshrl.u32 %v124, 7
    %v126 = vsub.s32 0, %v125
    %v127 = vrot.slane %v88, %v126
    %v128 = vlaneseq
    %v129 = vshrl.u32 %v128, 7
    %v130 = vsub.s32 0, %v129
    %v131 = vrot.slane %v96, %v130
    %v132 = vlaneseq
    %v133 = vshrl.u32 %v132, 7
    %v134 = vsub.s32 0, %v133
    %v135 = vrot.slane %v98, %v134
    %v136 = vlaneseq
    %v137 = vshrl.u32 %v136, 7
    %v138 = vsub.s32 0, %v137
    %v139 = vrot.slane %v81, %v138
    %v140 = vlaneseq
    %v141 = vshrl.u32 %v140, 7
    %v142 = vsub.s32 0, %v141
    %v143 = vrot.slane %v95, %v142
    %v144 = vlaneseq
    %v145 = vshrl.u32 %v144, 7
    %v146 = vsub.s32 0, %v145
    %v147 = vrot.slane %v97, %v146
    %v148 = vlaneseq
    %v149 = vshrl.u32 %v148, 7
    %v150 = vsub.s32 0, %v149
    %v151 = vrot.slane %v99, %v150
    %v160 = vmul.f32 %v103, %v123
    %v161 = vmul.f32 %v108, %v123
    %v162 = vmul.f32 %v113, %v123
    %v163 = vmul.f32 %v118, %v123
    %v164 = vmul.f32 %v103, %v127
    %v165 = vmul.f32 %v108, %v127
    %v166 = vmul.f32 %v113, %v127
    %v167 = vmul.f32 %v118, %v127
    %v168 = vmul.f32 %v103, %v131
    %v169 = vmul.f32 %v108, %v131
    %v170 = vmul.f32 %v113, %v131
    %v171 = vmul.f32 %v118, %v131
    %v172 = vmul.f32 %v103, %v135
    %v173 = vmul.f32 %v108, %v135
    %v174 = vmul.f32 %v113, %v135
    %v175 = vmul.f32 %v118, %v135
    %v176 = vmul.f32 %v103, %v139
    %v177 = vmul.f32 %v108, %v139
    %v178 = vmul.f32 %v113, %v139
    %v179 = vmul.f32 %v118, %v139
    %v180 = vmul.f32 %v103, %v143
    %v181 = vmul.f32 %v108, %v143
    %v182 = vmul.f32 %v113, %v143
    %v183 = vmul.f32 %v118, %v143
    %v184 = vmul.f32 %v103, %v147
    %v185 = vmul.f32 %v108, %v147
    %v186 = vmul.f32 %v113, %v147
    %v187 = vmul.f32 %v118, %v147
    %v188 = vmul.f32 %v103, %v151
    %v189 = vmul.f32 %v108, %v151
    %v190 = vmul.f32 %v113, %v151
    %v191 = vmul.f32 %v118, %v151
    %193 = vset.pattern.permute.xlu0 0
    %194 = vperm.xlu0 %193, %v46
    %v195 = vpop.permute.xlu0 %194
    %198 = vset.pattern.permute.xlu0 0
    %199 = vperm.xlu0 %198, %v47
    %v200 = vpop.permute.xlu0 %199
    %203 = vset.pattern.permute.xlu0 0
    %204 = vperm.xlu0 %203, %v48
    %v205 = vpop.permute.xlu0 %204
    %208 = vset.pattern.permute.xlu0 0
    %209 = vperm.xlu0 %208, %v49
    %v210 = vpop.permute.xlu0 %209
    %v212 = vadd.f32 %v195, %v160
    %v213 = vadd.f32 %v200, %v161
    %v214 = vadd.f32 %v205, %v162
    %v215 = vadd.f32 %v210, %v163
    %v216 = vadd.f32 %v195, %v164
    %v217 = vadd.f32 %v200, %v165
    %v218 = vadd.f32 %v205, %v166
    %v219 = vadd.f32 %v210, %v167
    %v220 = vadd.f32 %v195, %v168
    %v221 = vadd.f32 %v200, %v169
    %v222 = vadd.f32 %v205, %v170
    %v223 = vadd.f32 %v210, %v171
    %v224 = vadd.f32 %v195, %v172
    %v225 = vadd.f32 %v200, %v173
    %v226 = vadd.f32 %v205, %v174
    %v227 = vadd.f32 %v210, %v175
    %v228 = vadd.f32 %v195, %v176
    %v229 = vadd.f32 %v200, %v177
    %v230 = vadd.f32 %v205, %v178
    %v231 = vadd.f32 %v210, %v179
    %v232 = vadd.f32 %v195, %v180
    %v233 = vadd.f32 %v200, %v181
    %v234 = vadd.f32 %v205, %v182
    %v235 = vadd.f32 %v210, %v183
    %v236 = vadd.f32 %v195, %v184
    %v237 = vadd.f32 %v200, %v185
    %v238 = vadd.f32 %v205, %v186
    %v239 = vadd.f32 %v210, %v187
    %v240 = vadd.f32 %v195, %v188
    %v241 = vadd.f32 %v200, %v189
    %v242 = vadd.f32 %v205, %v190
    %v243 = vadd.f32 %v210, %v191
    %244 = vset.pattern.permute.xlu0 1
    %245 = vperm.xlu0 %244, %v42
    %v246 = vpop.permute.xlu0 %245
    %248 = vset.pattern.permute.xlu0 1
    %249 = vperm.xlu0 %248, %v43
    %v250 = vpop.permute.xlu0 %249
    %252 = vset.pattern.permute.xlu0 1
    %253 = vperm.xlu0 %252, %v44
    %v254 = vpop.permute.xlu0 %253
    %256 = vset.pattern.permute.xlu0 1
    %257 = vperm.xlu0 %256, %v45
    %v258 = vpop.permute.xlu0 %257
    %v260 = vmul.f32 %v246, %v123
    %v261 = vmul.f32 %v250, %v123
    %v262 = vmul.f32 %v254, %v123
    %v263 = vmul.f32 %v258, %v123
    %v264 = vmul.f32 %v246, %v127
    %v265 = vmul.f32 %v250, %v127
    %v266 = vmul.f32 %v254, %v127
    %v267 = vmul.f32 %v258, %v127
    %v268 = vmul.f32 %v246, %v131
    %v269 = vmul.f32 %v250, %v131
    %v270 = vmul.f32 %v254, %v131
    %v271 = vmul.f32 %v258, %v131
    %v272 = vmul.f32 %v246, %v135
    %v273 = vmul.f32 %v250, %v135
    %v274 = vmul.f32 %v254, %v135
    %v275 = vmul.f32 %v258, %v135
    %v276 = vmul.f32 %v246, %v139
    %v277 = vmul.f32 %v250, %v139
    %v278 = vmul.f32 %v254, %v139
    %v279 = vmul.f32 %v258, %v139
    %v280 = vmul.f32 %v246, %v143
    %v281 = vmul.f32 %v250, %v143
    %v282 = vmul.f32 %v254, %v143
    %v283 = vmul.f32 %v258, %v143
    %v284 = vmul.f32 %v246, %v147
    %v285 = vmul.f32 %v250, %v147
    %v286 = vmul.f32 %v254, %v147
    %v287 = vmul.f32 %v258, %v147
    %v288 = vmul.f32 %v246, %v151
    %v289 = vmul.f32 %v250, %v151
    %v290 = vmul.f32 %v254, %v151
    %v291 = vmul.f32 %v258, %v151
    %324 = vrot.lane.b32.xlu0 %v260, 127
    %v325 = vpop.permute.xlu0 %324
    %326 = vrot.lane.b32.xlu0 %v261, 127
    %v327 = vpop.permute.xlu0 %326
    %328 = vrot.lane.b32.xlu0 %v262, 127
    %v329 = vpop.permute.xlu0 %328
    %330 = vrot.lane.b32.xlu0 %v263, 127
    %v331 = vpop.permute.xlu0 %330
    %332 = vrot.lane.b32.xlu0 %v264, 127
    %v333 = vpop.permute.xlu0 %332
    %334 = vrot.lane.b32.xlu0 %v265, 127
    %v335 = vpop.permute.xlu0 %334
    %336 = vrot.lane.b32.xlu0 %v266, 127
    %v337 = vpop.permute.xlu0 %336
    %338 = vrot.lane.b32.xlu0 %v267, 127
    %v339 = vpop.permute.xlu0 %338
    %340 = vrot.lane.b32.xlu0 %v268, 127
    %v341 = vpop.permute.xlu0 %340
    %342 = vrot.lane.b32.xlu0 %v269, 127
    %v343 = vpop.permute.xlu0 %342
    %344 = vrot.lane.b32.xlu0 %v270, 127
    %v345 = vpop.permute.xlu0 %344
    %346 = vrot.lane.b32.xlu0 %v271, 127
    %v347 = vpop.permute.xlu0 %346
    %348 = vrot.lane.b32.xlu0 %v272, 127
    %v349 = vpop.permute.xlu0 %348
    %350 = vrot.lane.b32.xlu0 %v273, 127
    %v351 = vpop.permute.xlu0 %350
    %352 = vrot.lane.b32.xlu0 %v274, 127
    %v353 = vpop.permute.xlu0 %352
    %354 = vrot.lane.b32.xlu0 %v275, 127
    %v355 = vpop.permute.xlu0 %354
    %356 = vrot.lane.b32.xlu0 %v276, 127
    %v357 = vpop.permute.xlu0 %356
    %358 = vrot.lane.b32.xlu0 %v277, 127
    %v359 = vpop.permute.xlu0 %358
    %360 = vrot.lane.b32.xlu0 %v278, 127
    %v361 = vpop.permute.xlu0 %360
    %362 = vrot.lane.b32.xlu0 %v279, 127
    %v363 = vpop.permute.xlu0 %362
    %364 = vrot.lane.b32.xlu0 %v280, 127
    %v365 = vpop.permute.xlu0 %364
    %366 = vrot.lane.b32.xlu0 %v281, 127
    %v367 = vpop.permute.xlu0 %366
    %368 = vrot.lane.b32.xlu0 %v282, 127
    %v369 = vpop.permute.xlu0 %368
    %370 = vrot.lane.b32.xlu0 %v283, 127
    %v371 = vpop.permute.xlu0 %370
    %372 = vrot.lane.b32.xlu0 %v284, 127
    %v373 = vpop.permute.xlu0 %372
    %374 = vrot.lane.b32.xlu0 %v285, 127
    %v375 = vpop.permute.xlu0 %374
    %376 = vrot.lane.b32.xlu0 %v286, 127
    %v377 = vpop.permute.xlu0 %376
    %378 = vrot.lane.b32.xlu0 %v287, 127
    %v379 = vpop.permute.xlu0 %378
    %380 = vrot.lane.b32.xlu0 %v288, 127
    %v381 = vpop.permute.xlu0 %380
    %382 = vrot.lane.b32.xlu0 %v289, 127
    %v383 = vpop.permute.xlu0 %382
    %384 = vrot.lane.b32.xlu0 %v290, 127
    %v385 = vpop.permute.xlu0 %384
    %386 = vrot.lane.b32.xlu0 %v291, 127
    %v387 = vpop.permute.xlu0 %386
    %v420 = vadd.f32 %v212, %v325
    %v421 = vadd.f32 %v213, %v327
    %v422 = vadd.f32 %v214, %v329
    %v423 = vadd.f32 %v215, %v331
    %v424 = vadd.f32 %v216, %v333
    %v425 = vadd.f32 %v217, %v335
    %v426 = vadd.f32 %v218, %v337
    %v427 = vadd.f32 %v219, %v339
    %v428 = vadd.f32 %v220, %v341
    %v429 = vadd.f32 %v221, %v343
    %v430 = vadd.f32 %v222, %v345
    %v431 = vadd.f32 %v223, %v347
    %v432 = vadd.f32 %v224, %v349
    %v433 = vadd.f32 %v225, %v351
    %v434 = vadd.f32 %v226, %v353
    %v435 = vadd.f32 %v227, %v355
    %v436 = vadd.f32 %v228, %v357
    %v437 = vadd.f32 %v229, %v359
    %v438 = vadd.f32 %v230, %v361
    %v439 = vadd.f32 %v231, %v363
    %v440 = vadd.f32 %v232, %v365
    %v441 = vadd.f32 %v233, %v367
    %v442 = vadd.f32 %v234, %v369
    %v443 = vadd.f32 %v235, %v371
    %v444 = vadd.f32 %v236, %v373
    %v445 = vadd.f32 %v237, %v375
    %v446 = vadd.f32 %v238, %v377
    %v447 = vadd.f32 %v239, %v379
    %v448 = vadd.f32 %v240, %v381
    %v449 = vadd.f32 %v241, %v383
    %v450 = vadd.f32 %v242, %v385
    %v451 = vadd.f32 %v243, %v387
    %452 = vset.pattern.permute.xlu0 2
    %453 = vperm.xlu0 %452, %v42
    %v454 = vpop.permute.xlu0 %453
    %456 = vset.pattern.permute.xlu0 2
    %457 = vperm.xlu0 %456, %v43
    %v458 = vpop.permute.xlu0 %457
    %460 = vset.pattern.permute.xlu0 2
    %461 = vperm.xlu0 %460, %v44
    %v462 = vpop.permute.xlu0 %461
    %464 = vset.pattern.permute.xlu0 2
    %465 = vperm.xlu0 %464, %v45
    %v466 = vpop.permute.xlu0 %465
    %v468 = vmul.f32 %v454, %v123
    %v469 = vmul.f32 %v458, %v123
    %v470 = vmul.f32 %v462, %v123
    %v471 = vmul.f32 %v466, %v123
    %v472 = vmul.f32 %v454, %v127
    %v473 = vmul.f32 %v458, %v127
    %v474 = vmul.f32 %v462, %v127
    %v475 = vmul.f32 %v466, %v127
    %v476 = vmul.f32 %v454, %v131
    %v477 = vmul.f32 %v458, %v131
    %v478 = vmul.f32 %v462, %v131
    %v479 = vmul.f32 %v466, %v131
    %v480 = vmul.f32 %v454, %v135
    %v481 = vmul.f32 %v458, %v135
    %v482 = vmul.f32 %v462, %v135
    %v483 = vmul.f32 %v466, %v135
    %v484 = vmul.f32 %v454, %v139
    %v485 = vmul.f32 %v458, %v139
    %v486 = vmul.f32 %v462, %v139
    %v487 = vmul.f32 %v466, %v139
    %v488 = vmul.f32 %v454, %v143
    %v489 = vmul.f32 %v458, %v143
    %v490 = vmul.f32 %v462, %v143
    %v491 = vmul.f32 %v466, %v143
    %v492 = vmul.f32 %v454, %v147
    %v493 = vmul.f32 %v458, %v147
    %v494 = vmul.f32 %v462, %v147
    %v495 = vmul.f32 %v466, %v147
    %v496 = vmul.f32 %v454, %v151
    %v497 = vmul.f32 %v458, %v151
    %v498 = vmul.f32 %v462, %v151
    %v499 = vmul.f32 %v466, %v151
    %532 = vrot.lane.b32.xlu0 %v468, 126
    %v533 = vpop.permute.xlu0 %532
    %534 = vrot.lane.b32.xlu0 %v469, 126
    %v535 = vpop.permute.xlu0 %534
    %536 = vrot.lane.b32.xlu0 %v470, 126
    %v537 = vpop.permute.xlu0 %536
    %538 = vrot.lane.b32.xlu0 %v471, 126
    %v539 = vpop.permute.xlu0 %538
    %540 = vrot.lane.b32.xlu0 %v472, 126
    %v541 = vpop.permute.xlu0 %540
    %542 = vrot.lane.b32.xlu0 %v473, 126
    %v543 = vpop.permute.xlu0 %542
    %544 = vrot.lane.b32.xlu0 %v474, 126
    %v545 = vpop.permute.xlu0 %544
    %546 = vrot.lane.b32.xlu0 %v475, 126
    %v547 = vpop.permute.xlu0 %546
    %548 = vrot.lane.b32.xlu0 %v476, 126
    %v549 = vpop.permute.xlu0 %548
    %550 = vrot.lane.b32.xlu0 %v477, 126
    %v551 = vpop.permute.xlu0 %550
    %552 = vrot.lane.b32.xlu0 %v478, 126
    %v553 = vpop.permute.xlu0 %552
    %554 = vrot.lane.b32.xlu0 %v479, 126
    %v555 = vpop.permute.xlu0 %554
    %556 = vrot.lane.b32.xlu0 %v480, 126
    %v557 = vpop.permute.xlu0 %556
    %558 = vrot.lane.b32.xlu0 %v481, 126
    %v559 = vpop.permute.xlu0 %558
    %560 = vrot.lane.b32.xlu0 %v482, 126
    %v561 = vpop.permute.xlu0 %560
    %562 = vrot.lane.b32.xlu0 %v483, 126
    %v563 = vpop.permute.xlu0 %562
    %564 = vrot.lane.b32.xlu0 %v484, 126
    %v565 = vpop.permute.xlu0 %564
    %566 = vrot.lane.b32.xlu0 %v485, 126
    %v567 = vpop.permute.xlu0 %566
    %568 = vrot.lane.b32.xlu0 %v486, 126
    %v569 = vpop.permute.xlu0 %568
    %570 = vrot.lane.b32.xlu0 %v487, 126
    %v571 = vpop.permute.xlu0 %570
    %572 = vrot.lane.b32.xlu0 %v488, 126
    %v573 = vpop.permute.xlu0 %572
    %574 = vrot.lane.b32.xlu0 %v489, 126
    %v575 = vpop.permute.xlu0 %574
    %576 = vrot.lane.b32.xlu0 %v490, 126
    %v577 = vpop.permute.xlu0 %576
    %578 = vrot.lane.b32.xlu0 %v491, 126
    %v579 = vpop.permute.xlu0 %578
    %580 = vrot.lane.b32.xlu0 %v492, 126
    %v581 = vpop.permute.xlu0 %580
    %582 = vrot.lane.b32.xlu0 %v493, 126
    %v583 = vpop.permute.xlu0 %582
    %584 = vrot.lane.b32.xlu0 %v494, 126
    %v585 = vpop.permute.xlu0 %584
    %586 = vrot.lane.b32.xlu0 %v495, 126
    %v587 = vpop.permute.xlu0 %586
    %588 = vrot.lane.b32.xlu0 %v496, 126
    %v589 = vpop.permute.xlu0 %588
    %590 = vrot.lane.b32.xlu0 %v497, 126
    %v591 = vpop.permute.xlu0 %590
    %592 = vrot.lane.b32.xlu0 %v498, 126
    %v593 = vpop.permute.xlu0 %592
    %594 = vrot.lane.b32.xlu0 %v499, 126
    %v595 = vpop.permute.xlu0 %594
    %v628 = vadd.f32 %v420, %v533
    %v629 = vadd.f32 %v421, %v535
    %v630 = vadd.f32 %v422, %v537
    %v631 = vadd.f32 %v423, %v539
    %v632 = vadd.f32 %v424, %v541
    %v633 = vadd.f32 %v425, %v543
    %v634 = vadd.f32 %v426, %v545
    %v635 = vadd.f32 %v427, %v547
    %v636 = vadd.f32 %v428, %v549
    %v637 = vadd.f32 %v429, %v551
    %v638 = vadd.f32 %v430, %v553
    %v639 = vadd.f32 %v431, %v555
    %v640 = vadd.f32 %v432, %v557
    %v641 = vadd.f32 %v433, %v559
    %v642 = vadd.f32 %v434, %v561
    %v643 = vadd.f32 %v435, %v563
    %v644 = vadd.f32 %v436, %v565
    %v645 = vadd.f32 %v437, %v567
    %v646 = vadd.f32 %v438, %v569
    %v647 = vadd.f32 %v439, %v571
    %v648 = vadd.f32 %v440, %v573
    %v649 = vadd.f32 %v441, %v575
    %v650 = vadd.f32 %v442, %v577
    %v651 = vadd.f32 %v443, %v579
    %v652 = vadd.f32 %v444, %v581
    %v653 = vadd.f32 %v445, %v583
    %v654 = vadd.f32 %v446, %v585
    %v655 = vadd.f32 %v447, %v587
    %v656 = vadd.f32 %v448, %v589
    %v657 = vadd.f32 %v449, %v591
    %v658 = vadd.f32 %v450, %v593
    %v659 = vadd.f32 %v451, %v595
    %660 = vset.pattern.permute.xlu0 3
    %661 = vperm.xlu0 %660, %v42
    %v662 = vpop.permute.xlu0 %661
    %664 = vset.pattern.permute.xlu0 3
    %665 = vperm.xlu0 %664, %v43
    %v666 = vpop.permute.xlu0 %665
    %668 = vset.pattern.permute.xlu0 3
    %669 = vperm.xlu0 %668, %v44
    %v670 = vpop.permute.xlu0 %669
    %672 = vset.pattern.permute.xlu0 3
    %673 = vperm.xlu0 %672, %v45
    %v674 = vpop.permute.xlu0 %673
    %v676 = vmul.f32 %v662, %v123
    %v677 = vmul.f32 %v666, %v123
    %v678 = vmul.f32 %v670, %v123
    %v679 = vmul.f32 %v674, %v123
    %v680 = vmul.f32 %v662, %v127
    %v681 = vmul.f32 %v666, %v127
    %v682 = vmul.f32 %v670, %v127
    %v683 = vmul.f32 %v674, %v127
    %v684 = vmul.f32 %v662, %v131
    %v685 = vmul.f32 %v666, %v131
    %v686 = vmul.f32 %v670, %v131
    %v687 = vmul.f32 %v674, %v131
    %v688 = vmul.f32 %v662, %v135
    %v689 = vmul.f32 %v666, %v135
    %v690 = vmul.f32 %v670, %v135
    %v691 = vmul.f32 %v674, %v135
    %v692 = vmul.f32 %v662, %v139
    %v693 = vmul.f32 %v666, %v139
    %v694 = vmul.f32 %v670, %v139
    %v695 = vmul.f32 %v674, %v139
    %v696 = vmul.f32 %v662, %v143
    %v697 = vmul.f32 %v666, %v143
    %v698 = vmul.f32 %v670, %v143
    %v699 = vmul.f32 %v674, %v143
    %v700 = vmul.f32 %v662, %v147
    %v701 = vmul.f32 %v666, %v147
    %v702 = vmul.f32 %v670, %v147
    %v703 = vmul.f32 %v674, %v147
    %v704 = vmul.f32 %v662, %v151
    %v705 = vmul.f32 %v666, %v151
    %v706 = vmul.f32 %v670, %v151
    %v707 = vmul.f32 %v674, %v151
    %740 = vrot.lane.b32.xlu0 %v676, 125
    %v741 = vpop.permute.xlu0 %740
    %742 = vrot.lane.b32.xlu0 %v677, 125
    %v743 = vpop.permute.xlu0 %742
    %744 = vrot.lane.b32.xlu0 %v678, 125
    %v745 = vpop.permute.xlu0 %744
    %746 = vrot.lane.b32.xlu0 %v679, 125
    %v747 = vpop.permute.xlu0 %746
    %748 = vrot.lane.b32.xlu0 %v680, 125
    %v749 = vpop.permute.xlu0 %748
    %750 = vrot.lane.b32.xlu0 %v681, 125
    %v751 = vpop.permute.xlu0 %750
    %752 = vrot.lane.b32.xlu0 %v682, 125
    %v753 = vpop.permute.xlu0 %752
    %754 = vrot.lane.b32.xlu0 %v683, 125
    %v755 = vpop.permute.xlu0 %754
    %756 = vrot.lane.b32.xlu0 %v684, 125
    %v757 = vpop.permute.xlu0 %756
    %758 = vrot.lane.b32.xlu0 %v685, 125
    %v759 = vpop.permute.xlu0 %758
    %760 = vrot.lane.b32.xlu0 %v686, 125
    %v761 = vpop.permute.xlu0 %760
    %762 = vrot.lane.b32.xlu0 %v687, 125
    %v763 = vpop.permute.xlu0 %762
    %764 = vrot.lane.b32.xlu0 %v688, 125
    %v765 = vpop.permute.xlu0 %764
    %766 = vrot.lane.b32.xlu0 %v689, 125
    %v767 = vpop.permute.xlu0 %766
    %768 = vrot.lane.b32.xlu0 %v690, 125
    %v769 = vpop.permute.xlu0 %768
    %770 = vrot.lane.b32.xlu0 %v691, 125
    %v771 = vpop.permute.xlu0 %770
    %772 = vrot.lane.b32.xlu0 %v692, 125
    %v773 = vpop.permute.xlu0 %772
    %774 = vrot.lane.b32.xlu0 %v693, 125
    %v775 = vpop.permute.xlu0 %774
    %776 = vrot.lane.b32.xlu0 %v694, 125
    %v777 = vpop.permute.xlu0 %776
    %778 = vrot.lane.b32.xlu0 %v695, 125
    %v779 = vpop.permute.xlu0 %778
    %780 = vrot.lane.b32.xlu0 %v696, 125
    %v781 = vpop.permute.xlu0 %780
    %782 = vrot.lane.b32.xlu0 %v697, 125
    %v783 = vpop.permute.xlu0 %782
    %784 = vrot.lane.b32.xlu0 %v698, 125
    %v785 = vpop.permute.xlu0 %784
    %786 = vrot.lane.b32.xlu0 %v699, 125
    %v787 = vpop.permute.xlu0 %786
    %788 = vrot.lane.b32.xlu0 %v700, 125
    %v789 = vpop.permute.xlu0 %788
    %790 = vrot.lane.b32.xlu0 %v701, 125
    %v791 = vpop.permute.xlu0 %790
    %792 = vrot.lane.b32.xlu0 %v702, 125
    %v793 = vpop.permute.xlu0 %792
    %794 = vrot.lane.b32.xlu0 %v703, 125
    %v795 = vpop.permute.xlu0 %794
    %796 = vrot.lane.b32.xlu0 %v704, 125
    %v797 = vpop.permute.xlu0 %796
    %798 = vrot.lane.b32.xlu0 %v705, 125
    %v799 = vpop.permute.xlu0 %798
    %800 = vrot.lane.b32.xlu0 %v706, 125
    %v801 = vpop.permute.xlu0 %800
    %802 = vrot.lane.b32.xlu0 %v707, 125
    %v803 = vpop.permute.xlu0 %802
    %v836 = vadd.f32 %v628, %v741
    %v837 = vadd.f32 %v629, %v743
    %v838 = vadd.f32 %v630, %v745
    %v839 = vadd.f32 %v631, %v747
    %v840 = vadd.f32 %v632, %v749
    %v841 = vadd.f32 %v633, %v751
    %v842 = vadd.f32 %v634, %v753
    %v843 = vadd.f32 %v635, %v755
    %v844 = vadd.f32 %v636, %v757
    %v845 = vadd.f32 %v637, %v759
    %v846 = vadd.f32 %v638, %v761
    %v847 = vadd.f32 %v639, %v763
    %v848 = vadd.f32 %v640, %v765
    %v849 = vadd.f32 %v641, %v767
    %v850 = vadd.f32 %v642, %v769
    %v851 = vadd.f32 %v643, %v771
    %v852 = vadd.f32 %v644, %v773
    %v853 = vadd.f32 %v645, %v775
    %v854 = vadd.f32 %v646, %v777
    %v855 = vadd.f32 %v647, %v779
    %v856 = vadd.f32 %v648, %v781
    %v857 = vadd.f32 %v649, %v783
    %v858 = vadd.f32 %v650, %v785
    %v859 = vadd.f32 %v651, %v787
    %v860 = vadd.f32 %v652, %v789
    %v861 = vadd.f32 %v653, %v791
    %v862 = vadd.f32 %v654, %v793
    %v863 = vadd.f32 %v655, %v795
    %v864 = vadd.f32 %v656, %v797
    %v865 = vadd.f32 %v657, %v799
    %v866 = vadd.f32 %v658, %v801
    %v867 = vadd.f32 %v659, %v803
    %v868 = vmax.f32 %v836, 0.0
    %v869 = vmax.f32 %v837, 0.0
    %v870 = vmax.f32 %v838, 0.0
    %v871 = vmax.f32 %v839, 0.0
    %v872 = vmax.f32 %v840, 0.0
    %v873 = vmax.f32 %v841, 0.0
    %v874 = vmax.f32 %v842, 0.0
    %v875 = vmax.f32 %v843, 0.0
    %v876 = vmax.f32 %v844, 0.0
    %v877 = vmax.f32 %v845, 0.0
    %v878 = vmax.f32 %v846, 0.0
    %v879 = vmax.f32 %v847, 0.0
    %v880 = vmax.f32 %v848, 0.0
    %v881 = vmax.f32 %v849, 0.0
    %v882 = vmax.f32 %v850, 0.0
    %v883 = vmax.f32 %v851, 0.0
    %v884 = vmax.f32 %v852, 0.0
    %v885 = vmax.f32 %v853, 0.0
    %v886 = vmax.f32 %v854, 0.0
    %v887 = vmax.f32 %v855, 0.0
    %v888 = vmax.f32 %v856, 0.0
    %v889 = vmax.f32 %v857, 0.0
    %v890 = vmax.f32 %v858, 0.0
    %v891 = vmax.f32 %v859, 0.0
    %v892 = vmax.f32 %v860, 0.0
    %v893 = vmax.f32 %v861, 0.0
    %v894 = vmax.f32 %v862, 0.0
    %v895 = vmax.f32 %v863, 0.0
    %v896 = vmax.f32 %v864, 0.0
    %v897 = vmax.f32 %v865, 0.0
    %v898 = vmax.f32 %v866, 0.0
    %v899 = vmax.f32 %v867, 0.0
    %v900 = vld [vmem:[#allocation2] sm:$0xff]
    %v901 = vld [vmem:[#allocation2 + $0x8] sm:$0xff]
    %v902 = vld [vmem:[#allocation2 + $0x10] sm:$0xff]
    %v903 = vld [vmem:[#allocation2 + $0x18] sm:$0xff]
    %v904 = vld [vmem:[#allocation2 + $0x20] sm:$0xff]
    %v905 = vld [vmem:[#allocation2 + $0x28] sm:$0xff]
    %v906 = vld [vmem:[#allocation2 + $0x30] sm:$0xff]
    %v907 = vld [vmem:[#allocation2 + $0x38] sm:$0xff]
    %940 = vrot.lane.b32.xlu0 %v868, 127
    %v941 = vpop.permute.xlu0 %940
    %942 = vrot.lane.b32.xlu0 %v869, 127
    %v943 = vpop.permute.xlu0 %942
    %944 = vrot.lane.b32.xlu0 %v870, 127
    %v945 = vpop.permute.xlu0 %944
    %946 = vrot.lane.b32.xlu0 %v871, 127
    %v947 = vpop.permute.xlu0 %946
    %948 = vrot.lane.b32.xlu0 %v872, 127
    %v949 = vpop.permute.xlu0 %948
    %950 = vrot.lane.b32.xlu0 %v873, 127
    %v951 = vpop.permute.xlu0 %950
    %952 = vrot.lane.b32.xlu0 %v874, 127
    %v953 = vpop.permute.xlu0 %952
    %954 = vrot.lane.b32.xlu0 %v875, 127
    %v955 = vpop.permute.xlu0 %954
    %956 = vrot.lane.b32.xlu0 %v876, 127
    %v957 = vpop.permute.xlu0 %956
    %958 = vrot.lane.b32.xlu0 %v877, 127
    %v959 = vpop.permute.xlu0 %958
    %960 = vrot.lane.b32.xlu0 %v878, 127
    %v961 = vpop.permute.xlu0 %960
    %962 = vrot.lane.b32.xlu0 %v879, 127
    %v963 = vpop.permute.xlu0 %962
    %964 = vrot.lane.b32.xlu0 %v880, 127
    %v965 = vpop.permute.xlu0 %964
    %966 = vrot.lane.b32.xlu0 %v881, 127
    %v967 = vpop.permute.xlu0 %966
    %968 = vrot.lane.b32.xlu0 %v882, 127
    %v969 = vpop.permute.xlu0 %968
    %970 = vrot.lane.b32.xlu0 %v883, 127
    %v971 = vpop.permute.xlu0 %970
    %972 = vrot.lane.b32.xlu0 %v884, 127
    %v973 = vpop.permute.xlu0 %972
    %974 = vrot.lane.b32.xlu0 %v885, 127
    %v975 = vpop.permute.xlu0 %974
    %976 = vrot.lane.b32.xlu0 %v886, 127
    %v977 = vpop.permute.xlu0 %976
    %978 = vrot.lane.b32.xlu0 %v887, 127
    %v979 = vpop.permute.xlu0 %978
    %980 = vrot.lane.b32.xlu0 %v888, 127
    %v981 = vpop.permute.xlu0 %980
    %982 = vrot.lane.b32.xlu0 %v889, 127
    %v983 = vpop.permute.xlu0 %982
    %984 = vrot.lane.b32.xlu0 %v890, 127
    %v985 = vpop.permute.xlu0 %984
    %986 = vrot.lane.b32.xlu0 %v891, 127
    %v987 = vpop.permute.xlu0 %986
    %988 = vrot.lane.b32.xlu0 %v892, 127
    %v989 = vpop.permute.xlu0 %988
    %990 = vrot.lane.b32.xlu0 %v893, 127
    %v991 = vpop.permute.xlu0 %990
    %992 = vrot.lane.b32.xlu0 %v894, 127
    %v993 = vpop.permute.xlu0 %992
    %994 = vrot.lane.b32.xlu0 %v895, 127
    %v995 = vpop.permute.xlu0 %994
    %996 = vrot.lane.b32.xlu0 %v896, 127
    %v997 = vpop.permute.xlu0 %996
    %998 = vrot.lane.b32.xlu0 %v897, 127
    %v999 = vpop.permute.xlu0 %998
    %1000 = vrot.lane.b32.xlu0 %v898, 127
    %v1001 = vpop.permute.xlu0 %1000
    %1002 = vrot.lane.b32.xlu0 %v899, 127
    %v1003 = vpop.permute.xlu0 %1002
    %1036 = vrot.lane.b32.xlu0 %v868, 126
    %v1037 = vpop.permute.xlu0 %1036
    %1038 = vrot.lane.b32.xlu0 %v869, 126
    %v1039 = vpop.permute.xlu0 %1038
    %1040 = vrot.lane.b32.xlu0 %v870, 126
    %v1041 = vpop.permute.xlu0 %1040
    %1042 = vrot.lane.b32.xlu0 %v871, 126
    %v1043 = vpop.permute.xlu0 %1042
    %1044 = vrot.lane.b32.xlu0 %v872, 126
    %v1045 = vpop.permute.xlu0 %1044
    %1046 = vrot.lane.b32.xlu0 %v873, 126
    %v1047 = vpop.permute.xlu0 %1046
    %1048 = vrot.lane.b32.xlu0 %v874, 126
    %v1049 = vpop.permute.xlu0 %1048
    %1050 = vrot.lane.b32.xlu0 %v875, 126
    %v1051 = vpop.permute.xlu0 %1050
    %1052 = vrot.lane.b32.xlu0 %v876, 126
    %v1053 = vpop.permute.xlu0 %1052
    %1054 = vrot.lane.b32.xlu0 %v877, 126
    %v1055 = vpop.permute.xlu0 %1054
    %1056 = vrot.lane.b32.xlu0 %v878, 126
    %v1057 = vpop.permute.xlu0 %1056
    %1058 = vrot.lane.b32.xlu0 %v879, 126
    %v1059 = vpop.permute.xlu0 %1058
    %1060 = vrot.lane.b32.xlu0 %v880, 126
    %v1061 = vpop.permute.xlu0 %1060
    %1062 = vrot.lane.b32.xlu0 %v881, 126
    %v1063 = vpop.permute.xlu0 %1062
    %1064 = vrot.lane.b32.xlu0 %v882, 126
    %v1065 = vpop.permute.xlu0 %1064
    %1066 = vrot.lane.b32.xlu0 %v883, 126
    %v1067 = vpop.permute.xlu0 %1066
    %1068 = vrot.lane.b32.xlu0 %v884, 126
    %v1069 = vpop.permute.xlu0 %1068
    %1070 = vrot.lane.b32.xlu0 %v885, 126
    %v1071 = vpop.permute.xlu0 %1070
    %1072 = vrot.lane.b32.xlu0 %v886, 126
    %v1073 = vpop.permute.xlu0 %1072
    %1074 = vrot.lane.b32.xlu0 %v887, 126
    %v1075 = vpop.permute.xlu0 %1074
    %1076 = vrot.lane.b32.xlu0 %v888, 126
    %v1077 = vpop.permute.xlu0 %1076
    %1078 = vrot.lane.b32.xlu0 %v889, 126
    %v1079 = vpop.permute.xlu0 %1078
    %1080 = vrot.lane.b32.xlu0 %v890, 126
    %v1081 = vpop.permute.xlu0 %1080
    %1082 = vrot.lane.b32.xlu0 %v891, 126
    %v1083 = vpop.permute.xlu0 %1082
    %1084 = vrot.lane.b32.xlu0 %v892, 126
    %v1085 = vpop.permute.xlu0 %1084
    %1086 = vrot.lane.b32.xlu0 %v893, 126
    %v1087 = vpop.permute.xlu0 %1086
    %1088 = vrot.lane.b32.xlu0 %v894, 126
    %v1089 = vpop.permute.xlu0 %1088
    %1090 = vrot.lane.b32.xlu0 %v895, 126
    %v1091 = vpop.permute.xlu0 %1090
    %1092 = vrot.lane.b32.xlu0 %v896, 126
    %v1093 = vpop.permute.xlu0 %1092
    %1094 = vrot.lane.b32.xlu0 %v897, 126
    %v1095 = vpop.permute.xlu0 %1094
    %1096 = vrot.lane.b32.xlu0 %v898, 126
    %v1097 = vpop.permute.xlu0 %1096
    %1098 = vrot.lane.b32.xlu0 %v899, 126
    %v1099 = vpop.permute.xlu0 %1098
    %1132 = vrot.lane.b32.xlu0 %v868, 125
    %v1133 = vpop.permute.xlu0 %1132
    %1134 = vrot.lane.b32.xlu0 %v869, 125
    %v1135 = vpop.permute.xlu0 %1134
    %1136 = vrot.lane.b32.xlu0 %v870, 125
    %v1137 = vpop.permute.xlu0 %1136
    %1138 = vrot.lane.b32.xlu0 %v871, 125
    %v1139 = vpop.permute.xlu0 %1138
    %1140 = vrot.lane.b32.xlu0 %v872, 125
    %v1141 = vpop.permute.xlu0 %1140
    %1142 = vrot.lane.b32.xlu0 %v873, 125
    %v1143 = vpop.permute.xlu0 %1142
    %1144 = vrot.lane.b32.xlu0 %v874, 125
    %v1145 = vpop.permute.xlu0 %1144
    %1146 = vrot.lane.b32.xlu0 %v875, 125
    %v1147 = vpop.permute.xlu0 %1146
    %1148 = vrot.lane.b32.xlu0 %v876, 125
    %v1149 = vpop.permute.xlu0 %1148
    %1150 = vrot.lane.b32.xlu0 %v877, 125
    %v1151 = vpop.permute.xlu0 %1150
    %1152 = vrot.lane.b32.xlu0 %v878, 125
    %v1153 = vpop.permute.xlu0 %1152
    %1154 = vrot.lane.b32.xlu0 %v879, 125
    %v1155 = vpop.permute.xlu0 %1154
    %1156 = vrot.lane.b32.xlu0 %v880, 125
    %v1157 = vpop.permute.xlu0 %1156
    %1158 = vrot.lane.b32.xlu0 %v881, 125
    %v1159 = vpop.permute.xlu0 %1158
    %1160 = vrot.lane.b32.xlu0 %v882, 125
    %v1161 = vpop.permute.xlu0 %1160
    %1162 = vrot.lane.b32.xlu0 %v883, 125
    %v1163 = vpop.permute.xlu0 %1162
    %1164 = vrot.lane.b32.xlu0 %v884, 125
    %v1165 = vpop.permute.xlu0 %1164
    %1166 = vrot.lane.b32.xlu0 %v885, 125
    %v1167 = vpop.permute.xlu0 %1166
    %1168 = vrot.lane.b32.xlu0 %v886, 125
    %v1169 = vpop.permute.xlu0 %1168
    %1170 = vrot.lane.b32.xlu0 %v887, 125
    %v1171 = vpop.permute.xlu0 %1170
    %1172 = vrot.lane.b32.xlu0 %v888, 125
    %v1173 = vpop.permute.xlu0 %1172
    %1174 = vrot.lane.b32.xlu0 %v889, 125
    %v1175 = vpop.permute.xlu0 %1174
    %1176 = vrot.lane.b32.xlu0 %v890, 125
    %v1177 = vpop.permute.xlu0 %1176
    %1178 = vrot.lane.b32.xlu0 %v891, 125
    %v1179 = vpop.permute.xlu0 %1178
    %1180 = vrot.lane.b32.xlu0 %v892, 125
    %v1181 = vpop.permute.xlu0 %1180
    %1182 = vrot.lane.b32.xlu0 %v893, 125
    %v1183 = vpop.permute.xlu0 %1182
    %1184 = vrot.lane.b32.xlu0 %v894, 125
    %v1185 = vpop.permute.xlu0 %1184
    %1186 = vrot.lane.b32.xlu0 %v895, 125
    %v1187 = vpop.permute.xlu0 %1186
    %1188 = vrot.lane.b32.xlu0 %v896, 125
    %v1189 = vpop.permute.xlu0 %1188
    %1190 = vrot.lane.b32.xlu0 %v897, 125
    %v1191 = vpop.permute.xlu0 %1190
    %1192 = vrot.lane.b32.xlu0 %v898, 125
    %v1193 = vpop.permute.xlu0 %1192
    %1194 = vrot.lane.b32.xlu0 %v899, 125
    %v1195 = vpop.permute.xlu0 %1194
    %1228 = vxpose.xlu0.b32.start [1/16] %v868, 128
    %1229 = vxpose.xlu0.b32.cont [2/16] %v869, 128
    %1230 = vxpose.xlu0.b32.cont [3/16] %v870, 128
    %1231 = vxpose.xlu0.b32.cont [4/16] %v871, 128
    %1232 = vxpose.xlu0.b32.cont [5/16] %v941, 128
    %1233 = vxpose.xlu0.b32.cont [6/16] %v943, 128
    %1234 = vxpose.xlu0.b32.cont [7/16] %v945, 128
    %1235 = vxpose.xlu0.b32.cont [8/16] %v947, 128
    %1236 = vxpose.xlu0.b32.cont [9/16] %v1037, 128
    %1237 = vxpose.xlu0.b32.cont [10/16] %v1039, 128
    %1238 = vxpose.xlu0.b32.cont [11/16] %v1041, 128
    %1239 = vxpose.xlu0.b32.cont [12/16] %v1043, 128
    %1240 = vxpose.xlu0.b32.cont [13/16] %v1133, 128
    %1241 = vxpose.xlu0.b32.cont [14/16] %v1135, 128
    %1242 = vxpose.xlu0.b32.cont [15/16] %v1137, 128
    %1243 = vxpose.xlu0.b32.end [16/16] %v1139, 128
    %v1244 = vpop.trf.xlu0
    %v1245 = vpop.trf.xlu0
    %v1246 = vpop.trf.xlu0
    %v1247 = vpop.trf.xlu0
    %v1248 = vpop.trf.xlu0
    %v1249 = vpop.trf.xlu0
    %v1250 = vpop.trf.xlu0
    %v1251 = vpop.trf.xlu0
    %v1252 = vpop.trf.xlu0
    %v1253 = vpop.trf.xlu0
    %v1254 = vpop.trf.xlu0
    %v1255 = vpop.trf.xlu0
    %v1256 = vpop.trf.xlu0
    %v1257 = vpop.trf.xlu0
    %v1258 = vpop.trf.xlu0
    %v1259 = vpop.trf.xlu0
    %1260 = vxpose.xlu0.b32.start [1/16] %v872, 128
    %1261 = vxpose.xlu0.b32.cont [2/16] %v873, 128
    %1262 = vxpose.xlu0.b32.cont [3/16] %v874, 128
    %1263 = vxpose.xlu0.b32.cont [4/16] %v875, 128
    %1264 = vxpose.xlu0.b32.cont [5/16] %v949, 128
    %1265 = vxpose.xlu0.b32.cont [6/16] %v951, 128
    %1266 = vxpose.xlu0.b32.cont [7/16] %v953, 128
    %1267 = vxpose.xlu0.b32.cont [8/16] %v955, 128
    %1268 = vxpose.xlu0.b32.cont [9/16] %v1045, 128
    %1269 = vxpose.xlu0.b32.cont [10/16] %v1047, 128
    %1270 = vxpose.xlu0.b32.cont [11/16] %v1049, 128
    %1271 = vxpose.xlu0.b32.cont [12/16] %v1051, 128
    %1272 = vxpose.xlu0.b32.cont [13/16] %v1141, 128
    %1273 = vxpose.xlu0.b32.cont [14/16] %v1143, 128
    %1274 = vxpose.xlu0.b32.cont [15/16] %v1145, 128
    %1275 = vxpose.xlu0.b32.end [16/16] %v1147, 128
    %v1276 = vpop.trf.xlu0
    %v1277 = vpop.trf.xlu0
    %v1278 = vpop.trf.xlu0
    %v1279 = vpop.trf.xlu0
    %v1280 = vpop.trf.xlu0
    %v1281 = vpop.trf.xlu0
    %v1282 = vpop.trf.xlu0
    %v1283 = vpop.trf.xlu0
    %v1284 = vpop.trf.xlu0
    %v1285 = vpop.trf.xlu0
    %v1286 = vpop.trf.xlu0
    %v1287 = vpop.trf.xlu0
    %v1288 = vpop.trf.xlu0
    %v1289 = vpop.trf.xlu0
    %v1290 = vpop.trf.xlu0
    %v1291 = vpop.trf.xlu0
    %1292 = vxpose.xlu0.b32.start [1/16] %v876, 128
    %1293 = vxpose.xlu0.b32.cont [2/16] %v877, 128
    %1294 = vxpose.xlu0.b32.cont [3/16] %v878, 128
    %1295 = vxpose.xlu0.b32.cont [4/16] %v879, 128
    %1296 = vxpose.xlu0.b32.cont [5/16] %v957, 128
    %1297 = vxpose.xlu0.b32.cont [6/16] %v959, 128
    %1298 = vxpose.xlu0.b32.cont [7/16] %v961, 128
    %1299 = vxpose.xlu0.b32.cont [8/16] %v963, 128
    %1300 = vxpose.xlu0.b32.cont [9/16] %v1053, 128
    %1301 = vxpose.xlu0.b32.cont [10/16] %v1055, 128
    %1302 = vxpose.xlu0.b32.cont [11/16] %v1057, 128
    %1303 = vxpose.xlu0.b32.cont [12/16] %v1059, 128
    %1304 = vxpose.xlu0.b32.cont [13/16] %v1149, 128
    %1305 = vxpose.xlu0.b32.cont [14/16] %v1151, 128
    %1306 = vxpose.xlu0.b32.cont [15/16] %v1153, 128
    %1307 = vxpose.xlu0.b32.end [16/16] %v1155, 128
    %v1308 = vpop.trf.xlu0
    %v1309 = vpop.trf.xlu0
    %v1310 = vpop.trf.xlu0
    %v1311 = vpop.trf.xlu0
    %v1312 = vpop.trf.xlu0
    %v1313 = vpop.trf.xlu0
    %v1314 = vpop.trf.xlu0
    %v1315 = vpop.trf.xlu0
    %v1316 = vpop.trf.xlu0
    %v1317 = vpop.trf.xlu0
    %v1318 = vpop.trf.xlu0
    %v1319 = vpop.trf.xlu0
    %v1320 = vpop.trf.xlu0
    %v1321 = vpop.trf.xlu0
    %v1322 = vpop.trf.xlu0
    %v1323 = vpop.trf.xlu0
    %1324 = vxpose.xlu0.b32.start [1/16] %v880, 128
    %1325 = vxpose.xlu0.b32.cont [2/16] %v881, 128
    %1326 = vxpose.xlu0.b32.cont [3/16] %v882, 128
    %1327 = vxpose.xlu0.b32.cont [4/16] %v883, 128
    %1328 = vxpose.xlu0.b32.cont [5/16] %v965, 128
    %1329 = vxpose.xlu0.b32.cont [6/16] %v967, 128
    %1330 = vxpose.xlu0.b32.cont [7/16] %v969, 128
    %1331 = vxpose.xlu0.b32.cont [8/16] %v971, 128
    %1332 = vxpose.xlu0.b32.cont [9/16] %v1061, 128
    %1333 = vxpose.xlu0.b32.cont [10/16] %v1063, 128
    %1334 = vxpose.xlu0.b32.cont [11/16] %v1065, 128
    %1335 = vxpose.xlu0.b32.cont [12/16] %v1067, 128
    %1336 = vxpose.xlu0.b32.cont [13/16] %v1157, 128
    %1337 = vxpose.xlu0.b32.cont [14/16] %v1159, 128
    %1338 = vxpose.xlu0.b32.cont [15/16] %v1161, 128
    %1339 = vxpose.xlu0.b32.end [16/16] %v1163, 128
    %v1340 = vpop.trf.xlu0
    %v1341 = vpop.trf.xlu0
    %v1342 = vpop.trf.xlu0
    %v1343 = vpop.trf.xlu0
    %v1344 = vpop.trf.xlu0
    %v1345 = vpop.trf.xlu0
    %v1346 = vpop.trf.xlu0
    %v1347 = vpop.trf.xlu0
    %v1348 = vpop.trf.xlu0
    %v1349 = vpop.trf.xlu0
    %v1350 = vpop.trf.xlu0
    %v1351 = vpop.trf.xlu0
    %v1352 = vpop.trf.xlu0
    %v1353 = vpop.trf.xlu0
    %v1354 = vpop.trf.xlu0
    %v1355 = vpop.trf.xlu0
    %1356 = vxpose.xlu0.b32.start [1/16] %v884, 128
    %1357 = vxpose.xlu0.b32.cont [2/16] %v885, 128
    %1358 = vxpose.xlu0.b32.cont [3/16] %v886, 128
    %1359 = vxpose.xlu0.b32.cont [4/16] %v887, 128
    %1360 = vxpose.xlu0.b32.cont [5/16] %v973, 128
    %1361 = vxpose.xlu0.b32.cont [6/16] %v975, 128
    %1362 = vxpose.xlu0.b32.cont [7/16] %v977, 128
    %1363 = vxpose.xlu0.b32.cont [8/16] %v979, 128
    %1364 = vxpose.xlu0.b32.cont [9/16] %v1069, 128
    %1365 = vxpose.xlu0.b32.cont [10/16] %v1071, 128
    %1366 = vxpose.xlu0.b32.cont [11/16] %v1073, 128
    %1367 = vxpose.xlu0.b32.cont [12/16] %v1075, 128
    %1368 = vxpose.xlu0.b32.cont [13/16] %v1165, 128
    %1369 = vxpose.xlu0.b32.cont [14/16] %v1167, 128
    %1370 = vxpose.xlu0.b32.cont [15/16] %v1169, 128
    %1371 = vxpose.xlu0.b32.end [16/16] %v1171, 128
    %v1372 = vpop.trf.xlu0
    %v1373 = vpop.trf.xlu0
    %v1374 = vpop.trf.xlu0
    %v1375 = vpop.trf.xlu0
    %v1376 = vpop.trf.xlu0
    %v1377 = vpop.trf.xlu0
    %v1378 = vpop.trf.xlu0
    %v1379 = vpop.trf.xlu0
    %v1380 = vpop.trf.xlu0
    %v1381 = vpop.trf.xlu0
    %v1382 = vpop.trf.xlu0
    %v1383 = vpop.trf.xlu0
    %v1384 = vpop.trf.xlu0
    %v1385 = vpop.trf.xlu0
    %v1386 = vpop.trf.xlu0
    %v1387 = vpop.trf.xlu0
    %1388 = vxpose.xlu0.b32.start [1/16] %v888, 128
    %1389 = vxpose.xlu0.b32.cont [2/16] %v889, 128
    %1390 = vxpose.xlu0.b32.cont [3/16] %v890, 128
    %1391 = vxpose.xlu0.b32.cont [4/16] %v891, 128
    %1392 = vxpose.xlu0.b32.cont [5/16] %v981, 128
    %1393 = vxpose.xlu0.b32.cont [6/16] %v983, 128
    %1394 = vxpose.xlu0.b32.cont [7/16] %v985, 128
    %1395 = vxpose.xlu0.b32.cont [8/16] %v987, 128
    %1396 = vxpose.xlu0.b32.cont [9/16] %v1077, 128
    %1397 = vxpose.xlu0.b32.cont [10/16] %v1079, 128
    %1398 = vxpose.xlu0.b32.cont [11/16] %v1081, 128
    %1399 = vxpose.xlu0.b32.cont [12/16] %v1083, 128
    %1400 = vxpose.xlu0.b32.cont [13/16] %v1173, 128
    %1401 = vxpose.xlu0.b32.cont [14/16] %v1175, 128
    %1402 = vxpose.xlu0.b32.cont [15/16] %v1177, 128
    %1403 = vxpose.xlu0.b32.end [16/16] %v1179, 128
    %v1404 = vpop.trf.xlu0
    %v1405 = vpop.trf.xlu0
    %v1406 = vpop.trf.xlu0
    %v1407 = vpop.trf.xlu0
    %v1408 = vpop.trf.xlu0
    %v1409 = vpop.trf.xlu0
    %v1410 = vpop.trf.xlu0
    %v1411 = vpop.trf.xlu0
    %v1412 = vpop.trf.xlu0
    %v1413 = vpop.trf.xlu0
    %v1414 = vpop.trf.xlu0
    %v1415 = vpop.trf.xlu0
    %v1416 = vpop.trf.xlu0
    %v1417 = vpop.trf.xlu0
    %v1418 = vpop.trf.xlu0
    %v1419 = vpop.trf.xlu0
    %1420 = vxpose.xlu0.b32.start [1/16] %v892, 128
    %1421 = vxpose.xlu0.b32.cont [2/16] %v893, 128
    %1422 = vxpose.xlu0.b32.cont [3/16] %v894, 128
    %1423 = vxpose.xlu0.b32.cont [4/16] %v895, 128
    %1424 = vxpose.xlu0.b32.cont [5/16] %v989, 128
    %1425 = vxpose.xlu0.b32.cont [6/16] %v991, 128
    %1426 = vxpose.xlu0.b32.cont [7/16] %v993, 128
    %1427 = vxpose.xlu0.b32.cont [8/16] %v995, 128
    %1428 = vxpose.xlu0.b32.cont [9/16] %v1085, 128
    %1429 = vxpose.xlu0.b32.cont [10/16] %v1087, 128
    %1430 = vxpose.xlu0.b32.cont [11/16] %v1089, 128
    %1431 = vxpose.xlu0.b32.cont [12/16] %v1091, 128
    %1432 = vxpose.xlu0.b32.cont [13/16] %v1181, 128
    %1433 = vxpose.xlu0.b32.cont [14/16] %v1183, 128
    %1434 = vxpose.xlu0.b32.cont [15/16] %v1185, 128
    %1435 = vxpose.xlu0.b32.end [16/16] %v1187, 128
    %v1436 = vpop.trf.xlu0
    %v1437 = vpop.trf.xlu0
    %v1438 = vpop.trf.xlu0
    %v1439 = vpop.trf.xlu0
    %v1440 = vpop.trf.xlu0
    %v1441 = vpop.trf.xlu0
    %v1442 = vpop.trf.xlu0
    %v1443 = vpop.trf.xlu0
    %v1444 = vpop.trf.xlu0
    %v1445 = vpop.trf.xlu0
    %v1446 = vpop.trf.xlu0
    %v1447 = vpop.trf.xlu0
    %v1448 = vpop.trf.xlu0
    %v1449 = vpop.trf.xlu0
    %v1450 = vpop.trf.xlu0
    %v1451 = vpop.trf.xlu0
    %1452 = vxpose.xlu0.b32.start [1/16] %v896, 128
    %1453 = vxpose.xlu0.b32.cont [2/16] %v897, 128
    %1454 = vxpose.xlu0.b32.cont [3/16] %v898, 128
    %1455 = vxpose.xlu0.b32.cont [4/16] %v899, 128
    %1456 = vxpose.xlu0.b32.cont [5/16] %v997, 128
    %1457 = vxpose.xlu0.b32.cont [6/16] %v999, 128
    %1458 = vxpose.xlu0.b32.cont [7/16] %v1001, 128
    %1459 = vxpose.xlu0.b32.cont [8/16] %v1003, 128
    %1460 = vxpose.xlu0.b32.cont [9/16] %v1093, 128
    %1461 = vxpose.xlu0.b32.cont [10/16] %v1095, 128
    %1462 = vxpose.xlu0.b32.cont [11/16] %v1097, 128
    %1463 = vxpose.xlu0.b32.cont [12/16] %v1099, 128
    %1464 = vxpose.xlu0.b32.cont [13/16] %v1189, 128
    %1465 = vxpose.xlu0.b32.cont [14/16] %v1191, 128
    %1466 = vxpose.xlu0.b32.cont [15/16] %v1193, 128
    %1467 = vxpose.xlu0.b32.end [16/16] %v1195, 128
    %v1468 = vpop.trf.xlu0
    %v1469 = vpop.trf.xlu0
    %v1470 = vpop.trf.xlu0
    %v1471 = vpop.trf.xlu0
    %v1472 = vpop.trf.xlu0
    %v1473 = vpop.trf.xlu0
    %v1474 = vpop.trf.xlu0
    %v1475 = vpop.trf.xlu0
    %v1476 = vpop.trf.xlu0
    %v1477 = vpop.trf.xlu0
    %v1478 = vpop.trf.xlu0
    %v1479 = vpop.trf.xlu0
    %v1480 = vpop.trf.xlu0
    %v1481 = vpop.trf.xlu0
    %v1482 = vpop.trf.xlu0
    %v1483 = vpop.trf.xlu0
    %v1516 = vcombine.high %v1244, %v1244
    %v1518 = vunpack.c.l.s4 1983009808
    %v1519 = vunpack.c.0.s8 %v1518
    %v1520 = vlaneseq
    %v1521 = vshrl.u32 %v1520, 7
    %v1522 = vsub.s32 %v1519, %v1521
    %v1523 = vrot.slane %v1244, %v1522
    %v1525 = vunpack.c.l.s4 1983009808
    %v1526 = vunpack.c.0.s8 %v1525
    %v1527 = vlaneseq
    %v1528 = vshrl.u32 %v1527, 7
    %v1529 = vsub.s32 %v1526, %v1528
    %v1530 = vrot.slane %v1516, %v1529
    %v1531 = vcombine.high %v1523, %v1523
    %v1532 = vcombine.high %v1530, %v1530
    %v1533 = vcombine.high %v1245, %v1245
    %v1535 = vunpack.c.l.s4 1983009808
    %v1536 = vunpack.c.0.s8 %v1535
    %v1537 = vlaneseq
    %v1538 = vshrl.u32 %v1537, 7
    %v1539 = vsub.s32 %v1536, %v1538
    %v1540 = vrot.slane %v1245, %v1539
    %v1542 = vunpack.c.l.s4 1983009808
    %v1543 = vunpack.c.0.s8 %v1542
    %v1544 = vlaneseq
    %v1545 = vshrl.u32 %v1544, 7
    %v1546 = vsub.s32 %v1543, %v1545
    %v1547 = vrot.slane %v1533, %v1546
    %v1548 = vcombine.high %v1540, %v1540
    %v1549 = vcombine.high %v1547, %v1547
    %v1550 = vcombine.high %v1246, %v1246
    %v1552 = vunpack.c.l.s4 1983009808
    %v1553 = vunpack.c.0.s8 %v1552
    %v1554 = vlaneseq
    %v1555 = vshrl.u32 %v1554, 7
    %v1556 = vsub.s32 %v1553, %v1555
    %v1557 = vrot.slane %v1246, %v1556
    %v1559 = vunpack.c.l.s4 1983009808
    %v1560 = vunpack.c.0.s8 %v1559
    %v1561 = vlaneseq
    %v1562 = vshrl.u32 %v1561, 7
    %v1563 = vsub.s32 %v1560, %v1562
    %v1564 = vrot.slane %v1550, %v1563
    %v1565 = vcombine.high %v1557, %v1557
    %v1566 = vcombine.high %v1564, %v1564
    %v1568 = vunpack.c.l.s4 1983009808
    %v1569 = vunpack.c.0.s8 %v1568
    %v1570 = vlaneseq
    %v1571 = vshrl.u32 %v1570, 7
    %v1572 = vsub.s32 %v1569, %v1571
    %v1573 = vrot.slane %v1247, %v1572
    %v1574 = vcombine.high %v1276, %v1276
    %v1576 = vunpack.c.l.s4 1983009808
    %v1577 = vunpack.c.0.s8 %v1576
    %v1578 = vlaneseq
    %v1579 = vshrl.u32 %v1578, 7
    %v1580 = vsub.s32 %v1577, %v1579
    %v1581 = vrot.slane %v1276, %v1580
    %v1583 = vunpack.c.l.s4 1983009808
    %v1584 = vunpack.c.0.s8 %v1583
    %v1585 = vlaneseq
    %v1586 = vshrl.u32 %v1585, 7
    %v1587 = vsub.s32 %v1584, %v1586
    %v1588 = vrot.slane %v1574, %v1587
    %v1589 = vcombine.high %v1581, %v1581
    %v1590 = vcombine.high %v1588, %v1588
    %v1591 = vcombine.high %v1277, %v1277
    %v1593 = vunpack.c.l.s4 1983009808
    %v1594 = vunpack.c.0.s8 %v1593
    %v1595 = vlaneseq
    %v1596 = vshrl.u32 %v1595, 7
    %v1597 = vsub.s32 %v1594, %v1596
    %v1598 = vrot.slane %v1277, %v1597
    %v1600 = vunpack.c.l.s4 1983009808
    %v1601 = vunpack.c.0.s8 %v1600
    %v1602 = vlaneseq
    %v1603 = vshrl.u32 %v1602, 7
    %v1604 = vsub.s32 %v1601, %v1603
    %v1605 = vrot.slane %v1591, %v1604
    %v1606 = vcombine.high %v1598, %v1598
    %v1607 = vcombine.high %v1605, %v1605
    %v1608 = vcombine.high %v1278, %v1278
    %v1610 = vunpack.c.l.s4 1983009808
    %v1611 = vunpack.c.0.s8 %v1610
    %v1612 = vlaneseq
    %v1613 = vshrl.u32 %v1612, 7
    %v1614 = vsub.s32 %v1611, %v1613
    %v1615 = vrot.slane %v1278, %v1614
    %v1617 = vunpack.c.l.s4 1983009808
    %v1618 = vunpack.c.0.s8 %v1617
    %v1619 = vlaneseq
    %v1620 = vshrl.u32 %v1619, 7
    %v1621 = vsub.s32 %v1618, %v1620
    %v1622 = vrot.slane %v1608, %v1621
    %v1623 = vcombine.high %v1615, %v1615
    %v1624 = vcombine.high %v1622, %v1622
    %v1626 = vunpack.c.l.s4 1983009808
    %v1627 = vunpack.c.0.s8 %v1626
    %v1628 = vlaneseq
    %v1629 = vshrl.u32 %v1628, 7
    %v1630 = vsub.s32 %v1627, %v1629
    %v1631 = vrot.slane %v1279, %v1630
    %v1632 = vcombine.high %v1308, %v1308
    %v1634 = vunpack.c.l.s4 1983009808
    %v1635 = vunpack.c.0.s8 %v1634
    %v1636 = vlaneseq
    %v1637 = vshrl.u32 %v1636, 7
    %v1638 = vsub.s32 %v1635, %v1637
    %v1639 = vrot.slane %v1308, %v1638
    %v1641 = vunpack.c.l.s4 1983009808
    %v1642 = vunpack.c.0.s8 %v1641
    %v1643 = vlaneseq
    %v1644 = vshrl.u32 %v1643, 7
    %v1645 = vsub.s32 %v1642, %v1644
    %v1646 = vrot.slane %v1632, %v1645
    %v1647 = vcombine.high %v1639, %v1639
    %v1648 = vcombine.high %v1646, %v1646
    %v1649 = vcombine.high %v1309, %v1309
    %v1651 = vunpack.c.l.s4 1983009808
    %v1652 = vunpack.c.0.s8 %v1651
    %v1653 = vlaneseq
    %v1654 = vshrl.u32 %v1653, 7
    %v1655 = vsub.s32 %v1652, %v1654
    %v1656 = vrot.slane %v1309, %v1655
    %v1658 = vunpack.c.l.s4 1983009808
    %v1659 = vunpack.c.0.s8 %v1658
    %v1660 = vlaneseq
    %v1661 = vshrl.u32 %v1660, 7
    %v1662 = vsub.s32 %v1659, %v1661
    %v1663 = vrot.slane %v1649, %v1662
    %v1664 = vcombine.high %v1656, %v1656
    %v1665 = vcombine.high %v1663, %v1663
    %v1666 = vcombine.high %v1310, %v1310
    %v1668 = vunpack.c.l.s4 1983009808
    %v1669 = vunpack.c.0.s8 %v1668
    %v1670 = vlaneseq
    %v1671 = vshrl.u32 %v1670, 7
    %v1672 = vsub.s32 %v1669, %v1671
    %v1673 = vrot.slane %v1310, %v1672
    %v1675 = vunpack.c.l.s4 1983009808
    %v1676 = vunpack.c.0.s8 %v1675
    %v1677 = vlaneseq
    %v1678 = vshrl.u32 %v1677, 7
    %v1679 = vsub.s32 %v1676, %v1678
    %v1680 = vrot.slane %v1666, %v1679
    %v1681 = vcombine.high %v1673, %v1673
    %v1682 = vcombine.high %v1680, %v1680
    %v1684 = vunpack.c.l.s4 1983009808
    %v1685 = vunpack.c.0.s8 %v1684
    %v1686 = vlaneseq
    %v1687 = vshrl.u32 %v1686, 7
    %v1688 = vsub.s32 %v1685, %v1687
    %v1689 = vrot.slane %v1311, %v1688
    %v1690 = vcombine.high %v1340, %v1340
    %v1692 = vunpack.c.l.s4 1983009808
    %v1693 = vunpack.c.0.s8 %v1692
    %v1694 = vlaneseq
    %v1695 = vshrl.u32 %v1694, 7
    %v1696 = vsub.s32 %v1693, %v1695
    %v1697 = vrot.slane %v1340, %v1696
    %v1699 = vunpack.c.l.s4 1983009808
    %v1700 = vunpack.c.0.s8 %v1699
    %v1701 = vlaneseq
    %v1702 = vshrl.u32 %v1701, 7
    %v1703 = vsub.s32 %v1700, %v1702
    %v1704 = vrot.slane %v1690, %v1703
    %v1705 = vcombine.high %v1697, %v1697
    %v1706 = vcombine.high %v1704, %v1704
    %v1707 = vcombine.high %v1341, %v1341
    %v1709 = vunpack.c.l.s4 1983009808
    %v1710 = vunpack.c.0.s8 %v1709
    %v1711 = vlaneseq
    %v1712 = vshrl.u32 %v1711, 7
    %v1713 = vsub.s32 %v1710, %v1712
    %v1714 = vrot.slane %v1341, %v1713
    %v1716 = vunpack.c.l.s4 1983009808
    %v1717 = vunpack.c.0.s8 %v1716
    %v1718 = vlaneseq
    %v1719 = vshrl.u32 %v1718, 7
    %v1720 = vsub.s32 %v1717, %v1719
    %v1721 = vrot.slane %v1707, %v1720
    %v1722 = vcombine.high %v1714, %v1714
    %v1723 = vcombine.high %v1721, %v1721
    %v1724 = vcombine.high %v1342, %v1342
    %v1726 = vunpack.c.l.s4 1983009808
    %v1727 = vunpack.c.0.s8 %v1726
    %v1728 = vlaneseq
    %v1729 = vshrl.u32 %v1728, 7
    %v1730 = vsub.s32 %v1727, %v1729
    %v1731 = vrot.slane %v1342, %v1730
    %v1733 = vunpack.c.l.s4 1983009808
    %v1734 = vunpack.c.0.s8 %v1733
    %v1735 = vlaneseq
    %v1736 = vshrl.u32 %v1735, 7
    %v1737 = vsub.s32 %v1734, %v1736
    %v1738 = vrot.slane %v1724, %v1737
    %v1739 = vcombine.high %v1731, %v1731
    %v1740 = vcombine.high %v1738, %v1738
    %v1742 = vunpack.c.l.s4 1983009808
    %v1743 = vunpack.c.0.s8 %v1742
    %v1744 = vlaneseq
    %v1745 = vshrl.u32 %v1744, 7
    %v1746 = vsub.s32 %v1743, %v1745
    %v1747 = vrot.slane %v1343, %v1746
    %v1748 = vcombine.high %v1372, %v1372
    %v1750 = vunpack.c.l.s4 1983009808
    %v1751 = vunpack.c.0.s8 %v1750
    %v1752 = vlaneseq
    %v1753 = vshrl.u32 %v1752, 7
    %v1754 = vsub.s32 %v1751, %v1753
    %v1755 = vrot.slane %v1372, %v1754
    %v1757 = vunpack.c.l.s4 1983009808
    %v1758 = vunpack.c.0.s8 %v1757
    %v1759 = vlaneseq
    %v1760 = vshrl.u32 %v1759, 7
    %v1761 = vsub.s32 %v1758, %v1760
    %v1762 = vrot.slane %v1748, %v1761
    %v1763 = vcombine.high %v1755, %v1755
    %v1764 = vcombine.high %v1762, %v1762
    %v1765 = vcombine.high %v1373, %v1373
    %v1767 = vunpack.c.l.s4 1983009808
    %v1768 = vunpack.c.0.s8 %v1767
    %v1769 = vlaneseq
    %v1770 = vshrl.u32 %v1769, 7
    %v1771 = vsub.s32 %v1768, %v1770
    %v1772 = vrot.slane %v1373, %v1771
    %v1774 = vunpack.c.l.s4 1983009808
    %v1775 = vunpack.c.0.s8 %v1774
    %v1776 = vlaneseq
    %v1777 = vshrl.u32 %v1776, 7
    %v1778 = vsub.s32 %v1775, %v1777
    %v1779 = vrot.slane %v1765, %v1778
    %v1780 = vcombine.high %v1772, %v1772
    %v1781 = vcombine.high %v1779, %v1779
    %v1782 = vcombine.high %v1374, %v1374
    %v1784 = vunpack.c.l.s4 1983009808
    %v1785 = vunpack.c.0.s8 %v1784
    %v1786 = vlaneseq
    %v1787 = vshrl.u32 %v1786, 7
    %v1788 = vsub.s32 %v1785, %v1787
    %v1789 = vrot.slane %v1374, %v1788
    %v1791 = vunpack.c.l.s4 1983009808
    %v1792 = vunpack.c.0.s8 %v1791
    %v1793 = vlaneseq
    %v1794 = vshrl.u32 %v1793, 7
    %v1795 = vsub.s32 %v1792, %v1794
    %v1796 = vrot.slane %v1782, %v1795
    %v1797 = vcombine.high %v1789, %v1789
    %v1798 = vcombine.high %v1796, %v1796
    %v1800 = vunpack.c.l.s4 1983009808
    %v1801 = vunpack.c.0.s8 %v1800
    %v1802 = vlaneseq
    %v1803 = vshrl.u32 %v1802, 7
    %v1804 = vsub.s32 %v1801, %v1803
    %v1805 = vrot.slane %v1375, %v1804
    %v1806 = vcombine.high %v1404, %v1404
    %v1808 = vunpack.c.l.s4 1983009808
    %v1809 = vunpack.c.0.s8 %v1808
    %v1810 = vlaneseq
    %v1811 = vshrl.u32 %v1810, 7
    %v1812 = vsub.s32 %v1809, %v1811
    %v1813 = vrot.slane %v1404, %v1812
    %v1815 = vunpack.c.l.s4 1983009808
    %v1816 = vunpack.c.0.s8 %v1815
    %v1817 = vlaneseq
    %v1818 = vshrl.u32 %v1817, 7
    %v1819 = vsub.s32 %v1816, %v1818
    %v1820 = vrot.slane %v1806, %v1819
    %v1821 = vcombine.high %v1813, %v1813
    %v1822 = vcombine.high %v1820, %v1820
    %v1823 = vcombine.high %v1405, %v1405
    %v1825 = vunpack.c.l.s4 1983009808
    %v1826 = vunpack.c.0.s8 %v1825
    %v1827 = vlaneseq
    %v1828 = vshrl.u32 %v1827, 7
    %v1829 = vsub.s32 %v1826, %v1828
    %v1830 = vrot.slane %v1405, %v1829
    %v1832 = vunpack.c.l.s4 1983009808
    %v1833 = vunpack.c.0.s8 %v1832
    %v1834 = vlaneseq
    %v1835 = vshrl.u32 %v1834, 7
    %v1836 = vsub.s32 %v1833, %v1835
    %v1837 = vrot.slane %v1823, %v1836
    %v1838 = vcombine.high %v1830, %v1830
    %v1839 = vcombine.high %v1837, %v1837
    %v1840 = vcombine.high %v1406, %v1406
    %v1842 = vunpack.c.l.s4 1983009808
    %v1843 = vunpack.c.0.s8 %v1842
    %v1844 = vlaneseq
    %v1845 = vshrl.u32 %v1844, 7
    %v1846 = vsub.s32 %v1843, %v1845
    %v1847 = vrot.slane %v1406, %v1846
    %v1849 = vunpack.c.l.s4 1983009808
    %v1850 = vunpack.c.0.s8 %v1849
    %v1851 = vlaneseq
    %v1852 = vshrl.u32 %v1851, 7
    %v1853 = vsub.s32 %v1850, %v1852
    %v1854 = vrot.slane %v1840, %v1853
    %v1855 = vcombine.high %v1847, %v1847
    %v1856 = vcombine.high %v1854, %v1854
    %v1858 = vunpack.c.l.s4 1983009808
    %v1859 = vunpack.c.0.s8 %v1858
    %v1860 = vlaneseq
    %v1861 = vshrl.u32 %v1860, 7
    %v1862 = vsub.s32 %v1859, %v1861
    %v1863 = vrot.slane %v1407, %v1862
    %v1864 = vcombine.high %v1436, %v1436
    %v1866 = vunpack.c.l.s4 1983009808
    %v1867 = vunpack.c.0.s8 %v1866
    %v1868 = vlaneseq
    %v1869 = vshrl.u32 %v1868, 7
    %v1870 = vsub.s32 %v1867, %v1869
    %v1871 = vrot.slane %v1436, %v1870
    %v1873 = vunpack.c.l.s4 1983009808
    %v1874 = vunpack.c.0.s8 %v1873
    %v1875 = vlaneseq
    %v1876 = vshrl.u32 %v1875, 7
    %v1877 = vsub.s32 %v1874, %v1876
    %v1878 = vrot.slane %v1864, %v1877
    %v1879 = vcombine.high %v1871, %v1871
    %v1880 = vcombine.high %v1878, %v1878
    %v1881 = vcombine.high %v1437, %v1437
    %v1883 = vunpack.c.l.s4 1983009808
    %v1884 = vunpack.c.0.s8 %v1883
    %v1885 = vlaneseq
    %v1886 = vshrl.u32 %v1885, 7
    %v1887 = vsub.s32 %v1884, %v1886
    %v1888 = vrot.slane %v1437, %v1887
    %v1890 = vunpack.c.l.s4 1983009808
    %v1891 = vunpack.c.0.s8 %v1890
    %v1892 = vlaneseq
    %v1893 = vshrl.u32 %v1892, 7
    %v1894 = vsub.s32 %v1891, %v1893
    %v1895 = vrot.slane %v1881, %v1894
    %v1896 = vcombine.high %v1888, %v1888
    %v1897 = vcombine.high %v1895, %v1895
    %v1898 = vcombine.high %v1438, %v1438
    %v1900 = vunpack.c.l.s4 1983009808
    %v1901 = vunpack.c.0.s8 %v1900
    %v1902 = vlaneseq
    %v1903 = vshrl.u32 %v1902, 7
    %v1904 = vsub.s32 %v1901, %v1903
    %v1905 = vrot.slane %v1438, %v1904
    %v1907 = vunpack.c.l.s4 1983009808
    %v1908 = vunpack.c.0.s8 %v1907
    %v1909 = vlaneseq
    %v1910 = vshrl.u32 %v1909, 7
    %v1911 = vsub.s32 %v1908, %v1910
    %v1912 = vrot.slane %v1898, %v1911
    %v1913 = vcombine.high %v1905, %v1905
    %v1914 = vcombine.high %v1912, %v1912
    %v1916 = vunpack.c.l.s4 1983009808
    %v1917 = vunpack.c.0.s8 %v1916
    %v1918 = vlaneseq
    %v1919 = vshrl.u32 %v1918, 7
    %v1920 = vsub.s32 %v1917, %v1919
    %v1921 = vrot.slane %v1439, %v1920
    %v1922 = vcombine.high %v1468, %v1468
    %v1924 = vunpack.c.l.s4 1983009808
    %v1925 = vunpack.c.0.s8 %v1924
    %v1926 = vlaneseq
    %v1927 = vshrl.u32 %v1926, 7
    %v1928 = vsub.s32 %v1925, %v1927
    %v1929 = vrot.slane %v1468, %v1928
    %v1931 = vunpack.c.l.s4 1983009808
    %v1932 = vunpack.c.0.s8 %v1931
    %v1933 = vlaneseq
    %v1934 = vshrl.u32 %v1933, 7
    %v1935 = vsub.s32 %v1932, %v1934
    %v1936 = vrot.slane %v1922, %v1935
    %v1937 = vcombine.high %v1929, %v1929
    %v1938 = vcombine.high %v1936, %v1936
    %v1939 = vcombine.high %v1469, %v1469
    %v1941 = vunpack.c.l.s4 1983009808
    %v1942 = vunpack.c.0.s8 %v1941
    %v1943 = vlaneseq
    %v1944 = vshrl.u32 %v1943, 7
    %v1945 = vsub.s32 %v1942, %v1944
    %v1946 = vrot.slane %v1469, %v1945
    %v1948 = vunpack.c.l.s4 1983009808
    %v1949 = vunpack.c.0.s8 %v1948
    %v1950 = vlaneseq
    %v1951 = vshrl.u32 %v1950, 7
    %v1952 = vsub.s32 %v1949, %v1951
    %v1953 = vrot.slane %v1939, %v1952
    %v1954 = vcombine.high %v1946, %v1946
    %v1955 = vcombine.high %v1953, %v1953
    %v1956 = vcombine.high %v1470, %v1470
    %v1958 = vunpack.c.l.s4 1983009808
    %v1959 = vunpack.c.0.s8 %v1958
    %v1960 = vlaneseq
    %v1961 = vshrl.u32 %v1960, 7
    %v1962 = vsub.s32 %v1959, %v1961
    %v1963 = vrot.slane %v1470, %v1962
    %v1965 = vunpack.c.l.s4 1983009808
    %v1966 = vunpack.c.0.s8 %v1965
    %v1967 = vlaneseq
    %v1968 = vshrl.u32 %v1967, 7
    %v1969 = vsub.s32 %v1966, %v1968
    %v1970 = vrot.slane %v1956, %v1969
    %v1971 = vcombine.high %v1963, %v1963
    %v1972 = vcombine.high %v1970, %v1970
    %v1974 = vunpack.c.l.s4 1983009808
    %v1975 = vunpack.c.0.s8 %v1974
    %v1976 = vlaneseq
    %v1977 = vshrl.u32 %v1976, 7
    %v1978 = vsub.s32 %v1975, %v1977
    %v1979 = vrot.slane %v1471, %v1978
    %v1980 = vcombine.low %v1523, %v1531
    %v1981 = vcombine.low %v1530, %v1532
    %v1983 = vunpack.c.l.s4 1983009808
    %v1984 = vunpack.c.0.s8 %v1983
    %v1985 = vlaneseq
    %v1986 = vshrl.u32 %v1985, 7
    %v1987 = vsub.s32 %v1984, %v1986
    %v1988 = vrot.slane %v1980, %v1987
    %v1990 = vunpack.c.l.s4 1983009808
    %v1991 = vunpack.c.0.s8 %v1990
    %v1992 = vlaneseq
    %v1993 = vshrl.u32 %v1992, 7
    %v1994 = vsub.s32 %v1991, %v1993
    %v1995 = vrot.slane %v1981, %v1994
    %v1996 = vcombine.low %v1988, %v1995
    %v1997 = vcombine.low %v1540, %v1548
    %v1998 = vcombine.low %v1547, %v1549
    %v2000 = vunpack.c.l.s4 1983009808
    %v2001 = vunpack.c.0.s8 %v2000
    %v2002 = vlaneseq
    %v2003 = vshrl.u32 %v2002, 7
    %v2004 = vsub.s32 %v2001, %v2003
    %v2005 = vrot.slane %v1997, %v2004
    %v2007 = vunpack.c.l.s4 1983009808
    %v2008 = vunpack.c.0.s8 %v2007
    %v2009 = vlaneseq
    %v2010 = vshrl.u32 %v2009, 7
    %v2011 = vsub.s32 %v2008, %v2010
    %v2012 = vrot.slane %v1998, %v2011
    %v2013 = vcombine.low %v2005, %v2012
    %v2014 = vcombine.low %v1557, %v1565
    %v2015 = vcombine.low %v1564, %v1566
    %v2017 = vunpack.c.l.s4 1983009808
    %v2018 = vunpack.c.0.s8 %v2017
    %v2019 = vlaneseq
    %v2020 = vshrl.u32 %v2019, 7
    %v2021 = vsub.s32 %v2018, %v2020
    %v2022 = vrot.slane %v2014, %v2021
    %v2024 = vunpack.c.l.s4 1983009808
    %v2025 = vunpack.c.0.s8 %v2024
    %v2026 = vlaneseq
    %v2027 = vshrl.u32 %v2026, 7
    %v2028 = vsub.s32 %v2025, %v2027
    %v2029 = vrot.slane %v2015, %v2028
    %v2030 = vcombine.low %v2022, %v2029
    %v2031 = vcombine.low %v1573, %v1581
    %v2032 = vcombine.low %v1589, %v1588
    %v2034 = vunpack.c.l.s4 1983009808
    %v2035 = vunpack.c.0.s8 %v2034
    %v2036 = vlaneseq
    %v2037 = vshrl.u32 %v2036, 7
    %v2038 = vsub.s32 %v2035, %v2037
    %v2039 = vrot.slane %v2031, %v2038
    %v2041 = vunpack.c.l.s4 1983009808
    %v2042 = vunpack.c.0.s8 %v2041
    %v2043 = vlaneseq
    %v2044 = vshrl.u32 %v2043, 7
    %v2045 = vsub.s32 %v2042, %v2044
    %v2046 = vrot.slane %v2032, %v2045
    %v2047 = vcombine.low %v2039, %v2046
    %v2048 = vcombine.low %v1590, %v1598
    %v2049 = vcombine.low %v1606, %v1605
    %v2051 = vunpack.c.l.s4 1983009808
    %v2052 = vunpack.c.0.s8 %v2051
    %v2053 = vlaneseq
    %v2054 = vshrl.u32 %v2053, 7
    %v2055 = vsub.s32 %v2052, %v2054
    %v2056 = vrot.slane %v2048, %v2055
    %v2058 = vunpack.c.l.s4 1983009808
    %v2059 = vunpack.c.0.s8 %v2058
    %v2060 = vlaneseq
    %v2061 = vshrl.u32 %v2060, 7
    %v2062 = vsub.s32 %v2059, %v2061
    %v2063 = vrot.slane %v2049, %v2062
    %v2064 = vcombine.low %v2056, %v2063
    %v2065 = vcombine.low %v1607, %v1615
    %v2066 = vcombine.low %v1623, %v1622
    %v2068 = vunpack.c.l.s4 1983009808
    %v2069 = vunpack.c.0.s8 %v2068
    %v2070 = vlaneseq
    %v2071 = vshrl.u32 %v2070, 7
    %v2072 = vsub.s32 %v2069, %v2071
    %v2073 = vrot.slane %v2065, %v2072
    %v2075 = vunpack.c.l.s4 1983009808
    %v2076 = vunpack.c.0.s8 %v2075
    %v2077 = vlaneseq
    %v2078 = vshrl.u32 %v2077, 7
    %v2079 = vsub.s32 %v2076, %v2078
    %v2080 = vrot.slane %v2066, %v2079
    %v2081 = vcombine.low %v2073, %v2080
    %v2082 = vcombine.low %v1624, %v1631
    %v2083 = vcombine.low %v1639, %v1647
    %v2085 = vunpack.c.l.s4 1983009808
    %v2086 = vunpack.c.0.s8 %v2085
    %v2087 = vlaneseq
    %v2088 = vshrl.u32 %v2087, 7
    %v2089 = vsub.s32 %v2086, %v2088
    %v2090 = vrot.slane %v2082, %v2089
    %v2092 = vunpack.c.l.s4 1983009808
    %v2093 = vunpack.c.0.s8 %v2092
    %v2094 = vlaneseq
    %v2095 = vshrl.u32 %v2094, 7
    %v2096 = vsub.s32 %v2093, %v2095
    %v2097 = vrot.slane %v2083, %v2096
    %v2098 = vcombine.low %v2090, %v2097
    %v2099 = vcombine.low %v1646, %v1648
    %v2100 = vcombine.low %v1656, %v1664
    %v2102 = vunpack.c.l.s4 1983009808
    %v2103 = vunpack.c.0.s8 %v2102
    %v2104 = vlaneseq
    %v2105 = vshrl.u32 %v2104, 7
    %v2106 = vsub.s32 %v2103, %v2105
    %v2107 = vrot.slane %v2099, %v2106
    %v2109 = vunpack.c.l.s4 1983009808
    %v2110 = vunpack.c.0.s8 %v2109
    %v2111 = vlaneseq
    %v2112 = vshrl.u32 %v2111, 7
    %v2113 = vsub.s32 %v2110, %v2112
    %v2114 = vrot.slane %v2100, %v2113
    %v2115 = vcombine.low %v2107, %v2114
    %v2116 = vcombine.low %v1663, %v1665
    %v2117 = vcombine.low %v1673, %v1681
    %v2119 = vunpack.c.l.s4 1983009808
    %v2120 = vunpack.c.0.s8 %v2119
    %v2121 = vlaneseq
    %v2122 = vshrl.u32 %v2121, 7
    %v2123 = vsub.s32 %v2120, %v2122
    %v2124 = vrot.slane %v2116, %v2123
    %v2126 = vunpack.c.l.s4 1983009808
    %v2127 = vunpack.c.0.s8 %v2126
    %v2128 = vlaneseq
    %v2129 = vshrl.u32 %v2128, 7
    %v2130 = vsub.s32 %v2127, %v2129
    %v2131 = vrot.slane %v2117, %v2130
    %v2132 = vcombine.low %v2124, %v2131
    %v2133 = vcombine.low %v1680, %v1682
    %v2134 = vcombine.low %v1689, %v1697
    %v2136 = vunpack.c.l.s4 1983009808
    %v2137 = vunpack.c.0.s8 %v2136
    %v2138 = vlaneseq
    %v2139 = vshrl.u32 %v2138, 7
    %v2140 = vsub.s32 %v2137, %v2139
    %v2141 = vrot.slane %v2133, %v2140
    %v2143 = vunpack.c.l.s4 1983009808
    %v2144 = vunpack.c.0.s8 %v2143
    %v2145 = vlaneseq
    %v2146 = vshrl.u32 %v2145, 7
    %v2147 = vsub.s32 %v2144, %v2146
    %v2148 = vrot.slane %v2134, %v2147
    %v2149 = vcombine.low %v2141, %v2148
    %v2150 = vcombine.low %v1705, %v1704
    %v2151 = vcombine.low %v1706, %v1714
    %v2153 = vunpack.c.l.s4 1983009808
    %v2154 = vunpack.c.0.s8 %v2153
    %v2155 = vlaneseq
    %v2156 = vshrl.u32 %v2155, 7
    %v2157 = vsub.s32 %v2154, %v2156
    %v2158 = vrot.slane %v2150, %v2157
    %v2160 = vunpack.c.l.s4 1983009808
    %v2161 = vunpack.c.0.s8 %v2160
    %v2162 = vlaneseq
    %v2163 = vshrl.u32 %v2162, 7
    %v2164 = vsub.s32 %v2161, %v2163
    %v2165 = vrot.slane %v2151, %v2164
    %v2166 = vcombine.low %v2158, %v2165
    %v2167 = vcombine.low %v1722, %v1721
    %v2168 = vcombine.low %v1723, %v1731
    %v2170 = vunpack.c.l.s4 1983009808
    %v2171 = vunpack.c.0.s8 %v2170
    %v2172 = vlaneseq
    %v2173 = vshrl.u32 %v2172, 7
    %v2174 = vsub.s32 %v2171, %v2173
    %v2175 = vrot.slane %v2167, %v2174
    %v2177 = vunpack.c.l.s4 1983009808
    %v2178 = vunpack.c.0.s8 %v2177
    %v2179 = vlaneseq
    %v2180 = vshrl.u32 %v2179, 7
    %v2181 = vsub.s32 %v2178, %v2180
    %v2182 = vrot.slane %v2168, %v2181
    %v2183 = vcombine.low %v2175, %v2182
    %v2184 = vcombine.low %v1739, %v1738
    %v2185 = vcombine.low %v1740, %v1747
    %v2187 = vunpack.c.l.s4 1983009808
    %v2188 = vunpack.c.0.s8 %v2187
    %v2189 = vlaneseq
    %v2190 = vshrl.u32 %v2189, 7
    %v2191 = vsub.s32 %v2188, %v2190
    %v2192 = vrot.slane %v2184, %v2191
    %v2194 = vunpack.c.l.s4 1983009808
    %v2195 = vunpack.c.0.s8 %v2194
    %v2196 = vlaneseq
    %v2197 = vshrl.u32 %v2196, 7
    %v2198 = vsub.s32 %v2195, %v2197
    %v2199 = vrot.slane %v2185, %v2198
    %v2200 = vcombine.low %v2192, %v2199
    %v2201 = vcombine.low %v1755, %v1763
    %v2202 = vcombine.low %v1762, %v1764
    %v2204 = vunpack.c.l.s4 1983009808
    %v2205 = vunpack.c.0.s8 %v2204
    %v2206 = vlaneseq
    %v2207 = vshrl.u32 %v2206, 7
    %v2208 = vsub.s32 %v2205, %v2207
    %v2209 = vrot.slane %v2201, %v2208
    %v2211 = vunpack.c.l.s4 1983009808
    %v2212 = vunpack.c.0.s8 %v2211
    %v2213 = vlaneseq
    %v2214 = vshrl.u32 %v2213, 7
    %v2215 = vsub.s32 %v2212, %v2214
    %v2216 = vrot.slane %v2202, %v2215
    %v2217 = vcombine.low %v2209, %v2216
    %v2218 = vcombine.low %v1772, %v1780
    %v2219 = vcombine.low %v1779, %v1781
    %v2221 = vunpack.c.l.s4 1983009808
    %v2222 = vunpack.c.0.s8 %v2221
    %v2223 = vlaneseq
    %v2224 = vshrl.u32 %v2223, 7
    %v2225 = vsub.s32 %v2222, %v2224
    %v2226 = vrot.slane %v2218, %v2225
    %v2228 = vunpack.c.l.s4 1983009808
    %v2229 = vunpack.c.0.s8 %v2228
    %v2230 = vlaneseq
    %v2231 = vshrl.u32 %v2230, 7
    %v2232 = vsub.s32 %v2229, %v2231
    %v2233 = vrot.slane %v2219, %v2232
    %v2234 = vcombine.low %v2226, %v2233
    %v2235 = vcombine.low %v1789, %v1797
    %v2236 = vcombine.low %v1796, %v1798
    %v2238 = vunpack.c.l.s4 1983009808
    %v2239 = vunpack.c.0.s8 %v2238
    %v2240 = vlaneseq
    %v2241 = vshrl.u32 %v2240, 7
    %v2242 = vsub.s32 %v2239, %v2241
    %v2243 = vrot.slane %v2235, %v2242
    %v2245 = vunpack.c.l.s4 1983009808
    %v2246 = vunpack.c.0.s8 %v2245
    %v2247 = vlaneseq
    %v2248 = vshrl.u32 %v2247, 7
    %v2249 = vsub.s32 %v2246, %v2248
    %v2250 = vrot.slane %v2236, %v2249
    %v2251 = vcombine.low %v2243, %v2250
    %v2252 = vcombine.low %v1805, %v1813
    %v2253 = vcombine.low %v1821, %v1820
    %v2255 = vunpack.c.l.s4 1983009808
    %v2256 = vunpack.c.0.s8 %v2255
    %v2257 = vlaneseq
    %v2258 = vshrl.u32 %v2257, 7
    %v2259 = vsub.s32 %v2256, %v2258
    %v2260 = vrot.slane %v2252, %v2259
    %v2262 = vunpack.c.l.s4 1983009808
    %v2263 = vunpack.c.0.s8 %v2262
    %v2264 = vlaneseq
    %v2265 = vshrl.u32 %v2264, 7
    %v2266 = vsub.s32 %v2263, %v2265
    %v2267 = vrot.slane %v2253, %v2266
    %v2268 = vcombine.low %v2260, %v2267
    %v2269 = vcombine.low %v1822, %v1830
    %v2270 = vcombine.low %v1838, %v1837
    %v2272 = vunpack.c.l.s4 1983009808
    %v2273 = vunpack.c.0.s8 %v2272
    %v2274 = vlaneseq
    %v2275 = vshrl.u32 %v2274, 7
    %v2276 = vsub.s32 %v2273, %v2275
    %v2277 = vrot.slane %v2269, %v2276
    %v2279 = vunpack.c.l.s4 1983009808
    %v2280 = vunpack.c.0.s8 %v2279
    %v2281 = vlaneseq
    %v2282 = vshrl.u32 %v2281, 7
    %v2283 = vsub.s32 %v2280, %v2282
    %v2284 = vrot.slane %v2270, %v2283
    %v2285 = vcombine.low %v2277, %v2284
    %v2286 = vcombine.low %v1839, %v1847
    %v2287 = vcombine.low %v1855, %v1854
    %v2289 = vunpack.c.l.s4 1983009808
    %v2290 = vunpack.c.0.s8 %v2289
    %v2291 = vlaneseq
    %v2292 = vshrl.u32 %v2291, 7
    %v2293 = vsub.s32 %v2290, %v2292
    %v2294 = vrot.slane %v2286, %v2293
    %v2296 = vunpack.c.l.s4 1983009808
    %v2297 = vunpack.c.0.s8 %v2296
    %v2298 = vlaneseq
    %v2299 = vshrl.u32 %v2298, 7
    %v2300 = vsub.s32 %v2297, %v2299
    %v2301 = vrot.slane %v2287, %v2300
    %v2302 = vcombine.low %v2294, %v2301
    %v2303 = vcombine.low %v1856, %v1863
    %v2304 = vcombine.low %v1871, %v1879
    %v2306 = vunpack.c.l.s4 1983009808
    %v2307 = vunpack.c.0.s8 %v2306
    %v2308 = vlaneseq
    %v2309 = vshrl.u32 %v2308, 7
    %v2310 = vsub.s32 %v2307, %v2309
    %v2311 = vrot.slane %v2303, %v2310
    %v2313 = vunpack.c.l.s4 1983009808
    %v2314 = vunpack.c.0.s8 %v2313
    %v2315 = vlaneseq
    %v2316 = vshrl.u32 %v2315, 7
    %v2317 = vsub.s32 %v2314, %v2316
    %v2318 = vrot.slane %v2304, %v2317
    %v2319 = vcombine.low %v2311, %v2318
    %v2320 = vcombine.low %v1878, %v1880
    %v2321 = vcombine.low %v1888, %v1896
    %v2323 = vunpack.c.l.s4 1983009808
    %v2324 = vunpack.c.0.s8 %v2323
    %v2325 = vlaneseq
    %v2326 = vshrl.u32 %v2325, 7
    %v2327 = vsub.s32 %v2324, %v2326
    %v2328 = vrot.slane %v2320, %v2327
    %v2330 = vunpack.c.l.s4 1983009808
    %v2331 = vunpack.c.0.s8 %v2330
    %v2332 = vlaneseq
    %v2333 = vshrl.u32 %v2332, 7
    %v2334 = vsub.s32 %v2331, %v2333
    %v2335 = vrot.slane %v2321, %v2334
    %v2336 = vcombine.low %v2328, %v2335
    %v2337 = vcombine.low %v1895, %v1897
    %v2338 = vcombine.low %v1905, %v1913
    %v2340 = vunpack.c.l.s4 1983009808
    %v2341 = vunpack.c.0.s8 %v2340
    %v2342 = vlaneseq
    %v2343 = vshrl.u32 %v2342, 7
    %v2344 = vsub.s32 %v2341, %v2343
    %v2345 = vrot.slane %v2337, %v2344
    %v2347 = vunpack.c.l.s4 1983009808
    %v2348 = vunpack.c.0.s8 %v2347
    %v2349 = vlaneseq
    %v2350 = vshrl.u32 %v2349, 7
    %v2351 = vsub.s32 %v2348, %v2350
    %v2352 = vrot.slane %v2338, %v2351
    %v2353 = vcombine.low %v2345, %v2352
    %v2354 = vcombine.low %v1912, %v1914
    %v2355 = vcombine.low %v1921, %v1929
    %v2357 = vunpack.c.l.s4 1983009808
    %v2358 = vunpack.c.0.s8 %v2357
    %v2359 = vlaneseq
    %v2360 = vshrl.u32 %v2359, 7
    %v2361 = vsub.s32 %v2358, %v2360
    %v2362 = vrot.slane %v2354, %v2361
    %v2364 = vunpack.c.l.s4 1983009808
    %v2365 = vunpack.c.0.s8 %v2364
    %v2366 = vlaneseq
    %v2367 = vshrl.u32 %v2366, 7
    %v2368 = vsub.s32 %v2365, %v2367
    %v2369 = vrot.slane %v2355, %v2368
    %v2370 = vcombine.low %v2362, %v2369
    %v2371 = vcombine.low %v1937, %v1936
    %v2372 = vcombine.low %v1938, %v1946
    %v2374 = vunpack.c.l.s4 1983009808
    %v2375 = vunpack.c.0.s8 %v2374
    %v2376 = vlaneseq
    %v2377 = vshrl.u32 %v2376, 7
    %v2378 = vsub.s32 %v2375, %v2377
    %v2379 = vrot.slane %v2371, %v2378
    %v2381 = vunpack.c.l.s4 1983009808
    %v2382 = vunpack.c.0.s8 %v2381
    %v2383 = vlaneseq
    %v2384 = vshrl.u32 %v2383, 7
    %v2385 = vsub.s32 %v2382, %v2384
    %v2386 = vrot.slane %v2372, %v2385
    %v2387 = vcombine.low %v2379, %v2386
    %v2388 = vcombine.low %v1954, %v1953
    %v2389 = vcombine.low %v1955, %v1963
    %v2391 = vunpack.c.l.s4 1983009808
    %v2392 = vunpack.c.0.s8 %v2391
    %v2393 = vlaneseq
    %v2394 = vshrl.u32 %v2393, 7
    %v2395 = vsub.s32 %v2392, %v2394
    %v2396 = vrot.slane %v2388, %v2395
    %v2398 = vunpack.c.l.s4 1983009808
    %v2399 = vunpack.c.0.s8 %v2398
    %v2400 = vlaneseq
    %v2401 = vshrl.u32 %v2400, 7
    %v2402 = vsub.s32 %v2399, %v2401
    %v2403 = vrot.slane %v2389, %v2402
    %v2404 = vcombine.low %v2396, %v2403
    %v2405 = vcombine.low %v1971, %v1970
    %v2406 = vcombine.low %v1972, %v1979
    %v2408 = vunpack.c.l.s4 1983009808
    %v2409 = vunpack.c.0.s8 %v2408
    %v2410 = vlaneseq
    %v2411 = vshrl.u32 %v2410, 7
    %v2412 = vsub.s32 %v2409, %v2411
    %v2413 = vrot.slane %v2405, %v2412
    %v2415 = vunpack.c.l.s4 1983009808
    %v2416 = vunpack.c.0.s8 %v2415
    %v2417 = vlaneseq
    %v2418 = vshrl.u32 %v2417, 7
    %v2419 = vsub.s32 %v2416, %v2418
    %v2420 = vrot.slane %v2406, %v2419
    %v2421 = vcombine.low %v2413, %v2420
    %2448 = vmatprep.subr.mxu0 0.0
    %2449 = vmatpush1.xpose.msra.mxu0 %v900
    %2450 = vmatprep.subr.mxu0 0.0
    %2451 = vmatpush1.xpose.msra.mxu0 %v901
    %2452 = vmatprep.subr.mxu0 0.0
    %2453 = vmatpush1.xpose.msra.mxu0 %v902
    %2454 = vmatprep.subr.mxu0 0.0
    %2455 = vmatpush1.xpose.msra.mxu0 %v903
    %2456 = vmatprep.subr.mxu0 0.0
    %2457 = vmatpush1.xpose.msra.mxu0 %v904
    %2458 = vmatprep.subr.mxu0 0.0
    %2459 = vmatpush1.xpose.msra.mxu0 %v905
    %2460 = vmatprep.subr.mxu0 0.0
    %2461 = vmatpush1.xpose.msra.mxu0 %v906
    %2462 = vmatprep.subr.mxu0 0.0
    %2463 = vmatpush1.xpose.msra.mxu0 %v907
    %2464 = vmatprep.subr.mxu0 0.0
    %2465 = vmatpush1.xpose.msra.mxu0 0.0
    %2466 = vmatprep.subr.mxu0 0.0
    %2467 = vmatpush1.xpose.msra.mxu0 0.0
    %2468 = vmatprep.subr.mxu0 0.0
    %2469 = vmatpush1.xpose.msra.mxu0 0.0
    %2470 = vmatprep.subr.mxu0 0.0
    %2471 = vmatpush1.xpose.msra.mxu0 0.0
    %2472 = vmatprep.subr.mxu0 0.0
    %2473 = vmatpush1.xpose.msra.mxu0 0.0
    %2474 = vmatprep.subr.mxu0 0.0
    %2475 = vmatpush1.xpose.msra.mxu0 0.0
    %2476 = vmatprep.subr.mxu0 0.0
    %2477 = vmatpush1.xpose.msra.mxu0 0.0
    %2478 = vmatprep.subr.mxu0 0.0
    %2479 = vmatpush1.xpose.msra.mxu0 0.0
    %2480 = vmatprep.subr.mxu0 0.0
    %2481 = vmatpush1.xpose.msra.mxu0 0.0
    %2482 = vmatprep.subr.mxu0 0.0
    %2483 = vmatpush1.xpose.msra.mxu0 0.0
    %2484 = vmatprep.subr.mxu0 0.0
    %2485 = vmatpush1.xpose.msra.mxu0 0.0
    %2486 = vmatprep.subr.mxu0 0.0
    %2487 = vmatpush1.xpose.msra.mxu0 0.0
    %2488 = vmatprep.subr.mxu0 0.0
    %2489 = vmatpush1.xpose.msra.mxu0 0.0
    %2490 = vmatprep.subr.mxu0 0.0
    %2491 = vmatpush1.xpose.msra.mxu0 0.0
    %2492 = vmatprep.subr.mxu0 0.0
    %2493 = vmatpush1.xpose.msra.mxu0 0.0
    %2494 = vmatprep.subr.mxu0 0.0
    %2495 = vmatpush1.xpose.msra.mxu0 0.0
    %2496 = vmatprep.subr.mxu0 0.0
    %2497 = vmatpush1.xpose.msra.mxu0 0.0
    %2498 = vmatprep.subr.mxu0 0.0
    %2499 = vmatpush1.xpose.msra.mxu0 0.0
    %2500 = vmatprep.subr.mxu0 0.0
    %2501 = vmatpush1.xpose.msra.mxu0 0.0
    %2502 = vmatprep.subr.mxu0 0.0
    %2503 = vmatpush1.xpose.msra.mxu0 0.0
    %2504 = vmatprep.subr.mxu0 0.0
    %2505 = vmatpush1.xpose.msra.mxu0 0.0
    %2506 = vmatprep.subr.mxu0 0.0
    %2507 = vmatpush1.xpose.msra.mxu0 0.0
    %2508 = vmatprep.subr.mxu0 0.0
    %2509 = vmatpush1.xpose.msra.mxu0 0.0
    %2510 = vmatprep.subr.mxu0 0.0
    %2511 = vmatpush1.xpose.msra.mxu0 0.0
    %2512 = vmatprep.mubr.f32.mxu0 0.0
    %2513 = vmatmul.mubr.f32.gmra.mrb[0].mxu0 %v1996
    %v2514 = vpop.f32.mrb[0].mxu0
    %v2515 = vadd.f32 0.0, %v2514
    %v2516 = vpop.f32.mrb[0].mxu0
    %2517 = vmatprep.mubr.f32.mxu0 0.0
    %2518 = vmatmul.mubr.f32.gmra.mrb[0].mxu0 %v2013
    %v2519 = vpop.f32.mrb[0].mxu0
    %v2520 = vadd.f32 0.0, %v2519
    %v2521 = vpop.f32.mrb[0].mxu0
    %2522 = vmatprep.mubr.f32.mxu0 0.0
    %2523 = vmatmul.mubr.f32.gmra.mrb[0].mxu0 %v2030
    %v2524 = vpop.f32.mrb[0].mxu0
    %v2525 = vadd.f32 0.0, %v2524
    %v2526 = vpop.f32.mrb[0].mxu0
    %2527 = vmatprep.mubr.f32.mxu0 0.0
    %2528 = vmatmul.mubr.f32.gmra.mrb[0].mxu0 %v2047
    %v2529 = vpop.f32.mrb[0].mxu0
    %v2530 = vadd.f32 0.0, %v2529
    %v2531 = vpop.f32.mrb[0].mxu0
    %2532 = vmatprep.mubr.f32.mxu0 0.0
    %2533 = vmatmul.mubr.f32.gmra.mrb[0].mxu0 %v2064
    %v2534 = vpop.f32.mrb[0].mxu0
    %v2535 = vadd.f32 0.0, %v2534
    %v2536 = vpop.f32.mrb[0].mxu0
    %2537 = vmatprep.mubr.f32.mxu0 0.0
    %2538 = vmatmul.mubr.f32.gmra.mrb[0].mxu0 %v2081
    %v2539 = vpop.f32.mrb[0].mxu0
    %v2540 = vadd.f32 0.0, %v2539
    %v2541 = vpop.f32.mrb[0].mxu0
    %2542 = vmatprep.mubr.f32.mxu0 0.0
    %2543 = vmatmul.mubr.f32.gmra.mrb[0].mxu0 %v2098
    %v2544 = vpop.f32.mrb[0].mxu0
    %v2545 = vadd.f32 0.0, %v2544
    %v2546 = vpop.f32.mrb[0].mxu0
    %2547 = vmatprep.mubr.f32.mxu0 0.0
    %2548 = vmatmul.mubr.f32.gmra.mrb[0].mxu0 %v2115
    %v2549 = vpop.f32.mrb[0].mxu0
    %v2550 = vadd.f32 0.0, %v2549
    %v2551 = vpop.f32.mrb[0].mxu0
    %2552 = vmatprep.mubr.f32.mxu0 0.0
    %2553 = vmatmul.mubr.f32.gmra.mrb[0].mxu0 %v2132
    %v2554 = vpop.f32.mrb[0].mxu0
    %v2555 = vadd.f32 0.0, %v2554
    %v2556 = vpop.f32.mrb[0].mxu0
    %2557 = vmatprep.mubr.f32.mxu0 0.0
    %2558 = vmatmul.mubr.f32.gmra.mrb[0].mxu0 %v2149
    %v2559 = vpop.f32.mrb[0].mxu0
    %v2560 = vadd.f32 0.0, %v2559
    %v2561 = vpop.f32.mrb[0].mxu0
    %2562 = vmatprep.mubr.f32.mxu0 0.0
    %2563 = vmatmul.mubr.f32.gmra.mrb[0].mxu0 %v2166
    %v2564 = vpop.f32.mrb[0].mxu0
    %v2565 = vadd.f32 0.0, %v2564
    %v2566 = vpop.f32.mrb[0].mxu0
    %2567 = vmatprep.mubr.f32.mxu0 0.0
    %2568 = vmatmul.mubr.f32.gmra.mrb[0].mxu0 %v2183
    %v2569 = vpop.f32.mrb[0].mxu0
    %v2570 = vadd.f32 0.0, %v2569
    %v2571 = vpop.f32.mrb[0].mxu0
    %2572 = vmatprep.mubr.f32.mxu0 0.0
    %2573 = vmatmul.mubr.f32.gmra.mrb[0].mxu0 %v2200
    %v2574 = vpop.f32.mrb[0].mxu0
    %v2575 = vadd.f32 0.0, %v2574
    %v2576 = vpop.f32.mrb[0].mxu0
    %2577 = vmatprep.mubr.f32.mxu0 0.0
    %2578 = vmatmul.mubr.f32.gmra.mrb[0].mxu0 %v2217
    %v2579 = vpop.f32.mrb[0].mxu0
    %v2580 = vadd.f32 0.0, %v2579
    %v2581 = vpop.f32.mrb[0].mxu0
    %2582 = vmatprep.mubr.f32.mxu0 0.0
    %2583 = vmatmul.mubr.f32.gmra.mrb[0].mxu0 %v2234
    %v2584 = vpop.f32.mrb[0].mxu0
    %v2585 = vadd.f32 0.0, %v2584
    %v2586 = vpop.f32.mrb[0].mxu0
    %2587 = vmatprep.mubr.f32.mxu0 0.0
    %2588 = vmatmul.mubr.f32.gmra.mrb[0].mxu0 %v2251
    %v2589 = vpop.f32.mrb[0].mxu0
    %v2590 = vadd.f32 0.0, %v2589
    %v2591 = vpop.f32.mrb[0].mxu0
    %2592 = vmatprep.mubr.f32.mxu0 0.0
    %2593 = vmatmul.mubr.f32.gmra.mrb[0].mxu0 %v2268
    %v2594 = vpop.f32.mrb[0].mxu0
    %v2595 = vadd.f32 0.0, %v2594
    %v2596 = vpop.f32.mrb[0].mxu0
    %2597 = vmatprep.mubr.f32.mxu0 0.0
    %2598 = vmatmul.mubr.f32.gmra.mrb[0].mxu0 %v2285
    %v2599 = vpop.f32.mrb[0].mxu0
    %v2600 = vadd.f32 0.0, %v2599
    %v2601 = vpop.f32.mrb[0].mxu0
    %2602 = vmatprep.mubr.f32.mxu0 0.0
    %2603 = vmatmul.mubr.f32.gmra.mrb[0].mxu0 %v2302
    %v2604 = vpop.f32.mrb[0].mxu0
    %v2605 = vadd.f32 0.0, %v2604
    %v2606 = vpop.f32.mrb[0].mxu0
    %2607 = vmatprep.mubr.f32.mxu0 0.0
    %2608 = vmatmul.mubr.f32.gmra.mrb[0].mxu0 %v2319
    %v2609 = vpop.f32.mrb[0].mxu0
    %v2610 = vadd.f32 0.0, %v2609
    %v2611 = vpop.f32.mrb[0].mxu0
    %2612 = vmatprep.mubr.f32.mxu0 0.0
    %2613 = vmatmul.mubr.f32.gmra.mrb[0].mxu0 %v2336
    %v2614 = vpop.f32.mrb[0].mxu0
    %v2615 = vadd.f32 0.0, %v2614
    %v2616 = vpop.f32.mrb[0].mxu0
    %2617 = vmatprep.mubr.f32.mxu0 0.0
    %2618 = vmatmul.mubr.f32.gmra.mrb[0].mxu0 %v2353
    %v2619 = vpop.f32.mrb[0].mxu0
    %v2620 = vadd.f32 0.0, %v2619
    %v2621 = vpop.f32.mrb[0].mxu0
    %2622 = vmatprep.mubr.f32.mxu0 0.0
    %2623 = vmatmul.mubr.f32.gmra.mrb[0].mxu0 %v2370
    %v2624 = vpop.f32.mrb[0].mxu0
    %v2625 = vadd.f32 0.0, %v2624
    %v2626 = vpop.f32.mrb[0].mxu0
    %2627 = vmatprep.mubr.f32.mxu0 0.0
    %2628 = vmatmul.mubr.f32.gmra.mrb[0].mxu0 %v2387
    %v2629 = vpop.f32.mrb[0].mxu0
    %v2630 = vadd.f32 0.0, %v2629
    %v2631 = vpop.f32.mrb[0].mxu0
    %2632 = vmatprep.mubr.f32.mxu0 0.0
    %2633 = vmatmul.mubr.f32.gmra.mrb[0].mxu0 %v2404
    %v2634 = vpop.f32.mrb[0].mxu0
    %v2635 = vadd.f32 0.0, %v2634
    %v2636 = vpop.f32.mrb[0].mxu0
    %2637 = vmatprep.mubr.f32.mxu0 0.0
    %2638 = vmatmul.mubr.f32.gmra.mrb[0].mxu0 %v2421
    %v2639 = vpop.f32.mrb[0].mxu0
    %v2640 = vadd.f32 0.0, %v2639
    %v2641 = vpop.f32.mrb[0].mxu0
    %2642 = vdwg.mxu0
    %v2669 = vcombine.high %v2515, %v2515
    %v2671 = vunpack.c.l.s4 1983009808
    %v2672 = vunpack.c.0.s8 %v2671
    %v2673 = vlaneseq
    %v2674 = vshrl.u32 %v2673, 7
    %v2675 = vsub.s32 %v2672, %v2674
    %v2676 = vrot.slane %v2515, %v2675
    %v2678 = vunpack.c.l.s4 1983009808
    %v2679 = vunpack.c.0.s8 %v2678
    %v2680 = vlaneseq
    %v2681 = vshrl.u32 %v2680, 7
    %v2682 = vsub.s32 %v2679, %v2681
    %v2683 = vrot.slane %v2669, %v2682
    %v2684 = vcombine.high %v2676, %v2676
    %v2685 = vcombine.high %v2683, %v2683
    %v2686 = vcombine.high %v2520, %v2520
    %v2688 = vunpack.c.l.s4 1983009808
    %v2689 = vunpack.c.0.s8 %v2688
    %v2690 = vlaneseq
    %v2691 = vshrl.u32 %v2690, 7
    %v2692 = vsub.s32 %v2689, %v2691
    %v2693 = vrot.slane %v2520, %v2692
    %v2695 = vunpack.c.l.s4 1983009808
    %v2696 = vunpack.c.0.s8 %v2695
    %v2697 = vlaneseq
    %v2698 = vshrl.u32 %v2697, 7
    %v2699 = vsub.s32 %v2696, %v2698
    %v2700 = vrot.slane %v2686, %v2699
    %v2701 = vcombine.high %v2693, %v2693
    %v2702 = vcombine.high %v2700, %v2700
    %v2703 = vcombine.high %v2525, %v2525
    %v2705 = vunpack.c.l.s4 1983009808
    %v2706 = vunpack.c.0.s8 %v2705
    %v2707 = vlaneseq
    %v2708 = vshrl.u32 %v2707, 7
    %v2709 = vsub.s32 %v2706, %v2708
    %v2710 = vrot.slane %v2525, %v2709
    %v2712 = vunpack.c.l.s4 1983009808
    %v2713 = vunpack.c.0.s8 %v2712
    %v2714 = vlaneseq
    %v2715 = vshrl.u32 %v2714, 7
    %v2716 = vsub.s32 %v2713, %v2715
    %v2717 = vrot.slane %v2703, %v2716
    %v2718 = vcombine.high %v2710, %v2710
    %v2719 = vcombine.high %v2717, %v2717
    %v2720 = vcombine.high %v2530, %v2530
    %v2722 = vunpack.c.l.s4 1983009808
    %v2723 = vunpack.c.0.s8 %v2722
    %v2724 = vlaneseq
    %v2725 = vshrl.u32 %v2724, 7
    %v2726 = vsub.s32 %v2723, %v2725
    %v2727 = vrot.slane %v2530, %v2726
    %v2729 = vunpack.c.l.s4 1983009808
    %v2730 = vunpack.c.0.s8 %v2729
    %v2731 = vlaneseq
    %v2732 = vshrl.u32 %v2731, 7
    %v2733 = vsub.s32 %v2730, %v2732
    %v2734 = vrot.slane %v2720, %v2733
    %v2735 = vcombine.high %v2727, %v2727
    %v2736 = vcombine.high %v2734, %v2734
    %v2737 = vcombine.high %v2535, %v2535
    %v2739 = vunpack.c.l.s4 1983009808
    %v2740 = vunpack.c.0.s8 %v2739
    %v2741 = vlaneseq
    %v2742 = vshrl.u32 %v2741, 7
    %v2743 = vsub.s32 %v2740, %v2742
    %v2744 = vrot.slane %v2535, %v2743
    %v2746 = vunpack.c.l.s4 1983009808
    %v2747 = vunpack.c.0.s8 %v2746
    %v2748 = vlaneseq
    %v2749 = vshrl.u32 %v2748, 7
    %v2750 = vsub.s32 %v2747, %v2749
    %v2751 = vrot.slane %v2737, %v2750
    %v2752 = vcombine.high %v2744, %v2744
    %v2753 = vcombine.high %v2751, %v2751
    %v2754 = vcombine.high %v2540, %v2540
    %v2756 = vunpack.c.l.s4 1983009808
    %v2757 = vunpack.c.0.s8 %v2756
    %v2758 = vlaneseq
    %v2759 = vshrl.u32 %v2758, 7
    %v2760 = vsub.s32 %v2757, %v2759
    %v2761 = vrot.slane %v2540, %v2760
    %v2763 = vunpack.c.l.s4 1983009808
    %v2764 = vunpack.c.0.s8 %v2763
    %v2765 = vlaneseq
    %v2766 = vshrl.u32 %v2765, 7
    %v2767 = vsub.s32 %v2764, %v2766
    %v2768 = vrot.slane %v2754, %v2767
    %v2769 = vcombine.high %v2761, %v2761
    %v2770 = vcombine.high %v2768, %v2768
    %v2771 = vcombine.high %v2545, %v2545
    %v2773 = vunpack.c.l.s4 1983009808
    %v2774 = vunpack.c.0.s8 %v2773
    %v2775 = vlaneseq
    %v2776 = vshrl.u32 %v2775, 7
    %v2777 = vsub.s32 %v2774, %v2776
    %v2778 = vrot.slane %v2545, %v2777
    %v2780 = vunpack.c.l.s4 1983009808
    %v2781 = vunpack.c.0.s8 %v2780
    %v2782 = vlaneseq
    %v2783 = vshrl.u32 %v2782, 7
    %v2784 = vsub.s32 %v2781, %v2783
    %v2785 = vrot.slane %v2771, %v2784
    %v2786 = vcombine.high %v2778, %v2778
    %v2787 = vcombine.high %v2785, %v2785
    %v2788 = vcombine.high %v2550, %v2550
    %v2790 = vunpack.c.l.s4 1983009808
    %v2791 = vunpack.c.0.s8 %v2790
    %v2792 = vlaneseq
    %v2793 = vshrl.u32 %v2792, 7
    %v2794 = vsub.s32 %v2791, %v2793
    %v2795 = vrot.slane %v2550, %v2794
    %v2797 = vunpack.c.l.s4 1983009808
    %v2798 = vunpack.c.0.s8 %v2797
    %v2799 = vlaneseq
    %v2800 = vshrl.u32 %v2799, 7
    %v2801 = vsub.s32 %v2798, %v2800
    %v2802 = vrot.slane %v2788, %v2801
    %v2803 = vcombine.high %v2795, %v2795
    %v2804 = vcombine.high %v2802, %v2802
    %v2805 = vcombine.high %v2555, %v2555
    %v2807 = vunpack.c.l.s4 1983009808
    %v2808 = vunpack.c.0.s8 %v2807
    %v2809 = vlaneseq
    %v2810 = vshrl.u32 %v2809, 7
    %v2811 = vsub.s32 %v2808, %v2810
    %v2812 = vrot.slane %v2555, %v2811
    %v2814 = vunpack.c.l.s4 1983009808
    %v2815 = vunpack.c.0.s8 %v2814
    %v2816 = vlaneseq
    %v2817 = vshrl.u32 %v2816, 7
    %v2818 = vsub.s32 %v2815, %v2817
    %v2819 = vrot.slane %v2805, %v2818
    %v2820 = vcombine.high %v2812, %v2812
    %v2821 = vcombine.high %v2819, %v2819
    %v2822 = vcombine.high %v2560, %v2560
    %v2824 = vunpack.c.l.s4 1983009808
    %v2825 = vunpack.c.0.s8 %v2824
    %v2826 = vlaneseq
    %v2827 = vshrl.u32 %v2826, 7
    %v2828 = vsub.s32 %v2825, %v2827
    %v2829 = vrot.slane %v2560, %v2828
    %v2831 = vunpack.c.l.s4 1983009808
    %v2832 = vunpack.c.0.s8 %v2831
    %v2833 = vlaneseq
    %v2834 = vshrl.u32 %v2833, 7
    %v2835 = vsub.s32 %v2832, %v2834
    %v2836 = vrot.slane %v2822, %v2835
    %v2837 = vcombine.high %v2829, %v2829
    %v2838 = vcombine.high %v2836, %v2836
    %v2839 = vcombine.high %v2565, %v2565
    %v2841 = vunpack.c.l.s4 1983009808
    %v2842 = vunpack.c.0.s8 %v2841
    %v2843 = vlaneseq
    %v2844 = vshrl.u32 %v2843, 7
    %v2845 = vsub.s32 %v2842, %v2844
    %v2846 = vrot.slane %v2565, %v2845
    %v2848 = vunpack.c.l.s4 1983009808
    %v2849 = vunpack.c.0.s8 %v2848
    %v2850 = vlaneseq
    %v2851 = vshrl.u32 %v2850, 7
    %v2852 = vsub.s32 %v2849, %v2851
    %v2853 = vrot.slane %v2839, %v2852
    %v2854 = vcombine.high %v2846, %v2846
    %v2855 = vcombine.high %v2853, %v2853
    %v2856 = vcombine.high %v2570, %v2570
    %v2858 = vunpack.c.l.s4 1983009808
    %v2859 = vunpack.c.0.s8 %v2858
    %v2860 = vlaneseq
    %v2861 = vshrl.u32 %v2860, 7
    %v2862 = vsub.s32 %v2859, %v2861
    %v2863 = vrot.slane %v2570, %v2862
    %v2865 = vunpack.c.l.s4 1983009808
    %v2866 = vunpack.c.0.s8 %v2865
    %v2867 = vlaneseq
    %v2868 = vshrl.u32 %v2867, 7
    %v2869 = vsub.s32 %v2866, %v2868
    %v2870 = vrot.slane %v2856, %v2869
    %v2871 = vcombine.high %v2863, %v2863
    %v2872 = vcombine.high %v2870, %v2870
    %v2873 = vcombine.high %v2575, %v2575
    %v2875 = vunpack.c.l.s4 1983009808
    %v2876 = vunpack.c.0.s8 %v2875
    %v2877 = vlaneseq
    %v2878 = vshrl.u32 %v2877, 7
    %v2879 = vsub.s32 %v2876, %v2878
    %v2880 = vrot.slane %v2575, %v2879
    %v2882 = vunpack.c.l.s4 1983009808
    %v2883 = vunpack.c.0.s8 %v2882
    %v2884 = vlaneseq
    %v2885 = vshrl.u32 %v2884, 7
    %v2886 = vsub.s32 %v2883, %v2885
    %v2887 = vrot.slane %v2873, %v2886
    %v2888 = vcombine.high %v2880, %v2880
    %v2889 = vcombine.high %v2887, %v2887
    %v2890 = vcombine.high %v2580, %v2580
    %v2892 = vunpack.c.l.s4 1983009808
    %v2893 = vunpack.c.0.s8 %v2892
    %v2894 = vlaneseq
    %v2895 = vshrl.u32 %v2894, 7
    %v2896 = vsub.s32 %v2893, %v2895
    %v2897 = vrot.slane %v2580, %v2896
    %v2899 = vunpack.c.l.s4 1983009808
    %v2900 = vunpack.c.0.s8 %v2899
    %v2901 = vlaneseq
    %v2902 = vshrl.u32 %v2901, 7
    %v2903 = vsub.s32 %v2900, %v2902
    %v2904 = vrot.slane %v2890, %v2903
    %v2905 = vcombine.high %v2897, %v2897
    %v2906 = vcombine.high %v2904, %v2904
    %v2907 = vcombine.high %v2585, %v2585
    %v2909 = vunpack.c.l.s4 1983009808
    %v2910 = vunpack.c.0.s8 %v2909
    %v2911 = vlaneseq
    %v2912 = vshrl.u32 %v2911, 7
    %v2913 = vsub.s32 %v2910, %v2912
    %v2914 = vrot.slane %v2585, %v2913
    %v2916 = vunpack.c.l.s4 1983009808
    %v2917 = vunpack.c.0.s8 %v2916
    %v2918 = vlaneseq
    %v2919 = vshrl.u32 %v2918, 7
    %v2920 = vsub.s32 %v2917, %v2919
    %v2921 = vrot.slane %v2907, %v2920
    %v2922 = vcombine.high %v2914, %v2914
    %v2923 = vcombine.high %v2921, %v2921
    %v2924 = vcombine.high %v2590, %v2590
    %v2926 = vunpack.c.l.s4 1983009808
    %v2927 = vunpack.c.0.s8 %v2926
    %v2928 = vlaneseq
    %v2929 = vshrl.u32 %v2928, 7
    %v2930 = vsub.s32 %v2927, %v2929
    %v2931 = vrot.slane %v2590, %v2930
    %v2933 = vunpack.c.l.s4 1983009808
    %v2934 = vunpack.c.0.s8 %v2933
    %v2935 = vlaneseq
    %v2936 = vshrl.u32 %v2935, 7
    %v2937 = vsub.s32 %v2934, %v2936
    %v2938 = vrot.slane %v2924, %v2937
    %v2939 = vcombine.high %v2931, %v2931
    %v2940 = vcombine.high %v2938, %v2938
    %v2941 = vcombine.high %v2595, %v2595
    %v2943 = vunpack.c.l.s4 1983009808
    %v2944 = vunpack.c.0.s8 %v2943
    %v2945 = vlaneseq
    %v2946 = vshrl.u32 %v2945, 7
    %v2947 = vsub.s32 %v2944, %v2946
    %v2948 = vrot.slane %v2595, %v2947
    %v2950 = vunpack.c.l.s4 1983009808
    %v2951 = vunpack.c.0.s8 %v2950
    %v2952 = vlaneseq
    %v2953 = vshrl.u32 %v2952, 7
    %v2954 = vsub.s32 %v2951, %v2953
    %v2955 = vrot.slane %v2941, %v2954
    %v2956 = vcombine.high %v2948, %v2948
    %v2957 = vcombine.high %v2955, %v2955
    %v2958 = vcombine.high %v2600, %v2600
    %v2960 = vunpack.c.l.s4 1983009808
    %v2961 = vunpack.c.0.s8 %v2960
    %v2962 = vlaneseq
    %v2963 = vshrl.u32 %v2962, 7
    %v2964 = vsub.s32 %v2961, %v2963
    %v2965 = vrot.slane %v2600, %v2964
    %v2967 = vunpack.c.l.s4 1983009808
    %v2968 = vunpack.c.0.s8 %v2967
    %v2969 = vlaneseq
    %v2970 = vshrl.u32 %v2969, 7
    %v2971 = vsub.s32 %v2968, %v2970
    %v2972 = vrot.slane %v2958, %v2971
    %v2973 = vcombine.high %v2965, %v2965
    %v2974 = vcombine.high %v2972, %v2972
    %v2975 = vcombine.high %v2605, %v2605
    %v2977 = vunpack.c.l.s4 1983009808
    %v2978 = vunpack.c.0.s8 %v2977
    %v2979 = vlaneseq
    %v2980 = vshrl.u32 %v2979, 7
    %v2981 = vsub.s32 %v2978, %v2980
    %v2982 = vrot.slane %v2605, %v2981
    %v2984 = vunpack.c.l.s4 1983009808
    %v2985 = vunpack.c.0.s8 %v2984
    %v2986 = vlaneseq
    %v2987 = vshrl.u32 %v2986, 7
    %v2988 = vsub.s32 %v2985, %v2987
    %v2989 = vrot.slane %v2975, %v2988
    %v2990 = vcombine.high %v2982, %v2982
    %v2991 = vcombine.high %v2989, %v2989
    %v2992 = vcombine.high %v2610, %v2610
    %v2994 = vunpack.c.l.s4 1983009808
    %v2995 = vunpack.c.0.s8 %v2994
    %v2996 = vlaneseq
    %v2997 = vshrl.u32 %v2996, 7
    %v2998 = vsub.s32 %v2995, %v2997
    %v2999 = vrot.slane %v2610, %v2998
    %v3001 = vunpack.c.l.s4 1983009808
    %v3002 = vunpack.c.0.s8 %v3001
    %v3003 = vlaneseq
    %v3004 = vshrl.u32 %v3003, 7
    %v3005 = vsub.s32 %v3002, %v3004
    %v3006 = vrot.slane %v2992, %v3005
    %v3007 = vcombine.high %v2999, %v2999
    %v3008 = vcombine.high %v3006, %v3006
    %v3009 = vcombine.high %v2615, %v2615
    %v3011 = vunpack.c.l.s4 1983009808
    %v3012 = vunpack.c.0.s8 %v3011
    %v3013 = vlaneseq
    %v3014 = vshrl.u32 %v3013, 7
    %v3015 = vsub.s32 %v3012, %v3014
    %v3016 = vrot.slane %v2615, %v3015
    %v3018 = vunpack.c.l.s4 1983009808
    %v3019 = vunpack.c.0.s8 %v3018
    %v3020 = vlaneseq
    %v3021 = vshrl.u32 %v3020, 7
    %v3022 = vsub.s32 %v3019, %v3021
    %v3023 = vrot.slane %v3009, %v3022
    %v3024 = vcombine.high %v3016, %v3016
    %v3025 = vcombine.high %v3023, %v3023
    %v3026 = vcombine.high %v2620, %v2620
    %v3028 = vunpack.c.l.s4 1983009808
    %v3029 = vunpack.c.0.s8 %v3028
    %v3030 = vlaneseq
    %v3031 = vshrl.u32 %v3030, 7
    %v3032 = vsub.s32 %v3029, %v3031
    %v3033 = vrot.slane %v2620, %v3032
    %v3035 = vunpack.c.l.s4 1983009808
    %v3036 = vunpack.c.0.s8 %v3035
    %v3037 = vlaneseq
    %v3038 = vshrl.u32 %v3037, 7
    %v3039 = vsub.s32 %v3036, %v3038
    %v3040 = vrot.slane %v3026, %v3039
    %v3041 = vcombine.high %v3033, %v3033
    %v3042 = vcombine.high %v3040, %v3040
    %v3043 = vcombine.high %v2625, %v2625
    %v3045 = vunpack.c.l.s4 1983009808
    %v3046 = vunpack.c.0.s8 %v3045
    %v3047 = vlaneseq
    %v3048 = vshrl.u32 %v3047, 7
    %v3049 = vsub.s32 %v3046, %v3048
    %v3050 = vrot.slane %v2625, %v3049
    %v3052 = vunpack.c.l.s4 1983009808
    %v3053 = vunpack.c.0.s8 %v3052
    %v3054 = vlaneseq
    %v3055 = vshrl.u32 %v3054, 7
    %v3056 = vsub.s32 %v3053, %v3055
    %v3057 = vrot.slane %v3043, %v3056
    %v3058 = vcombine.high %v3050, %v3050
    %v3059 = vcombine.high %v3057, %v3057
    %v3060 = vcombine.high %v2630, %v2630
    %v3062 = vunpack.c.l.s4 1983009808
    %v3063 = vunpack.c.0.s8 %v3062
    %v3064 = vlaneseq
    %v3065 = vshrl.u32 %v3064, 7
    %v3066 = vsub.s32 %v3063, %v3065
    %v3067 = vrot.slane %v2630, %v3066
    %v3069 = vunpack.c.l.s4 1983009808
    %v3070 = vunpack.c.0.s8 %v3069
    %v3071 = vlaneseq
    %v3072 = vshrl.u32 %v3071, 7
    %v3073 = vsub.s32 %v3070, %v3072
    %v3074 = vrot.slane %v3060, %v3073
    %v3075 = vcombine.high %v3067, %v3067
    %v3076 = vcombine.high %v3074, %v3074
    %v3077 = vcombine.high %v2635, %v2635
    %v3079 = vunpack.c.l.s4 1983009808
    %v3080 = vunpack.c.0.s8 %v3079
    %v3081 = vlaneseq
    %v3082 = vshrl.u32 %v3081, 7
    %v3083 = vsub.s32 %v3080, %v3082
    %v3084 = vrot.slane %v2635, %v3083
    %v3086 = vunpack.c.l.s4 1983009808
    %v3087 = vunpack.c.0.s8 %v3086
    %v3088 = vlaneseq
    %v3089 = vshrl.u32 %v3088, 7
    %v3090 = vsub.s32 %v3087, %v3089
    %v3091 = vrot.slane %v3077, %v3090
    %v3092 = vcombine.high %v3084, %v3084
    %v3093 = vcombine.high %v3091, %v3091
    %v3094 = vcombine.high %v2640, %v2640
    %v3096 = vunpack.c.l.s4 1983009808
    %v3097 = vunpack.c.0.s8 %v3096
    %v3098 = vlaneseq
    %v3099 = vshrl.u32 %v3098, 7
    %v3100 = vsub.s32 %v3097, %v3099
    %v3101 = vrot.slane %v2640, %v3100
    %v3103 = vunpack.c.l.s4 1983009808
    %v3104 = vunpack.c.0.s8 %v3103
    %v3105 = vlaneseq
    %v3106 = vshrl.u32 %v3105, 7
    %v3107 = vsub.s32 %v3104, %v3106
    %v3108 = vrot.slane %v3094, %v3107
    %v3109 = vcombine.high %v3101, %v3101
    %v3110 = vcombine.high %v3108, %v3108
    %v3111 = vcombine.low %v2676, %v2684
    %v3112 = vcombine.low %v2683, %v2685
    %v3114 = vunpack.c.l.s4 1983009808
    %v3115 = vunpack.c.0.s8 %v3114
    %v3116 = vlaneseq
    %v3117 = vshrl.u32 %v3116, 7
    %v3118 = vsub.s32 %v3115, %v3117
    %v3119 = vrot.slane %v3111, %v3118
    %v3121 = vunpack.c.l.s4 1983009808
    %v3122 = vunpack.c.0.s8 %v3121
    %v3123 = vlaneseq
    %v3124 = vshrl.u32 %v3123, 7
    %v3125 = vsub.s32 %v3122, %v3124
    %v3126 = vrot.slane %v3112, %v3125
    %v3127 = vcombine.low %v3119, %v3126
    %v3128 = vcombine.low %v2693, %v2701
    %v3129 = vcombine.low %v2700, %v2702
    %v3131 = vunpack.c.l.s4 1983009808
    %v3132 = vunpack.c.0.s8 %v3131
    %v3133 = vlaneseq
    %v3134 = vshrl.u32 %v3133, 7
    %v3135 = vsub.s32 %v3132, %v3134
    %v3136 = vrot.slane %v3128, %v3135
    %v3138 = vunpack.c.l.s4 1983009808
    %v3139 = vunpack.c.0.s8 %v3138
    %v3140 = vlaneseq
    %v3141 = vshrl.u32 %v3140, 7
    %v3142 = vsub.s32 %v3139, %v3141
    %v3143 = vrot.slane %v3129, %v3142
    %v3144 = vcombine.low %v3136, %v3143
    %v3145 = vcombine.low %v2710, %v2718
    %v3146 = vcombine.low %v2717, %v2719
    %v3148 = vunpack.c.l.s4 1983009808
    %v3149 = vunpack.c.0.s8 %v3148
    %v3150 = vlaneseq
    %v3151 = vshrl.u32 %v3150, 7
    %v3152 = vsub.s32 %v3149, %v3151
    %v3153 = vrot.slane %v3145, %v3152
    %v3155 = vunpack.c.l.s4 1983009808
    %v3156 = vunpack.c.0.s8 %v3155
    %v3157 = vlaneseq
    %v3158 = vshrl.u32 %v3157, 7
    %v3159 = vsub.s32 %v3156, %v3158
    %v3160 = vrot.slane %v3146, %v3159
    %v3161 = vcombine.low %v3153, %v3160
    %v3163 = vunpack.c.l.s4 1983009808
    %v3164 = vunpack.c.0.s8 %v3163
    %v3165 = vlaneseq
    %v3166 = vshrl.u32 %v3165, 7
    %v3167 = vsub.s32 %v3164, %v3166
    %v3168 = vrot.slane %v2727, %v3167
    %v3169 = vcombine.low %v2735, %v2734
    %v3170 = vcombine.low %v2736, %v2744
    %v3172 = vunpack.c.l.s4 1983009808
    %v3173 = vunpack.c.0.s8 %v3172
    %v3174 = vlaneseq
    %v3175 = vshrl.u32 %v3174, 7
    %v3176 = vsub.s32 %v3173, %v3175
    %v3177 = vrot.slane %v3169, %v3176
    %v3179 = vunpack.c.l.s4 1983009808
    %v3180 = vunpack.c.0.s8 %v3179
    %v3181 = vlaneseq
    %v3182 = vshrl.u32 %v3181, 7
    %v3183 = vsub.s32 %v3180, %v3182
    %v3184 = vrot.slane %v3170, %v3183
    %v3185 = vcombine.low %v3177, %v3184
    %v3186 = vcombine.low %v2752, %v2751
    %v3187 = vcombine.low %v2753, %v2761
    %v3189 = vunpack.c.l.s4 1983009808
    %v3190 = vunpack.c.0.s8 %v3189
    %v3191 = vlaneseq
    %v3192 = vshrl.u32 %v3191, 7
    %v3193 = vsub.s32 %v3190, %v3192
    %v3194 = vrot.slane %v3186, %v3193
    %v3196 = vunpack.c.l.s4 1983009808
    %v3197 = vunpack.c.0.s8 %v3196
    %v3198 = vlaneseq
    %v3199 = vshrl.u32 %v3198, 7
    %v3200 = vsub.s32 %v3197, %v3199
    %v3201 = vrot.slane %v3187, %v3200
    %v3202 = vcombine.low %v3194, %v3201
    %v3203 = vcombine.low %v2769, %v2768
    %v3204 = vcombine.low %v2770, %v2778
    %v3206 = vunpack.c.l.s4 1983009808
    %v3207 = vunpack.c.0.s8 %v3206
    %v3208 = vlaneseq
    %v3209 = vshrl.u32 %v3208, 7
    %v3210 = vsub.s32 %v3207, %v3209
    %v3211 = vrot.slane %v3203, %v3210
    %v3213 = vunpack.c.l.s4 1983009808
    %v3214 = vunpack.c.0.s8 %v3213
    %v3215 = vlaneseq
    %v3216 = vshrl.u32 %v3215, 7
    %v3217 = vsub.s32 %v3214, %v3216
    %v3218 = vrot.slane %v3204, %v3217
    %v3219 = vcombine.low %v3211, %v3218
    %v3221 = vunpack.c.l.s4 1983009808
    %v3222 = vunpack.c.0.s8 %v3221
    %v3223 = vlaneseq
    %v3224 = vshrl.u32 %v3223, 7
    %v3225 = vsub.s32 %v3222, %v3224
    %v3226 = vrot.slane %v2786, %v3225
    %v3227 = vcombine.low %v2785, %v2787
    %v3228 = vcombine.low %v2795, %v2803
    %v3230 = vunpack.c.l.s4 1983009808
    %v3231 = vunpack.c.0.s8 %v3230
    %v3232 = vlaneseq
    %v3233 = vshrl.u32 %v3232, 7
    %v3234 = vsub.s32 %v3231, %v3233
    %v3235 = vrot.slane %v3227, %v3234
    %v3237 = vunpack.c.l.s4 1983009808
    %v3238 = vunpack.c.0.s8 %v3237
    %v3239 = vlaneseq
    %v3240 = vshrl.u32 %v3239, 7
    %v3241 = vsub.s32 %v3238, %v3240
    %v3242 = vrot.slane %v3228, %v3241
    %v3243 = vcombine.low %v3235, %v3242
    %v3244 = vcombine.low %v2802, %v2804
    %v3245 = vcombine.low %v2812, %v2820
    %v3247 = vunpack.c.l.s4 1983009808
    %v3248 = vunpack.c.0.s8 %v3247
    %v3249 = vlaneseq
    %v3250 = vshrl.u32 %v3249, 7
    %v3251 = vsub.s32 %v3248, %v3250
    %v3252 = vrot.slane %v3244, %v3251
    %v3254 = vunpack.c.l.s4 1983009808
    %v3255 = vunpack.c.0.s8 %v3254
    %v3256 = vlaneseq
    %v3257 = vshrl.u32 %v3256, 7
    %v3258 = vsub.s32 %v3255, %v3257
    %v3259 = vrot.slane %v3245, %v3258
    %v3260 = vcombine.low %v3252, %v3259
    %v3261 = vcombine.low %v2819, %v2821
    %v3262 = vcombine.low %v2829, %v2837
    %v3264 = vunpack.c.l.s4 1983009808
    %v3265 = vunpack.c.0.s8 %v3264
    %v3266 = vlaneseq
    %v3267 = vshrl.u32 %v3266, 7
    %v3268 = vsub.s32 %v3265, %v3267
    %v3269 = vrot.slane %v3261, %v3268
    %v3271 = vunpack.c.l.s4 1983009808
    %v3272 = vunpack.c.0.s8 %v3271
    %v3273 = vlaneseq
    %v3274 = vshrl.u32 %v3273, 7
    %v3275 = vsub.s32 %v3272, %v3274
    %v3276 = vrot.slane %v3262, %v3275
    %v3277 = vcombine.low %v3269, %v3276
    %v3279 = vunpack.c.l.s4 1983009808
    %v3280 = vunpack.c.0.s8 %v3279
    %v3281 = vlaneseq
    %v3282 = vshrl.u32 %v3281, 7
    %v3283 = vsub.s32 %v3280, %v3282
    %v3284 = vrot.slane %v2836, %v3283
    %v3285 = vcombine.low %v2838, %v2846
    %v3286 = vcombine.low %v2854, %v2853
    %v3288 = vunpack.c.l.s4 1983009808
    %v3289 = vunpack.c.0.s8 %v3288
    %v3290 = vlaneseq
    %v3291 = vshrl.u32 %v3290, 7
    %v3292 = vsub.s32 %v3289, %v3291
    %v3293 = vrot.slane %v3285, %v3292
    %v3295 = vunpack.c.l.s4 1983009808
    %v3296 = vunpack.c.0.s8 %v3295
    %v3297 = vlaneseq
    %v3298 = vshrl.u32 %v3297, 7
    %v3299 = vsub.s32 %v3296, %v3298
    %v3300 = vrot.slane %v3286, %v3299
    %v3301 = vcombine.low %v3293, %v3300
    %v3302 = vcombine.low %v2855, %v2863
    %v3303 = vcombine.low %v2871, %v2870
    %v3305 = vunpack.c.l.s4 1983009808
    %v3306 = vunpack.c.0.s8 %v3305
    %v3307 = vlaneseq
    %v3308 = vshrl.u32 %v3307, 7
    %v3309 = vsub.s32 %v3306, %v3308
    %v3310 = vrot.slane %v3302, %v3309
    %v3312 = vunpack.c.l.s4 1983009808
    %v3313 = vunpack.c.0.s8 %v3312
    %v3314 = vlaneseq
    %v3315 = vshrl.u32 %v3314, 7
    %v3316 = vsub.s32 %v3313, %v3315
    %v3317 = vrot.slane %v3303, %v3316
    %v3318 = vcombine.low %v3310, %v3317
    %v3319 = vcombine.low %v2872, %v2880
    %v3320 = vcombine.low %v2888, %v2887
    %v3322 = vunpack.c.l.s4 1983009808
    %v3323 = vunpack.c.0.s8 %v3322
    %v3324 = vlaneseq
    %v3325 = vshrl.u32 %v3324, 7
    %v3326 = vsub.s32 %v3323, %v3325
    %v3327 = vrot.slane %v3319, %v3326
    %v3329 = vunpack.c.l.s4 1983009808
    %v3330 = vunpack.c.0.s8 %v3329
    %v3331 = vlaneseq
    %v3332 = vshrl.u32 %v3331, 7
    %v3333 = vsub.s32 %v3330, %v3332
    %v3334 = vrot.slane %v3320, %v3333
    %v3335 = vcombine.low %v3327, %v3334
    %v3337 = vunpack.c.l.s4 1983009808
    %v3338 = vunpack.c.0.s8 %v3337
    %v3339 = vlaneseq
    %v3340 = vshrl.u32 %v3339, 7
    %v3341 = vsub.s32 %v3338, %v3340
    %v3342 = vrot.slane %v2889, %v3341
    %v3343 = vcombine.low %v2897, %v2905
    %v3344 = vcombine.low %v2904, %v2906
    %v3346 = vunpack.c.l.s4 1983009808
    %v3347 = vunpack.c.0.s8 %v3346
    %v3348 = vlaneseq
    %v3349 = vshrl.u32 %v3348, 7
    %v3350 = vsub.s32 %v3347, %v3349
    %v3351 = vrot.slane %v3343, %v3350
    %v3353 = vunpack.c.l.s4 1983009808
    %v3354 = vunpack.c.0.s8 %v3353
    %v3355 = vlaneseq
    %v3356 = vshrl.u32 %v3355, 7
    %v3357 = vsub.s32 %v3354, %v3356
    %v3358 = vrot.slane %v3344, %v3357
    %v3359 = vcombine.low %v3351, %v3358
    %v3360 = vcombine.low %v2914, %v2922
    %v3361 = vcombine.low %v2921, %v2923
    %v3363 = vunpack.c.l.s4 1983009808
    %v3364 = vunpack.c.0.s8 %v3363
    %v3365 = vlaneseq
    %v3366 = vshrl.u32 %v3365, 7
    %v3367 = vsub.s32 %v3364, %v3366
    %v3368 = vrot.slane %v3360, %v3367
    %v3370 = vunpack.c.l.s4 1983009808
    %v3371 = vunpack.c.0.s8 %v3370
    %v3372 = vlaneseq
    %v3373 = vshrl.u32 %v3372, 7
    %v3374 = vsub.s32 %v3371, %v3373
    %v3375 = vrot.slane %v3361, %v3374
    %v3376 = vcombine.low %v3368, %v3375
    %v3377 = vcombine.low %v2931, %v2939
    %v3378 = vcombine.low %v2938, %v2940
    %v3380 = vunpack.c.l.s4 1983009808
    %v3381 = vunpack.c.0.s8 %v3380
    %v3382 = vlaneseq
    %v3383 = vshrl.u32 %v3382, 7
    %v3384 = vsub.s32 %v3381, %v3383
    %v3385 = vrot.slane %v3377, %v3384
    %v3387 = vunpack.c.l.s4 1983009808
    %v3388 = vunpack.c.0.s8 %v3387
    %v3389 = vlaneseq
    %v3390 = vshrl.u32 %v3389, 7
    %v3391 = vsub.s32 %v3388, %v3390
    %v3392 = vrot.slane %v3378, %v3391
    %v3393 = vcombine.low %v3385, %v3392
    %v3395 = vunpack.c.l.s4 1983009808
    %v3396 = vunpack.c.0.s8 %v3395
    %v3397 = vlaneseq
    %v3398 = vshrl.u32 %v3397, 7
    %v3399 = vsub.s32 %v3396, %v3398
    %v3400 = vrot.slane %v2948, %v3399
    %v3401 = vcombine.low %v2956, %v2955
    %v3402 = vcombine.low %v2957, %v2965
    %v3404 = vunpack.c.l.s4 1983009808
    %v3405 = vunpack.c.0.s8 %v3404
    %v3406 = vlaneseq
    %v3407 = vshrl.u32 %v3406, 7
    %v3408 = vsub.s32 %v3405, %v3407
    %v3409 = vrot.slane %v3401, %v3408
    %v3411 = vunpack.c.l.s4 1983009808
    %v3412 = vunpack.c.0.s8 %v3411
    %v3413 = vlaneseq
    %v3414 = vshrl.u32 %v3413, 7
    %v3415 = vsub.s32 %v3412, %v3414
    %v3416 = vrot.slane %v3402, %v3415
    %v3417 = vcombine.low %v3409, %v3416
    %v3418 = vcombine.low %v2973, %v2972
    %v3419 = vcombine.low %v2974, %v2982
    %v3421 = vunpack.c.l.s4 1983009808
    %v3422 = vunpack.c.0.s8 %v3421
    %v3423 = vlaneseq
    %v3424 = vshrl.u32 %v3423, 7
    %v3425 = vsub.s32 %v3422, %v3424
    %v3426 = vrot.slane %v3418, %v3425
    %v3428 = vunpack.c.l.s4 1983009808
    %v3429 = vunpack.c.0.s8 %v3428
    %v3430 = vlaneseq
    %v3431 = vshrl.u32 %v3430, 7
    %v3432 = vsub.s32 %v3429, %v3431
    %v3433 = vrot.slane %v3419, %v3432
    %v3434 = vcombine.low %v3426, %v3433
    %v3435 = vcombine.low %v2990, %v2989
    %v3436 = vcombine.low %v2991, %v2999
    %v3438 = vunpack.c.l.s4 1983009808
    %v3439 = vunpack.c.0.s8 %v3438
    %v3440 = vlaneseq
    %v3441 = vshrl.u32 %v3440, 7
    %v3442 = vsub.s32 %v3439, %v3441
    %v3443 = vrot.slane %v3435, %v3442
    %v3445 = vunpack.c.l.s4 1983009808
    %v3446 = vunpack.c.0.s8 %v3445
    %v3447 = vlaneseq
    %v3448 = vshrl.u32 %v3447, 7
    %v3449 = vsub.s32 %v3446, %v3448
    %v3450 = vrot.slane %v3436, %v3449
    %v3451 = vcombine.low %v3443, %v3450
    %v3453 = vunpack.c.l.s4 1983009808
    %v3454 = vunpack.c.0.s8 %v3453
    %v3455 = vlaneseq
    %v3456 = vshrl.u32 %v3455, 7
    %v3457 = vsub.s32 %v3454, %v3456
    %v3458 = vrot.slane %v3007, %v3457
    %v3459 = vcombine.low %v3006, %v3008
    %v3460 = vcombine.low %v3016, %v3024
    %v3462 = vunpack.c.l.s4 1983009808
    %v3463 = vunpack.c.0.s8 %v3462
    %v3464 = vlaneseq
    %v3465 = vshrl.u32 %v3464, 7
    %v3466 = vsub.s32 %v3463, %v3465
    %v3467 = vrot.slane %v3459, %v3466
    %v3469 = vunpack.c.l.s4 1983009808
    %v3470 = vunpack.c.0.s8 %v3469
    %v3471 = vlaneseq
    %v3472 = vshrl.u32 %v3471, 7
    %v3473 = vsub.s32 %v3470, %v3472
    %v3474 = vrot.slane %v3460, %v3473
    %v3475 = vcombine.low %v3467, %v3474
    %v3476 = vcombine.low %v3023, %v3025
    %v3477 = vcombine.low %v3033, %v3041
    %v3479 = vunpack.c.l.s4 1983009808
    %v3480 = vunpack.c.0.s8 %v3479
    %v3481 = vlaneseq
    %v3482 = vshrl.u32 %v3481, 7
    %v3483 = vsub.s32 %v3480, %v3482
    %v3484 = vrot.slane %v3476, %v3483
    %v3486 = vunpack.c.l.s4 1983009808
    %v3487 = vunpack.c.0.s8 %v3486
    %v3488 = vlaneseq
    %v3489 = vshrl.u32 %v3488, 7
    %v3490 = vsub.s32 %v3487, %v3489
    %v3491 = vrot.slane %v3477, %v3490
    %v3492 = vcombine.low %v3484, %v3491
    %v3493 = vcombine.low %v3040, %v3042
    %v3494 = vcombine.low %v3050, %v3058
    %v3496 = vunpack.c.l.s4 1983009808
    %v3497 = vunpack.c.0.s8 %v3496
    %v3498 = vlaneseq
    %v3499 = vshrl.u32 %v3498, 7
    %v3500 = vsub.s32 %v3497, %v3499
    %v3501 = vrot.slane %v3493, %v3500
    %v3503 = vunpack.c.l.s4 1983009808
    %v3504 = vunpack.c.0.s8 %v3503
    %v3505 = vlaneseq
    %v3506 = vshrl.u32 %v3505, 7
    %v3507 = vsub.s32 %v3504, %v3506
    %v3508 = vrot.slane %v3494, %v3507
    %v3509 = vcombine.low %v3501, %v3508
    %v3511 = vunpack.c.l.s4 1983009808
    %v3512 = vunpack.c.0.s8 %v3511
    %v3513 = vlaneseq
    %v3514 = vshrl.u32 %v3513, 7
    %v3515 = vsub.s32 %v3512, %v3514
    %v3516 = vrot.slane %v3057, %v3515
    %v3517 = vcombine.low %v3059, %v3067
    %v3518 = vcombine.low %v3075, %v3074
    %v3520 = vunpack.c.l.s4 1983009808
    %v3521 = vunpack.c.0.s8 %v3520
    %v3522 = vlaneseq
    %v3523 = vshrl.u32 %v3522, 7
    %v3524 = vsub.s32 %v3521, %v3523
    %v3525 = vrot.slane %v3517, %v3524
    %v3527 = vunpack.c.l.s4 1983009808
    %v3528 = vunpack.c.0.s8 %v3527
    %v3529 = vlaneseq
    %v3530 = vshrl.u32 %v3529, 7
    %v3531 = vsub.s32 %v3528, %v3530
    %v3532 = vrot.slane %v3518, %v3531
    %v3533 = vcombine.low %v3525, %v3532
    %v3534 = vcombine.low %v3076, %v3084
    %v3535 = vcombine.low %v3092, %v3091
    %v3537 = vunpack.c.l.s4 1983009808
    %v3538 = vunpack.c.0.s8 %v3537
    %v3539 = vlaneseq
    %v3540 = vshrl.u32 %v3539, 7
    %v3541 = vsub.s32 %v3538, %v3540
    %v3542 = vrot.slane %v3534, %v3541
    %v3544 = vunpack.c.l.s4 1983009808
    %v3545 = vunpack.c.0.s8 %v3544
    %v3546 = vlaneseq
    %v3547 = vshrl.u32 %v3546, 7
    %v3548 = vsub.s32 %v3545, %v3547
    %v3549 = vrot.slane %v3535, %v3548
    %v3550 = vcombine.low %v3542, %v3549
    %v3551 = vcombine.low %v3093, %v3101
    %v3552 = vcombine.low %v3109, %v3108
    %v3554 = vunpack.c.l.s4 1983009808
    %v3555 = vunpack.c.0.s8 %v3554
    %v3556 = vlaneseq
    %v3557 = vshrl.u32 %v3556, 7
    %v3558 = vsub.s32 %v3555, %v3557
    %v3559 = vrot.slane %v3551, %v3558
    %v3561 = vunpack.c.l.s4 1983009808
    %v3562 = vunpack.c.0.s8 %v3561
    %v3563 = vlaneseq
    %v3564 = vshrl.u32 %v3563, 7
    %v3565 = vsub.s32 %v3562, %v3564
    %v3566 = vrot.slane %v3552, %v3565
    %v3567 = vcombine.low %v3559, %v3566
    %v3569 = vunpack.c.l.s4 1983009808
    %v3570 = vunpack.c.0.s8 %v3569
    %v3571 = vlaneseq
    %v3572 = vshrl.u32 %v3571, 7
    %v3573 = vsub.s32 %v3570, %v3572
    %v3574 = vrot.slane %v3110, %v3573
    %3607 = vxpose.xlu0.b32.start [1/16] %v3127, 128
    %3608 = vxpose.xlu0.b32.cont [2/16] %v3144, 128
    %3609 = vxpose.xlu0.b32.cont [3/16] %v3161, 128
    %3610 = vxpose.xlu0.b32.cont [4/16] %v3168, 128
    %3611 = vxpose.xlu0.b32.cont [5/16] 0.0, 128
    %3612 = vxpose.xlu0.b32.cont [6/16] 0.0, 128
    %3613 = vxpose.xlu0.b32.cont [7/16] 0.0, 128
    %3614 = vxpose.xlu0.b32.cont [8/16] 0.0, 128
    %3615 = vxpose.xlu0.b32.cont [9/16] 0.0, 128
    %3616 = vxpose.xlu0.b32.cont [10/16] 0.0, 128
    %3617 = vxpose.xlu0.b32.cont [11/16] 0.0, 128
    %3618 = vxpose.xlu0.b32.cont [12/16] 0.0, 128
    %3619 = vxpose.xlu0.b32.cont [13/16] 0.0, 128
    %3620 = vxpose.xlu0.b32.cont [14/16] 0.0, 128
    %3621 = vxpose.xlu0.b32.cont [15/16] 0.0, 128
    %3622 = vxpose.xlu0.b32.end [16/16] 0.0, 128
    %v3623 = vpop.trf.xlu0
    %v3624 = vpop.trf.xlu0
    %v3625 = vpop.trf.xlu0
    %v3626 = vpop.trf.xlu0
    %v3627 = vpop.trf.xlu0
    %v3628 = vpop.trf.xlu0
    %v3629 = vpop.trf.xlu0
    %v3630 = vpop.trf.xlu0
    %v3631 = vpop.trf.xlu0
    %v3632 = vpop.trf.xlu0
    %v3633 = vpop.trf.xlu0
    %v3634 = vpop.trf.xlu0
    %v3635 = vpop.trf.xlu0
    %v3636 = vpop.trf.xlu0
    %v3637 = vpop.trf.xlu0
    %v3638 = vpop.trf.xlu0
    %3639 = vxpose.xlu0.b32.start [1/16] %v3185, 128
    %3640 = vxpose.xlu0.b32.cont [2/16] %v3202, 128
    %3641 = vxpose.xlu0.b32.cont [3/16] %v3219, 128
    %3642 = vxpose.xlu0.b32.cont [4/16] %v3226, 128
    %3643 = vxpose.xlu0.b32.cont [5/16] 0.0, 128
    %3644 = vxpose.xlu0.b32.cont [6/16] 0.0, 128
    %3645 = vxpose.xlu0.b32.cont [7/16] 0.0, 128
    %3646 = vxpose.xlu0.b32.cont [8/16] 0.0, 128
    %3647 = vxpose.xlu0.b32.cont [9/16] 0.0, 128
    %3648 = vxpose.xlu0.b32.cont [10/16] 0.0, 128
    %3649 = vxpose.xlu0.b32.cont [11/16] 0.0, 128
    %3650 = vxpose.xlu0.b32.cont [12/16] 0.0, 128
    %3651 = vxpose.xlu0.b32.cont [13/16] 0.0, 128
    %3652 = vxpose.xlu0.b32.cont [14/16] 0.0, 128
    %3653 = vxpose.xlu0.b32.cont [15/16] 0.0, 128
    %3654 = vxpose.xlu0.b32.end [16/16] 0.0, 128
    %v3655 = vpop.trf.xlu0
    %v3656 = vpop.trf.xlu0
    %v3657 = vpop.trf.xlu0
    %v3658 = vpop.trf.xlu0
    %v3659 = vpop.trf.xlu0
    %v3660 = vpop.trf.xlu0
    %v3661 = vpop.trf.xlu0
    %v3662 = vpop.trf.xlu0
    %v3663 = vpop.trf.xlu0
    %v3664 = vpop.trf.xlu0
    %v3665 = vpop.trf.xlu0
    %v3666 = vpop.trf.xlu0
    %v3667 = vpop.trf.xlu0
    %v3668 = vpop.trf.xlu0
    %v3669 = vpop.trf.xlu0
    %v3670 = vpop.trf.xlu0
    %3671 = vxpose.xlu0.b32.start [1/16] %v3243, 128
    %3672 = vxpose.xlu0.b32.cont [2/16] %v3260, 128
    %3673 = vxpose.xlu0.b32.cont [3/16] %v3277, 128
    %3674 = vxpose.xlu0.b32.cont [4/16] %v3284, 128
    %3675 = vxpose.xlu0.b32.cont [5/16] 0.0, 128
    %3676 = vxpose.xlu0.b32.cont [6/16] 0.0, 128
    %3677 = vxpose.xlu0.b32.cont [7/16] 0.0, 128
    %3678 = vxpose.xlu0.b32.cont [8/16] 0.0, 128
    %3679 = vxpose.xlu0.b32.cont [9/16] 0.0, 128
    %3680 = vxpose.xlu0.b32.cont [10/16] 0.0, 128
    %3681 = vxpose.xlu0.b32.cont [11/16] 0.0, 128
    %3682 = vxpose.xlu0.b32.cont [12/16] 0.0, 128
    %3683 = vxpose.xlu0.b32.cont [13/16] 0.0, 128
    %3684 = vxpose.xlu0.b32.cont [14/16] 0.0, 128
    %3685 = vxpose.xlu0.b32.cont [15/16] 0.0, 128
    %3686 = vxpose.xlu0.b32.end [16/16] 0.0, 128
    %v3687 = vpop.trf.xlu0
    %v3688 = vpop.trf.xlu0
    %v3689 = vpop.trf.xlu0
    %v3690 = vpop.trf.xlu0
    %v3691 = vpop.trf.xlu0
    %v3692 = vpop.trf.xlu0
    %v3693 = vpop.trf.xlu0
    %v3694 = vpop.trf.xlu0
    %v3695 = vpop.trf.xlu0
    %v3696 = vpop.trf.xlu0
    %v3697 = vpop.trf.xlu0
    %v3698 = vpop.trf.xlu0
    %v3699 = vpop.trf.xlu0
    %v3700 = vpop.trf.xlu0
    %v3701 = vpop.trf.xlu0
    %v3702 = vpop.trf.xlu0
    %3703 = vxpose.xlu0.b32.start [1/16] %v3301, 128
    %3704 = vxpose.xlu0.b32.cont [2/16] %v3318, 128
    %3705 = vxpose.xlu0.b32.cont [3/16] %v3335, 128
    %3706 = vxpose.xlu0.b32.cont [4/16] %v3342, 128
    %3707 = vxpose.xlu0.b32.cont [5/16] 0.0, 128
    %3708 = vxpose.xlu0.b32.cont [6/16] 0.0, 128
    %3709 = vxpose.xlu0.b32.cont [7/16] 0.0, 128
    %3710 = vxpose.xlu0.b32.cont [8/16] 0.0, 128
    %3711 = vxpose.xlu0.b32.cont [9/16] 0.0, 128
    %3712 = vxpose.xlu0.b32.cont [10/16] 0.0, 128
    %3713 = vxpose.xlu0.b32.cont [11/16] 0.0, 128
    %3714 = vxpose.xlu0.b32.cont [12/16] 0.0, 128
    %3715 = vxpose.xlu0.b32.cont [13/16] 0.0, 128
    %3716 = vxpose.xlu0.b32.cont [14/16] 0.0, 128
    %3717 = vxpose.xlu0.b32.cont [15/16] 0.0, 128
    %3718 = vxpose.xlu0.b32.end [16/16] 0.0, 128
    %v3719 = vpop.trf.xlu0
    %v3720 = vpop.trf.xlu0
    %v3721 = vpop.trf.xlu0
    %v3722 = vpop.trf.xlu0
    %v3723 = vpop.trf.xlu0
    %v3724 = vpop.trf.xlu0
    %v3725 = vpop.trf.xlu0
    %v3726 = vpop.trf.xlu0
    %v3727 = vpop.trf.xlu0
    %v3728 = vpop.trf.xlu0
    %v3729 = vpop.trf.xlu0
    %v3730 = vpop.trf.xlu0
    %v3731 = vpop.trf.xlu0
    %v3732 = vpop.trf.xlu0
    %v3733 = vpop.trf.xlu0
    %v3734 = vpop.trf.xlu0
    %3735 = vxpose.xlu0.b32.start [1/16] %v3359, 128
    %3736 = vxpose.xlu0.b32.cont [2/16] %v3376, 128
    %3737 = vxpose.xlu0.b32.cont [3/16] %v3393, 128
    %3738 = vxpose.xlu0.b32.cont [4/16] %v3400, 128
    %3739 = vxpose.xlu0.b32.cont [5/16] 0.0, 128
    %3740 = vxpose.xlu0.b32.cont [6/16] 0.0, 128
    %3741 = vxpose.xlu0.b32.cont [7/16] 0.0, 128
    %3742 = vxpose.xlu0.b32.cont [8/16] 0.0, 128
    %3743 = vxpose.xlu0.b32.cont [9/16] 0.0, 128
    %3744 = vxpose.xlu0.b32.cont [10/16] 0.0, 128
    %3745 = vxpose.xlu0.b32.cont [11/16] 0.0, 128
    %3746 = vxpose.xlu0.b32.cont [12/16] 0.0, 128
    %3747 = vxpose.xlu0.b32.cont [13/16] 0.0, 128
    %3748 = vxpose.xlu0.b32.cont [14/16] 0.0, 128
    %3749 = vxpose.xlu0.b32.cont [15/16] 0.0, 128
    %3750 = vxpose.xlu0.b32.end [16/16] 0.0, 128
    %v3751 = vpop.trf.xlu0
    %v3752 = vpop.trf.xlu0
    %v3753 = vpop.trf.xlu0
    %v3754 = vpop.trf.xlu0
    %v3755 = vpop.trf.xlu0
    %v3756 = vpop.trf.xlu0
    %v3757 = vpop.trf.xlu0
    %v3758 = vpop.trf.xlu0
    %v3759 = vpop.trf.xlu0
    %v3760 = vpop.trf.xlu0
    %v3761 = vpop.trf.xlu0
    %v3762 = vpop.trf.xlu0
    %v3763 = vpop.trf.xlu0
    %v3764 = vpop.trf.xlu0
    %v3765 = vpop.trf.xlu0
    %v3766 = vpop.trf.xlu0
    %3767 = vxpose.xlu0.b32.start [1/16] %v3417, 128
    %3768 = vxpose.xlu0.b32.cont [2/16] %v3434, 128
    %3769 = vxpose.xlu0.b32.cont [3/16] %v3451, 128
    %3770 = vxpose.xlu0.b32.cont [4/16] %v3458, 128
    %3771 = vxpose.xlu0.b32.cont [5/16] 0.0, 128
    %3772 = vxpose.xlu0.b32.cont [6/16] 0.0, 128
    %3773 = vxpose.xlu0.b32.cont [7/16] 0.0, 128
    %3774 = vxpose.xlu0.b32.cont [8/16] 0.0, 128
    %3775 = vxpose.xlu0.b32.cont [9/16] 0.0, 128
    %3776 = vxpose.xlu0.b32.cont [10/16] 0.0, 128
    %3777 = vxpose.xlu0.b32.cont [11/16] 0.0, 128
    %3778 = vxpose.xlu0.b32.cont [12/16] 0.0, 128
    %3779 = vxpose.xlu0.b32.cont [13/16] 0.0, 128
    %3780 = vxpose.xlu0.b32.cont [14/16] 0.0, 128
    %3781 = vxpose.xlu0.b32.cont [15/16] 0.0, 128
    %3782 = vxpose.xlu0.b32.end [16/16] 0.0, 128
    %v3783 = vpop.trf.xlu0
    %v3784 = vpop.trf.xlu0
    %v3785 = vpop.trf.xlu0
    %v3786 = vpop.trf.xlu0
    %v3787 = vpop.trf.xlu0
    %v3788 = vpop.trf.xlu0
    %v3789 = vpop.trf.xlu0
    %v3790 = vpop.trf.xlu0
    %v3791 = vpop.trf.xlu0
    %v3792 = vpop.trf.xlu0
    %v3793 = vpop.trf.xlu0
    %v3794 = vpop.trf.xlu0
    %v3795 = vpop.trf.xlu0
    %v3796 = vpop.trf.xlu0
    %v3797 = vpop.trf.xlu0
    %v3798 = vpop.trf.xlu0
    %3799 = vxpose.xlu0.b32.start [1/16] %v3475, 128
    %3800 = vxpose.xlu0.b32.cont [2/16] %v3492, 128
    %3801 = vxpose.xlu0.b32.cont [3/16] %v3509, 128
    %3802 = vxpose.xlu0.b32.cont [4/16] %v3516, 128
    %3803 = vxpose.xlu0.b32.cont [5/16] 0.0, 128
    %3804 = vxpose.xlu0.b32.cont [6/16] 0.0, 128
    %3805 = vxpose.xlu0.b32.cont [7/16] 0.0, 128
    %3806 = vxpose.xlu0.b32.cont [8/16] 0.0, 128
    %3807 = vxpose.xlu0.b32.cont [9/16] 0.0, 128
    %3808 = vxpose.xlu0.b32.cont [10/16] 0.0, 128
    %3809 = vxpose.xlu0.b32.cont [11/16] 0.0, 128
    %3810 = vxpose.xlu0.b32.cont [12/16] 0.0, 128
    %3811 = vxpose.xlu0.b32.cont [13/16] 0.0, 128
    %3812 = vxpose.xlu0.b32.cont [14/16] 0.0, 128
    %3813 = vxpose.xlu0.b32.cont [15/16] 0.0, 128
    %3814 = vxpose.xlu0.b32.end [16/16] 0.0, 128
    %v3815 = vpop.trf.xlu0
    %v3816 = vpop.trf.xlu0
    %v3817 = vpop.trf.xlu0
    %v3818 = vpop.trf.xlu0
    %v3819 = vpop.trf.xlu0
    %v3820 = vpop.trf.xlu0
    %v3821 = vpop.trf.xlu0
    %v3822 = vpop.trf.xlu0
    %v3823 = vpop.trf.xlu0
    %v3824 = vpop.trf.xlu0
    %v3825 = vpop.trf.xlu0
    %v3826 = vpop.trf.xlu0
    %v3827 = vpop.trf.xlu0
    %v3828 = vpop.trf.xlu0
    %v3829 = vpop.trf.xlu0
    %v3830 = vpop.trf.xlu0
    %3831 = vxpose.xlu0.b32.start [1/16] %v3533, 128
    %3832 = vxpose.xlu0.b32.cont [2/16] %v3550, 128
    %3833 = vxpose.xlu0.b32.cont [3/16] %v3567, 128
    %3834 = vxpose.xlu0.b32.cont [4/16] %v3574, 128
    %3835 = vxpose.xlu0.b32.cont [5/16] 0.0, 128
    %3836 = vxpose.xlu0.b32.cont [6/16] 0.0, 128
    %3837 = vxpose.xlu0.b32.cont [7/16] 0.0, 128
    %3838 = vxpose.xlu0.b32.cont [8/16] 0.0, 128
    %3839 = vxpose.xlu0.b32.cont [9/16] 0.0, 128
    %3840 = vxpose.xlu0.b32.cont [10/16] 0.0, 128
    %3841 = vxpose.xlu0.b32.cont [11/16] 0.0, 128
    %3842 = vxpose.xlu0.b32.cont [12/16] 0.0, 128
    %3843 = vxpose.xlu0.b32.cont [13/16] 0.0, 128
    %3844 = vxpose.xlu0.b32.cont [14/16] 0.0, 128
    %3845 = vxpose.xlu0.b32.cont [15/16] 0.0, 128
    %3846 = vxpose.xlu0.b32.end [16/16] 0.0, 128
    %v3847 = vpop.trf.xlu0
    %v3848 = vpop.trf.xlu0
    %v3849 = vpop.trf.xlu0
    %v3850 = vpop.trf.xlu0
    %v3851 = vpop.trf.xlu0
    %v3852 = vpop.trf.xlu0
    %v3853 = vpop.trf.xlu0
    %v3854 = vpop.trf.xlu0
    %v3855 = vpop.trf.xlu0
    %v3856 = vpop.trf.xlu0
    %v3857 = vpop.trf.xlu0
    %v3858 = vpop.trf.xlu0
    %v3859 = vpop.trf.xlu0
    %v3860 = vpop.trf.xlu0
    %v3861 = vpop.trf.xlu0
    %v3862 = vpop.trf.xlu0
    %v3863 = vld [vmem:[%s4] sm:$0xff]
    %v3864 = vld [vmem:[%s4 + $0x8] sm:$0xff]
    %v3865 = vld [vmem:[%s4 + $0x10] sm:$0xff]
    %v3866 = vld [vmem:[%s4 + $0x18] sm:$0xff]
    %v3867 = vld [vmem:[%s4 + $0x20] sm:$0xff]
    %v3868 = vld [vmem:[%s4 + $0x28] sm:$0xff]
    %v3869 = vld [vmem:[%s4 + $0x30] sm:$0xff]
    %v3870 = vld [vmem:[%s4 + $0x38] sm:$0xff]
    %3872 = vset.pattern.permute.xlu0 0
    %3873 = vperm.xlu0 %3872, %v3863
    %v3874 = vpop.permute.xlu0 %3873
    %3877 = vset.pattern.permute.xlu0 0
    %3878 = vperm.xlu0 %3877, %v3864
    %v3879 = vpop.permute.xlu0 %3878
    %3882 = vset.pattern.permute.xlu0 0
    %3883 = vperm.xlu0 %3882, %v3865
    %v3884 = vpop.permute.xlu0 %3883
    %3887 = vset.pattern.permute.xlu0 0
    %3888 = vperm.xlu0 %3887, %v3866
    %v3889 = vpop.permute.xlu0 %3888
    %3892 = vset.pattern.permute.xlu0 0
    %3893 = vperm.xlu0 %3892, %v3867
    %v3894 = vpop.permute.xlu0 %3893
    %3897 = vset.pattern.permute.xlu0 0
    %3898 = vperm.xlu0 %3897, %v3868
    %v3899 = vpop.permute.xlu0 %3898
    %3902 = vset.pattern.permute.xlu0 0
    %3903 = vperm.xlu0 %3902, %v3869
    %v3904 = vpop.permute.xlu0 %3903
    %3907 = vset.pattern.permute.xlu0 0
    %3908 = vperm.xlu0 %3907, %v3870
    %v3909 = vpop.permute.xlu0 %3908
    %v3911 = vadd.f32 %v3623, %v3874
    %v3912 = vadd.f32 %v3624, %v3879
    %v3913 = vadd.f32 %v3625, %v3884
    %v3914 = vadd.f32 %v3626, %v3889
    %v3915 = vadd.f32 %v3627, %v3894
    %v3916 = vadd.f32 %v3628, %v3899
    %v3917 = vadd.f32 %v3629, %v3904
    %v3918 = vadd.f32 %v3630, %v3909
    %v3919 = vadd.f32 %v3655, %v3874
    %v3920 = vadd.f32 %v3656, %v3879
    %v3921 = vadd.f32 %v3657, %v3884
    %v3922 = vadd.f32 %v3658, %v3889
    %v3923 = vadd.f32 %v3659, %v3894
    %v3924 = vadd.f32 %v3660, %v3899
    %v3925 = vadd.f32 %v3661, %v3904
    %v3926 = vadd.f32 %v3662, %v3909
    %v3927 = vadd.f32 %v3687, %v3874
    %v3928 = vadd.f32 %v3688, %v3879
    %v3929 = vadd.f32 %v3689, %v3884
    %v3930 = vadd.f32 %v3690, %v3889
    %v3931 = vadd.f32 %v3691, %v3894
    %v3932 = vadd.f32 %v3692, %v3899
    %v3933 = vadd.f32 %v3693, %v3904
    %v3934 = vadd.f32 %v3694, %v3909
    %v3935 = vadd.f32 %v3719, %v3874
    %v3936 = vadd.f32 %v3720, %v3879
    %v3937 = vadd.f32 %v3721, %v3884
    %v3938 = vadd.f32 %v3722, %v3889
    %v3939 = vadd.f32 %v3723, %v3894
    %v3940 = vadd.f32 %v3724, %v3899
    %v3941 = vadd.f32 %v3725, %v3904
    %v3942 = vadd.f32 %v3726, %v3909
    %v3943 = vadd.f32 %v3751, %v3874
    %v3944 = vadd.f32 %v3752, %v3879
    %v3945 = vadd.f32 %v3753, %v3884
    %v3946 = vadd.f32 %v3754, %v3889
    %v3947 = vadd.f32 %v3755, %v3894
    %v3948 = vadd.f32 %v3756, %v3899
    %v3949 = vadd.f32 %v3757, %v3904
    %v3950 = vadd.f32 %v3758, %v3909
    %v3951 = vadd.f32 %v3783, %v3874
    %v3952 = vadd.f32 %v3784, %v3879
    %v3953 = vadd.f32 %v3785, %v3884
    %v3954 = vadd.f32 %v3786, %v3889
    %v3955 = vadd.f32 %v3787, %v3894
    %v3956 = vadd.f32 %v3788, %v3899
    %v3957 = vadd.f32 %v3789, %v3904
    %v3958 = vadd.f32 %v3790, %v3909
    %v3959 = vadd.f32 %v3815, %v3874
    %v3960 = vadd.f32 %v3816, %v3879
    %v3961 = vadd.f32 %v3817, %v3884
    %v3962 = vadd.f32 %v3818, %v3889
    %v3963 = vadd.f32 %v3819, %v3894
    %v3964 = vadd.f32 %v3820, %v3899
    %v3965 = vadd.f32 %v3821, %v3904
    %v3966 = vadd.f32 %v3822, %v3909
    %v3967 = vadd.f32 %v3847, %v3874
    %v3968 = vadd.f32 %v3848, %v3879
    %v3969 = vadd.f32 %v3849, %v3884
    %v3970 = vadd.f32 %v3850, %v3889
    %v3971 = vadd.f32 %v3851, %v3894
    %v3972 = vadd.f32 %v3852, %v3899
    %v3973 = vadd.f32 %v3853, %v3904
    %v3974 = vadd.f32 %v3854, %v3909
    %v3975 = vmax.f32 %v3911, 0.0
    %v3976 = vmax.f32 %v3912, 0.0
    %v3977 = vmax.f32 %v3913, 0.0
    %v3978 = vmax.f32 %v3914, 0.0
    %v3979 = vmax.f32 %v3915, 0.0
    %v3980 = vmax.f32 %v3916, 0.0
    %v3981 = vmax.f32 %v3917, 0.0
    %v3982 = vmax.f32 %v3918, 0.0
    %v3983 = vmax.f32 %v3919, 0.0
    %v3984 = vmax.f32 %v3920, 0.0
    %v3985 = vmax.f32 %v3921, 0.0
    %v3986 = vmax.f32 %v3922, 0.0
    %v3987 = vmax.f32 %v3923, 0.0
    %v3988 = vmax.f32 %v3924, 0.0
    %v3989 = vmax.f32 %v3925, 0.0
    %v3990 = vmax.f32 %v3926, 0.0
    %v3991 = vmax.f32 %v3927, 0.0
    %v3992 = vmax.f32 %v3928, 0.0
    %v3993 = vmax.f32 %v3929, 0.0
    %v3994 = vmax.f32 %v3930, 0.0
    %v3995 = vmax.f32 %v3931, 0.0
    %v3996 = vmax.f32 %v3932, 0.0
    %v3997 = vmax.f32 %v3933, 0.0
    %v3998 = vmax.f32 %v3934, 0.0
    %v3999 = vmax.f32 %v3935, 0.0
    %v4000 = vmax.f32 %v3936, 0.0
    %v4001 = vmax.f32 %v3937, 0.0
    %v4002 = vmax.f32 %v3938, 0.0
    %v4003 = vmax.f32 %v3939, 0.0
    %v4004 = vmax.f32 %v3940, 0.0
    %v4005 = vmax.f32 %v3941, 0.0
    %v4006 = vmax.f32 %v3942, 0.0
    %v4007 = vmax.f32 %v3943, 0.0
    %v4008 = vmax.f32 %v3944, 0.0
    %v4009 = vmax.f32 %v3945, 0.0
    %v4010 = vmax.f32 %v3946, 0.0
    %v4011 = vmax.f32 %v3947, 0.0
    %v4012 = vmax.f32 %v3948, 0.0
    %v4013 = vmax.f32 %v3949, 0.0
    %v4014 = vmax.f32 %v3950, 0.0
    %v4015 = vmax.f32 %v3951, 0.0
    %v4016 = vmax.f32 %v3952, 0.0
    %v4017 = vmax.f32 %v3953, 0.0
    %v4018 = vmax.f32 %v3954, 0.0
    %v4019 = vmax.f32 %v3955, 0.0
    %v4020 = vmax.f32 %v3956, 0.0
    %v4021 = vmax.f32 %v3957, 0.0
    %v4022 = vmax.f32 %v3958, 0.0
    %v4023 = vmax.f32 %v3959, 0.0
    %v4024 = vmax.f32 %v3960, 0.0
    %v4025 = vmax.f32 %v3961, 0.0
    %v4026 = vmax.f32 %v3962, 0.0
    %v4027 = vmax.f32 %v3963, 0.0
    %v4028 = vmax.f32 %v3964, 0.0
    %v4029 = vmax.f32 %v3965, 0.0
    %v4030 = vmax.f32 %v3966, 0.0
    %v4031 = vmax.f32 %v3967, 0.0
    %v4032 = vmax.f32 %v3968, 0.0
    %v4033 = vmax.f32 %v3969, 0.0
    %v4034 = vmax.f32 %v3970, 0.0
    %v4035 = vmax.f32 %v3971, 0.0
    %v4036 = vmax.f32 %v3972, 0.0
    %v4037 = vmax.f32 %v3973, 0.0
    %v4038 = vmax.f32 %v3974, 0.0
    %v4039 = vld [vmem:[%s5] sm:$0xff]
    %v4040 = vld [vmem:[%s5 + $0x8] sm:$0xff]
    %v4041 = vld [vmem:[%s5 + $0x10] sm:$0xff]
    %v4042 = vld [vmem:[%s5 + $0x18] sm:$0xff]
    %v4043 = vld [vmem:[%s5 + $0x20] sm:$0xff]
    %v4044 = vld [vmem:[%s5 + $0x28] sm:$0xff]
    %v4045 = vld [vmem:[%s5 + $0x30] sm:$0xff]
    %v4046 = vld [vmem:[%s5 + $0x38] sm:$0xff]
    %v4047 = vld [vmem:[%s5 + $0x40] sm:$0xff]
    %v4048 = vld [vmem:[%s5 + $0x48] sm:$0xff]
    %v4049 = vld [vmem:[%s5 + $0x50] sm:$0xff]
    %v4050 = vld [vmem:[%s5 + $0x58] sm:$0xff]
    %v4051 = vld [vmem:[%s5 + $0x60] sm:$0xff]
    %v4052 = vld [vmem:[%s5 + $0x68] sm:$0xff]
    %v4053 = vld [vmem:[%s5 + $0x70] sm:$0xff]
    %v4054 = vld [vmem:[%s5 + $0x78] sm:$0xff]
    %v4055 = vld [vmem:[%s5 + $0x80] sm:$0xff]
    %v4056 = vld [vmem:[%s5 + $0x88] sm:$0xff]
    %v4057 = vld [vmem:[%s5 + $0x90] sm:$0xff]
    %v4058 = vld [vmem:[%s5 + $0x98] sm:$0xff]
    %v4059 = vld [vmem:[%s5 + $0xa0] sm:$0xff]
    %v4060 = vld [vmem:[%s5 + $0xa8] sm:$0xff]
    %v4061 = vld [vmem:[%s5 + $0xb0] sm:$0xff]
    %v4062 = vld [vmem:[%s5 + $0xb8] sm:$0xff]
    %4127 = vrot.lane.b32.xlu0 %v3975, 127
    %v4128 = vpop.permute.xlu0 %4127
    %4129 = vrot.lane.b32.xlu0 %v3976, 127
    %v4130 = vpop.permute.xlu0 %4129
    %4131 = vrot.lane.b32.xlu0 %v3977, 127
    %v4132 = vpop.permute.xlu0 %4131
    %4133 = vrot.lane.b32.xlu0 %v3978, 127
    %v4134 = vpop.permute.xlu0 %4133
    %4135 = vrot.lane.b32.xlu0 %v3979, 127
    %v4136 = vpop.permute.xlu0 %4135
    %4137 = vrot.lane.b32.xlu0 %v3980, 127
    %v4138 = vpop.permute.xlu0 %4137
    %4139 = vrot.lane.b32.xlu0 %v3981, 127
    %v4140 = vpop.permute.xlu0 %4139
    %4141 = vrot.lane.b32.xlu0 %v3982, 127
    %v4142 = vpop.permute.xlu0 %4141
    %4143 = vrot.lane.b32.xlu0 %v3983, 127
    %v4144 = vpop.permute.xlu0 %4143
    %4145 = vrot.lane.b32.xlu0 %v3984, 127
    %v4146 = vpop.permute.xlu0 %4145
    %4147 = vrot.lane.b32.xlu0 %v3985, 127
    %v4148 = vpop.permute.xlu0 %4147
    %4149 = vrot.lane.b32.xlu0 %v3986, 127
    %v4150 = vpop.permute.xlu0 %4149
    %4151 = vrot.lane.b32.xlu0 %v3987, 127
    %v4152 = vpop.permute.xlu0 %4151
    %4153 = vrot.lane.b32.xlu0 %v3988, 127
    %v4154 = vpop.permute.xlu0 %4153
    %4155 = vrot.lane.b32.xlu0 %v3989, 127
    %v4156 = vpop.permute.xlu0 %4155
    %4157 = vrot.lane.b32.xlu0 %v3990, 127
    %v4158 = vpop.permute.xlu0 %4157
    %4159 = vrot.lane.b32.xlu0 %v3991, 127
    %v4160 = vpop.permute.xlu0 %4159
    %4161 = vrot.lane.b32.xlu0 %v3992, 127
    %v4162 = vpop.permute.xlu0 %4161
    %4163 = vrot.lane.b32.xlu0 %v3993, 127
    %v4164 = vpop.permute.xlu0 %4163
    %4165 = vrot.lane.b32.xlu0 %v3994, 127
    %v4166 = vpop.permute.xlu0 %4165
    %4167 = vrot.lane.b32.xlu0 %v3995, 127
    %v4168 = vpop.permute.xlu0 %4167
    %4169 = vrot.lane.b32.xlu0 %v3996, 127
    %v4170 = vpop.permute.xlu0 %4169
    %4171 = vrot.lane.b32.xlu0 %v3997, 127
    %v4172 = vpop.permute.xlu0 %4171
    %4173 = vrot.lane.b32.xlu0 %v3998, 127
    %v4174 = vpop.permute.xlu0 %4173
    %4175 = vrot.lane.b32.xlu0 %v3999, 127
    %v4176 = vpop.permute.xlu0 %4175
    %4177 = vrot.lane.b32.xlu0 %v4000, 127
    %v4178 = vpop.permute.xlu0 %4177
    %4179 = vrot.lane.b32.xlu0 %v4001, 127
    %v4180 = vpop.permute.xlu0 %4179
    %4181 = vrot.lane.b32.xlu0 %v4002, 127
    %v4182 = vpop.permute.xlu0 %4181
    %4183 = vrot.lane.b32.xlu0 %v4003, 127
    %v4184 = vpop.permute.xlu0 %4183
    %4185 = vrot.lane.b32.xlu0 %v4004, 127
    %v4186 = vpop.permute.xlu0 %4185
    %4187 = vrot.lane.b32.xlu0 %v4005, 127
    %v4188 = vpop.permute.xlu0 %4187
    %4189 = vrot.lane.b32.xlu0 %v4006, 127
    %v4190 = vpop.permute.xlu0 %4189
    %4191 = vrot.lane.b32.xlu0 %v4007, 127
    %v4192 = vpop.permute.xlu0 %4191
    %4193 = vrot.lane.b32.xlu0 %v4008, 127
    %v4194 = vpop.permute.xlu0 %4193
    %4195 = vrot.lane.b32.xlu0 %v4009, 127
    %v4196 = vpop.permute.xlu0 %4195
    %4197 = vrot.lane.b32.xlu0 %v4010, 127
    %v4198 = vpop.permute.xlu0 %4197
    %4199 = vrot.lane.b32.xlu0 %v4011, 127
    %v4200 = vpop.permute.xlu0 %4199
    %4201 = vrot.lane.b32.xlu0 %v4012, 127
    %v4202 = vpop.permute.xlu0 %4201
    %4203 = vrot.lane.b32.xlu0 %v4013, 127
    %v4204 = vpop.permute.xlu0 %4203
    %4205 = vrot.lane.b32.xlu0 %v4014, 127
    %v4206 = vpop.permute.xlu0 %4205
    %4207 = vrot.lane.b32.xlu0 %v4015, 127
    %v4208 = vpop.permute.xlu0 %4207
    %4209 = vrot.lane.b32.xlu0 %v4016, 127
    %v4210 = vpop.permute.xlu0 %4209
    %4211 = vrot.lane.b32.xlu0 %v4017, 127
    %v4212 = vpop.permute.xlu0 %4211
    %4213 = vrot.lane.b32.xlu0 %v4018, 127
    %v4214 = vpop.permute.xlu0 %4213
    %4215 = vrot.lane.b32.xlu0 %v4019, 127
    %v4216 = vpop.permute.xlu0 %4215
    %4217 = vrot.lane.b32.xlu0 %v4020, 127
    %v4218 = vpop.permute.xlu0 %4217
    %4219 = vrot.lane.b32.xlu0 %v4021, 127
    %v4220 = vpop.permute.xlu0 %4219
    %4221 = vrot.lane.b32.xlu0 %v4022, 127
    %v4222 = vpop.permute.xlu0 %4221
    %4223 = vrot.lane.b32.xlu0 %v4023, 127
    %v4224 = vpop.permute.xlu0 %4223
    %4225 = vrot.lane.b32.xlu0 %v4024, 127
    %v4226 = vpop.permute.xlu0 %4225
    %4227 = vrot.lane.b32.xlu0 %v4025, 127
    %v4228 = vpop.permute.xlu0 %4227
    %4229 = vrot.lane.b32.xlu0 %v4026, 127
    %v4230 = vpop.permute.xlu0 %4229
    %4231 = vrot.lane.b32.xlu0 %v4027, 127
    %v4232 = vpop.permute.xlu0 %4231
    %4233 = vrot.lane.b32.xlu0 %v4028, 127
    %v4234 = vpop.permute.xlu0 %4233
    %4235 = vrot.lane.b32.xlu0 %v4029, 127
    %v4236 = vpop.permute.xlu0 %4235
    %4237 = vrot.lane.b32.xlu0 %v4030, 127
    %v4238 = vpop.permute.xlu0 %4237
    %4239 = vrot.lane.b32.xlu0 %v4031, 127
    %v4240 = vpop.permute.xlu0 %4239
    %4241 = vrot.lane.b32.xlu0 %v4032, 127
    %v4242 = vpop.permute.xlu0 %4241
    %4243 = vrot.lane.b32.xlu0 %v4033, 127
    %v4244 = vpop.permute.xlu0 %4243
    %4245 = vrot.lane.b32.xlu0 %v4034, 127
    %v4246 = vpop.permute.xlu0 %4245
    %4247 = vrot.lane.b32.xlu0 %v4035, 127
    %v4248 = vpop.permute.xlu0 %4247
    %4249 = vrot.lane.b32.xlu0 %v4036, 127
    %v4250 = vpop.permute.xlu0 %4249
    %4251 = vrot.lane.b32.xlu0 %v4037, 127
    %v4252 = vpop.permute.xlu0 %4251
    %4253 = vrot.lane.b32.xlu0 %v4038, 127
    %v4254 = vpop.permute.xlu0 %4253
    %4319 = vrot.lane.b32.xlu0 %v3975, 126
    %v4320 = vpop.permute.xlu0 %4319
    %4321 = vrot.lane.b32.xlu0 %v3976, 126
    %v4322 = vpop.permute.xlu0 %4321
    %4323 = vrot.lane.b32.xlu0 %v3977, 126
    %v4324 = vpop.permute.xlu0 %4323
    %4325 = vrot.lane.b32.xlu0 %v3978, 126
    %v4326 = vpop.permute.xlu0 %4325
    %4327 = vrot.lane.b32.xlu0 %v3979, 126
    %v4328 = vpop.permute.xlu0 %4327
    %4329 = vrot.lane.b32.xlu0 %v3980, 126
    %v4330 = vpop.permute.xlu0 %4329
    %4331 = vrot.lane.b32.xlu0 %v3981, 126
    %v4332 = vpop.permute.xlu0 %4331
    %4333 = vrot.lane.b32.xlu0 %v3982, 126
    %v4334 = vpop.permute.xlu0 %4333
    %4335 = vrot.lane.b32.xlu0 %v3983, 126
    %v4336 = vpop.permute.xlu0 %4335
    %4337 = vrot.lane.b32.xlu0 %v3984, 126
    %v4338 = vpop.permute.xlu0 %4337
    %4339 = vrot.lane.b32.xlu0 %v3985, 126
    %v4340 = vpop.permute.xlu0 %4339
    %4341 = vrot.lane.b32.xlu0 %v3986, 126
    %v4342 = vpop.permute.xlu0 %4341
    %4343 = vrot.lane.b32.xlu0 %v3987, 126
    %v4344 = vpop.permute.xlu0 %4343
    %4345 = vrot.lane.b32.xlu0 %v3988, 126
    %v4346 = vpop.permute.xlu0 %4345
    %4347 = vrot.lane.b32.xlu0 %v3989, 126
    %v4348 = vpop.permute.xlu0 %4347
    %4349 = vrot.lane.b32.xlu0 %v3990, 126
    %v4350 = vpop.permute.xlu0 %4349
    %4351 = vrot.lane.b32.xlu0 %v3991, 126
    %v4352 = vpop.permute.xlu0 %4351
    %4353 = vrot.lane.b32.xlu0 %v3992, 126
    %v4354 = vpop.permute.xlu0 %4353
    %4355 = vrot.lane.b32.xlu0 %v3993, 126
    %v4356 = vpop.permute.xlu0 %4355
    %4357 = vrot.lane.b32.xlu0 %v3994, 126
    %v4358 = vpop.permute.xlu0 %4357
    %4359 = vrot.lane.b32.xlu0 %v3995, 126
    %v4360 = vpop.permute.xlu0 %4359
    %4361 = vrot.lane.b32.xlu0 %v3996, 126
    %v4362 = vpop.permute.xlu0 %4361
    %4363 = vrot.lane.b32.xlu0 %v3997, 126
    %v4364 = vpop.permute.xlu0 %4363
    %4365 = vrot.lane.b32.xlu0 %v3998, 126
    %v4366 = vpop.permute.xlu0 %4365
    %4367 = vrot.lane.b32.xlu0 %v3999, 126
    %v4368 = vpop.permute.xlu0 %4367
    %4369 = vrot.lane.b32.xlu0 %v4000, 126
    %v4370 = vpop.permute.xlu0 %4369
    %4371 = vrot.lane.b32.xlu0 %v4001, 126
    %v4372 = vpop.permute.xlu0 %4371
    %4373 = vrot.lane.b32.xlu0 %v4002, 126
    %v4374 = vpop.permute.xlu0 %4373
    %4375 = vrot.lane.b32.xlu0 %v4003, 126
    %v4376 = vpop.permute.xlu0 %4375
    %4377 = vrot.lane.b32.xlu0 %v4004, 126
    %v4378 = vpop.permute.xlu0 %4377
    %4379 = vrot.lane.b32.xlu0 %v4005, 126
    %v4380 = vpop.permute.xlu0 %4379
    %4381 = vrot.lane.b32.xlu0 %v4006, 126
    %v4382 = vpop.permute.xlu0 %4381
    %4383 = vrot.lane.b32.xlu0 %v4007, 126
    %v4384 = vpop.permute.xlu0 %4383
    %4385 = vrot.lane.b32.xlu0 %v4008, 126
    %v4386 = vpop.permute.xlu0 %4385
    %4387 = vrot.lane.b32.xlu0 %v4009, 126
    %v4388 = vpop.permute.xlu0 %4387
    %4389 = vrot.lane.b32.xlu0 %v4010, 126
    %v4390 = vpop.permute.xlu0 %4389
    %4391 = vrot.lane.b32.xlu0 %v4011, 126
    %v4392 = vpop.permute.xlu0 %4391
    %4393 = vrot.lane.b32.xlu0 %v4012, 126
    %v4394 = vpop.permute.xlu0 %4393
    %4395 = vrot.lane.b32.xlu0 %v4013, 126
    %v4396 = vpop.permute.xlu0 %4395
    %4397 = vrot.lane.b32.xlu0 %v4014, 126
    %v4398 = vpop.permute.xlu0 %4397
    %4399 = vrot.lane.b32.xlu0 %v4015, 126
    %v4400 = vpop.permute.xlu0 %4399
    %4401 = vrot.lane.b32.xlu0 %v4016, 126
    %v4402 = vpop.permute.xlu0 %4401
    %4403 = vrot.lane.b32.xlu0 %v4017, 126
    %v4404 = vpop.permute.xlu0 %4403
    %4405 = vrot.lane.b32.xlu0 %v4018, 126
    %v4406 = vpop.permute.xlu0 %4405
    %4407 = vrot.lane.b32.xlu0 %v4019, 126
    %v4408 = vpop.permute.xlu0 %4407
    %4409 = vrot.lane.b32.xlu0 %v4020, 126
    %v4410 = vpop.permute.xlu0 %4409
    %4411 = vrot.lane.b32.xlu0 %v4021, 126
    %v4412 = vpop.permute.xlu0 %4411
    %4413 = vrot.lane.b32.xlu0 %v4022, 126
    %v4414 = vpop.permute.xlu0 %4413
    %4415 = vrot.lane.b32.xlu0 %v4023, 126
    %v4416 = vpop.permute.xlu0 %4415
    %4417 = vrot.lane.b32.xlu0 %v4024, 126
    %v4418 = vpop.permute.xlu0 %4417
    %4419 = vrot.lane.b32.xlu0 %v4025, 126
    %v4420 = vpop.permute.xlu0 %4419
    %4421 = vrot.lane.b32.xlu0 %v4026, 126
    %v4422 = vpop.permute.xlu0 %4421
    %4423 = vrot.lane.b32.xlu0 %v4027, 126
    %v4424 = vpop.permute.xlu0 %4423
    %4425 = vrot.lane.b32.xlu0 %v4028, 126
    %v4426 = vpop.permute.xlu0 %4425
    %4427 = vrot.lane.b32.xlu0 %v4029, 126
    %v4428 = vpop.permute.xlu0 %4427
    %4429 = vrot.lane.b32.xlu0 %v4030, 126
    %v4430 = vpop.permute.xlu0 %4429
    %4431 = vrot.lane.b32.xlu0 %v4031, 126
    %v4432 = vpop.permute.xlu0 %4431
    %4433 = vrot.lane.b32.xlu0 %v4032, 126
    %v4434 = vpop.permute.xlu0 %4433
    %4435 = vrot.lane.b32.xlu0 %v4033, 126
    %v4436 = vpop.permute.xlu0 %4435
    %4437 = vrot.lane.b32.xlu0 %v4034, 126
    %v4438 = vpop.permute.xlu0 %4437
    %4439 = vrot.lane.b32.xlu0 %v4035, 126
    %v4440 = vpop.permute.xlu0 %4439
    %4441 = vrot.lane.b32.xlu0 %v4036, 126
    %v4442 = vpop.permute.xlu0 %4441
    %4443 = vrot.lane.b32.xlu0 %v4037, 126
    %v4444 = vpop.permute.xlu0 %4443
    %4445 = vrot.lane.b32.xlu0 %v4038, 126
    %v4446 = vpop.permute.xlu0 %4445
    %4511 = vrot.lane.b32.xlu0 %v3975, 125
    %v4512 = vpop.permute.xlu0 %4511
    %4513 = vrot.lane.b32.xlu0 %v3976, 125
    %v4514 = vpop.permute.xlu0 %4513
    %4515 = vrot.lane.b32.xlu0 %v3977, 125
    %v4516 = vpop.permute.xlu0 %4515
    %4517 = vrot.lane.b32.xlu0 %v3978, 125
    %v4518 = vpop.permute.xlu0 %4517
    %4519 = vrot.lane.b32.xlu0 %v3979, 125
    %v4520 = vpop.permute.xlu0 %4519
    %4521 = vrot.lane.b32.xlu0 %v3980, 125
    %v4522 = vpop.permute.xlu0 %4521
    %4523 = vrot.lane.b32.xlu0 %v3981, 125
    %v4524 = vpop.permute.xlu0 %4523
    %4525 = vrot.lane.b32.xlu0 %v3982, 125
    %v4526 = vpop.permute.xlu0 %4525
    %4527 = vrot.lane.b32.xlu0 %v3983, 125
    %v4528 = vpop.permute.xlu0 %4527
    %4529 = vrot.lane.b32.xlu0 %v3984, 125
    %v4530 = vpop.permute.xlu0 %4529
    %4531 = vrot.lane.b32.xlu0 %v3985, 125
    %v4532 = vpop.permute.xlu0 %4531
    %4533 = vrot.lane.b32.xlu0 %v3986, 125
    %v4534 = vpop.permute.xlu0 %4533
    %4535 = vrot.lane.b32.xlu0 %v3987, 125
    %v4536 = vpop.permute.xlu0 %4535
    %4537 = vrot.lane.b32.xlu0 %v3988, 125
    %v4538 = vpop.permute.xlu0 %4537
    %4539 = vrot.lane.b32.xlu0 %v3989, 125
    %v4540 = vpop.permute.xlu0 %4539
    %4541 = vrot.lane.b32.xlu0 %v3990, 125
    %v4542 = vpop.permute.xlu0 %4541
    %4543 = vrot.lane.b32.xlu0 %v3991, 125
    %v4544 = vpop.permute.xlu0 %4543
    %4545 = vrot.lane.b32.xlu0 %v3992, 125
    %v4546 = vpop.permute.xlu0 %4545
    %4547 = vrot.lane.b32.xlu0 %v3993, 125
    %v4548 = vpop.permute.xlu0 %4547
    %4549 = vrot.lane.b32.xlu0 %v3994, 125
    %v4550 = vpop.permute.xlu0 %4549
    %4551 = vrot.lane.b32.xlu0 %v3995, 125
    %v4552 = vpop.permute.xlu0 %4551
    %4553 = vrot.lane.b32.xlu0 %v3996, 125
    %v4554 = vpop.permute.xlu0 %4553
    %4555 = vrot.lane.b32.xlu0 %v3997, 125
    %v4556 = vpop.permute.xlu0 %4555
    %4557 = vrot.lane.b32.xlu0 %v3998, 125
    %v4558 = vpop.permute.xlu0 %4557
    %4559 = vrot.lane.b32.xlu0 %v3999, 125
    %v4560 = vpop.permute.xlu0 %4559
    %4561 = vrot.lane.b32.xlu0 %v4000, 125
    %v4562 = vpop.permute.xlu0 %4561
    %4563 = vrot.lane.b32.xlu0 %v4001, 125
    %v4564 = vpop.permute.xlu0 %4563
    %4565 = vrot.lane.b32.xlu0 %v4002, 125
    %v4566 = vpop.permute.xlu0 %4565
    %4567 = vrot.lane.b32.xlu0 %v4003, 125
    %v4568 = vpop.permute.xlu0 %4567
    %4569 = vrot.lane.b32.xlu0 %v4004, 125
    %v4570 = vpop.permute.xlu0 %4569
    %4571 = vrot.lane.b32.xlu0 %v4005, 125
    %v4572 = vpop.permute.xlu0 %4571
    %4573 = vrot.lane.b32.xlu0 %v4006, 125
    %v4574 = vpop.permute.xlu0 %4573
    %4575 = vrot.lane.b32.xlu0 %v4007, 125
    %v4576 = vpop.permute.xlu0 %4575
    %4577 = vrot.lane.b32.xlu0 %v4008, 125
    %v4578 = vpop.permute.xlu0 %4577
    %4579 = vrot.lane.b32.xlu0 %v4009, 125
    %v4580 = vpop.permute.xlu0 %4579
    %4581 = vrot.lane.b32.xlu0 %v4010, 125
    %v4582 = vpop.permute.xlu0 %4581
    %4583 = vrot.lane.b32.xlu0 %v4011, 125
    %v4584 = vpop.permute.xlu0 %4583
    %4585 = vrot.lane.b32.xlu0 %v4012, 125
    %v4586 = vpop.permute.xlu0 %4585
    %4587 = vrot.lane.b32.xlu0 %v4013, 125
    %v4588 = vpop.permute.xlu0 %4587
    %4589 = vrot.lane.b32.xlu0 %v4014, 125
    %v4590 = vpop.permute.xlu0 %4589
    %4591 = vrot.lane.b32.xlu0 %v4015, 125
    %v4592 = vpop.permute.xlu0 %4591
    %4593 = vrot.lane.b32.xlu0 %v4016, 125
    %v4594 = vpop.permute.xlu0 %4593
    %4595 = vrot.lane.b32.xlu0 %v4017, 125
    %v4596 = vpop.permute.xlu0 %4595
    %4597 = vrot.lane.b32.xlu0 %v4018, 125
    %v4598 = vpop.permute.xlu0 %4597
    %4599 = vrot.lane.b32.xlu0 %v4019, 125
    %v4600 = vpop.permute.xlu0 %4599
    %4601 = vrot.lane.b32.xlu0 %v4020, 125
    %v4602 = vpop.permute.xlu0 %4601
    %4603 = vrot.lane.b32.xlu0 %v4021, 125
    %v4604 = vpop.permute.xlu0 %4603
    %4605 = vrot.lane.b32.xlu0 %v4022, 125
    %v4606 = vpop.permute.xlu0 %4605
    %4607 = vrot.lane.b32.xlu0 %v4023, 125
    %v4608 = vpop.permute.xlu0 %4607
    %4609 = vrot.lane.b32.xlu0 %v4024, 125
    %v4610 = vpop.permute.xlu0 %4609
    %4611 = vrot.lane.b32.xlu0 %v4025, 125
    %v4612 = vpop.permute.xlu0 %4611
    %4613 = vrot.lane.b32.xlu0 %v4026, 125
    %v4614 = vpop.permute.xlu0 %4613
    %4615 = vrot.lane.b32.xlu0 %v4027, 125
    %v4616 = vpop.permute.xlu0 %4615
    %4617 = vrot.lane.b32.xlu0 %v4028, 125
    %v4618 = vpop.permute.xlu0 %4617
    %4619 = vrot.lane.b32.xlu0 %v4029, 125
    %v4620 = vpop.permute.xlu0 %4619
    %4621 = vrot.lane.b32.xlu0 %v4030, 125
    %v4622 = vpop.permute.xlu0 %4621
    %4623 = vrot.lane.b32.xlu0 %v4031, 125
    %v4624 = vpop.permute.xlu0 %4623
    %4625 = vrot.lane.b32.xlu0 %v4032, 125
    %v4626 = vpop.permute.xlu0 %4625
    %4627 = vrot.lane.b32.xlu0 %v4033, 125
    %v4628 = vpop.permute.xlu0 %4627
    %4629 = vrot.lane.b32.xlu0 %v4034, 125
    %v4630 = vpop.permute.xlu0 %4629
    %4631 = vrot.lane.b32.xlu0 %v4035, 125
    %v4632 = vpop.permute.xlu0 %4631
    %4633 = vrot.lane.b32.xlu0 %v4036, 125
    %v4634 = vpop.permute.xlu0 %4633
    %4635 = vrot.lane.b32.xlu0 %v4037, 125
    %v4636 = vpop.permute.xlu0 %4635
    %4637 = vrot.lane.b32.xlu0 %v4038, 125
    %v4638 = vpop.permute.xlu0 %4637
    %4703 = vxpose.xlu0.b32.start [1/16] %v3975, 128
    %4704 = vxpose.xlu0.b32.cont [2/16] %v3976, 128
    %4705 = vxpose.xlu0.b32.cont [3/16] %v3977, 128
    %4706 = vxpose.xlu0.b32.cont [4/16] %v3978, 128
    %4707 = vxpose.xlu0.b32.cont [5/16] %v3979, 128
    %4708 = vxpose.xlu0.b32.cont [6/16] %v3980, 128
    %4709 = vxpose.xlu0.b32.cont [7/16] %v3981, 128
    %4710 = vxpose.xlu0.b32.cont [8/16] %v3982, 128
    %4711 = vxpose.xlu0.b32.cont [9/16] %v4128, 128
    %4712 = vxpose.xlu0.b32.cont [10/16] %v4130, 128
    %4713 = vxpose.xlu0.b32.cont [11/16] %v4132, 128
    %4714 = vxpose.xlu0.b32.cont [12/16] %v4134, 128
    %4715 = vxpose.xlu0.b32.cont [13/16] %v4136, 128
    %4716 = vxpose.xlu0.b32.cont [14/16] %v4138, 128
    %4717 = vxpose.xlu0.b32.cont [15/16] %v4140, 128
    %4718 = vxpose.xlu0.b32.end [16/16] %v4142, 128
    %v4719 = vpop.trf.xlu0
    %v4720 = vpop.trf.xlu0
    %v4721 = vpop.trf.xlu0
    %v4722 = vpop.trf.xlu0
    %v4723 = vpop.trf.xlu0
    %v4724 = vpop.trf.xlu0
    %v4725 = vpop.trf.xlu0
    %v4726 = vpop.trf.xlu0
    %v4727 = vpop.trf.xlu0
    %v4728 = vpop.trf.xlu0
    %v4729 = vpop.trf.xlu0
    %v4730 = vpop.trf.xlu0
    %v4731 = vpop.trf.xlu0
    %v4732 = vpop.trf.xlu0
    %v4733 = vpop.trf.xlu0
    %v4734 = vpop.trf.xlu0
    %4735 = vxpose.xlu0.b32.start [1/16] %v4320, 128
    %4736 = vxpose.xlu0.b32.cont [2/16] %v4322, 128
    %4737 = vxpose.xlu0.b32.cont [3/16] %v4324, 128
    %4738 = vxpose.xlu0.b32.cont [4/16] %v4326, 128
    %4739 = vxpose.xlu0.b32.cont [5/16] %v4328, 128
    %4740 = vxpose.xlu0.b32.cont [6/16] %v4330, 128
    %4741 = vxpose.xlu0.b32.cont [7/16] %v4332, 128
    %4742 = vxpose.xlu0.b32.cont [8/16] %v4334, 128
    %4743 = vxpose.xlu0.b32.cont [9/16] %v4512, 128
    %4744 = vxpose.xlu0.b32.cont [10/16] %v4514, 128
    %4745 = vxpose.xlu0.b32.cont [11/16] %v4516, 128
    %4746 = vxpose.xlu0.b32.cont [12/16] %v4518, 128
    %4747 = vxpose.xlu0.b32.cont [13/16] %v4520, 128
    %4748 = vxpose.xlu0.b32.cont [14/16] %v4522, 128
    %4749 = vxpose.xlu0.b32.cont [15/16] %v4524, 128
    %4750 = vxpose.xlu0.b32.end [16/16] %v4526, 128
    %v4751 = vpop.trf.xlu0
    %v4752 = vpop.trf.xlu0
    %v4753 = vpop.trf.xlu0
    %v4754 = vpop.trf.xlu0
    %v4755 = vpop.trf.xlu0
    %v4756 = vpop.trf.xlu0
    %v4757 = vpop.trf.xlu0
    %v4758 = vpop.trf.xlu0
    %v4759 = vpop.trf.xlu0
    %v4760 = vpop.trf.xlu0
    %v4761 = vpop.trf.xlu0
    %v4762 = vpop.trf.xlu0
    %v4763 = vpop.trf.xlu0
    %v4764 = vpop.trf.xlu0
    %v4765 = vpop.trf.xlu0
    %v4766 = vpop.trf.xlu0
    %4767 = vxpose.xlu0.b32.start [1/16] %v3983, 128
    %4768 = vxpose.xlu0.b32.cont [2/16] %v3984, 128
    %4769 = vxpose.xlu0.b32.cont [3/16] %v3985, 128
    %4770 = vxpose.xlu0.b32.cont [4/16] %v3986, 128
    %4771 = vxpose.xlu0.b32.cont [5/16] %v3987, 128
    %4772 = vxpose.xlu0.b32.cont [6/16] %v3988, 128
    %4773 = vxpose.xlu0.b32.cont [7/16] %v3989, 128
    %4774 = vxpose.xlu0.b32.cont [8/16] %v3990, 128
    %4775 = vxpose.xlu0.b32.cont [9/16] %v4144, 128
    %4776 = vxpose.xlu0.b32.cont [10/16] %v4146, 128
    %4777 = vxpose.xlu0.b32.cont [11/16] %v4148, 128
    %4778 = vxpose.xlu0.b32.cont [12/16] %v4150, 128
    %4779 = vxpose.xlu0.b32.cont [13/16] %v4152, 128
    %4780 = vxpose.xlu0.b32.cont [14/16] %v4154, 128
    %4781 = vxpose.xlu0.b32.cont [15/16] %v4156, 128
    %4782 = vxpose.xlu0.b32.end [16/16] %v4158, 128
    %v4783 = vpop.trf.xlu0
    %v4784 = vpop.trf.xlu0
    %v4785 = vpop.trf.xlu0
    %v4786 = vpop.trf.xlu0
    %v4787 = vpop.trf.xlu0
    %v4788 = vpop.trf.xlu0
    %v4789 = vpop.trf.xlu0
    %v4790 = vpop.trf.xlu0
    %v4791 = vpop.trf.xlu0
    %v4792 = vpop.trf.xlu0
    %v4793 = vpop.trf.xlu0
    %v4794 = vpop.trf.xlu0
    %v4795 = vpop.trf.xlu0
    %v4796 = vpop.trf.xlu0
    %v4797 = vpop.trf.xlu0
    %v4798 = vpop.trf.xlu0
    %4799 = vxpose.xlu0.b32.start [1/16] %v4336, 128
    %4800 = vxpose.xlu0.b32.cont [2/16] %v4338, 128
    %4801 = vxpose.xlu0.b32.cont [3/16] %v4340, 128
    %4802 = vxpose.xlu0.b32.cont [4/16] %v4342, 128
    %4803 = vxpose.xlu0.b32.cont [5/16] %v4344, 128
    %4804 = vxpose.xlu0.b32.cont [6/16] %v4346, 128
    %4805 = vxpose.xlu0.b32.cont [7/16] %v4348, 128
    %4806 = vxpose.xlu0.b32.cont [8/16] %v4350, 128
    %4807 = vxpose.xlu0.b32.cont [9/16] %v4528, 128
    %4808 = vxpose.xlu0.b32.cont [10/16] %v4530, 128
    %4809 = vxpose.xlu0.b32.cont [11/16] %v4532, 128
    %4810 = vxpose.xlu0.b32.cont [12/16] %v4534, 128
    %4811 = vxpose.xlu0.b32.cont [13/16] %v4536, 128
    %4812 = vxpose.xlu0.b32.cont [14/16] %v4538, 128
    %4813 = vxpose.xlu0.b32.cont [15/16] %v4540, 128
    %4814 = vxpose.xlu0.b32.end [16/16] %v4542, 128
    %v4815 = vpop.trf.xlu0
    %v4816 = vpop.trf.xlu0
    %v4817 = vpop.trf.xlu0
    %v4818 = vpop.trf.xlu0
    %v4819 = vpop.trf.xlu0
    %v4820 = vpop.trf.xlu0
    %v4821 = vpop.trf.xlu0
    %v4822 = vpop.trf.xlu0
    %v4823 = vpop.trf.xlu0
    %v4824 = vpop.trf.xlu0
    %v4825 = vpop.trf.xlu0
    %v4826 = vpop.trf.xlu0
    %v4827 = vpop.trf.xlu0
    %v4828 = vpop.trf.xlu0
    %v4829 = vpop.trf.xlu0
    %v4830 = vpop.trf.xlu0
    %4831 = vxpose.xlu0.b32.start [1/16] %v3991, 128
    %4832 = vxpose.xlu0.b32.cont [2/16] %v3992, 128
    %4833 = vxpose.xlu0.b32.cont [3/16] %v3993, 128
    %4834 = vxpose.xlu0.b32.cont [4/16] %v3994, 128
    %4835 = vxpose.xlu0.b32.cont [5/16] %v3995, 128
    %4836 = vxpose.xlu0.b32.cont [6/16] %v3996, 128
    %4837 = vxpose.xlu0.b32.cont [7/16] %v3997, 128
    %4838 = vxpose.xlu0.b32.cont [8/16] %v3998, 128
    %4839 = vxpose.xlu0.b32.cont [9/16] %v4160, 128
    %4840 = vxpose.xlu0.b32.cont [10/16] %v4162, 128
    %4841 = vxpose.xlu0.b32.cont [11/16] %v4164, 128
    %4842 = vxpose.xlu0.b32.cont [12/16] %v4166, 128
    %4843 = vxpose.xlu0.b32.cont [13/16] %v4168, 128
    %4844 = vxpose.xlu0.b32.cont [14/16] %v4170, 128
    %4845 = vxpose.xlu0.b32.cont [15/16] %v4172, 128
    %4846 = vxpose.xlu0.b32.end [16/16] %v4174, 128
    %v4847 = vpop.trf.xlu0
    %v4848 = vpop.trf.xlu0
    %v4849 = vpop.trf.xlu0
    %v4850 = vpop.trf.xlu0
    %v4851 = vpop.trf.xlu0
    %v4852 = vpop.trf.xlu0
    %v4853 = vpop.trf.xlu0
    %v4854 = vpop.trf.xlu0
    %v4855 = vpop.trf.xlu0
    %v4856 = vpop.trf.xlu0
    %v4857 = vpop.trf.xlu0
    %v4858 = vpop.trf.xlu0
    %v4859 = vpop.trf.xlu0
    %v4860 = vpop.trf.xlu0
    %v4861 = vpop.trf.xlu0
    %v4862 = vpop.trf.xlu0
    %4863 = vxpose.xlu0.b32.start [1/16] %v4352, 128
    %4864 = vxpose.xlu0.b32.cont [2/16] %v4354, 128
    %4865 = vxpose.xlu0.b32.cont [3/16] %v4356, 128
    %4866 = vxpose.xlu0.b32.cont [4/16] %v4358, 128
    %4867 = vxpose.xlu0.b32.cont [5/16] %v4360, 128
    %4868 = vxpose.xlu0.b32.cont [6/16] %v4362, 128
    %4869 = vxpose.xlu0.b32.cont [7/16] %v4364, 128
    %4870 = vxpose.xlu0.b32.cont [8/16] %v4366, 128
    %4871 = vxpose.xlu0.b32.cont [9/16] %v4544, 128
    %4872 = vxpose.xlu0.b32.cont [10/16] %v4546, 128
    %4873 = vxpose.xlu0.b32.cont [11/16] %v4548, 128
    %4874 = vxpose.xlu0.b32.cont [12/16] %v4550, 128
    %4875 = vxpose.xlu0.b32.cont [13/16] %v4552, 128
    %4876 = vxpose.xlu0.b32.cont [14/16] %v4554, 128
    %4877 = vxpose.xlu0.b32.cont [15/16] %v4556, 128
    %4878 = vxpose.xlu0.b32.end [16/16] %v4558, 128
    %v4879 = vpop.trf.xlu0
    %v4880 = vpop.trf.xlu0
    %v4881 = vpop.trf.xlu0
    %v4882 = vpop.trf.xlu0
    %v4883 = vpop.trf.xlu0
    %v4884 = vpop.trf.xlu0
    %v4885 = vpop.trf.xlu0
    %v4886 = vpop.trf.xlu0
    %v4887 = vpop.trf.xlu0
    %v4888 = vpop.trf.xlu0
    %v4889 = vpop.trf.xlu0
    %v4890 = vpop.trf.xlu0
    %v4891 = vpop.trf.xlu0
    %v4892 = vpop.trf.xlu0
    %v4893 = vpop.trf.xlu0
    %v4894 = vpop.trf.xlu0
    %4895 = vxpose.xlu0.b32.start [1/16] %v3999, 128
    %4896 = vxpose.xlu0.b32.cont [2/16] %v4000, 128
    %4897 = vxpose.xlu0.b32.cont [3/16] %v4001, 128
    %4898 = vxpose.xlu0.b32.cont [4/16] %v4002, 128
    %4899 = vxpose.xlu0.b32.cont [5/16] %v4003, 128
    %4900 = vxpose.xlu0.b32.cont [6/16] %v4004, 128
    %4901 = vxpose.xlu0.b32.cont [7/16] %v4005, 128
    %4902 = vxpose.xlu0.b32.cont [8/16] %v4006, 128
    %4903 = vxpose.xlu0.b32.cont [9/16] %v4176, 128
    %4904 = vxpose.xlu0.b32.cont [10/16] %v4178, 128
    %4905 = vxpose.xlu0.b32.cont [11/16] %v4180, 128
    %4906 = vxpose.xlu0.b32.cont [12/16] %v4182, 128
    %4907 = vxpose.xlu0.b32.cont [13/16] %v4184, 128
    %4908 = vxpose.xlu0.b32.cont [14/16] %v4186, 128
    %4909 = vxpose.xlu0.b32.cont [15/16] %v4188, 128
    %4910 = vxpose.xlu0.b32.end [16/16] %v4190, 128
    %v4911 = vpop.trf.xlu0
    %v4912 = vpop.trf.xlu0
    %v4913 = vpop.trf.xlu0
    %v4914 = vpop.trf.xlu0
    %v4915 = vpop.trf.xlu0
    %v4916 = vpop.trf.xlu0
    %v4917 = vpop.trf.xlu0
    %v4918 = vpop.trf.xlu0
    %v4919 = vpop.trf.xlu0
    %v4920 = vpop.trf.xlu0
    %v4921 = vpop.trf.xlu0
    %v4922 = vpop.trf.xlu0
    %v4923 = vpop.trf.xlu0
    %v4924 = vpop.trf.xlu0
    %v4925 = vpop.trf.xlu0
    %v4926 = vpop.trf.xlu0
    %4927 = vxpose.xlu0.b32.start [1/16] %v4368, 128
    %4928 = vxpose.xlu0.b32.cont [2/16] %v4370, 128
    %4929 = vxpose.xlu0.b32.cont [3/16] %v4372, 128
    %4930 = vxpose.xlu0.b32.cont [4/16] %v4374, 128
    %4931 = vxpose.xlu0.b32.cont [5/16] %v4376, 128
    %4932 = vxpose.xlu0.b32.cont [6/16] %v4378, 128
    %4933 = vxpose.xlu0.b32.cont [7/16] %v4380, 128
    %4934 = vxpose.xlu0.b32.cont [8/16] %v4382, 128
    %4935 = vxpose.xlu0.b32.cont [9/16] %v4560, 128
    %4936 = vxpose.xlu0.b32.cont [10/16] %v4562, 128
    %4937 = vxpose.xlu0.b32.cont [11/16] %v4564, 128
    %4938 = vxpose.xlu0.b32.cont [12/16] %v4566, 128
    %4939 = vxpose.xlu0.b32.cont [13/16] %v4568, 128
    %4940 = vxpose.xlu0.b32.cont [14/16] %v4570, 128
    %4941 = vxpose.xlu0.b32.cont [15/16] %v4572, 128
    %4942 = vxpose.xlu0.b32.end [16/16] %v4574, 128
    %v4943 = vpop.trf.xlu0
    %v4944 = vpop.trf.xlu0
    %v4945 = vpop.trf.xlu0
    %v4946 = vpop.trf.xlu0
    %v4947 = vpop.trf.xlu0
    %v4948 = vpop.trf.xlu0
    %v4949 = vpop.trf.xlu0
    %v4950 = vpop.trf.xlu0
    %v4951 = vpop.trf.xlu0
    %v4952 = vpop.trf.xlu0
    %v4953 = vpop.trf.xlu0
    %v4954 = vpop.trf.xlu0
    %v4955 = vpop.trf.xlu0
    %v4956 = vpop.trf.xlu0
    %v4957 = vpop.trf.xlu0
    %v4958 = vpop.trf.xlu0
    %4959 = vxpose.xlu0.b32.start [1/16] %v4007, 128
    %4960 = vxpose.xlu0.b32.cont [2/16] %v4008, 128
    %4961 = vxpose.xlu0.b32.cont [3/16] %v4009, 128
    %4962 = vxpose.xlu0.b32.cont [4/16] %v4010, 128
    %4963 = vxpose.xlu0.b32.cont [5/16] %v4011, 128
    %4964 = vxpose.xlu0.b32.cont [6/16] %v4012, 128
    %4965 = vxpose.xlu0.b32.cont [7/16] %v4013, 128
    %4966 = vxpose.xlu0.b32.cont [8/16] %v4014, 128
    %4967 = vxpose.xlu0.b32.cont [9/16] %v4192, 128
    %4968 = vxpose.xlu0.b32.cont [10/16] %v4194, 128
    %4969 = vxpose.xlu0.b32.cont [11/16] %v4196, 128
    %4970 = vxpose.xlu0.b32.cont [12/16] %v4198, 128
    %4971 = vxpose.xlu0.b32.cont [13/16] %v4200, 128
    %4972 = vxpose.xlu0.b32.cont [14/16] %v4202, 128
    %4973 = vxpose.xlu0.b32.cont [15/16] %v4204, 128
    %4974 = vxpose.xlu0.b32.end [16/16] %v4206, 128
    %v4975 = vpop.trf.xlu0
    %v4976 = vpop.trf.xlu0
    %v4977 = vpop.trf.xlu0
    %v4978 = vpop.trf.xlu0
    %v4979 = vpop.trf.xlu0
    %v4980 = vpop.trf.xlu0
    %v4981 = vpop.trf.xlu0
    %v4982 = vpop.trf.xlu0
    %v4983 = vpop.trf.xlu0
    %v4984 = vpop.trf.xlu0
    %v4985 = vpop.trf.xlu0
    %v4986 = vpop.trf.xlu0
    %v4987 = vpop.trf.xlu0
    %v4988 = vpop.trf.xlu0
    %v4989 = vpop.trf.xlu0
    %v4990 = vpop.trf.xlu0
    %4991 = vxpose.xlu0.b32.start [1/16] %v4384, 128
    %4992 = vxpose.xlu0.b32.cont [2/16] %v4386, 128
    %4993 = vxpose.xlu0.b32.cont [3/16] %v4388, 128
    %4994 = vxpose.xlu0.b32.cont [4/16] %v4390, 128
    %4995 = vxpose.xlu0.b32.cont [5/16] %v4392, 128
    %4996 = vxpose.xlu0.b32.cont [6/16] %v4394, 128
    %4997 = vxpose.xlu0.b32.cont [7/16] %v4396, 128
    %4998 = vxpose.xlu0.b32.cont [8/16] %v4398, 128
    %4999 = vxpose.xlu0.b32.cont [9/16] %v4576, 128
    %5000 = vxpose.xlu0.b32.cont [10/16] %v4578, 128
    %5001 = vxpose.xlu0.b32.cont [11/16] %v4580, 128
    %5002 = vxpose.xlu0.b32.cont [12/16] %v4582, 128
    %5003 = vxpose.xlu0.b32.cont [13/16] %v4584, 128
    %5004 = vxpose.xlu0.b32.cont [14/16] %v4586, 128
    %5005 = vxpose.xlu0.b32.cont [15/16] %v4588, 128
    %5006 = vxpose.xlu0.b32.end [16/16] %v4590, 128
    %v5007 = vpop.trf.xlu0
    %v5008 = vpop.trf.xlu0
    %v5009 = vpop.trf.xlu0
    %v5010 = vpop.trf.xlu0
    %v5011 = vpop.trf.xlu0
    %v5012 = vpop.trf.xlu0
    %v5013 = vpop.trf.xlu0
    %v5014 = vpop.trf.xlu0
    %v5015 = vpop.trf.xlu0
    %v5016 = vpop.trf.xlu0
    %v5017 = vpop.trf.xlu0
    %v5018 = vpop.trf.xlu0
    %v5019 = vpop.trf.xlu0
    %v5020 = vpop.trf.xlu0
    %v5021 = vpop.trf.xlu0
    %v5022 = vpop.trf.xlu0
    %5023 = vxpose.xlu0.b32.start [1/16] %v4015, 128
    %5024 = vxpose.xlu0.b32.cont [2/16] %v4016, 128
    %5025 = vxpose.xlu0.b32.cont [3/16] %v4017, 128
    %5026 = vxpose.xlu0.b32.cont [4/16] %v4018, 128
    %5027 = vxpose.xlu0.b32.cont [5/16] %v4019, 128
    %5028 = vxpose.xlu0.b32.cont [6/16] %v4020, 128
    %5029 = vxpose.xlu0.b32.cont [7/16] %v4021, 128
    %5030 = vxpose.xlu0.b32.cont [8/16] %v4022, 128
    %5031 = vxpose.xlu0.b32.cont [9/16] %v4208, 128
    %5032 = vxpose.xlu0.b32.cont [10/16] %v4210, 128
    %5033 = vxpose.xlu0.b32.cont [11/16] %v4212, 128
    %5034 = vxpose.xlu0.b32.cont [12/16] %v4214, 128
    %5035 = vxpose.xlu0.b32.cont [13/16] %v4216, 128
    %5036 = vxpose.xlu0.b32.cont [14/16] %v4218, 128
    %5037 = vxpose.xlu0.b32.cont [15/16] %v4220, 128
    %5038 = vxpose.xlu0.b32.end [16/16] %v4222, 128
    %v5039 = vpop.trf.xlu0
    %v5040 = vpop.trf.xlu0
    %v5041 = vpop.trf.xlu0
    %v5042 = vpop.trf.xlu0
    %v5043 = vpop.trf.xlu0
    %v5044 = vpop.trf.xlu0
    %v5045 = vpop.trf.xlu0
    %v5046 = vpop.trf.xlu0
    %v5047 = vpop.trf.xlu0
    %v5048 = vpop.trf.xlu0
    %v5049 = vpop.trf.xlu0
    %v5050 = vpop.trf.xlu0
    %v5051 = vpop.trf.xlu0
    %v5052 = vpop.trf.xlu0
    %v5053 = vpop.trf.xlu0
    %v5054 = vpop.trf.xlu0
    %5055 = vxpose.xlu0.b32.start [1/16] %v4400, 128
    %5056 = vxpose.xlu0.b32.cont [2/16] %v4402, 128
    %5057 = vxpose.xlu0.b32.cont [3/16] %v4404, 128
    %5058 = vxpose.xlu0.b32.cont [4/16] %v4406, 128
    %5059 = vxpose.xlu0.b32.cont [5/16] %v4408, 128
    %5060 = vxpose.xlu0.b32.cont [6/16] %v4410, 128
    %5061 = vxpose.xlu0.b32.cont [7/16] %v4412, 128
    %5062 = vxpose.xlu0.b32.cont [8/16] %v4414, 128
    %5063 = vxpose.xlu0.b32.cont [9/16] %v4592, 128
    %5064 = vxpose.xlu0.b32.cont [10/16] %v4594, 128
    %5065 = vxpose.xlu0.b32.cont [11/16] %v4596, 128
    %5066 = vxpose.xlu0.b32.cont [12/16] %v4598, 128
    %5067 = vxpose.xlu0.b32.cont [13/16] %v4600, 128
    %5068 = vxpose.xlu0.b32.cont [14/16] %v4602, 128
    %5069 = vxpose.xlu0.b32.cont [15/16] %v4604, 128
    %5070 = vxpose.xlu0.b32.end [16/16] %v4606, 128
    %v5071 = vpop.trf.xlu0
    %v5072 = vpop.trf.xlu0
    %v5073 = vpop.trf.xlu0
    %v5074 = vpop.trf.xlu0
    %v5075 = vpop.trf.xlu0
    %v5076 = vpop.trf.xlu0
    %v5077 = vpop.trf.xlu0
    %v5078 = vpop.trf.xlu0
    %v5079 = vpop.trf.xlu0
    %v5080 = vpop.trf.xlu0
    %v5081 = vpop.trf.xlu0
    %v5082 = vpop.trf.xlu0
    %v5083 = vpop.trf.xlu0
    %v5084 = vpop.trf.xlu0
    %v5085 = vpop.trf.xlu0
    %v5086 = vpop.trf.xlu0
    %5087 = vxpose.xlu0.b32.start [1/16] %v4023, 128
    %5088 = vxpose.xlu0.b32.cont [2/16] %v4024, 128
    %5089 = vxpose.xlu0.b32.cont [3/16] %v4025, 128
    %5090 = vxpose.xlu0.b32.cont [4/16] %v4026, 128
    %5091 = vxpose.xlu0.b32.cont [5/16] %v4027, 128
    %5092 = vxpose.xlu0.b32.cont [6/16] %v4028, 128
    %5093 = vxpose.xlu0.b32.cont [7/16] %v4029, 128
    %5094 = vxpose.xlu0.b32.cont [8/16] %v4030, 128
    %5095 = vxpose.xlu0.b32.cont [9/16] %v4224, 128
    %5096 = vxpose.xlu0.b32.cont [10/16] %v4226, 128
    %5097 = vxpose.xlu0.b32.cont [11/16] %v4228, 128
    %5098 = vxpose.xlu0.b32.cont [12/16] %v4230, 128
    %5099 = vxpose.xlu0.b32.cont [13/16] %v4232, 128
    %5100 = vxpose.xlu0.b32.cont [14/16] %v4234, 128
    %5101 = vxpose.xlu0.b32.cont [15/16] %v4236, 128
    %5102 = vxpose.xlu0.b32.end [16/16] %v4238, 128
    %v5103 = vpop.trf.xlu0
    %v5104 = vpop.trf.xlu0
    %v5105 = vpop.trf.xlu0
    %v5106 = vpop.trf.xlu0
    %v5107 = vpop.trf.xlu0
    %v5108 = vpop.trf.xlu0
    %v5109 = vpop.trf.xlu0
    %v5110 = vpop.trf.xlu0
    %v5111 = vpop.trf.xlu0
    %v5112 = vpop.trf.xlu0
    %v5113 = vpop.trf.xlu0
    %v5114 = vpop.trf.xlu0
    %v5115 = vpop.trf.xlu0
    %v5116 = vpop.trf.xlu0
    %v5117 = vpop.trf.xlu0
    %v5118 = vpop.trf.xlu0
    %5119 = vxpose.xlu0.b32.start [1/16] %v4416, 128
    %5120 = vxpose.xlu0.b32.cont [2/16] %v4418, 128
    %5121 = vxpose.xlu0.b32.cont [3/16] %v4420, 128
    %5122 = vxpose.xlu0.b32.cont [4/16] %v4422, 128
    %5123 = vxpose.xlu0.b32.cont [5/16] %v4424, 128
    %5124 = vxpose.xlu0.b32.cont [6/16] %v4426, 128
    %5125 = vxpose.xlu0.b32.cont [7/16] %v4428, 128
    %5126 = vxpose.xlu0.b32.cont [8/16] %v4430, 128
    %5127 = vxpose.xlu0.b32.cont [9/16] %v4608, 128
    %5128 = vxpose.xlu0.b32.cont [10/16] %v4610, 128
    %5129 = vxpose.xlu0.b32.cont [11/16] %v4612, 128
    %5130 = vxpose.xlu0.b32.cont [12/16] %v4614, 128
    %5131 = vxpose.xlu0.b32.cont [13/16] %v4616, 128
    %5132 = vxpose.xlu0.b32.cont [14/16] %v4618, 128
    %5133 = vxpose.xlu0.b32.cont [15/16] %v4620, 128
    %5134 = vxpose.xlu0.b32.end [16/16] %v4622, 128
    %v5135 = vpop.trf.xlu0
    %v5136 = vpop.trf.xlu0
    %v5137 = vpop.trf.xlu0
    %v5138 = vpop.trf.xlu0
    %v5139 = vpop.trf.xlu0
    %v5140 = vpop.trf.xlu0
    %v5141 = vpop.trf.xlu0
    %v5142 = vpop.trf.xlu0
    %v5143 = vpop.trf.xlu0
    %v5144 = vpop.trf.xlu0
    %v5145 = vpop.trf.xlu0
    %v5146 = vpop.trf.xlu0
    %v5147 = vpop.trf.xlu0
    %v5148 = vpop.trf.xlu0
    %v5149 = vpop.trf.xlu0
    %v5150 = vpop.trf.xlu0
    %5151 = vxpose.xlu0.b32.start [1/16] %v4031, 128
    %5152 = vxpose.xlu0.b32.cont [2/16] %v4032, 128
    %5153 = vxpose.xlu0.b32.cont [3/16] %v4033, 128
    %5154 = vxpose.xlu0.b32.cont [4/16] %v4034, 128
    %5155 = vxpose.xlu0.b32.cont [5/16] %v4035, 128
    %5156 = vxpose.xlu0.b32.cont [6/16] %v4036, 128
    %5157 = vxpose.xlu0.b32.cont [7/16] %v4037, 128
    %5158 = vxpose.xlu0.b32.cont [8/16] %v4038, 128
    %5159 = vxpose.xlu0.b32.cont [9/16] %v4240, 128
    %5160 = vxpose.xlu0.b32.cont [10/16] %v4242, 128
    %5161 = vxpose.xlu0.b32.cont [11/16] %v4244, 128
    %5162 = vxpose.xlu0.b32.cont [12/16] %v4246, 128
    %5163 = vxpose.xlu0.b32.cont [13/16] %v4248, 128
    %5164 = vxpose.xlu0.b32.cont [14/16] %v4250, 128
    %5165 = vxpose.xlu0.b32.cont [15/16] %v4252, 128
    %5166 = vxpose.xlu0.b32.end [16/16] %v4254, 128
    %v5167 = vpop.trf.xlu0
    %v5168 = vpop.trf.xlu0
    %v5169 = vpop.trf.xlu0
    %v5170 = vpop.trf.xlu0
    %v5171 = vpop.trf.xlu0
    %v5172 = vpop.trf.xlu0
    %v5173 = vpop.trf.xlu0
    %v5174 = vpop.trf.xlu0
    %v5175 = vpop.trf.xlu0
    %v5176 = vpop.trf.xlu0
    %v5177 = vpop.trf.xlu0
    %v5178 = vpop.trf.xlu0
    %v5179 = vpop.trf.xlu0
    %v5180 = vpop.trf.xlu0
    %v5181 = vpop.trf.xlu0
    %v5182 = vpop.trf.xlu0
    %5183 = vxpose.xlu0.b32.start [1/16] %v4432, 128
    %5184 = vxpose.xlu0.b32.cont [2/16] %v4434, 128
    %5185 = vxpose.xlu0.b32.cont [3/16] %v4436, 128
    %5186 = vxpose.xlu0.b32.cont [4/16] %v4438, 128
    %5187 = vxpose.xlu0.b32.cont [5/16] %v4440, 128
    %5188 = vxpose.xlu0.b32.cont [6/16] %v4442, 128
    %5189 = vxpose.xlu0.b32.cont [7/16] %v4444, 128
    %5190 = vxpose.xlu0.b32.cont [8/16] %v4446, 128
    %5191 = vxpose.xlu0.b32.cont [9/16] %v4624, 128
    %5192 = vxpose.xlu0.b32.cont [10/16] %v4626, 128
    %5193 = vxpose.xlu0.b32.cont [11/16] %v4628, 128
    %5194 = vxpose.xlu0.b32.cont [12/16] %v4630, 128
    %5195 = vxpose.xlu0.b32.cont [13/16] %v4632, 128
    %5196 = vxpose.xlu0.b32.cont [14/16] %v4634, 128
    %5197 = vxpose.xlu0.b32.cont [15/16] %v4636, 128
    %5198 = vxpose.xlu0.b32.end [16/16] %v4638, 128
    %v5199 = vpop.trf.xlu0
    %v5200 = vpop.trf.xlu0
    %v5201 = vpop.trf.xlu0
    %v5202 = vpop.trf.xlu0
    %v5203 = vpop.trf.xlu0
    %v5204 = vpop.trf.xlu0
    %v5205 = vpop.trf.xlu0
    %v5206 = vpop.trf.xlu0
    %v5207 = vpop.trf.xlu0
    %v5208 = vpop.trf.xlu0
    %v5209 = vpop.trf.xlu0
    %v5210 = vpop.trf.xlu0
    %v5211 = vpop.trf.xlu0
    %v5212 = vpop.trf.xlu0
    %v5213 = vpop.trf.xlu0
    %v5214 = vpop.trf.xlu0
    %v5263 = vcombine.low %v4719, %v4751
    %v5264 = vcombine.high %v4719, %v4751
    %v5266 = vunpack.c.l.s4 1966171168
    %v5267 = vunpack.c.0.s8 %v5266
    %v5268 = vlaneseq
    %v5269 = vshrl.u32 %v5268, 7
    %v5270 = vsub.s32 %v5267, %v5269
    %v5271 = vrot.slane %v5263, %v5270
    %v5273 = vunpack.c.l.s4 1966171168
    %v5274 = vunpack.c.0.s8 %v5273
    %v5275 = vlaneseq
    %v5276 = vshrl.u32 %v5275, 7
    %v5277 = vsub.s32 %v5274, %v5276
    %v5278 = vrot.slane %v5264, %v5277
    %v5279 = vcombine.high %v5271, %v5271
    %v5280 = vcombine.high %v5278, %v5278
    %v5282 = vunpack.c.l.s4 1966171168
    %v5283 = vunpack.c.0.s8 %v5282
    %v5284 = vlaneseq
    %v5285 = vshrl.u32 %v5284, 7
    %v5286 = vsub.s32 %v5283, %v5285
    %v5287 = vrot.slane %v5271, %v5286
    %v5289 = vunpack.c.l.s4 1966171168
    %v5290 = vunpack.c.0.s8 %v5289
    %v5291 = vlaneseq
    %v5292 = vshrl.u32 %v5291, 7
    %v5293 = vsub.s32 %v5290, %v5292
    %v5294 = vrot.slane %v5278, %v5293
    %v5296 = vunpack.c.l.s4 1966171168
    %v5297 = vunpack.c.0.s8 %v5296
    %v5298 = vlaneseq
    %v5299 = vshrl.u32 %v5298, 7
    %v5300 = vsub.s32 %v5297, %v5299
    %v5301 = vrot.slane %v5279, %v5300
    %v5303 = vunpack.c.l.s4 1966171168
    %v5304 = vunpack.c.0.s8 %v5303
    %v5305 = vlaneseq
    %v5306 = vshrl.u32 %v5305, 7
    %v5307 = vsub.s32 %v5304, %v5306
    %v5308 = vrot.slane %v5280, %v5307
    %v5309 = vcombine.high %v5287, %v5287
    %v5310 = vcombine.high %v5294, %v5294
    %v5311 = vcombine.high %v5301, %v5301
    %v5312 = vcombine.high %v5308, %v5308
    %v5313 = vcombine.low %v4720, %v4752
    %v5314 = vcombine.high %v4720, %v4752
    %v5316 = vunpack.c.l.s4 1966171168
    %v5317 = vunpack.c.0.s8 %v5316
    %v5318 = vlaneseq
    %v5319 = vshrl.u32 %v5318, 7
    %v5320 = vsub.s32 %v5317, %v5319
    %v5321 = vrot.slane %v5313, %v5320
    %v5323 = vunpack.c.l.s4 1966171168
    %v5324 = vunpack.c.0.s8 %v5323
    %v5325 = vlaneseq
    %v5326 = vshrl.u32 %v5325, 7
    %v5327 = vsub.s32 %v5324, %v5326
    %v5328 = vrot.slane %v5314, %v5327
    %v5329 = vcombine.high %v5321, %v5321
    %v5330 = vcombine.high %v5328, %v5328
    %v5332 = vunpack.c.l.s4 1966171168
    %v5333 = vunpack.c.0.s8 %v5332
    %v5334 = vlaneseq
    %v5335 = vshrl.u32 %v5334, 7
    %v5336 = vsub.s32 %v5333, %v5335
    %v5337 = vrot.slane %v5321, %v5336
    %v5339 = vunpack.c.l.s4 1966171168
    %v5340 = vunpack.c.0.s8 %v5339
    %v5341 = vlaneseq
    %v5342 = vshrl.u32 %v5341, 7
    %v5343 = vsub.s32 %v5340, %v5342
    %v5344 = vrot.slane %v5328, %v5343
    %v5346 = vunpack.c.l.s4 1966171168
    %v5347 = vunpack.c.0.s8 %v5346
    %v5348 = vlaneseq
    %v5349 = vshrl.u32 %v5348, 7
    %v5350 = vsub.s32 %v5347, %v5349
    %v5351 = vrot.slane %v5329, %v5350
    %v5353 = vunpack.c.l.s4 1966171168
    %v5354 = vunpack.c.0.s8 %v5353
    %v5355 = vlaneseq
    %v5356 = vshrl.u32 %v5355, 7
    %v5357 = vsub.s32 %v5354, %v5356
    %v5358 = vrot.slane %v5330, %v5357
    %v5359 = vcombine.high %v5337, %v5337
    %v5360 = vcombine.high %v5344, %v5344
    %v5361 = vcombine.high %v5351, %v5351
    %v5362 = vcombine.high %v5358, %v5358
    %v5363 = vcombine.low %v4721, %v4753
    %v5364 = vcombine.high %v4721, %v4753
    %v5366 = vunpack.c.l.s4 1966171168
    %v5367 = vunpack.c.0.s8 %v5366
    %v5368 = vlaneseq
    %v5369 = vshrl.u32 %v5368, 7
    %v5370 = vsub.s32 %v5367, %v5369
    %v5371 = vrot.slane %v5363, %v5370
    %v5373 = vunpack.c.l.s4 1966171168
    %v5374 = vunpack.c.0.s8 %v5373
    %v5375 = vlaneseq
    %v5376 = vshrl.u32 %v5375, 7
    %v5377 = vsub.s32 %v5374, %v5376
    %v5378 = vrot.slane %v5364, %v5377
    %v5379 = vcombine.high %v5371, %v5371
    %v5380 = vcombine.high %v5378, %v5378
    %v5382 = vunpack.c.l.s4 1966171168
    %v5383 = vunpack.c.0.s8 %v5382
    %v5384 = vlaneseq
    %v5385 = vshrl.u32 %v5384, 7
    %v5386 = vsub.s32 %v5383, %v5385
    %v5387 = vrot.slane %v5371, %v5386
    %v5389 = vunpack.c.l.s4 1966171168
    %v5390 = vunpack.c.0.s8 %v5389
    %v5391 = vlaneseq
    %v5392 = vshrl.u32 %v5391, 7
    %v5393 = vsub.s32 %v5390, %v5392
    %v5394 = vrot.slane %v5378, %v5393
    %v5396 = vunpack.c.l.s4 1966171168
    %v5397 = vunpack.c.0.s8 %v5396
    %v5398 = vlaneseq
    %v5399 = vshrl.u32 %v5398, 7
    %v5400 = vsub.s32 %v5397, %v5399
    %v5401 = vrot.slane %v5379, %v5400
    %v5403 = vunpack.c.l.s4 1966171168
    %v5404 = vunpack.c.0.s8 %v5403
    %v5405 = vlaneseq
    %v5406 = vshrl.u32 %v5405, 7
    %v5407 = vsub.s32 %v5404, %v5406
    %v5408 = vrot.slane %v5380, %v5407
    %v5409 = vcombine.high %v5387, %v5387
    %v5410 = vcombine.high %v5394, %v5394
    %v5411 = vcombine.high %v5401, %v5401
    %v5412 = vcombine.low %v4783, %v4815
    %v5413 = vcombine.high %v4783, %v4815
    %v5415 = vunpack.c.l.s4 1966171168
    %v5416 = vunpack.c.0.s8 %v5415
    %v5417 = vlaneseq
    %v5418 = vshrl.u32 %v5417, 7
    %v5419 = vsub.s32 %v5416, %v5418
    %v5420 = vrot.slane %v5412, %v5419
    %v5422 = vunpack.c.l.s4 1966171168
    %v5423 = vunpack.c.0.s8 %v5422
    %v5424 = vlaneseq
    %v5425 = vshrl.u32 %v5424, 7
    %v5426 = vsub.s32 %v5423, %v5425
    %v5427 = vrot.slane %v5413, %v5426
    %v5428 = vcombine.high %v5420, %v5420
    %v5429 = vcombine.high %v5427, %v5427
    %v5431 = vunpack.c.l.s4 1966171168
    %v5432 = vunpack.c.0.s8 %v5431
    %v5433 = vlaneseq
    %v5434 = vshrl.u32 %v5433, 7
    %v5435 = vsub.s32 %v5432, %v5434
    %v5436 = vrot.slane %v5420, %v5435
    %v5438 = vunpack.c.l.s4 1966171168
    %v5439 = vunpack.c.0.s8 %v5438
    %v5440 = vlaneseq
    %v5441 = vshrl.u32 %v5440, 7
    %v5442 = vsub.s32 %v5439, %v5441
    %v5443 = vrot.slane %v5427, %v5442
    %v5445 = vunpack.c.l.s4 1966171168
    %v5446 = vunpack.c.0.s8 %v5445
    %v5447 = vlaneseq
    %v5448 = vshrl.u32 %v5447, 7
    %v5449 = vsub.s32 %v5446, %v5448
    %v5450 = vrot.slane %v5428, %v5449
    %v5452 = vunpack.c.l.s4 1966171168
    %v5453 = vunpack.c.0.s8 %v5452
    %v5454 = vlaneseq
    %v5455 = vshrl.u32 %v5454, 7
    %v5456 = vsub.s32 %v5453, %v5455
    %v5457 = vrot.slane %v5429, %v5456
    %v5458 = vcombine.high %v5436, %v5436
    %v5459 = vcombine.high %v5443, %v5443
    %v5460 = vcombine.high %v5450, %v5450
    %v5461 = vcombine.high %v5457, %v5457
    %v5462 = vcombine.low %v4784, %v4816
    %v5463 = vcombine.high %v4784, %v4816
    %v5465 = vunpack.c.l.s4 1966171168
    %v5466 = vunpack.c.0.s8 %v5465
    %v5467 = vlaneseq
    %v5468 = vshrl.u32 %v5467, 7
    %v5469 = vsub.s32 %v5466, %v5468
    %v5470 = vrot.slane %v5462, %v5469
    %v5472 = vunpack.c.l.s4 1966171168
    %v5473 = vunpack.c.0.s8 %v5472
    %v5474 = vlaneseq
    %v5475 = vshrl.u32 %v5474, 7
    %v5476 = vsub.s32 %v5473, %v5475
    %v5477 = vrot.slane %v5463, %v5476
    %v5478 = vcombine.high %v5470, %v5470
    %v5479 = vcombine.high %v5477, %v5477
    %v5481 = vunpack.c.l.s4 1966171168
    %v5482 = vunpack.c.0.s8 %v5481
    %v5483 = vlaneseq
    %v5484 = vshrl.u32 %v5483, 7
    %v5485 = vsub.s32 %v5482, %v5484
    %v5486 = vrot.slane %v5470, %v5485
    %v5488 = vunpack.c.l.s4 1966171168
    %v5489 = vunpack.c.0.s8 %v5488
    %v5490 = vlaneseq
    %v5491 = vshrl.u32 %v5490, 7
    %v5492 = vsub.s32 %v5489, %v5491
    %v5493 = vrot.slane %v5477, %v5492
    %v5495 = vunpack.c.l.s4 1966171168
    %v5496 = vunpack.c.0.s8 %v5495
    %v5497 = vlaneseq
    %v5498 = vshrl.u32 %v5497, 7
    %v5499 = vsub.s32 %v5496, %v5498
    %v5500 = vrot.slane %v5478, %v5499
    %v5502 = vunpack.c.l.s4 1966171168
    %v5503 = vunpack.c.0.s8 %v5502
    %v5504 = vlaneseq
    %v5505 = vshrl.u32 %v5504, 7
    %v5506 = vsub.s32 %v5503, %v5505
    %v5507 = vrot.slane %v5479, %v5506
    %v5508 = vcombine.high %v5486, %v5486
    %v5509 = vcombine.high %v5493, %v5493
    %v5510 = vcombine.high %v5500, %v5500
    %v5511 = vcombine.high %v5507, %v5507
    %v5512 = vcombine.low %v4785, %v4817
    %v5513 = vcombine.high %v4785, %v4817
    %v5515 = vunpack.c.l.s4 1966171168
    %v5516 = vunpack.c.0.s8 %v5515
    %v5517 = vlaneseq
    %v5518 = vshrl.u32 %v5517, 7
    %v5519 = vsub.s32 %v5516, %v5518
    %v5520 = vrot.slane %v5512, %v5519
    %v5522 = vunpack.c.l.s4 1966171168
    %v5523 = vunpack.c.0.s8 %v5522
    %v5524 = vlaneseq
    %v5525 = vshrl.u32 %v5524, 7
    %v5526 = vsub.s32 %v5523, %v5525
    %v5527 = vrot.slane %v5513, %v5526
    %v5528 = vcombine.high %v5520, %v5520
    %v5529 = vcombine.high %v5527, %v5527
    %v5531 = vunpack.c.l.s4 1966171168
    %v5532 = vunpack.c.0.s8 %v5531
    %v5533 = vlaneseq
    %v5534 = vshrl.u32 %v5533, 7
    %v5535 = vsub.s32 %v5532, %v5534
    %v5536 = vrot.slane %v5520, %v5535
    %v5538 = vunpack.c.l.s4 1966171168
    %v5539 = vunpack.c.0.s8 %v5538
    %v5540 = vlaneseq
    %v5541 = vshrl.u32 %v5540, 7
    %v5542 = vsub.s32 %v5539, %v5541
    %v5543 = vrot.slane %v5527, %v5542
    %v5545 = vunpack.c.l.s4 1966171168
    %v5546 = vunpack.c.0.s8 %v5545
    %v5547 = vlaneseq
    %v5548 = vshrl.u32 %v5547, 7
    %v5549 = vsub.s32 %v5546, %v5548
    %v5550 = vrot.slane %v5528, %v5549
    %v5552 = vunpack.c.l.s4 1966171168
    %v5553 = vunpack.c.0.s8 %v5552
    %v5554 = vlaneseq
    %v5555 = vshrl.u32 %v5554, 7
    %v5556 = vsub.s32 %v5553, %v5555
    %v5557 = vrot.slane %v5529, %v5556
    %v5558 = vcombine.high %v5536, %v5536
    %v5559 = vcombine.high %v5543, %v5543
    %v5560 = vcombine.high %v5550, %v5550
    %v5561 = vcombine.low %v4847, %v4879
    %v5562 = vcombine.high %v4847, %v4879
    %v5564 = vunpack.c.l.s4 1966171168
    %v5565 = vunpack.c.0.s8 %v5564
    %v5566 = vlaneseq
    %v5567 = vshrl.u32 %v5566, 7
    %v5568 = vsub.s32 %v5565, %v5567
    %v5569 = vrot.slane %v5561, %v5568
    %v5571 = vunpack.c.l.s4 1966171168
    %v5572 = vunpack.c.0.s8 %v5571
    %v5573 = vlaneseq
    %v5574 = vshrl.u32 %v5573, 7
    %v5575 = vsub.s32 %v5572, %v5574
    %v5576 = vrot.slane %v5562, %v5575
    %v5577 = vcombine.high %v5569, %v5569
    %v5578 = vcombine.high %v5576, %v5576
    %v5580 = vunpack.c.l.s4 1966171168
    %v5581 = vunpack.c.0.s8 %v5580
    %v5582 = vlaneseq
    %v5583 = vshrl.u32 %v5582, 7
    %v5584 = vsub.s32 %v5581, %v5583
    %v5585 = vrot.slane %v5569, %v5584
    %v5587 = vunpack.c.l.s4 1966171168
    %v5588 = vunpack.c.0.s8 %v5587
    %v5589 = vlaneseq
    %v5590 = vshrl.u32 %v5589, 7
    %v5591 = vsub.s32 %v5588, %v5590
    %v5592 = vrot.slane %v5576, %v5591
    %v5594 = vunpack.c.l.s4 1966171168
    %v5595 = vunpack.c.0.s8 %v5594
    %v5596 = vlaneseq
    %v5597 = vshrl.u32 %v5596, 7
    %v5598 = vsub.s32 %v5595, %v5597
    %v5599 = vrot.slane %v5577, %v5598
    %v5601 = vunpack.c.l.s4 1966171168
    %v5602 = vunpack.c.0.s8 %v5601
    %v5603 = vlaneseq
    %v5604 = vshrl.u32 %v5603, 7
    %v5605 = vsub.s32 %v5602, %v5604
    %v5606 = vrot.slane %v5578, %v5605
    %v5607 = vcombine.high %v5585, %v5585
    %v5608 = vcombine.high %v5592, %v5592
    %v5609 = vcombine.high %v5599, %v5599
    %v5610 = vcombine.high %v5606, %v5606
    %v5611 = vcombine.low %v4848, %v4880
    %v5612 = vcombine.high %v4848, %v4880
    %v5614 = vunpack.c.l.s4 1966171168
    %v5615 = vunpack.c.0.s8 %v5614
    %v5616 = vlaneseq
    %v5617 = vshrl.u32 %v5616, 7
    %v5618 = vsub.s32 %v5615, %v5617
    %v5619 = vrot.slane %v5611, %v5618
    %v5621 = vunpack.c.l.s4 1966171168
    %v5622 = vunpack.c.0.s8 %v5621
    %v5623 = vlaneseq
    %v5624 = vshrl.u32 %v5623, 7
    %v5625 = vsub.s32 %v5622, %v5624
    %v5626 = vrot.slane %v5612, %v5625
    %v5627 = vcombine.high %v5619, %v5619
    %v5628 = vcombine.high %v5626, %v5626
    %v5630 = vunpack.c.l.s4 1966171168
    %v5631 = vunpack.c.0.s8 %v5630
    %v5632 = vlaneseq
    %v5633 = vshrl.u32 %v5632, 7
    %v5634 = vsub.s32 %v5631, %v5633
    %v5635 = vrot.slane %v5619, %v5634
    %v5637 = vunpack.c.l.s4 1966171168
    %v5638 = vunpack.c.0.s8 %v5637
    %v5639 = vlaneseq
    %v5640 = vshrl.u32 %v5639, 7
    %v5641 = vsub.s32 %v5638, %v5640
    %v5642 = vrot.slane %v5626, %v5641
    %v5644 = vunpack.c.l.s4 1966171168
    %v5645 = vunpack.c.0.s8 %v5644
    %v5646 = vlaneseq
    %v5647 = vshrl.u32 %v5646, 7
    %v5648 = vsub.s32 %v5645, %v5647
    %v5649 = vrot.slane %v5627, %v5648
    %v5651 = vunpack.c.l.s4 1966171168
    %v5652 = vunpack.c.0.s8 %v5651
    %v5653 = vlaneseq
    %v5654 = vshrl.u32 %v5653, 7
    %v5655 = vsub.s32 %v5652, %v5654
    %v5656 = vrot.slane %v5628, %v5655
    %v5657 = vcombine.high %v5635, %v5635
    %v5658 = vcombine.high %v5642, %v5642
    %v5659 = vcombine.high %v5649, %v5649
    %v5660 = vcombine.high %v5656, %v5656
    %v5661 = vcombine.low %v4849, %v4881
    %v5662 = vcombine.high %v4849, %v4881
    %v5664 = vunpack.c.l.s4 1966171168
    %v5665 = vunpack.c.0.s8 %v5664
    %v5666 = vlaneseq
    %v5667 = vshrl.u32 %v5666, 7
    %v5668 = vsub.s32 %v5665, %v5667
    %v5669 = vrot.slane %v5661, %v5668
    %v5671 = vunpack.c.l.s4 1966171168
    %v5672 = vunpack.c.0.s8 %v5671
    %v5673 = vlaneseq
    %v5674 = vshrl.u32 %v5673, 7
    %v5675 = vsub.s32 %v5672, %v5674
    %v5676 = vrot.slane %v5662, %v5675
    %v5677 = vcombine.high %v5669, %v5669
    %v5678 = vcombine.high %v5676, %v5676
    %v5680 = vunpack.c.l.s4 1966171168
    %v5681 = vunpack.c.0.s8 %v5680
    %v5682 = vlaneseq
    %v5683 = vshrl.u32 %v5682, 7
    %v5684 = vsub.s32 %v5681, %v5683
    %v5685 = vrot.slane %v5669, %v5684
    %v5687 = vunpack.c.l.s4 1966171168
    %v5688 = vunpack.c.0.s8 %v5687
    %v5689 = vlaneseq
    %v5690 = vshrl.u32 %v5689, 7
    %v5691 = vsub.s32 %v5688, %v5690
    %v5692 = vrot.slane %v5676, %v5691
    %v5694 = vunpack.c.l.s4 1966171168
    %v5695 = vunpack.c.0.s8 %v5694
    %v5696 = vlaneseq
    %v5697 = vshrl.u32 %v5696, 7
    %v5698 = vsub.s32 %v5695, %v5697
    %v5699 = vrot.slane %v5677, %v5698
    %v5701 = vunpack.c.l.s4 1966171168
    %v5702 = vunpack.c.0.s8 %v5701
    %v5703 = vlaneseq
    %v5704 = vshrl.u32 %v5703, 7
    %v5705 = vsub.s32 %v5702, %v5704
    %v5706 = vrot.slane %v5678, %v5705
    %v5707 = vcombine.high %v5685, %v5685
    %v5708 = vcombine.high %v5692, %v5692
    %v5709 = vcombine.high %v5699, %v5699
    %v5710 = vcombine.low %v4911, %v4943
    %v5711 = vcombine.high %v4911, %v4943
    %v5713 = vunpack.c.l.s4 1966171168
    %v5714 = vunpack.c.0.s8 %v5713
    %v5715 = vlaneseq
    %v5716 = vshrl.u32 %v5715, 7
    %v5717 = vsub.s32 %v5714, %v5716
    %v5718 = vrot.slane %v5710, %v5717
    %v5720 = vunpack.c.l.s4 1966171168
    %v5721 = vunpack.c.0.s8 %v5720
    %v5722 = vlaneseq
    %v5723 = vshrl.u32 %v5722, 7
    %v5724 = vsub.s32 %v5721, %v5723
    %v5725 = vrot.slane %v5711, %v5724
    %v5726 = vcombine.high %v5718, %v5718
    %v5727 = vcombine.high %v5725, %v5725
    %v5729 = vunpack.c.l.s4 1966171168
    %v5730 = vunpack.c.0.s8 %v5729
    %v5731 = vlaneseq
    %v5732 = vshrl.u32 %v5731, 7
    %v5733 = vsub.s32 %v5730, %v5732
    %v5734 = vrot.slane %v5718, %v5733
    %v5736 = vunpack.c.l.s4 1966171168
    %v5737 = vunpack.c.0.s8 %v5736
    %v5738 = vlaneseq
    %v5739 = vshrl.u32 %v5738, 7
    %v5740 = vsub.s32 %v5737, %v5739
    %v5741 = vrot.slane %v5725, %v5740
    %v5743 = vunpack.c.l.s4 1966171168
    %v5744 = vunpack.c.0.s8 %v5743
    %v5745 = vlaneseq
    %v5746 = vshrl.u32 %v5745, 7
    %v5747 = vsub.s32 %v5744, %v5746
    %v5748 = vrot.slane %v5726, %v5747
    %v5750 = vunpack.c.l.s4 1966171168
    %v5751 = vunpack.c.0.s8 %v5750
    %v5752 = vlaneseq
    %v5753 = vshrl.u32 %v5752, 7
    %v5754 = vsub.s32 %v5751, %v5753
    %v5755 = vrot.slane %v5727, %v5754
    %v5756 = vcombine.high %v5734, %v5734
    %v5757 = vcombine.high %v5741, %v5741
    %v5758 = vcombine.high %v5748, %v5748
    %v5759 = vcombine.high %v5755, %v5755
    %v5760 = vcombine.low %v4912, %v4944
    %v5761 = vcombine.high %v4912, %v4944
    %v5763 = vunpack.c.l.s4 1966171168
    %v5764 = vunpack.c.0.s8 %v5763
    %v5765 = vlaneseq
    %v5766 = vshrl.u32 %v5765, 7
    %v5767 = vsub.s32 %v5764, %v5766
    %v5768 = vrot.slane %v5760, %v5767
    %v5770 = vunpack.c.l.s4 1966171168
    %v5771 = vunpack.c.0.s8 %v5770
    %v5772 = vlaneseq
    %v5773 = vshrl.u32 %v5772, 7
    %v5774 = vsub.s32 %v5771, %v5773
    %v5775 = vrot.slane %v5761, %v5774
    %v5776 = vcombine.high %v5768, %v5768
    %v5777 = vcombine.high %v5775, %v5775
    %v5779 = vunpack.c.l.s4 1966171168
    %v5780 = vunpack.c.0.s8 %v5779
    %v5781 = vlaneseq
    %v5782 = vshrl.u32 %v5781, 7
    %v5783 = vsub.s32 %v5780, %v5782
    %v5784 = vrot.slane %v5768, %v5783
    %v5786 = vunpack.c.l.s4 1966171168
    %v5787 = vunpack.c.0.s8 %v5786
    %v5788 = vlaneseq
    %v5789 = vshrl.u32 %v5788, 7
    %v5790 = vsub.s32 %v5787, %v5789
    %v5791 = vrot.slane %v5775, %v5790
    %v5793 = vunpack.c.l.s4 1966171168
    %v5794 = vunpack.c.0.s8 %v5793
    %v5795 = vlaneseq
    %v5796 = vshrl.u32 %v5795, 7
    %v5797 = vsub.s32 %v5794, %v5796
    %v5798 = vrot.slane %v5776, %v5797
    %v5800 = vunpack.c.l.s4 1966171168
    %v5801 = vunpack.c.0.s8 %v5800
    %v5802 = vlaneseq
    %v5803 = vshrl.u32 %v5802, 7
    %v5804 = vsub.s32 %v5801, %v5803
    %v5805 = vrot.slane %v5777, %v5804
    %v5806 = vcombine.high %v5784, %v5784
    %v5807 = vcombine.high %v5791, %v5791
    %v5808 = vcombine.high %v5798, %v5798
    %v5809 = vcombine.high %v5805, %v5805
    %v5810 = vcombine.low %v4913, %v4945
    %v5811 = vcombine.high %v4913, %v4945
    %v5813 = vunpack.c.l.s4 1966171168
    %v5814 = vunpack.c.0.s8 %v5813
    %v5815 = vlaneseq
    %v5816 = vshrl.u32 %v5815, 7
    %v5817 = vsub.s32 %v5814, %v5816
    %v5818 = vrot.slane %v5810, %v5817
    %v5820 = vunpack.c.l.s4 1966171168
    %v5821 = vunpack.c.0.s8 %v5820
    %v5822 = vlaneseq
    %v5823 = vshrl.u32 %v5822, 7
    %v5824 = vsub.s32 %v5821, %v5823
    %v5825 = vrot.slane %v5811, %v5824
    %v5826 = vcombine.high %v5818, %v5818
    %v5827 = vcombine.high %v5825, %v5825
    %v5829 = vunpack.c.l.s4 1966171168
    %v5830 = vunpack.c.0.s8 %v5829
    %v5831 = vlaneseq
    %v5832 = vshrl.u32 %v5831, 7
    %v5833 = vsub.s32 %v5830, %v5832
    %v5834 = vrot.slane %v5818, %v5833
    %v5836 = vunpack.c.l.s4 1966171168
    %v5837 = vunpack.c.0.s8 %v5836
    %v5838 = vlaneseq
    %v5839 = vshrl.u32 %v5838, 7
    %v5840 = vsub.s32 %v5837, %v5839
    %v5841 = vrot.slane %v5825, %v5840
    %v5843 = vunpack.c.l.s4 1966171168
    %v5844 = vunpack.c.0.s8 %v5843
    %v5845 = vlaneseq
    %v5846 = vshrl.u32 %v5845, 7
    %v5847 = vsub.s32 %v5844, %v5846
    %v5848 = vrot.slane %v5826, %v5847
    %v5850 = vunpack.c.l.s4 1966171168
    %v5851 = vunpack.c.0.s8 %v5850
    %v5852 = vlaneseq
    %v5853 = vshrl.u32 %v5852, 7
    %v5854 = vsub.s32 %v5851, %v5853
    %v5855 = vrot.slane %v5827, %v5854
    %v5856 = vcombine.high %v5834, %v5834
    %v5857 = vcombine.high %v5841, %v5841
    %v5858 = vcombine.high %v5848, %v5848
    %v5859 = vcombine.low %v4975, %v5007
    %v5860 = vcombine.high %v4975, %v5007
    %v5862 = vunpack.c.l.s4 1966171168
    %v5863 = vunpack.c.0.s8 %v5862
    %v5864 = vlaneseq
    %v5865 = vshrl.u32 %v5864, 7
    %v5866 = vsub.s32 %v5863, %v5865
    %v5867 = vrot.slane %v5859, %v5866
    %v5869 = vunpack.c.l.s4 1966171168
    %v5870 = vunpack.c.0.s8 %v5869
    %v5871 = vlaneseq
    %v5872 = vshrl.u32 %v5871, 7
    %v5873 = vsub.s32 %v5870, %v5872
    %v5874 = vrot.slane %v5860, %v5873
    %v5875 = vcombine.high %v5867, %v5867
    %v5876 = vcombine.high %v5874, %v5874
    %v5878 = vunpack.c.l.s4 1966171168
    %v5879 = vunpack.c.0.s8 %v5878
    %v5880 = vlaneseq
    %v5881 = vshrl.u32 %v5880, 7
    %v5882 = vsub.s32 %v5879, %v5881
    %v5883 = vrot.slane %v5867, %v5882
    %v5885 = vunpack.c.l.s4 1966171168
    %v5886 = vunpack.c.0.s8 %v5885
    %v5887 = vlaneseq
    %v5888 = vshrl.u32 %v5887, 7
    %v5889 = vsub.s32 %v5886, %v5888
    %v5890 = vrot.slane %v5874, %v5889
    %v5892 = vunpack.c.l.s4 1966171168
    %v5893 = vunpack.c.0.s8 %v5892
    %v5894 = vlaneseq
    %v5895 = vshrl.u32 %v5894, 7
    %v5896 = vsub.s32 %v5893, %v5895
    %v5897 = vrot.slane %v5875, %v5896
    %v5899 = vunpack.c.l.s4 1966171168
    %v5900 = vunpack.c.0.s8 %v5899
    %v5901 = vlaneseq
    %v5902 = vshrl.u32 %v5901, 7
    %v5903 = vsub.s32 %v5900, %v5902
    %v5904 = vrot.slane %v5876, %v5903
    %v5905 = vcombine.high %v5883, %v5883
    %v5906 = vcombine.high %v5890, %v5890
    %v5907 = vcombine.high %v5897, %v5897
    %v5908 = vcombine.high %v5904, %v5904
    %v5909 = vcombine.low %v4976, %v5008
    %v5910 = vcombine.high %v4976, %v5008
    %v5912 = vunpack.c.l.s4 1966171168
    %v5913 = vunpack.c.0.s8 %v5912
    %v5914 = vlaneseq
    %v5915 = vshrl.u32 %v5914, 7
    %v5916 = vsub.s32 %v5913, %v5915
    %v5917 = vrot.slane %v5909, %v5916
    %v5919 = vunpack.c.l.s4 1966171168
    %v5920 = vunpack.c.0.s8 %v5919
    %v5921 = vlaneseq
    %v5922 = vshrl.u32 %v5921, 7
    %v5923 = vsub.s32 %v5920, %v5922
    %v5924 = vrot.slane %v5910, %v5923
    %v5925 = vcombine.high %v5917, %v5917
    %v5926 = vcombine.high %v5924, %v5924
    %v5928 = vunpack.c.l.s4 1966171168
    %v5929 = vunpack.c.0.s8 %v5928
    %v5930 = vlaneseq
    %v5931 = vshrl.u32 %v5930, 7
    %v5932 = vsub.s32 %v5929, %v5931
    %v5933 = vrot.slane %v5917, %v5932
    %v5935 = vunpack.c.l.s4 1966171168
    %v5936 = vunpack.c.0.s8 %v5935
    %v5937 = vlaneseq
    %v5938 = vshrl.u32 %v5937, 7
    %v5939 = vsub.s32 %v5936, %v5938
    %v5940 = vrot.slane %v5924, %v5939
    %v5942 = vunpack.c.l.s4 1966171168
    %v5943 = vunpack.c.0.s8 %v5942
    %v5944 = vlaneseq
    %v5945 = vshrl.u32 %v5944, 7
    %v5946 = vsub.s32 %v5943, %v5945
    %v5947 = vrot.slane %v5925, %v5946
    %v5949 = vunpack.c.l.s4 1966171168
    %v5950 = vunpack.c.0.s8 %v5949
    %v5951 = vlaneseq
    %v5952 = vshrl.u32 %v5951, 7
    %v5953 = vsub.s32 %v5950, %v5952
    %v5954 = vrot.slane %v5926, %v5953
    %v5955 = vcombine.high %v5933, %v5933
    %v5956 = vcombine.high %v5940, %v5940
    %v5957 = vcombine.high %v5947, %v5947
    %v5958 = vcombine.high %v5954, %v5954
    %v5959 = vcombine.low %v4977, %v5009
    %v5960 = vcombine.high %v4977, %v5009
    %v5962 = vunpack.c.l.s4 1966171168
    %v5963 = vunpack.c.0.s8 %v5962
    %v5964 = vlaneseq
    %v5965 = vshrl.u32 %v5964, 7
    %v5966 = vsub.s32 %v5963, %v5965
    %v5967 = vrot.slane %v5959, %v5966
    %v5969 = vunpack.c.l.s4 1966171168
    %v5970 = vunpack.c.0.s8 %v5969
    %v5971 = vlaneseq
    %v5972 = vshrl.u32 %v5971, 7
    %v5973 = vsub.s32 %v5970, %v5972
    %v5974 = vrot.slane %v5960, %v5973
    %v5975 = vcombine.high %v5967, %v5967
    %v5976 = vcombine.high %v5974, %v5974
    %v5978 = vunpack.c.l.s4 1966171168
    %v5979 = vunpack.c.0.s8 %v5978
    %v5980 = vlaneseq
    %v5981 = vshrl.u32 %v5980, 7
    %v5982 = vsub.s32 %v5979, %v5981
    %v5983 = vrot.slane %v5967, %v5982
    %v5985 = vunpack.c.l.s4 1966171168
    %v5986 = vunpack.c.0.s8 %v5985
    %v5987 = vlaneseq
    %v5988 = vshrl.u32 %v5987, 7
    %v5989 = vsub.s32 %v5986, %v5988
    %v5990 = vrot.slane %v5974, %v5989
    %v5992 = vunpack.c.l.s4 1966171168
    %v5993 = vunpack.c.0.s8 %v5992
    %v5994 = vlaneseq
    %v5995 = vshrl.u32 %v5994, 7
    %v5996 = vsub.s32 %v5993, %v5995
    %v5997 = vrot.slane %v5975, %v5996
    %v5999 = vunpack.c.l.s4 1966171168
    %v6000 = vunpack.c.0.s8 %v5999
    %v6001 = vlaneseq
    %v6002 = vshrl.u32 %v6001, 7
    %v6003 = vsub.s32 %v6000, %v6002
    %v6004 = vrot.slane %v5976, %v6003
    %v6005 = vcombine.high %v5983, %v5983
    %v6006 = vcombine.high %v5990, %v5990
    %v6007 = vcombine.high %v5997, %v5997
    %v6008 = vcombine.low %v5039, %v5071
    %v6009 = vcombine.high %v5039, %v5071
    %v6011 = vunpack.c.l.s4 1966171168
    %v6012 = vunpack.c.0.s8 %v6011
    %v6013 = vlaneseq
    %v6014 = vshrl.u32 %v6013, 7
    %v6015 = vsub.s32 %v6012, %v6014
    %v6016 = vrot.slane %v6008, %v6015
    %v6018 = vunpack.c.l.s4 1966171168
    %v6019 = vunpack.c.0.s8 %v6018
    %v6020 = vlaneseq
    %v6021 = vshrl.u32 %v6020, 7
    %v6022 = vsub.s32 %v6019, %v6021
    %v6023 = vrot.slane %v6009, %v6022
    %v6024 = vcombine.high %v6016, %v6016
    %v6025 = vcombine.high %v6023, %v6023
    %v6027 = vunpack.c.l.s4 1966171168
    %v6028 = vunpack.c.0.s8 %v6027
    %v6029 = vlaneseq
    %v6030 = vshrl.u32 %v6029, 7
    %v6031 = vsub.s32 %v6028, %v6030
    %v6032 = vrot.slane %v6016, %v6031
    %v6034 = vunpack.c.l.s4 1966171168
    %v6035 = vunpack.c.0.s8 %v6034
    %v6036 = vlaneseq
    %v6037 = vshrl.u32 %v6036, 7
    %v6038 = vsub.s32 %v6035, %v6037
    %v6039 = vrot.slane %v6023, %v6038
    %v6041 = vunpack.c.l.s4 1966171168
    %v6042 = vunpack.c.0.s8 %v6041
    %v6043 = vlaneseq
    %v6044 = vshrl.u32 %v6043, 7
    %v6045 = vsub.s32 %v6042, %v6044
    %v6046 = vrot.slane %v6024, %v6045
    %v6048 = vunpack.c.l.s4 1966171168
    %v6049 = vunpack.c.0.s8 %v6048
    %v6050 = vlaneseq
    %v6051 = vshrl.u32 %v6050, 7
    %v6052 = vsub.s32 %v6049, %v6051
    %v6053 = vrot.slane %v6025, %v6052
    %v6054 = vcombine.high %v6032, %v6032
    %v6055 = vcombine.high %v6039, %v6039
    %v6056 = vcombine.high %v6046, %v6046
    %v6057 = vcombine.high %v6053, %v6053
    %v6058 = vcombine.low %v5040, %v5072
    %v6059 = vcombine.high %v5040, %v5072
    %v6061 = vunpack.c.l.s4 1966171168
    %v6062 = vunpack.c.0.s8 %v6061
    %v6063 = vlaneseq
    %v6064 = vshrl.u32 %v6063, 7
    %v6065 = vsub.s32 %v6062, %v6064
    %v6066 = vrot.slane %v6058, %v6065
    %v6068 = vunpack.c.l.s4 1966171168
    %v6069 = vunpack.c.0.s8 %v6068
    %v6070 = vlaneseq
    %v6071 = vshrl.u32 %v6070, 7
    %v6072 = vsub.s32 %v6069, %v6071
    %v6073 = vrot.slane %v6059, %v6072
    %v6074 = vcombine.high %v6066, %v6066
    %v6075 = vcombine.high %v6073, %v6073
    %v6077 = vunpack.c.l.s4 1966171168
    %v6078 = vunpack.c.0.s8 %v6077
    %v6079 = vlaneseq
    %v6080 = vshrl.u32 %v6079, 7
    %v6081 = vsub.s32 %v6078, %v6080
    %v6082 = vrot.slane %v6066, %v6081
    %v6084 = vunpack.c.l.s4 1966171168
    %v6085 = vunpack.c.0.s8 %v6084
    %v6086 = vlaneseq
    %v6087 = vshrl.u32 %v6086, 7
    %v6088 = vsub.s32 %v6085, %v6087
    %v6089 = vrot.slane %v6073, %v6088
    %v6091 = vunpack.c.l.s4 1966171168
    %v6092 = vunpack.c.0.s8 %v6091
    %v6093 = vlaneseq
    %v6094 = vshrl.u32 %v6093, 7
    %v6095 = vsub.s32 %v6092, %v6094
    %v6096 = vrot.slane %v6074, %v6095
    %v6098 = vunpack.c.l.s4 1966171168
    %v6099 = vunpack.c.0.s8 %v6098
    %v6100 = vlaneseq
    %v6101 = vshrl.u32 %v6100, 7
    %v6102 = vsub.s32 %v6099, %v6101
    %v6103 = vrot.slane %v6075, %v6102
    %v6104 = vcombine.high %v6082, %v6082
    %v6105 = vcombine.high %v6089, %v6089
    %v6106 = vcombine.high %v6096, %v6096
    %v6107 = vcombine.high %v6103, %v6103
    %v6108 = vcombine.low %v5041, %v5073
    %v6109 = vcombine.high %v5041, %v5073
    %v6111 = vunpack.c.l.s4 1966171168
    %v6112 = vunpack.c.0.s8 %v6111
    %v6113 = vlaneseq
    %v6114 = vshrl.u32 %v6113, 7
    %v6115 = vsub.s32 %v6112, %v6114
    %v6116 = vrot.slane %v6108, %v6115
    %v6118 = vunpack.c.l.s4 1966171168
    %v6119 = vunpack.c.0.s8 %v6118
    %v6120 = vlaneseq
    %v6121 = vshrl.u32 %v6120, 7
    %v6122 = vsub.s32 %v6119, %v6121
    %v6123 = vrot.slane %v6109, %v6122
    %v6124 = vcombine.high %v6116, %v6116
    %v6125 = vcombine.high %v6123, %v6123
    %v6127 = vunpack.c.l.s4 1966171168
    %v6128 = vunpack.c.0.s8 %v6127
    %v6129 = vlaneseq
    %v6130 = vshrl.u32 %v6129, 7
    %v6131 = vsub.s32 %v6128, %v6130
    %v6132 = vrot.slane %v6116, %v6131
    %v6134 = vunpack.c.l.s4 1966171168
    %v6135 = vunpack.c.0.s8 %v6134
    %v6136 = vlaneseq
    %v6137 = vshrl.u32 %v6136, 7
    %v6138 = vsub.s32 %v6135, %v6137
    %v6139 = vrot.slane %v6123, %v6138
    %v6141 = vunpack.c.l.s4 1966171168
    %v6142 = vunpack.c.0.s8 %v6141
    %v6143 = vlaneseq
    %v6144 = vshrl.u32 %v6143, 7
    %v6145 = vsub.s32 %v6142, %v6144
    %v6146 = vrot.slane %v6124, %v6145
    %v6148 = vunpack.c.l.s4 1966171168
    %v6149 = vunpack.c.0.s8 %v6148
    %v6150 = vlaneseq
    %v6151 = vshrl.u32 %v6150, 7
    %v6152 = vsub.s32 %v6149, %v6151
    %v6153 = vrot.slane %v6125, %v6152
    %v6154 = vcombine.high %v6132, %v6132
    %v6155 = vcombine.high %v6139, %v6139
    %v6156 = vcombine.high %v6146, %v6146
    %v6157 = vcombine.low %v5103, %v5135
    %v6158 = vcombine.high %v5103, %v5135
    %v6160 = vunpack.c.l.s4 1966171168
    %v6161 = vunpack.c.0.s8 %v6160
    %v6162 = vlaneseq
    %v6163 = vshrl.u32 %v6162, 7
    %v6164 = vsub.s32 %v6161, %v6163
    %v6165 = vrot.slane %v6157, %v6164
    %v6167 = vunpack.c.l.s4 1966171168
    %v6168 = vunpack.c.0.s8 %v6167
    %v6169 = vlaneseq
    %v6170 = vshrl.u32 %v6169, 7
    %v6171 = vsub.s32 %v6168, %v6170
    %v6172 = vrot.slane %v6158, %v6171
    %v6173 = vcombine.high %v6165, %v6165
    %v6174 = vcombine.high %v6172, %v6172
    %v6176 = vunpack.c.l.s4 1966171168
    %v6177 = vunpack.c.0.s8 %v6176
    %v6178 = vlaneseq
    %v6179 = vshrl.u32 %v6178, 7
    %v6180 = vsub.s32 %v6177, %v6179
    %v6181 = vrot.slane %v6165, %v6180
    %v6183 = vunpack.c.l.s4 1966171168
    %v6184 = vunpack.c.0.s8 %v6183
    %v6185 = vlaneseq
    %v6186 = vshrl.u32 %v6185, 7
    %v6187 = vsub.s32 %v6184, %v6186
    %v6188 = vrot.slane %v6172, %v6187
    %v6190 = vunpack.c.l.s4 1966171168
    %v6191 = vunpack.c.0.s8 %v6190
    %v6192 = vlaneseq
    %v6193 = vshrl.u32 %v6192, 7
    %v6194 = vsub.s32 %v6191, %v6193
    %v6195 = vrot.slane %v6173, %v6194
    %v6197 = vunpack.c.l.s4 1966171168
    %v6198 = vunpack.c.0.s8 %v6197
    %v6199 = vlaneseq
    %v6200 = vshrl.u32 %v6199, 7
    %v6201 = vsub.s32 %v6198, %v6200
    %v6202 = vrot.slane %v6174, %v6201
    %v6203 = vcombine.high %v6181, %v6181
    %v6204 = vcombine.high %v6188, %v6188
    %v6205 = vcombine.high %v6195, %v6195
    %v6206 = vcombine.high %v6202, %v6202
    %v6207 = vcombine.low %v5104, %v5136
    %v6208 = vcombine.high %v5104, %v5136
    %v6210 = vunpack.c.l.s4 1966171168
    %v6211 = vunpack.c.0.s8 %v6210
    %v6212 = vlaneseq
    %v6213 = vshrl.u32 %v6212, 7
    %v6214 = vsub.s32 %v6211, %v6213
    %v6215 = vrot.slane %v6207, %v6214
    %v6217 = vunpack.c.l.s4 1966171168
    %v6218 = vunpack.c.0.s8 %v6217
    %v6219 = vlaneseq
    %v6220 = vshrl.u32 %v6219, 7
    %v6221 = vsub.s32 %v6218, %v6220
    %v6222 = vrot.slane %v6208, %v6221
    %v6223 = vcombine.high %v6215, %v6215
    %v6224 = vcombine.high %v6222, %v6222
    %v6226 = vunpack.c.l.s4 1966171168
    %v6227 = vunpack.c.0.s8 %v6226
    %v6228 = vlaneseq
    %v6229 = vshrl.u32 %v6228, 7
    %v6230 = vsub.s32 %v6227, %v6229
    %v6231 = vrot.slane %v6215, %v6230
    %v6233 = vunpack.c.l.s4 1966171168
    %v6234 = vunpack.c.0.s8 %v6233
    %v6235 = vlaneseq
    %v6236 = vshrl.u32 %v6235, 7
    %v6237 = vsub.s32 %v6234, %v6236
    %v6238 = vrot.slane %v6222, %v6237
    %v6240 = vunpack.c.l.s4 1966171168
    %v6241 = vunpack.c.0.s8 %v6240
    %v6242 = vlaneseq
    %v6243 = vshrl.u32 %v6242, 7
    %v6244 = vsub.s32 %v6241, %v6243
    %v6245 = vrot.slane %v6223, %v6244
    %v6247 = vunpack.c.l.s4 1966171168
    %v6248 = vunpack.c.0.s8 %v6247
    %v6249 = vlaneseq
    %v6250 = vshrl.u32 %v6249, 7
    %v6251 = vsub.s32 %v6248, %v6250
    %v6252 = vrot.slane %v6224, %v6251
    %v6253 = vcombine.high %v6231, %v6231
    %v6254 = vcombine.high %v6238, %v6238
    %v6255 = vcombine.high %v6245, %v6245
    %v6256 = vcombine.high %v6252, %v6252
    %v6257 = vcombine.low %v5105, %v5137
    %v6258 = vcombine.high %v5105, %v5137
    %v6260 = vunpack.c.l.s4 1966171168
    %v6261 = vunpack.c.0.s8 %v6260
    %v6262 = vlaneseq
    %v6263 = vshrl.u32 %v6262, 7
    %v6264 = vsub.s32 %v6261, %v6263
    %v6265 = vrot.slane %v6257, %v6264
    %v6267 = vunpack.c.l.s4 1966171168
    %v6268 = vunpack.c.0.s8 %v6267
    %v6269 = vlaneseq
    %v6270 = vshrl.u32 %v6269, 7
    %v6271 = vsub.s32 %v6268, %v6270
    %v6272 = vrot.slane %v6258, %v6271
    %v6273 = vcombine.high %v6265, %v6265
    %v6274 = vcombine.high %v6272, %v6272
    %v6276 = vunpack.c.l.s4 1966171168
    %v6277 = vunpack.c.0.s8 %v6276
    %v6278 = vlaneseq
    %v6279 = vshrl.u32 %v6278, 7
    %v6280 = vsub.s32 %v6277, %v6279
    %v6281 = vrot.slane %v6265, %v6280
    %v6283 = vunpack.c.l.s4 1966171168
    %v6284 = vunpack.c.0.s8 %v6283
    %v6285 = vlaneseq
    %v6286 = vshrl.u32 %v6285, 7
    %v6287 = vsub.s32 %v6284, %v6286
    %v6288 = vrot.slane %v6272, %v6287
    %v6290 = vunpack.c.l.s4 1966171168
    %v6291 = vunpack.c.0.s8 %v6290
    %v6292 = vlaneseq
    %v6293 = vshrl.u32 %v6292, 7
    %v6294 = vsub.s32 %v6291, %v6293
    %v6295 = vrot.slane %v6273, %v6294
    %v6297 = vunpack.c.l.s4 1966171168
    %v6298 = vunpack.c.0.s8 %v6297
    %v6299 = vlaneseq
    %v6300 = vshrl.u32 %v6299, 7
    %v6301 = vsub.s32 %v6298, %v6300
    %v6302 = vrot.slane %v6274, %v6301
    %v6303 = vcombine.high %v6281, %v6281
    %v6304 = vcombine.high %v6288, %v6288
    %v6305 = vcombine.high %v6295, %v6295
    %v6306 = vcombine.low %v5167, %v5199
    %v6307 = vcombine.high %v5167, %v5199
    %v6309 = vunpack.c.l.s4 1966171168
    %v6310 = vunpack.c.0.s8 %v6309
    %v6311 = vlaneseq
    %v6312 = vshrl.u32 %v6311, 7
    %v6313 = vsub.s32 %v6310, %v6312
    %v6314 = vrot.slane %v6306, %v6313
    %v6316 = vunpack.c.l.s4 1966171168
    %v6317 = vunpack.c.0.s8 %v6316
    %v6318 = vlaneseq
    %v6319 = vshrl.u32 %v6318, 7
    %v6320 = vsub.s32 %v6317, %v6319
    %v6321 = vrot.slane %v6307, %v6320
    %v6322 = vcombine.high %v6314, %v6314
    %v6323 = vcombine.high %v6321, %v6321
    %v6325 = vunpack.c.l.s4 1966171168
    %v6326 = vunpack.c.0.s8 %v6325
    %v6327 = vlaneseq
    %v6328 = vshrl.u32 %v6327, 7
    %v6329 = vsub.s32 %v6326, %v6328
    %v6330 = vrot.slane %v6314, %v6329
    %v6332 = vunpack.c.l.s4 1966171168
    %v6333 = vunpack.c.0.s8 %v6332
    %v6334 = vlaneseq
    %v6335 = vshrl.u32 %v6334, 7
    %v6336 = vsub.s32 %v6333, %v6335
    %v6337 = vrot.slane %v6321, %v6336
    %v6339 = vunpack.c.l.s4 1966171168
    %v6340 = vunpack.c.0.s8 %v6339
    %v6341 = vlaneseq
    %v6342 = vshrl.u32 %v6341, 7
    %v6343 = vsub.s32 %v6340, %v6342
    %v6344 = vrot.slane %v6322, %v6343
    %v6346 = vunpack.c.l.s4 1966171168
    %v6347 = vunpack.c.0.s8 %v6346
    %v6348 = vlaneseq
    %v6349 = vshrl.u32 %v6348, 7
    %v6350 = vsub.s32 %v6347, %v6349
    %v6351 = vrot.slane %v6323, %v6350
    %v6352 = vcombine.high %v6330, %v6330
    %v6353 = vcombine.high %v6337, %v6337
    %v6354 = vcombine.high %v6344, %v6344
    %v6355 = vcombine.high %v6351, %v6351
    %v6356 = vcombine.low %v5168, %v5200
    %v6357 = vcombine.high %v5168, %v5200
    %v6359 = vunpack.c.l.s4 1966171168
    %v6360 = vunpack.c.0.s8 %v6359
    %v6361 = vlaneseq
    %v6362 = vshrl.u32 %v6361, 7
    %v6363 = vsub.s32 %v6360, %v6362
    %v6364 = vrot.slane %v6356, %v6363
    %v6366 = vunpack.c.l.s4 1966171168
    %v6367 = vunpack.c.0.s8 %v6366
    %v6368 = vlaneseq
    %v6369 = vshrl.u32 %v6368, 7
    %v6370 = vsub.s32 %v6367, %v6369
    %v6371 = vrot.slane %v6357, %v6370
    %v6372 = vcombine.high %v6364, %v6364
    %v6373 = vcombine.high %v6371, %v6371
    %v6375 = vunpack.c.l.s4 1966171168
    %v6376 = vunpack.c.0.s8 %v6375
    %v6377 = vlaneseq
    %v6378 = vshrl.u32 %v6377, 7
    %v6379 = vsub.s32 %v6376, %v6378
    %v6380 = vrot.slane %v6364, %v6379
    %v6382 = vunpack.c.l.s4 1966171168
    %v6383 = vunpack.c.0.s8 %v6382
    %v6384 = vlaneseq
    %v6385 = vshrl.u32 %v6384, 7
    %v6386 = vsub.s32 %v6383, %v6385
    %v6387 = vrot.slane %v6371, %v6386
    %v6389 = vunpack.c.l.s4 1966171168
    %v6390 = vunpack.c.0.s8 %v6389
    %v6391 = vlaneseq
    %v6392 = vshrl.u32 %v6391, 7
    %v6393 = vsub.s32 %v6390, %v6392
    %v6394 = vrot.slane %v6372, %v6393
    %v6396 = vunpack.c.l.s4 1966171168
    %v6397 = vunpack.c.0.s8 %v6396
    %v6398 = vlaneseq
    %v6399 = vshrl.u32 %v6398, 7
    %v6400 = vsub.s32 %v6397, %v6399
    %v6401 = vrot.slane %v6373, %v6400
    %v6402 = vcombine.high %v6380, %v6380
    %v6403 = vcombine.high %v6387, %v6387
    %v6404 = vcombine.high %v6394, %v6394
    %v6405 = vcombine.high %v6401, %v6401
    %v6406 = vcombine.low %v5169, %v5201
    %v6407 = vcombine.high %v5169, %v5201
    %v6409 = vunpack.c.l.s4 1966171168
    %v6410 = vunpack.c.0.s8 %v6409
    %v6411 = vlaneseq
    %v6412 = vshrl.u32 %v6411, 7
    %v6413 = vsub.s32 %v6410, %v6412
    %v6414 = vrot.slane %v6406, %v6413
    %v6416 = vunpack.c.l.s4 1966171168
    %v6417 = vunpack.c.0.s8 %v6416
    %v6418 = vlaneseq
    %v6419 = vshrl.u32 %v6418, 7
    %v6420 = vsub.s32 %v6417, %v6419
    %v6421 = vrot.slane %v6407, %v6420
    %v6422 = vcombine.high %v6414, %v6414
    %v6423 = vcombine.high %v6421, %v6421
    %v6425 = vunpack.c.l.s4 1966171168
    %v6426 = vunpack.c.0.s8 %v6425
    %v6427 = vlaneseq
    %v6428 = vshrl.u32 %v6427, 7
    %v6429 = vsub.s32 %v6426, %v6428
    %v6430 = vrot.slane %v6414, %v6429
    %v6432 = vunpack.c.l.s4 1966171168
    %v6433 = vunpack.c.0.s8 %v6432
    %v6434 = vlaneseq
    %v6435 = vshrl.u32 %v6434, 7
    %v6436 = vsub.s32 %v6433, %v6435
    %v6437 = vrot.slane %v6421, %v6436
    %v6439 = vunpack.c.l.s4 1966171168
    %v6440 = vunpack.c.0.s8 %v6439
    %v6441 = vlaneseq
    %v6442 = vshrl.u32 %v6441, 7
    %v6443 = vsub.s32 %v6440, %v6442
    %v6444 = vrot.slane %v6422, %v6443
    %v6446 = vunpack.c.l.s4 1966171168
    %v6447 = vunpack.c.0.s8 %v6446
    %v6448 = vlaneseq
    %v6449 = vshrl.u32 %v6448, 7
    %v6450 = vsub.s32 %v6447, %v6449
    %v6451 = vrot.slane %v6423, %v6450
    %v6452 = vcombine.high %v6430, %v6430
    %v6453 = vcombine.high %v6437, %v6437
    %v6454 = vcombine.high %v6444, %v6444
    %v6455 = vcombine.low %v5287, %v5301
    %v6456 = vcombine.low %v5309, %v5311
    %v6457 = vcombine.low %v5294, %v5308
    %v6458 = vcombine.low %v5310, %v5312
    %v6460 = vunpack.c.l.s4 1966171168
    %v6461 = vunpack.c.0.s8 %v6460
    %v6462 = vlaneseq
    %v6463 = vshrl.u32 %v6462, 7
    %v6464 = vsub.s32 %v6461, %v6463
    %v6465 = vrot.slane %v6455, %v6464
    %v6467 = vunpack.c.l.s4 1966171168
    %v6468 = vunpack.c.0.s8 %v6467
    %v6469 = vlaneseq
    %v6470 = vshrl.u32 %v6469, 7
    %v6471 = vsub.s32 %v6468, %v6470
    %v6472 = vrot.slane %v6456, %v6471
    %v6474 = vunpack.c.l.s4 1966171168
    %v6475 = vunpack.c.0.s8 %v6474
    %v6476 = vlaneseq
    %v6477 = vshrl.u32 %v6476, 7
    %v6478 = vsub.s32 %v6475, %v6477
    %v6479 = vrot.slane %v6457, %v6478
    %v6481 = vunpack.c.l.s4 1966171168
    %v6482 = vunpack.c.0.s8 %v6481
    %v6483 = vlaneseq
    %v6484 = vshrl.u32 %v6483, 7
    %v6485 = vsub.s32 %v6482, %v6484
    %v6486 = vrot.slane %v6458, %v6485
    %v6487 = vcombine.low %v6465, %v6472
    %v6488 = vcombine.high %v6465, %v6472
    %v6489 = vcombine.low %v6479, %v6486
    %v6490 = vcombine.high %v6479, %v6486
    %v6492 = vunpack.c.l.s4 1966171168
    %v6493 = vunpack.c.0.s8 %v6492
    %v6494 = vlaneseq
    %v6495 = vshrl.u32 %v6494, 7
    %v6496 = vsub.s32 %v6493, %v6495
    %v6497 = vrot.slane %v6487, %v6496
    %v6499 = vunpack.c.l.s4 1966171168
    %v6500 = vunpack.c.0.s8 %v6499
    %v6501 = vlaneseq
    %v6502 = vshrl.u32 %v6501, 7
    %v6503 = vsub.s32 %v6500, %v6502
    %v6504 = vrot.slane %v6488, %v6503
    %v6506 = vunpack.c.l.s4 1966171168
    %v6507 = vunpack.c.0.s8 %v6506
    %v6508 = vlaneseq
    %v6509 = vshrl.u32 %v6508, 7
    %v6510 = vsub.s32 %v6507, %v6509
    %v6511 = vrot.slane %v6489, %v6510
    %v6513 = vunpack.c.l.s4 1966171168
    %v6514 = vunpack.c.0.s8 %v6513
    %v6515 = vlaneseq
    %v6516 = vshrl.u32 %v6515, 7
    %v6517 = vsub.s32 %v6514, %v6516
    %v6518 = vrot.slane %v6490, %v6517
    %v6519 = vcombine.low %v6497, %v6511
    %v6520 = vcombine.low %v6504, %v6518
    %v6521 = vcombine.low %v5337, %v5351
    %v6522 = vcombine.low %v5359, %v5361
    %v6523 = vcombine.low %v5344, %v5358
    %v6524 = vcombine.low %v5360, %v5362
    %v6526 = vunpack.c.l.s4 1966171168
    %v6527 = vunpack.c.0.s8 %v6526
    %v6528 = vlaneseq
    %v6529 = vshrl.u32 %v6528, 7
    %v6530 = vsub.s32 %v6527, %v6529
    %v6531 = vrot.slane %v6521, %v6530
    %v6533 = vunpack.c.l.s4 1966171168
    %v6534 = vunpack.c.0.s8 %v6533
    %v6535 = vlaneseq
    %v6536 = vshrl.u32 %v6535, 7
    %v6537 = vsub.s32 %v6534, %v6536
    %v6538 = vrot.slane %v6522, %v6537
    %v6540 = vunpack.c.l.s4 1966171168
    %v6541 = vunpack.c.0.s8 %v6540
    %v6542 = vlaneseq
    %v6543 = vshrl.u32 %v6542, 7
    %v6544 = vsub.s32 %v6541, %v6543
    %v6545 = vrot.slane %v6523, %v6544
    %v6547 = vunpack.c.l.s4 1966171168
    %v6548 = vunpack.c.0.s8 %v6547
    %v6549 = vlaneseq
    %v6550 = vshrl.u32 %v6549, 7
    %v6551 = vsub.s32 %v6548, %v6550
    %v6552 = vrot.slane %v6524, %v6551
    %v6553 = vcombine.low %v6531, %v6538
    %v6554 = vcombine.high %v6531, %v6538
    %v6555 = vcombine.low %v6545, %v6552
    %v6556 = vcombine.high %v6545, %v6552
    %v6558 = vunpack.c.l.s4 1966171168
    %v6559 = vunpack.c.0.s8 %v6558
    %v6560 = vlaneseq
    %v6561 = vshrl.u32 %v6560, 7
    %v6562 = vsub.s32 %v6559, %v6561
    %v6563 = vrot.slane %v6553, %v6562
    %v6565 = vunpack.c.l.s4 1966171168
    %v6566 = vunpack.c.0.s8 %v6565
    %v6567 = vlaneseq
    %v6568 = vshrl.u32 %v6567, 7
    %v6569 = vsub.s32 %v6566, %v6568
    %v6570 = vrot.slane %v6554, %v6569
    %v6572 = vunpack.c.l.s4 1966171168
    %v6573 = vunpack.c.0.s8 %v6572
    %v6574 = vlaneseq
    %v6575 = vshrl.u32 %v6574, 7
    %v6576 = vsub.s32 %v6573, %v6575
    %v6577 = vrot.slane %v6555, %v6576
    %v6579 = vunpack.c.l.s4 1966171168
    %v6580 = vunpack.c.0.s8 %v6579
    %v6581 = vlaneseq
    %v6582 = vshrl.u32 %v6581, 7
    %v6583 = vsub.s32 %v6580, %v6582
    %v6584 = vrot.slane %v6556, %v6583
    %v6585 = vcombine.low %v6563, %v6577
    %v6586 = vcombine.low %v6570, %v6584
    %v6587 = vcombine.low %v5387, %v5401
    %v6588 = vcombine.low %v5409, %v5411
    %v6589 = vcombine.low %v5394, %v5408
    %v6590 = vcombine.low %v5410, %v5436
    %v6592 = vunpack.c.l.s4 1966171168
    %v6593 = vunpack.c.0.s8 %v6592
    %v6594 = vlaneseq
    %v6595 = vshrl.u32 %v6594, 7
    %v6596 = vsub.s32 %v6593, %v6595
    %v6597 = vrot.slane %v6587, %v6596
    %v6599 = vunpack.c.l.s4 1966171168
    %v6600 = vunpack.c.0.s8 %v6599
    %v6601 = vlaneseq
    %v6602 = vshrl.u32 %v6601, 7
    %v6603 = vsub.s32 %v6600, %v6602
    %v6604 = vrot.slane %v6588, %v6603
    %v6606 = vunpack.c.l.s4 1966171168
    %v6607 = vunpack.c.0.s8 %v6606
    %v6608 = vlaneseq
    %v6609 = vshrl.u32 %v6608, 7
    %v6610 = vsub.s32 %v6607, %v6609
    %v6611 = vrot.slane %v6589, %v6610
    %v6613 = vunpack.c.l.s4 1966171168
    %v6614 = vunpack.c.0.s8 %v6613
    %v6615 = vlaneseq
    %v6616 = vshrl.u32 %v6615, 7
    %v6617 = vsub.s32 %v6614, %v6616
    %v6618 = vrot.slane %v6590, %v6617
    %v6619 = vcombine.low %v6597, %v6604
    %v6620 = vcombine.high %v6597, %v6604
    %v6621 = vcombine.low %v6611, %v6618
    %v6622 = vcombine.high %v6611, %v6618
    %v6624 = vunpack.c.l.s4 1966171168
    %v6625 = vunpack.c.0.s8 %v6624
    %v6626 = vlaneseq
    %v6627 = vshrl.u32 %v6626, 7
    %v6628 = vsub.s32 %v6625, %v6627
    %v6629 = vrot.slane %v6619, %v6628
    %v6631 = vunpack.c.l.s4 1966171168
    %v6632 = vunpack.c.0.s8 %v6631
    %v6633 = vlaneseq
    %v6634 = vshrl.u32 %v6633, 7
    %v6635 = vsub.s32 %v6632, %v6634
    %v6636 = vrot.slane %v6620, %v6635
    %v6638 = vunpack.c.l.s4 1966171168
    %v6639 = vunpack.c.0.s8 %v6638
    %v6640 = vlaneseq
    %v6641 = vshrl.u32 %v6640, 7
    %v6642 = vsub.s32 %v6639, %v6641
    %v6643 = vrot.slane %v6621, %v6642
    %v6645 = vunpack.c.l.s4 1966171168
    %v6646 = vunpack.c.0.s8 %v6645
    %v6647 = vlaneseq
    %v6648 = vshrl.u32 %v6647, 7
    %v6649 = vsub.s32 %v6646, %v6648
    %v6650 = vrot.slane %v6622, %v6649
    %v6651 = vcombine.low %v6629, %v6643
    %v6652 = vcombine.low %v6636, %v6650
    %v6653 = vcombine.low %v5450, %v5458
    %v6654 = vcombine.low %v5460, %v5443
    %v6655 = vcombine.low %v5457, %v5459
    %v6656 = vcombine.low %v5461, %v5486
    %v6658 = vunpack.c.l.s4 1966171168
    %v6659 = vunpack.c.0.s8 %v6658
    %v6660 = vlaneseq
    %v6661 = vshrl.u32 %v6660, 7
    %v6662 = vsub.s32 %v6659, %v6661
    %v6663 = vrot.slane %v6653, %v6662
    %v6665 = vunpack.c.l.s4 1966171168
    %v6666 = vunpack.c.0.s8 %v6665
    %v6667 = vlaneseq
    %v6668 = vshrl.u32 %v6667, 7
    %v6669 = vsub.s32 %v6666, %v6668
    %v6670 = vrot.slane %v6654, %v6669
    %v6672 = vunpack.c.l.s4 1966171168
    %v6673 = vunpack.c.0.s8 %v6672
    %v6674 = vlaneseq
    %v6675 = vshrl.u32 %v6674, 7
    %v6676 = vsub.s32 %v6673, %v6675
    %v6677 = vrot.slane %v6655, %v6676
    %v6679 = vunpack.c.l.s4 1966171168
    %v6680 = vunpack.c.0.s8 %v6679
    %v6681 = vlaneseq
    %v6682 = vshrl.u32 %v6681, 7
    %v6683 = vsub.s32 %v6680, %v6682
    %v6684 = vrot.slane %v6656, %v6683
    %v6685 = vcombine.low %v6663, %v6670
    %v6686 = vcombine.high %v6663, %v6670
    %v6687 = vcombine.low %v6677, %v6684
    %v6688 = vcombine.high %v6677, %v6684
    %v6690 = vunpack.c.l.s4 1966171168
    %v6691 = vunpack.c.0.s8 %v6690
    %v6692 = vlaneseq
    %v6693 = vshrl.u32 %v6692, 7
    %v6694 = vsub.s32 %v6691, %v6693
    %v6695 = vrot.slane %v6685, %v6694
    %v6697 = vunpack.c.l.s4 1966171168
    %v6698 = vunpack.c.0.s8 %v6697
    %v6699 = vlaneseq
    %v6700 = vshrl.u32 %v6699, 7
    %v6701 = vsub.s32 %v6698, %v6700
    %v6702 = vrot.slane %v6686, %v6701
    %v6704 = vunpack.c.l.s4 1966171168
    %v6705 = vunpack.c.0.s8 %v6704
    %v6706 = vlaneseq
    %v6707 = vshrl.u32 %v6706, 7
    %v6708 = vsub.s32 %v6705, %v6707
    %v6709 = vrot.slane %v6687, %v6708
    %v6711 = vunpack.c.l.s4 1966171168
    %v6712 = vunpack.c.0.s8 %v6711
    %v6713 = vlaneseq
    %v6714 = vshrl.u32 %v6713, 7
    %v6715 = vsub.s32 %v6712, %v6714
    %v6716 = vrot.slane %v6688, %v6715
    %v6717 = vcombine.low %v6695, %v6709
    %v6718 = vcombine.low %v6702, %v6716
    %v6719 = vcombine.low %v5500, %v5508
    %v6720 = vcombine.low %v5510, %v5493
    %v6721 = vcombine.low %v5507, %v5509
    %v6722 = vcombine.low %v5511, %v5536
    %v6724 = vunpack.c.l.s4 1966171168
    %v6725 = vunpack.c.0.s8 %v6724
    %v6726 = vlaneseq
    %v6727 = vshrl.u32 %v6726, 7
    %v6728 = vsub.s32 %v6725, %v6727
    %v6729 = vrot.slane %v6719, %v6728
    %v6731 = vunpack.c.l.s4 1966171168
    %v6732 = vunpack.c.0.s8 %v6731
    %v6733 = vlaneseq
    %v6734 = vshrl.u32 %v6733, 7
    %v6735 = vsub.s32 %v6732, %v6734
    %v6736 = vrot.slane %v6720, %v6735
    %v6738 = vunpack.c.l.s4 1966171168
    %v6739 = vunpack.c.0.s8 %v6738
    %v6740 = vlaneseq
    %v6741 = vshrl.u32 %v6740, 7
    %v6742 = vsub.s32 %v6739, %v6741
    %v6743 = vrot.slane %v6721, %v6742
    %v6745 = vunpack.c.l.s4 1966171168
    %v6746 = vunpack.c.0.s8 %v6745
    %v6747 = vlaneseq
    %v6748 = vshrl.u32 %v6747, 7
    %v6749 = vsub.s32 %v6746, %v6748
    %v6750 = vrot.slane %v6722, %v6749
    %v6751 = vcombine.low %v6729, %v6736
    %v6752 = vcombine.high %v6729, %v6736
    %v6753 = vcombine.low %v6743, %v6750
    %v6754 = vcombine.high %v6743, %v6750
    %v6756 = vunpack.c.l.s4 1966171168
    %v6757 = vunpack.c.0.s8 %v6756
    %v6758 = vlaneseq
    %v6759 = vshrl.u32 %v6758, 7
    %v6760 = vsub.s32 %v6757, %v6759
    %v6761 = vrot.slane %v6751, %v6760
    %v6763 = vunpack.c.l.s4 1966171168
    %v6764 = vunpack.c.0.s8 %v6763
    %v6765 = vlaneseq
    %v6766 = vshrl.u32 %v6765, 7
    %v6767 = vsub.s32 %v6764, %v6766
    %v6768 = vrot.slane %v6752, %v6767
    %v6770 = vunpack.c.l.s4 1966171168
    %v6771 = vunpack.c.0.s8 %v6770
    %v6772 = vlaneseq
    %v6773 = vshrl.u32 %v6772, 7
    %v6774 = vsub.s32 %v6771, %v6773
    %v6775 = vrot.slane %v6753, %v6774
    %v6777 = vunpack.c.l.s4 1966171168
    %v6778 = vunpack.c.0.s8 %v6777
    %v6779 = vlaneseq
    %v6780 = vshrl.u32 %v6779, 7
    %v6781 = vsub.s32 %v6778, %v6780
    %v6782 = vrot.slane %v6754, %v6781
    %v6783 = vcombine.low %v6761, %v6775
    %v6784 = vcombine.low %v6768, %v6782
    %v6785 = vcombine.low %v5550, %v5558
    %v6786 = vcombine.low %v5560, %v5543
    %v6787 = vcombine.low %v5557, %v5559
    %v6788 = vcombine.low %v5585, %v5599
    %v6790 = vunpack.c.l.s4 1966171168
    %v6791 = vunpack.c.0.s8 %v6790
    %v6792 = vlaneseq
    %v6793 = vshrl.u32 %v6792, 7
    %v6794 = vsub.s32 %v6791, %v6793
    %v6795 = vrot.slane %v6785, %v6794
    %v6797 = vunpack.c.l.s4 1966171168
    %v6798 = vunpack.c.0.s8 %v6797
    %v6799 = vlaneseq
    %v6800 = vshrl.u32 %v6799, 7
    %v6801 = vsub.s32 %v6798, %v6800
    %v6802 = vrot.slane %v6786, %v6801
    %v6804 = vunpack.c.l.s4 1966171168
    %v6805 = vunpack.c.0.s8 %v6804
    %v6806 = vlaneseq
    %v6807 = vshrl.u32 %v6806, 7
    %v6808 = vsub.s32 %v6805, %v6807
    %v6809 = vrot.slane %v6787, %v6808
    %v6811 = vunpack.c.l.s4 1966171168
    %v6812 = vunpack.c.0.s8 %v6811
    %v6813 = vlaneseq
    %v6814 = vshrl.u32 %v6813, 7
    %v6815 = vsub.s32 %v6812, %v6814
    %v6816 = vrot.slane %v6788, %v6815
    %v6817 = vcombine.low %v6795, %v6802
    %v6818 = vcombine.high %v6795, %v6802
    %v6819 = vcombine.low %v6809, %v6816
    %v6820 = vcombine.high %v6809, %v6816
    %v6822 = vunpack.c.l.s4 1966171168
    %v6823 = vunpack.c.0.s8 %v6822
    %v6824 = vlaneseq
    %v6825 = vshrl.u32 %v6824, 7
    %v6826 = vsub.s32 %v6823, %v6825
    %v6827 = vrot.slane %v6817, %v6826
    %v6829 = vunpack.c.l.s4 1966171168
    %v6830 = vunpack.c.0.s8 %v6829
    %v6831 = vlaneseq
    %v6832 = vshrl.u32 %v6831, 7
    %v6833 = vsub.s32 %v6830, %v6832
    %v6834 = vrot.slane %v6818, %v6833
    %v6836 = vunpack.c.l.s4 1966171168
    %v6837 = vunpack.c.0.s8 %v6836
    %v6838 = vlaneseq
    %v6839 = vshrl.u32 %v6838, 7
    %v6840 = vsub.s32 %v6837, %v6839
    %v6841 = vrot.slane %v6819, %v6840
    %v6843 = vunpack.c.l.s4 1966171168
    %v6844 = vunpack.c.0.s8 %v6843
    %v6845 = vlaneseq
    %v6846 = vshrl.u32 %v6845, 7
    %v6847 = vsub.s32 %v6844, %v6846
    %v6848 = vrot.slane %v6820, %v6847
    %v6849 = vcombine.low %v6827, %v6841
    %v6850 = vcombine.low %v6834, %v6848
    %v6851 = vcombine.low %v5607, %v5609
    %v6852 = vcombine.low %v5592, %v5606
    %v6853 = vcombine.low %v5608, %v5610
    %v6854 = vcombine.low %v5635, %v5649
    %v6856 = vunpack.c.l.s4 1966171168
    %v6857 = vunpack.c.0.s8 %v6856
    %v6858 = vlaneseq
    %v6859 = vshrl.u32 %v6858, 7
    %v6860 = vsub.s32 %v6857, %v6859
    %v6861 = vrot.slane %v6851, %v6860
    %v6863 = vunpack.c.l.s4 1966171168
    %v6864 = vunpack.c.0.s8 %v6863
    %v6865 = vlaneseq
    %v6866 = vshrl.u32 %v6865, 7
    %v6867 = vsub.s32 %v6864, %v6866
    %v6868 = vrot.slane %v6852, %v6867
    %v6870 = vunpack.c.l.s4 1966171168
    %v6871 = vunpack.c.0.s8 %v6870
    %v6872 = vlaneseq
    %v6873 = vshrl.u32 %v6872, 7
    %v6874 = vsub.s32 %v6871, %v6873
    %v6875 = vrot.slane %v6853, %v6874
    %v6877 = vunpack.c.l.s4 1966171168
    %v6878 = vunpack.c.0.s8 %v6877
    %v6879 = vlaneseq
    %v6880 = vshrl.u32 %v6879, 7
    %v6881 = vsub.s32 %v6878, %v6880
    %v6882 = vrot.slane %v6854, %v6881
    %v6883 = vcombine.low %v6861, %v6868
    %v6884 = vcombine.high %v6861, %v6868
    %v6885 = vcombine.low %v6875, %v6882
    %v6886 = vcombine.high %v6875, %v6882
    %v6888 = vunpack.c.l.s4 1966171168
    %v6889 = vunpack.c.0.s8 %v6888
    %v6890 = vlaneseq
    %v6891 = vshrl.u32 %v6890, 7
    %v6892 = vsub.s32 %v6889, %v6891
    %v6893 = vrot.slane %v6883, %v6892
    %v6895 = vunpack.c.l.s4 1966171168
    %v6896 = vunpack.c.0.s8 %v6895
    %v6897 = vlaneseq
    %v6898 = vshrl.u32 %v6897, 7
    %v6899 = vsub.s32 %v6896, %v6898
    %v6900 = vrot.slane %v6884, %v6899
    %v6902 = vunpack.c.l.s4 1966171168
    %v6903 = vunpack.c.0.s8 %v6902
    %v6904 = vlaneseq
    %v6905 = vshrl.u32 %v6904, 7
    %v6906 = vsub.s32 %v6903, %v6905
    %v6907 = vrot.slane %v6885, %v6906
    %v6909 = vunpack.c.l.s4 1966171168
    %v6910 = vunpack.c.0.s8 %v6909
    %v6911 = vlaneseq
    %v6912 = vshrl.u32 %v6911, 7
    %v6913 = vsub.s32 %v6910, %v6912
    %v6914 = vrot.slane %v6886, %v6913
    %v6915 = vcombine.low %v6893, %v6907
    %v6916 = vcombine.low %v6900, %v6914
    %v6917 = vcombine.low %v5657, %v5659
    %v6918 = vcombine.low %v5642, %v5656
    %v6919 = vcombine.low %v5658, %v5660
    %v6920 = vcombine.low %v5685, %v5699
    %v6922 = vunpack.c.l.s4 1966171168
    %v6923 = vunpack.c.0.s8 %v6922
    %v6924 = vlaneseq
    %v6925 = vshrl.u32 %v6924, 7
    %v6926 = vsub.s32 %v6923, %v6925
    %v6927 = vrot.slane %v6917, %v6926
    %v6929 = vunpack.c.l.s4 1966171168
    %v6930 = vunpack.c.0.s8 %v6929
    %v6931 = vlaneseq
    %v6932 = vshrl.u32 %v6931, 7
    %v6933 = vsub.s32 %v6930, %v6932
    %v6934 = vrot.slane %v6918, %v6933
    %v6936 = vunpack.c.l.s4 1966171168
    %v6937 = vunpack.c.0.s8 %v6936
    %v6938 = vlaneseq
    %v6939 = vshrl.u32 %v6938, 7
    %v6940 = vsub.s32 %v6937, %v6939
    %v6941 = vrot.slane %v6919, %v6940
    %v6943 = vunpack.c.l.s4 1966171168
    %v6944 = vunpack.c.0.s8 %v6943
    %v6945 = vlaneseq
    %v6946 = vshrl.u32 %v6945, 7
    %v6947 = vsub.s32 %v6944, %v6946
    %v6948 = vrot.slane %v6920, %v6947
    %v6949 = vcombine.low %v6927, %v6934
    %v6950 = vcombine.high %v6927, %v6934
    %v6951 = vcombine.low %v6941, %v6948
    %v6952 = vcombine.high %v6941, %v6948
    %v6954 = vunpack.c.l.s4 1966171168
    %v6955 = vunpack.c.0.s8 %v6954
    %v6956 = vlaneseq
    %v6957 = vshrl.u32 %v6956, 7
    %v6958 = vsub.s32 %v6955, %v6957
    %v6959 = vrot.slane %v6949, %v6958
    %v6961 = vunpack.c.l.s4 1966171168
    %v6962 = vunpack.c.0.s8 %v6961
    %v6963 = vlaneseq
    %v6964 = vshrl.u32 %v6963, 7
    %v6965 = vsub.s32 %v6962, %v6964
    %v6966 = vrot.slane %v6950, %v6965
    %v6968 = vunpack.c.l.s4 1966171168
    %v6969 = vunpack.c.0.s8 %v6968
    %v6970 = vlaneseq
    %v6971 = vshrl.u32 %v6970, 7
    %v6972 = vsub.s32 %v6969, %v6971
    %v6973 = vrot.slane %v6951, %v6972
    %v6975 = vunpack.c.l.s4 1966171168
    %v6976 = vunpack.c.0.s8 %v6975
    %v6977 = vlaneseq
    %v6978 = vshrl.u32 %v6977, 7
    %v6979 = vsub.s32 %v6976, %v6978
    %v6980 = vrot.slane %v6952, %v6979
    %v6981 = vcombine.low %v6959, %v6973
    %v6982 = vcombine.low %v6966, %v6980
    %v6983 = vcombine.low %v5707, %v5709
    %v6984 = vcombine.low %v5692, %v5706
    %v6985 = vcombine.low %v5708, %v5734
    %v6986 = vcombine.low %v5748, %v5756
    %v6988 = vunpack.c.l.s4 1966171168
    %v6989 = vunpack.c.0.s8 %v6988
    %v6990 = vlaneseq
    %v6991 = vshrl.u32 %v6990, 7
    %v6992 = vsub.s32 %v6989, %v6991
    %v6993 = vrot.slane %v6983, %v6992
    %v6995 = vunpack.c.l.s4 1966171168
    %v6996 = vunpack.c.0.s8 %v6995
    %v6997 = vlaneseq
    %v6998 = vshrl.u32 %v6997, 7
    %v6999 = vsub.s32 %v6996, %v6998
    %v7000 = vrot.slane %v6984, %v6999
    %v7002 = vunpack.c.l.s4 1966171168
    %v7003 = vunpack.c.0.s8 %v7002
    %v7004 = vlaneseq
    %v7005 = vshrl.u32 %v7004, 7
    %v7006 = vsub.s32 %v7003, %v7005
    %v7007 = vrot.slane %v6985, %v7006
    %v7009 = vunpack.c.l.s4 1966171168
    %v7010 = vunpack.c.0.s8 %v7009
    %v7011 = vlaneseq
    %v7012 = vshrl.u32 %v7011, 7
    %v7013 = vsub.s32 %v7010, %v7012
    %v7014 = vrot.slane %v6986, %v7013
    %v7015 = vcombine.low %v6993, %v7000
    %v7016 = vcombine.high %v6993, %v7000
    %v7017 = vcombine.low %v7007, %v7014
    %v7018 = vcombine.high %v7007, %v7014
    %v7020 = vunpack.c.l.s4 1966171168
    %v7021 = vunpack.c.0.s8 %v7020
    %v7022 = vlaneseq
    %v7023 = vshrl.u32 %v7022, 7
    %v7024 = vsub.s32 %v7021, %v7023
    %v7025 = vrot.slane %v7015, %v7024
    %v7027 = vunpack.c.l.s4 1966171168
    %v7028 = vunpack.c.0.s8 %v7027
    %v7029 = vlaneseq
    %v7030 = vshrl.u32 %v7029, 7
    %v7031 = vsub.s32 %v7028, %v7030
    %v7032 = vrot.slane %v7016, %v7031
    %v7034 = vunpack.c.l.s4 1966171168
    %v7035 = vunpack.c.0.s8 %v7034
    %v7036 = vlaneseq
    %v7037 = vshrl.u32 %v7036, 7
    %v7038 = vsub.s32 %v7035, %v7037
    %v7039 = vrot.slane %v7017, %v7038
    %v7041 = vunpack.c.l.s4 1966171168
    %v7042 = vunpack.c.0.s8 %v7041
    %v7043 = vlaneseq
    %v7044 = vshrl.u32 %v7043, 7
    %v7045 = vsub.s32 %v7042, %v7044
    %v7046 = vrot.slane %v7018, %v7045
    %v7047 = vcombine.low %v7025, %v7039
    %v7048 = vcombine.low %v7032, %v7046
    %v7049 = vcombine.low %v5758, %v5741
    %v7050 = vcombine.low %v5755, %v5757
    %v7051 = vcombine.low %v5759, %v5784
    %v7052 = vcombine.low %v5798, %v5806
    %v7054 = vunpack.c.l.s4 1966171168
    %v7055 = vunpack.c.0.s8 %v7054
    %v7056 = vlaneseq
    %v7057 = vshrl.u32 %v7056, 7
    %v7058 = vsub.s32 %v7055, %v7057
    %v7059 = vrot.slane %v7049, %v7058
    %v7061 = vunpack.c.l.s4 1966171168
    %v7062 = vunpack.c.0.s8 %v7061
    %v7063 = vlaneseq
    %v7064 = vshrl.u32 %v7063, 7
    %v7065 = vsub.s32 %v7062, %v7064
    %v7066 = vrot.slane %v7050, %v7065
    %v7068 = vunpack.c.l.s4 1966171168
    %v7069 = vunpack.c.0.s8 %v7068
    %v7070 = vlaneseq
    %v7071 = vshrl.u32 %v7070, 7
    %v7072 = vsub.s32 %v7069, %v7071
    %v7073 = vrot.slane %v7051, %v7072
    %v7075 = vunpack.c.l.s4 1966171168
    %v7076 = vunpack.c.0.s8 %v7075
    %v7077 = vlaneseq
    %v7078 = vshrl.u32 %v7077, 7
    %v7079 = vsub.s32 %v7076, %v7078
    %v7080 = vrot.slane %v7052, %v7079
    %v7081 = vcombine.low %v7059, %v7066
    %v7082 = vcombine.high %v7059, %v7066
    %v7083 = vcombine.low %v7073, %v7080
    %v7084 = vcombine.high %v7073, %v7080
    %v7086 = vunpack.c.l.s4 1966171168
    %v7087 = vunpack.c.0.s8 %v7086
    %v7088 = vlaneseq
    %v7089 = vshrl.u32 %v7088, 7
    %v7090 = vsub.s32 %v7087, %v7089
    %v7091 = vrot.slane %v7081, %v7090
    %v7093 = vunpack.c.l.s4 1966171168
    %v7094 = vunpack.c.0.s8 %v7093
    %v7095 = vlaneseq
    %v7096 = vshrl.u32 %v7095, 7
    %v7097 = vsub.s32 %v7094, %v7096
    %v7098 = vrot.slane %v7082, %v7097
    %v7100 = vunpack.c.l.s4 1966171168
    %v7101 = vunpack.c.0.s8 %v7100
    %v7102 = vlaneseq
    %v7103 = vshrl.u32 %v7102, 7
    %v7104 = vsub.s32 %v7101, %v7103
    %v7105 = vrot.slane %v7083, %v7104
    %v7107 = vunpack.c.l.s4 1966171168
    %v7108 = vunpack.c.0.s8 %v7107
    %v7109 = vlaneseq
    %v7110 = vshrl.u32 %v7109, 7
    %v7111 = vsub.s32 %v7108, %v7110
    %v7112 = vrot.slane %v7084, %v7111
    %v7113 = vcombine.low %v7091, %v7105
    %v7114 = vcombine.low %v7098, %v7112
    %v7115 = vcombine.low %v5808, %v5791
    %v7116 = vcombine.low %v5805, %v5807
    %v7117 = vcombine.low %v5809, %v5834
    %v7118 = vcombine.low %v5848, %v5856
    %v7120 = vunpack.c.l.s4 1966171168
    %v7121 = vunpack.c.0.s8 %v7120
    %v7122 = vlaneseq
    %v7123 = vshrl.u32 %v7122, 7
    %v7124 = vsub.s32 %v7121, %v7123
    %v7125 = vrot.slane %v7115, %v7124
    %v7127 = vunpack.c.l.s4 1966171168
    %v7128 = vunpack.c.0.s8 %v7127
    %v7129 = vlaneseq
    %v7130 = vshrl.u32 %v7129, 7
    %v7131 = vsub.s32 %v7128, %v7130
    %v7132 = vrot.slane %v7116, %v7131
    %v7134 = vunpack.c.l.s4 1966171168
    %v7135 = vunpack.c.0.s8 %v7134
    %v7136 = vlaneseq
    %v7137 = vshrl.u32 %v7136, 7
    %v7138 = vsub.s32 %v7135, %v7137
    %v7139 = vrot.slane %v7117, %v7138
    %v7141 = vunpack.c.l.s4 1966171168
    %v7142 = vunpack.c.0.s8 %v7141
    %v7143 = vlaneseq
    %v7144 = vshrl.u32 %v7143, 7
    %v7145 = vsub.s32 %v7142, %v7144
    %v7146 = vrot.slane %v7118, %v7145
    %v7147 = vcombine.low %v7125, %v7132
    %v7148 = vcombine.high %v7125, %v7132
    %v7149 = vcombine.low %v7139, %v7146
    %v7150 = vcombine.high %v7139, %v7146
    %v7152 = vunpack.c.l.s4 1966171168
    %v7153 = vunpack.c.0.s8 %v7152
    %v7154 = vlaneseq
    %v7155 = vshrl.u32 %v7154, 7
    %v7156 = vsub.s32 %v7153, %v7155
    %v7157 = vrot.slane %v7147, %v7156
    %v7159 = vunpack.c.l.s4 1966171168
    %v7160 = vunpack.c.0.s8 %v7159
    %v7161 = vlaneseq
    %v7162 = vshrl.u32 %v7161, 7
    %v7163 = vsub.s32 %v7160, %v7162
    %v7164 = vrot.slane %v7148, %v7163
    %v7166 = vunpack.c.l.s4 1966171168
    %v7167 = vunpack.c.0.s8 %v7166
    %v7168 = vlaneseq
    %v7169 = vshrl.u32 %v7168, 7
    %v7170 = vsub.s32 %v7167, %v7169
    %v7171 = vrot.slane %v7149, %v7170
    %v7173 = vunpack.c.l.s4 1966171168
    %v7174 = vunpack.c.0.s8 %v7173
    %v7175 = vlaneseq
    %v7176 = vshrl.u32 %v7175, 7
    %v7177 = vsub.s32 %v7174, %v7176
    %v7178 = vrot.slane %v7150, %v7177
    %v7179 = vcombine.low %v7157, %v7171
    %v7180 = vcombine.low %v7164, %v7178
    %v7181 = vcombine.low %v5858, %v5841
    %v7182 = vcombine.low %v5855, %v5857
    %v7183 = vcombine.low %v5883, %v5897
    %v7184 = vcombine.low %v5905, %v5907
    %v7186 = vunpack.c.l.s4 1966171168
    %v7187 = vunpack.c.0.s8 %v7186
    %v7188 = vlaneseq
    %v7189 = vshrl.u32 %v7188, 7
    %v7190 = vsub.s32 %v7187, %v7189
    %v7191 = vrot.slane %v7181, %v7190
    %v7193 = vunpack.c.l.s4 1966171168
    %v7194 = vunpack.c.0.s8 %v7193
    %v7195 = vlaneseq
    %v7196 = vshrl.u32 %v7195, 7
    %v7197 = vsub.s32 %v7194, %v7196
    %v7198 = vrot.slane %v7182, %v7197
    %v7200 = vunpack.c.l.s4 1966171168
    %v7201 = vunpack.c.0.s8 %v7200
    %v7202 = vlaneseq
    %v7203 = vshrl.u32 %v7202, 7
    %v7204 = vsub.s32 %v7201, %v7203
    %v7205 = vrot.slane %v7183, %v7204
    %v7207 = vunpack.c.l.s4 1966171168
    %v7208 = vunpack.c.0.s8 %v7207
    %v7209 = vlaneseq
    %v7210 = vshrl.u32 %v7209, 7
    %v7211 = vsub.s32 %v7208, %v7210
    %v7212 = vrot.slane %v7184, %v7211
    %v7213 = vcombine.low %v7191, %v7198
    %v7214 = vcombine.high %v7191, %v7198
    %v7215 = vcombine.low %v7205, %v7212
    %v7216 = vcombine.high %v7205, %v7212
    %v7218 = vunpack.c.l.s4 1966171168
    %v7219 = vunpack.c.0.s8 %v7218
    %v7220 = vlaneseq
    %v7221 = vshrl.u32 %v7220, 7
    %v7222 = vsub.s32 %v7219, %v7221
    %v7223 = vrot.slane %v7213, %v7222
    %v7225 = vunpack.c.l.s4 1966171168
    %v7226 = vunpack.c.0.s8 %v7225
    %v7227 = vlaneseq
    %v7228 = vshrl.u32 %v7227, 7
    %v7229 = vsub.s32 %v7226, %v7228
    %v7230 = vrot.slane %v7214, %v7229
    %v7232 = vunpack.c.l.s4 1966171168
    %v7233 = vunpack.c.0.s8 %v7232
    %v7234 = vlaneseq
    %v7235 = vshrl.u32 %v7234, 7
    %v7236 = vsub.s32 %v7233, %v7235
    %v7237 = vrot.slane %v7215, %v7236
    %v7239 = vunpack.c.l.s4 1966171168
    %v7240 = vunpack.c.0.s8 %v7239
    %v7241 = vlaneseq
    %v7242 = vshrl.u32 %v7241, 7
    %v7243 = vsub.s32 %v7240, %v7242
    %v7244 = vrot.slane %v7216, %v7243
    %v7245 = vcombine.low %v7223, %v7237
    %v7246 = vcombine.low %v7230, %v7244
    %v7247 = vcombine.low %v5890, %v5904
    %v7248 = vcombine.low %v5906, %v5908
    %v7249 = vcombine.low %v5933, %v5947
    %v7250 = vcombine.low %v5955, %v5957
    %v7252 = vunpack.c.l.s4 1966171168
    %v7253 = vunpack.c.0.s8 %v7252
    %v7254 = vlaneseq
    %v7255 = vshrl.u32 %v7254, 7
    %v7256 = vsub.s32 %v7253, %v7255
    %v7257 = vrot.slane %v7247, %v7256
    %v7259 = vunpack.c.l.s4 1966171168
    %v7260 = vunpack.c.0.s8 %v7259
    %v7261 = vlaneseq
    %v7262 = vshrl.u32 %v7261, 7
    %v7263 = vsub.s32 %v7260, %v7262
    %v7264 = vrot.slane %v7248, %v7263
    %v7266 = vunpack.c.l.s4 1966171168
    %v7267 = vunpack.c.0.s8 %v7266
    %v7268 = vlaneseq
    %v7269 = vshrl.u32 %v7268, 7
    %v7270 = vsub.s32 %v7267, %v7269
    %v7271 = vrot.slane %v7249, %v7270
    %v7273 = vunpack.c.l.s4 1966171168
    %v7274 = vunpack.c.0.s8 %v7273
    %v7275 = vlaneseq
    %v7276 = vshrl.u32 %v7275, 7
    %v7277 = vsub.s32 %v7274, %v7276
    %v7278 = vrot.slane %v7250, %v7277
    %v7279 = vcombine.low %v7257, %v7264
    %v7280 = vcombine.high %v7257, %v7264
    %v7281 = vcombine.low %v7271, %v7278
    %v7282 = vcombine.high %v7271, %v7278
    %v7284 = vunpack.c.l.s4 1966171168
    %v7285 = vunpack.c.0.s8 %v7284
    %v7286 = vlaneseq
    %v7287 = vshrl.u32 %v7286, 7
    %v7288 = vsub.s32 %v7285, %v7287
    %v7289 = vrot.slane %v7279, %v7288
    %v7291 = vunpack.c.l.s4 1966171168
    %v7292 = vunpack.c.0.s8 %v7291
    %v7293 = vlaneseq
    %v7294 = vshrl.u32 %v7293, 7
    %v7295 = vsub.s32 %v7292, %v7294
    %v7296 = vrot.slane %v7280, %v7295
    %v7298 = vunpack.c.l.s4 1966171168
    %v7299 = vunpack.c.0.s8 %v7298
    %v7300 = vlaneseq
    %v7301 = vshrl.u32 %v7300, 7
    %v7302 = vsub.s32 %v7299, %v7301
    %v7303 = vrot.slane %v7281, %v7302
    %v7305 = vunpack.c.l.s4 1966171168
    %v7306 = vunpack.c.0.s8 %v7305
    %v7307 = vlaneseq
    %v7308 = vshrl.u32 %v7307, 7
    %v7309 = vsub.s32 %v7306, %v7308
    %v7310 = vrot.slane %v7282, %v7309
    %v7311 = vcombine.low %v7289, %v7303
    %v7312 = vcombine.low %v7296, %v7310
    %v7313 = vcombine.low %v5940, %v5954
    %v7314 = vcombine.low %v5956, %v5958
    %v7315 = vcombine.low %v5983, %v5997
    %v7316 = vcombine.low %v6005, %v6007
    %v7318 = vunpack.c.l.s4 1966171168
    %v7319 = vunpack.c.0.s8 %v7318
    %v7320 = vlaneseq
    %v7321 = vshrl.u32 %v7320, 7
    %v7322 = vsub.s32 %v7319, %v7321
    %v7323 = vrot.slane %v7313, %v7322
    %v7325 = vunpack.c.l.s4 1966171168
    %v7326 = vunpack.c.0.s8 %v7325
    %v7327 = vlaneseq
    %v7328 = vshrl.u32 %v7327, 7
    %v7329 = vsub.s32 %v7326, %v7328
    %v7330 = vrot.slane %v7314, %v7329
    %v7332 = vunpack.c.l.s4 1966171168
    %v7333 = vunpack.c.0.s8 %v7332
    %v7334 = vlaneseq
    %v7335 = vshrl.u32 %v7334, 7
    %v7336 = vsub.s32 %v7333, %v7335
    %v7337 = vrot.slane %v7315, %v7336
    %v7339 = vunpack.c.l.s4 1966171168
    %v7340 = vunpack.c.0.s8 %v7339
    %v7341 = vlaneseq
    %v7342 = vshrl.u32 %v7341, 7
    %v7343 = vsub.s32 %v7340, %v7342
    %v7344 = vrot.slane %v7316, %v7343
    %v7345 = vcombine.low %v7323, %v7330
    %v7346 = vcombine.high %v7323, %v7330
    %v7347 = vcombine.low %v7337, %v7344
    %v7348 = vcombine.high %v7337, %v7344
    %v7350 = vunpack.c.l.s4 1966171168
    %v7351 = vunpack.c.0.s8 %v7350
    %v7352 = vlaneseq
    %v7353 = vshrl.u32 %v7352, 7
    %v7354 = vsub.s32 %v7351, %v7353
    %v7355 = vrot.slane %v7345, %v7354
    %v7357 = vunpack.c.l.s4 1966171168
    %v7358 = vunpack.c.0.s8 %v7357
    %v7359 = vlaneseq
    %v7360 = vshrl.u32 %v7359, 7
    %v7361 = vsub.s32 %v7358, %v7360
    %v7362 = vrot.slane %v7346, %v7361
    %v7364 = vunpack.c.l.s4 1966171168
    %v7365 = vunpack.c.0.s8 %v7364
    %v7366 = vlaneseq
    %v7367 = vshrl.u32 %v7366, 7
    %v7368 = vsub.s32 %v7365, %v7367
    %v7369 = vrot.slane %v7347, %v7368
    %v7371 = vunpack.c.l.s4 1966171168
    %v7372 = vunpack.c.0.s8 %v7371
    %v7373 = vlaneseq
    %v7374 = vshrl.u32 %v7373, 7
    %v7375 = vsub.s32 %v7372, %v7374
    %v7376 = vrot.slane %v7348, %v7375
    %v7377 = vcombine.low %v7355, %v7369
    %v7378 = vcombine.low %v7362, %v7376
    %v7379 = vcombine.low %v5990, %v6004
    %v7380 = vcombine.low %v6006, %v6032
    %v7381 = vcombine.low %v6046, %v6054
    %v7382 = vcombine.low %v6056, %v6039
    %v7384 = vunpack.c.l.s4 1966171168
    %v7385 = vunpack.c.0.s8 %v7384
    %v7386 = vlaneseq
    %v7387 = vshrl.u32 %v7386, 7
    %v7388 = vsub.s32 %v7385, %v7387
    %v7389 = vrot.slane %v7379, %v7388
    %v7391 = vunpack.c.l.s4 1966171168
    %v7392 = vunpack.c.0.s8 %v7391
    %v7393 = vlaneseq
    %v7394 = vshrl.u32 %v7393, 7
    %v7395 = vsub.s32 %v7392, %v7394
    %v7396 = vrot.slane %v7380, %v7395
    %v7398 = vunpack.c.l.s4 1966171168
    %v7399 = vunpack.c.0.s8 %v7398
    %v7400 = vlaneseq
    %v7401 = vshrl.u32 %v7400, 7
    %v7402 = vsub.s32 %v7399, %v7401
    %v7403 = vrot.slane %v7381, %v7402
    %v7405 = vunpack.c.l.s4 1966171168
    %v7406 = vunpack.c.0.s8 %v7405
    %v7407 = vlaneseq
    %v7408 = vshrl.u32 %v7407, 7
    %v7409 = vsub.s32 %v7406, %v7408
    %v7410 = vrot.slane %v7382, %v7409
    %v7411 = vcombine.low %v7389, %v7396
    %v7412 = vcombine.high %v7389, %v7396
    %v7413 = vcombine.low %v7403, %v7410
    %v7414 = vcombine.high %v7403, %v7410
    %v7416 = vunpack.c.l.s4 1966171168
    %v7417 = vunpack.c.0.s8 %v7416
    %v7418 = vlaneseq
    %v7419 = vshrl.u32 %v7418, 7
    %v7420 = vsub.s32 %v7417, %v7419
    %v7421 = vrot.slane %v7411, %v7420
    %v7423 = vunpack.c.l.s4 1966171168
    %v7424 = vunpack.c.0.s8 %v7423
    %v7425 = vlaneseq
    %v7426 = vshrl.u32 %v7425, 7
    %v7427 = vsub.s32 %v7424, %v7426
    %v7428 = vrot.slane %v7412, %v7427
    %v7430 = vunpack.c.l.s4 1966171168
    %v7431 = vunpack.c.0.s8 %v7430
    %v7432 = vlaneseq
    %v7433 = vshrl.u32 %v7432, 7
    %v7434 = vsub.s32 %v7431, %v7433
    %v7435 = vrot.slane %v7413, %v7434
    %v7437 = vunpack.c.l.s4 1966171168
    %v7438 = vunpack.c.0.s8 %v7437
    %v7439 = vlaneseq
    %v7440 = vshrl.u32 %v7439, 7
    %v7441 = vsub.s32 %v7438, %v7440
    %v7442 = vrot.slane %v7414, %v7441
    %v7443 = vcombine.low %v7421, %v7435
    %v7444 = vcombine.low %v7428, %v7442
    %v7445 = vcombine.low %v6053, %v6055
    %v7446 = vcombine.low %v6057, %v6082
    %v7447 = vcombine.low %v6096, %v6104
    %v7448 = vcombine.low %v6106, %v6089
    %v7450 = vunpack.c.l.s4 1966171168
    %v7451 = vunpack.c.0.s8 %v7450
    %v7452 = vlaneseq
    %v7453 = vshrl.u32 %v7452, 7
    %v7454 = vsub.s32 %v7451, %v7453
    %v7455 = vrot.slane %v7445, %v7454
    %v7457 = vunpack.c.l.s4 1966171168
    %v7458 = vunpack.c.0.s8 %v7457
    %v7459 = vlaneseq
    %v7460 = vshrl.u32 %v7459, 7
    %v7461 = vsub.s32 %v7458, %v7460
    %v7462 = vrot.slane %v7446, %v7461
    %v7464 = vunpack.c.l.s4 1966171168
    %v7465 = vunpack.c.0.s8 %v7464
    %v7466 = vlaneseq
    %v7467 = vshrl.u32 %v7466, 7
    %v7468 = vsub.s32 %v7465, %v7467
    %v7469 = vrot.slane %v7447, %v7468
    %v7471 = vunpack.c.l.s4 1966171168
    %v7472 = vunpack.c.0.s8 %v7471
    %v7473 = vlaneseq
    %v7474 = vshrl.u32 %v7473, 7
    %v7475 = vsub.s32 %v7472, %v7474
    %v7476 = vrot.slane %v7448, %v7475
    %v7477 = vcombine.low %v7455, %v7462
    %v7478 = vcombine.high %v7455, %v7462
    %v7479 = vcombine.low %v7469, %v7476
    %v7480 = vcombine.high %v7469, %v7476
    %v7482 = vunpack.c.l.s4 1966171168
    %v7483 = vunpack.c.0.s8 %v7482
    %v7484 = vlaneseq
    %v7485 = vshrl.u32 %v7484, 7
    %v7486 = vsub.s32 %v7483, %v7485
    %v7487 = vrot.slane %v7477, %v7486
    %v7489 = vunpack.c.l.s4 1966171168
    %v7490 = vunpack.c.0.s8 %v7489
    %v7491 = vlaneseq
    %v7492 = vshrl.u32 %v7491, 7
    %v7493 = vsub.s32 %v7490, %v7492
    %v7494 = vrot.slane %v7478, %v7493
    %v7496 = vunpack.c.l.s4 1966171168
    %v7497 = vunpack.c.0.s8 %v7496
    %v7498 = vlaneseq
    %v7499 = vshrl.u32 %v7498, 7
    %v7500 = vsub.s32 %v7497, %v7499
    %v7501 = vrot.slane %v7479, %v7500
    %v7503 = vunpack.c.l.s4 1966171168
    %v7504 = vunpack.c.0.s8 %v7503
    %v7505 = vlaneseq
    %v7506 = vshrl.u32 %v7505, 7
    %v7507 = vsub.s32 %v7504, %v7506
    %v7508 = vrot.slane %v7480, %v7507
    %v7509 = vcombine.low %v7487, %v7501
    %v7510 = vcombine.low %v7494, %v7508
    %v7511 = vcombine.low %v6103, %v6105
    %v7512 = vcombine.low %v6107, %v6132
    %v7513 = vcombine.low %v6146, %v6154
    %v7514 = vcombine.low %v6156, %v6139
    %v7516 = vunpack.c.l.s4 1966171168
    %v7517 = vunpack.c.0.s8 %v7516
    %v7518 = vlaneseq
    %v7519 = vshrl.u32 %v7518, 7
    %v7520 = vsub.s32 %v7517, %v7519
    %v7521 = vrot.slane %v7511, %v7520
    %v7523 = vunpack.c.l.s4 1966171168
    %v7524 = vunpack.c.0.s8 %v7523
    %v7525 = vlaneseq
    %v7526 = vshrl.u32 %v7525, 7
    %v7527 = vsub.s32 %v7524, %v7526
    %v7528 = vrot.slane %v7512, %v7527
    %v7530 = vunpack.c.l.s4 1966171168
    %v7531 = vunpack.c.0.s8 %v7530
    %v7532 = vlaneseq
    %v7533 = vshrl.u32 %v7532, 7
    %v7534 = vsub.s32 %v7531, %v7533
    %v7535 = vrot.slane %v7513, %v7534
    %v7537 = vunpack.c.l.s4 1966171168
    %v7538 = vunpack.c.0.s8 %v7537
    %v7539 = vlaneseq
    %v7540 = vshrl.u32 %v7539, 7
    %v7541 = vsub.s32 %v7538, %v7540
    %v7542 = vrot.slane %v7514, %v7541
    %v7543 = vcombine.low %v7521, %v7528
    %v7544 = vcombine.high %v7521, %v7528
    %v7545 = vcombine.low %v7535, %v7542
    %v7546 = vcombine.high %v7535, %v7542
    %v7548 = vunpack.c.l.s4 1966171168
    %v7549 = vunpack.c.0.s8 %v7548
    %v7550 = vlaneseq
    %v7551 = vshrl.u32 %v7550, 7
    %v7552 = vsub.s32 %v7549, %v7551
    %v7553 = vrot.slane %v7543, %v7552
    %v7555 = vunpack.c.l.s4 1966171168
    %v7556 = vunpack.c.0.s8 %v7555
    %v7557 = vlaneseq
    %v7558 = vshrl.u32 %v7557, 7
    %v7559 = vsub.s32 %v7556, %v7558
    %v7560 = vrot.slane %v7544, %v7559
    %v7562 = vunpack.c.l.s4 1966171168
    %v7563 = vunpack.c.0.s8 %v7562
    %v7564 = vlaneseq
    %v7565 = vshrl.u32 %v7564, 7
    %v7566 = vsub.s32 %v7563, %v7565
    %v7567 = vrot.slane %v7545, %v7566
    %v7569 = vunpack.c.l.s4 1966171168
    %v7570 = vunpack.c.0.s8 %v7569
    %v7571 = vlaneseq
    %v7572 = vshrl.u32 %v7571, 7
    %v7573 = vsub.s32 %v7570, %v7572
    %v7574 = vrot.slane %v7546, %v7573
    %v7575 = vcombine.low %v7553, %v7567
    %v7576 = vcombine.low %v7560, %v7574
    %v7577 = vcombine.low %v6153, %v6155
    %v7578 = vcombine.low %v6181, %v6195
    %v7579 = vcombine.low %v6203, %v6205
    %v7580 = vcombine.low %v6188, %v6202
    %v7582 = vunpack.c.l.s4 1966171168
    %v7583 = vunpack.c.0.s8 %v7582
    %v7584 = vlaneseq
    %v7585 = vshrl.u32 %v7584, 7
    %v7586 = vsub.s32 %v7583, %v7585
    %v7587 = vrot.slane %v7577, %v7586
    %v7589 = vunpack.c.l.s4 1966171168
    %v7590 = vunpack.c.0.s8 %v7589
    %v7591 = vlaneseq
    %v7592 = vshrl.u32 %v7591, 7
    %v7593 = vsub.s32 %v7590, %v7592
    %v7594 = vrot.slane %v7578, %v7593
    %v7596 = vunpack.c.l.s4 1966171168
    %v7597 = vunpack.c.0.s8 %v7596
    %v7598 = vlaneseq
    %v7599 = vshrl.u32 %v7598, 7
    %v7600 = vsub.s32 %v7597, %v7599
    %v7601 = vrot.slane %v7579, %v7600
    %v7603 = vunpack.c.l.s4 1966171168
    %v7604 = vunpack.c.0.s8 %v7603
    %v7605 = vlaneseq
    %v7606 = vshrl.u32 %v7605, 7
    %v7607 = vsub.s32 %v7604, %v7606
    %v7608 = vrot.slane %v7580, %v7607
    %v7609 = vcombine.low %v7587, %v7594
    %v7610 = vcombine.high %v7587, %v7594
    %v7611 = vcombine.low %v7601, %v7608
    %v7612 = vcombine.high %v7601, %v7608
    %v7614 = vunpack.c.l.s4 1966171168
    %v7615 = vunpack.c.0.s8 %v7614
    %v7616 = vlaneseq
    %v7617 = vshrl.u32 %v7616, 7
    %v7618 = vsub.s32 %v7615, %v7617
    %v7619 = vrot.slane %v7609, %v7618
    %v7621 = vunpack.c.l.s4 1966171168
    %v7622 = vunpack.c.0.s8 %v7621
    %v7623 = vlaneseq
    %v7624 = vshrl.u32 %v7623, 7
    %v7625 = vsub.s32 %v7622, %v7624
    %v7626 = vrot.slane %v7610, %v7625
    %v7628 = vunpack.c.l.s4 1966171168
    %v7629 = vunpack.c.0.s8 %v7628
    %v7630 = vlaneseq
    %v7631 = vshrl.u32 %v7630, 7
    %v7632 = vsub.s32 %v7629, %v7631
    %v7633 = vrot.slane %v7611, %v7632
    %v7635 = vunpack.c.l.s4 1966171168
    %v7636 = vunpack.c.0.s8 %v7635
    %v7637 = vlaneseq
    %v7638 = vshrl.u32 %v7637, 7
    %v7639 = vsub.s32 %v7636, %v7638
    %v7640 = vrot.slane %v7612, %v7639
    %v7641 = vcombine.low %v7619, %v7633
    %v7642 = vcombine.low %v7626, %v7640
    %v7643 = vcombine.low %v6204, %v6206
    %v7644 = vcombine.low %v6231, %v6245
    %v7645 = vcombine.low %v6253, %v6255
    %v7646 = vcombine.low %v6238, %v6252
    %v7648 = vunpack.c.l.s4 1966171168
    %v7649 = vunpack.c.0.s8 %v7648
    %v7650 = vlaneseq
    %v7651 = vshrl.u32 %v7650, 7
    %v7652 = vsub.s32 %v7649, %v7651
    %v7653 = vrot.slane %v7643, %v7652
    %v7655 = vunpack.c.l.s4 1966171168
    %v7656 = vunpack.c.0.s8 %v7655
    %v7657 = vlaneseq
    %v7658 = vshrl.u32 %v7657, 7
    %v7659 = vsub.s32 %v7656, %v7658
    %v7660 = vrot.slane %v7644, %v7659
    %v7662 = vunpack.c.l.s4 1966171168
    %v7663 = vunpack.c.0.s8 %v7662
    %v7664 = vlaneseq
    %v7665 = vshrl.u32 %v7664, 7
    %v7666 = vsub.s32 %v7663, %v7665
    %v7667 = vrot.slane %v7645, %v7666
    %v7669 = vunpack.c.l.s4 1966171168
    %v7670 = vunpack.c.0.s8 %v7669
    %v7671 = vlaneseq
    %v7672 = vshrl.u32 %v7671, 7
    %v7673 = vsub.s32 %v7670, %v7672
    %v7674 = vrot.slane %v7646, %v7673
    %v7675 = vcombine.low %v7653, %v7660
    %v7676 = vcombine.high %v7653, %v7660
    %v7677 = vcombine.low %v7667, %v7674
    %v7678 = vcombine.high %v7667, %v7674
    %v7680 = vunpack.c.l.s4 1966171168
    %v7681 = vunpack.c.0.s8 %v7680
    %v7682 = vlaneseq
    %v7683 = vshrl.u32 %v7682, 7
    %v7684 = vsub.s32 %v7681, %v7683
    %v7685 = vrot.slane %v7675, %v7684
    %v7687 = vunpack.c.l.s4 1966171168
    %v7688 = vunpack.c.0.s8 %v7687
    %v7689 = vlaneseq
    %v7690 = vshrl.u32 %v7689, 7
    %v7691 = vsub.s32 %v7688, %v7690
    %v7692 = vrot.slane %v7676, %v7691
    %v7694 = vunpack.c.l.s4 1966171168
    %v7695 = vunpack.c.0.s8 %v7694
    %v7696 = vlaneseq
    %v7697 = vshrl.u32 %v7696, 7
    %v7698 = vsub.s32 %v7695, %v7697
    %v7699 = vrot.slane %v7677, %v7698
    %v7701 = vunpack.c.l.s4 1966171168
    %v7702 = vunpack.c.0.s8 %v7701
    %v7703 = vlaneseq
    %v7704 = vshrl.u32 %v7703, 7
    %v7705 = vsub.s32 %v7702, %v7704
    %v7706 = vrot.slane %v7678, %v7705
    %v7707 = vcombine.low %v7685, %v7699
    %v7708 = vcombine.low %v7692, %v7706
    %v7709 = vcombine.low %v6254, %v6256
    %v7710 = vcombine.low %v6281, %v6295
    %v7711 = vcombine.low %v6303, %v6305
    %v7712 = vcombine.low %v6288, %v6302
    %v7714 = vunpack.c.l.s4 1966171168
    %v7715 = vunpack.c.0.s8 %v7714
    %v7716 = vlaneseq
    %v7717 = vshrl.u32 %v7716, 7
    %v7718 = vsub.s32 %v7715, %v7717
    %v7719 = vrot.slane %v7709, %v7718
    %v7721 = vunpack.c.l.s4 1966171168
    %v7722 = vunpack.c.0.s8 %v7721
    %v7723 = vlaneseq
    %v7724 = vshrl.u32 %v7723, 7
    %v7725 = vsub.s32 %v7722, %v7724
    %v7726 = vrot.slane %v7710, %v7725
    %v7728 = vunpack.c.l.s4 1966171168
    %v7729 = vunpack.c.0.s8 %v7728
    %v7730 = vlaneseq
    %v7731 = vshrl.u32 %v7730, 7
    %v7732 = vsub.s32 %v7729, %v7731
    %v7733 = vrot.slane %v7711, %v7732
    %v7735 = vunpack.c.l.s4 1966171168
    %v7736 = vunpack.c.0.s8 %v7735
    %v7737 = vlaneseq
    %v7738 = vshrl.u32 %v7737, 7
    %v7739 = vsub.s32 %v7736, %v7738
    %v7740 = vrot.slane %v7712, %v7739
    %v7741 = vcombine.low %v7719, %v7726
    %v7742 = vcombine.high %v7719, %v7726
    %v7743 = vcombine.low %v7733, %v7740
    %v7744 = vcombine.high %v7733, %v7740
    %v7746 = vunpack.c.l.s4 1966171168
    %v7747 = vunpack.c.0.s8 %v7746
    %v7748 = vlaneseq
    %v7749 = vshrl.u32 %v7748, 7
    %v7750 = vsub.s32 %v7747, %v7749
    %v7751 = vrot.slane %v7741, %v7750
    %v7753 = vunpack.c.l.s4 1966171168
    %v7754 = vunpack.c.0.s8 %v7753
    %v7755 = vlaneseq
    %v7756 = vshrl.u32 %v7755, 7
    %v7757 = vsub.s32 %v7754, %v7756
    %v7758 = vrot.slane %v7742, %v7757
    %v7760 = vunpack.c.l.s4 1966171168
    %v7761 = vunpack.c.0.s8 %v7760
    %v7762 = vlaneseq
    %v7763 = vshrl.u32 %v7762, 7
    %v7764 = vsub.s32 %v7761, %v7763
    %v7765 = vrot.slane %v7743, %v7764
    %v7767 = vunpack.c.l.s4 1966171168
    %v7768 = vunpack.c.0.s8 %v7767
    %v7769 = vlaneseq
    %v7770 = vshrl.u32 %v7769, 7
    %v7771 = vsub.s32 %v7768, %v7770
    %v7772 = vrot.slane %v7744, %v7771
    %v7773 = vcombine.low %v7751, %v7765
    %v7774 = vcombine.low %v7758, %v7772
    %v7775 = vcombine.low %v6304, %v6330
    %v7776 = vcombine.low %v6344, %v6352
    %v7777 = vcombine.low %v6354, %v6337
    %v7778 = vcombine.low %v6351, %v6353
    %v7780 = vunpack.c.l.s4 1966171168
    %v7781 = vunpack.c.0.s8 %v7780
    %v7782 = vlaneseq
    %v7783 = vshrl.u32 %v7782, 7
    %v7784 = vsub.s32 %v7781, %v7783
    %v7785 = vrot.slane %v7775, %v7784
    %v7787 = vunpack.c.l.s4 1966171168
    %v7788 = vunpack.c.0.s8 %v7787
    %v7789 = vlaneseq
    %v7790 = vshrl.u32 %v7789, 7
    %v7791 = vsub.s32 %v7788, %v7790
    %v7792 = vrot.slane %v7776, %v7791
    %v7794 = vunpack.c.l.s4 1966171168
    %v7795 = vunpack.c.0.s8 %v7794
    %v7796 = vlaneseq
    %v7797 = vshrl.u32 %v7796, 7
    %v7798 = vsub.s32 %v7795, %v7797
    %v7799 = vrot.slane %v7777, %v7798
    %v7801 = vunpack.c.l.s4 1966171168
    %v7802 = vunpack.c.0.s8 %v7801
    %v7803 = vlaneseq
    %v7804 = vshrl.u32 %v7803, 7
    %v7805 = vsub.s32 %v7802, %v7804
    %v7806 = vrot.slane %v7778, %v7805
    %v7807 = vcombine.low %v7785, %v7792
    %v7808 = vcombine.high %v7785, %v7792
    %v7809 = vcombine.low %v7799, %v7806
    %v7810 = vcombine.high %v7799, %v7806
    %v7812 = vunpack.c.l.s4 1966171168
    %v7813 = vunpack.c.0.s8 %v7812
    %v7814 = vlaneseq
    %v7815 = vshrl.u32 %v7814, 7
    %v7816 = vsub.s32 %v7813, %v7815
    %v7817 = vrot.slane %v7807, %v7816
    %v7819 = vunpack.c.l.s4 1966171168
    %v7820 = vunpack.c.0.s8 %v7819
    %v7821 = vlaneseq
    %v7822 = vshrl.u32 %v7821, 7
    %v7823 = vsub.s32 %v7820, %v7822
    %v7824 = vrot.slane %v7808, %v7823
    %v7826 = vunpack.c.l.s4 1966171168
    %v7827 = vunpack.c.0.s8 %v7826
    %v7828 = vlaneseq
    %v7829 = vshrl.u32 %v7828, 7
    %v7830 = vsub.s32 %v7827, %v7829
    %v7831 = vrot.slane %v7809, %v7830
    %v7833 = vunpack.c.l.s4 1966171168
    %v7834 = vunpack.c.0.s8 %v7833
    %v7835 = vlaneseq
    %v7836 = vshrl.u32 %v7835, 7
    %v7837 = vsub.s32 %v7834, %v7836
    %v7838 = vrot.slane %v7810, %v7837
    %v7839 = vcombine.low %v7817, %v7831
    %v7840 = vcombine.low %v7824, %v7838
    %v7841 = vcombine.low %v6355, %v6380
    %v7842 = vcombine.low %v6394, %v6402
    %v7843 = vcombine.low %v6404, %v6387
    %v7844 = vcombine.low %v6401, %v6403
    %v7846 = vunpack.c.l.s4 1966171168
    %v7847 = vunpack.c.0.s8 %v7846
    %v7848 = vlaneseq
    %v7849 = vshrl.u32 %v7848, 7
    %v7850 = vsub.s32 %v7847, %v7849
    %v7851 = vrot.slane %v7841, %v7850
    %v7853 = vunpack.c.l.s4 1966171168
    %v7854 = vunpack.c.0.s8 %v7853
    %v7855 = vlaneseq
    %v7856 = vshrl.u32 %v7855, 7
    %v7857 = vsub.s32 %v7854, %v7856
    %v7858 = vrot.slane %v7842, %v7857
    %v7860 = vunpack.c.l.s4 1966171168
    %v7861 = vunpack.c.0.s8 %v7860
    %v7862 = vlaneseq
    %v7863 = vshrl.u32 %v7862, 7
    %v7864 = vsub.s32 %v7861, %v7863
    %v7865 = vrot.slane %v7843, %v7864
    %v7867 = vunpack.c.l.s4 1966171168
    %v7868 = vunpack.c.0.s8 %v7867
    %v7869 = vlaneseq
    %v7870 = vshrl.u32 %v7869, 7
    %v7871 = vsub.s32 %v7868, %v7870
    %v7872 = vrot.slane %v7844, %v7871
    %v7873 = vcombine.low %v7851, %v7858
    %v7874 = vcombine.high %v7851, %v7858
    %v7875 = vcombine.low %v7865, %v7872
    %v7876 = vcombine.high %v7865, %v7872
    %v7878 = vunpack.c.l.s4 1966171168
    %v7879 = vunpack.c.0.s8 %v7878
    %v7880 = vlaneseq
    %v7881 = vshrl.u32 %v7880, 7
    %v7882 = vsub.s32 %v7879, %v7881
    %v7883 = vrot.slane %v7873, %v7882
    %v7885 = vunpack.c.l.s4 1966171168
    %v7886 = vunpack.c.0.s8 %v7885
    %v7887 = vlaneseq
    %v7888 = vshrl.u32 %v7887, 7
    %v7889 = vsub.s32 %v7886, %v7888
    %v7890 = vrot.slane %v7874, %v7889
    %v7892 = vunpack.c.l.s4 1966171168
    %v7893 = vunpack.c.0.s8 %v7892
    %v7894 = vlaneseq
    %v7895 = vshrl.u32 %v7894, 7
    %v7896 = vsub.s32 %v7893, %v7895
    %v7897 = vrot.slane %v7875, %v7896
    %v7899 = vunpack.c.l.s4 1966171168
    %v7900 = vunpack.c.0.s8 %v7899
    %v7901 = vlaneseq
    %v7902 = vshrl.u32 %v7901, 7
    %v7903 = vsub.s32 %v7900, %v7902
    %v7904 = vrot.slane %v7876, %v7903
    %v7905 = vcombine.low %v7883, %v7897
    %v7906 = vcombine.low %v7890, %v7904
    %v7907 = vcombine.low %v6405, %v6430
    %v7908 = vcombine.low %v6444, %v6452
    %v7909 = vcombine.low %v6454, %v6437
    %v7910 = vcombine.low %v6451, %v6453
    %v7912 = vunpack.c.l.s4 1966171168
    %v7913 = vunpack.c.0.s8 %v7912
    %v7914 = vlaneseq
    %v7915 = vshrl.u32 %v7914, 7
    %v7916 = vsub.s32 %v7913, %v7915
    %v7917 = vrot.slane %v7907, %v7916
    %v7919 = vunpack.c.l.s4 1966171168
    %v7920 = vunpack.c.0.s8 %v7919
    %v7921 = vlaneseq
    %v7922 = vshrl.u32 %v7921, 7
    %v7923 = vsub.s32 %v7920, %v7922
    %v7924 = vrot.slane %v7908, %v7923
    %v7926 = vunpack.c.l.s4 1966171168
    %v7927 = vunpack.c.0.s8 %v7926
    %v7928 = vlaneseq
    %v7929 = vshrl.u32 %v7928, 7
    %v7930 = vsub.s32 %v7927, %v7929
    %v7931 = vrot.slane %v7909, %v7930
    %v7933 = vunpack.c.l.s4 1966171168
    %v7934 = vunpack.c.0.s8 %v7933
    %v7935 = vlaneseq
    %v7936 = vshrl.u32 %v7935, 7
    %v7937 = vsub.s32 %v7934, %v7936
    %v7938 = vrot.slane %v7910, %v7937
    %v7939 = vcombine.low %v7917, %v7924
    %v7940 = vcombine.high %v7917, %v7924
    %v7941 = vcombine.low %v7931, %v7938
    %v7942 = vcombine.high %v7931, %v7938
    %v7944 = vunpack.c.l.s4 1966171168
    %v7945 = vunpack.c.0.s8 %v7944
    %v7946 = vlaneseq
    %v7947 = vshrl.u32 %v7946, 7
    %v7948 = vsub.s32 %v7945, %v7947
    %v7949 = vrot.slane %v7939, %v7948
    %v7951 = vunpack.c.l.s4 1966171168
    %v7952 = vunpack.c.0.s8 %v7951
    %v7953 = vlaneseq
    %v7954 = vshrl.u32 %v7953, 7
    %v7955 = vsub.s32 %v7952, %v7954
    %v7956 = vrot.slane %v7940, %v7955
    %v7958 = vunpack.c.l.s4 1966171168
    %v7959 = vunpack.c.0.s8 %v7958
    %v7960 = vlaneseq
    %v7961 = vshrl.u32 %v7960, 7
    %v7962 = vsub.s32 %v7959, %v7961
    %v7963 = vrot.slane %v7941, %v7962
    %v7965 = vunpack.c.l.s4 1966171168
    %v7966 = vunpack.c.0.s8 %v7965
    %v7967 = vlaneseq
    %v7968 = vshrl.u32 %v7967, 7
    %v7969 = vsub.s32 %v7966, %v7968
    %v7970 = vrot.slane %v7942, %v7969
    %v7971 = vcombine.low %v7949, %v7963
    %v7972 = vcombine.low %v7956, %v7970
    %8019 = vmatprep.subr.mxu0 %v4040
    %8020 = vmatpush1.xpose.msra.mxu0 %v4039
    %8021 = vmatprep.subr.mxu0 %v4042
    %8022 = vmatpush1.xpose.msra.mxu0 %v4041
    %8023 = vmatprep.subr.mxu0 %v4044
    %8024 = vmatpush1.xpose.msra.mxu0 %v4043
    %8025 = vmatprep.subr.mxu0 %v4046
    %8026 = vmatpush1.xpose.msra.mxu0 %v4045
    %8027 = vmatprep.subr.mxu0 %v4048
    %8028 = vmatpush1.xpose.msra.mxu0 %v4047
    %8029 = vmatprep.subr.mxu0 %v4050
    %8030 = vmatpush1.xpose.msra.mxu0 %v4049
    %8031 = vmatprep.subr.mxu0 %v4052
    %8032 = vmatpush1.xpose.msra.mxu0 %v4051
    %8033 = vmatprep.subr.mxu0 %v4054
    %8034 = vmatpush1.xpose.msra.mxu0 %v4053
    %8035 = vmatprep.subr.mxu0 %v4056
    %8036 = vmatpush1.xpose.msra.mxu0 %v4055
    %8037 = vmatprep.subr.mxu0 %v4058
    %8038 = vmatpush1.xpose.msra.mxu0 %v4057
    %8039 = vmatprep.subr.mxu0 %v4060
    %8040 = vmatpush1.xpose.msra.mxu0 %v4059
    %8041 = vmatprep.subr.mxu0 %v4062
    %8042 = vmatpush1.xpose.msra.mxu0 %v4061
    %8043 = vmatprep.subr.mxu0 0.0
    %8044 = vmatpush1.xpose.msra.mxu0 0.0
    %8045 = vmatprep.subr.mxu0 0.0
    %8046 = vmatpush1.xpose.msra.mxu0 0.0
    %8047 = vmatprep.subr.mxu0 0.0
    %8048 = vmatpush1.xpose.msra.mxu0 0.0
    %8049 = vmatprep.subr.mxu0 0.0
    %8050 = vmatpush1.xpose.msra.mxu0 0.0
    %8051 = vmatprep.subr.mxu0 0.0
    %8052 = vmatpush1.xpose.msra.mxu0 0.0
    %8053 = vmatprep.subr.mxu0 0.0
    %8054 = vmatpush1.xpose.msra.mxu0 0.0
    %8055 = vmatprep.subr.mxu0 0.0
    %8056 = vmatpush1.xpose.msra.mxu0 0.0
    %8057 = vmatprep.subr.mxu0 0.0
    %8058 = vmatpush1.xpose.msra.mxu0 0.0
    %8059 = vmatprep.subr.mxu0 0.0
    %8060 = vmatpush1.xpose.msra.mxu0 0.0
    %8061 = vmatprep.subr.mxu0 0.0
    %8062 = vmatpush1.xpose.msra.mxu0 0.0
    %8063 = vmatprep.subr.mxu0 0.0
    %8064 = vmatpush1.xpose.msra.mxu0 0.0
    %8065 = vmatprep.subr.mxu0 0.0
    %8066 = vmatpush1.xpose.msra.mxu0 0.0
    %8067 = vmatprep.subr.mxu0 0.0
    %8068 = vmatpush1.xpose.msra.mxu0 0.0
    %8069 = vmatprep.subr.mxu0 0.0
    %8070 = vmatpush1.xpose.msra.mxu0 0.0
    %8071 = vmatprep.subr.mxu0 0.0
    %8072 = vmatpush1.xpose.msra.mxu0 0.0
    %8073 = vmatprep.subr.mxu0 0.0
    %8074 = vmatpush1.xpose.msra.mxu0 0.0
    %8075 = vmatprep.subr.mxu0 0.0
    %8076 = vmatpush1.xpose.msra.mxu0 0.0
    %8077 = vmatprep.subr.mxu0 0.0
    %8078 = vmatpush1.xpose.msra.mxu0 0.0
    %8079 = vmatprep.subr.mxu0 0.0
    %8080 = vmatpush1.xpose.msra.mxu0 0.0
    %8081 = vmatprep.subr.mxu0 0.0
    %8082 = vmatpush1.xpose.msra.mxu0 0.0
    %8083 = vmatprep.mubr.f32.mxu0 %v6520
    %8084 = vmatmul.mubr.f32.gmra.mrb[0].mxu0 %v6519
    %v8085 = vpop.f32.mrb[0].mxu0
    %v8086 = vadd.f32 0.0, %v8085
    %v8087 = vpop.f32.mrb[0].mxu0
    %8088 = vmatprep.mubr.f32.mxu0 %v6586
    %8089 = vmatmul.mubr.f32.gmra.mrb[0].mxu0 %v6585
    %v8090 = vpop.f32.mrb[0].mxu0
    %v8091 = vadd.f32 0.0, %v8090
    %v8092 = vpop.f32.mrb[0].mxu0
    %8093 = vmatprep.mubr.f32.mxu0 %v6652
    %8094 = vmatmul.mubr.f32.gmra.mrb[0].mxu0 %v6651
    %v8095 = vpop.f32.mrb[0].mxu0
    %v8096 = vadd.f32 0.0, %v8095
    %v8097 = vpop.f32.mrb[0].mxu0
    %8098 = vmatprep.mubr.f32.mxu0 %v6718
    %8099 = vmatmul.mubr.f32.gmra.mrb[0].mxu0 %v6717
    %v8100 = vpop.f32.mrb[0].mxu0
    %v8101 = vadd.f32 0.0, %v8100
    %v8102 = vpop.f32.mrb[0].mxu0
    %8103 = vmatprep.mubr.f32.mxu0 %v6784
    %8104 = vmatmul.mubr.f32.gmra.mrb[0].mxu0 %v6783
    %v8105 = vpop.f32.mrb[0].mxu0
    %v8106 = vadd.f32 0.0, %v8105
    %v8107 = vpop.f32.mrb[0].mxu0
    %8108 = vmatprep.mubr.f32.mxu0 %v6850
    %8109 = vmatmul.mubr.f32.gmra.mrb[0].mxu0 %v6849
    %v8110 = vpop.f32.mrb[0].mxu0
    %v8111 = vadd.f32 0.0, %v8110
    %v8112 = vpop.f32.mrb[0].mxu0
    %8113 = vmatprep.mubr.f32.mxu0 %v6916
    %8114 = vmatmul.mubr.f32.gmra.mrb[0].mxu0 %v6915
    %v8115 = vpop.f32.mrb[0].mxu0
    %v8116 = vadd.f32 0.0, %v8115
    %v8117 = vpop.f32.mrb[0].mxu0
    %8118 = vmatprep.mubr.f32.mxu0 %v6982
    %8119 = vmatmul.mubr.f32.gmra.mrb[0].mxu0 %v6981
    %v8120 = vpop.f32.mrb[0].mxu0
    %v8121 = vadd.f32 0.0, %v8120
    %v8122 = vpop.f32.mrb[0].mxu0
    %8123 = vmatprep.mubr.f32.mxu0 %v7048
    %8124 = vmatmul.mubr.f32.gmra.mrb[0].mxu0 %v7047
    %v8125 = vpop.f32.mrb[0].mxu0
    %v8126 = vadd.f32 0.0, %v8125
    %v8127 = vpop.f32.mrb[0].mxu0
    %8128 = vmatprep.mubr.f32.mxu0 %v7114
    %8129 = vmatmul.mubr.f32.gmra.mrb[0].mxu0 %v7113
    %v8130 = vpop.f32.mrb[0].mxu0
    %v8131 = vadd.f32 0.0, %v8130
    %v8132 = vpop.f32.mrb[0].mxu0
    %8133 = vmatprep.mubr.f32.mxu0 %v7180
    %8134 = vmatmul.mubr.f32.gmra.mrb[0].mxu0 %v7179
    %v8135 = vpop.f32.mrb[0].mxu0
    %v8136 = vadd.f32 0.0, %v8135
    %v8137 = vpop.f32.mrb[0].mxu0
    %8138 = vmatprep.mubr.f32.mxu0 %v7246
    %8139 = vmatmul.mubr.f32.gmra.mrb[0].mxu0 %v7245
    %v8140 = vpop.f32.mrb[0].mxu0
    %v8141 = vadd.f32 0.0, %v8140
    %v8142 = vpop.f32.mrb[0].mxu0
    %8143 = vmatprep.mubr.f32.mxu0 %v7312
    %8144 = vmatmul.mubr.f32.gmra.mrb[0].mxu0 %v7311
    %v8145 = vpop.f32.mrb[0].mxu0
    %v8146 = vadd.f32 0.0, %v8145
    %v8147 = vpop.f32.mrb[0].mxu0
    %8148 = vmatprep.mubr.f32.mxu0 %v7378
    %8149 = vmatmul.mubr.f32.gmra.mrb[0].mxu0 %v7377
    %v8150 = vpop.f32.mrb[0].mxu0
    %v8151 = vadd.f32 0.0, %v8150
    %v8152 = vpop.f32.mrb[0].mxu0
    %8153 = vmatprep.mubr.f32.mxu0 %v7444
    %8154 = vmatmul.mubr.f32.gmra.mrb[0].mxu0 %v7443
    %v8155 = vpop.f32.mrb[0].mxu0
    %v8156 = vadd.f32 0.0, %v8155
    %v8157 = vpop.f32.mrb[0].mxu0
    %8158 = vmatprep.mubr.f32.mxu0 %v7510
    %8159 = vmatmul.mubr.f32.gmra.mrb[0].mxu0 %v7509
    %v8160 = vpop.f32.mrb[0].mxu0
    %v8161 = vadd.f32 0.0, %v8160
    %v8162 = vpop.f32.mrb[0].mxu0
    %8163 = vmatprep.mubr.f32.mxu0 %v7576
    %8164 = vmatmul.mubr.f32.gmra.mrb[0].mxu0 %v7575
    %v8165 = vpop.f32.mrb[0].mxu0
    %v8166 = vadd.f32 0.0, %v8165
    %v8167 = vpop.f32.mrb[0].mxu0
    %8168 = vmatprep.mubr.f32.mxu0 %v7642
    %8169 = vmatmul.mubr.f32.gmra.mrb[0].mxu0 %v7641
    %v8170 = vpop.f32.mrb[0].mxu0
    %v8171 = vadd.f32 0.0, %v8170
    %v8172 = vpop.f32.mrb[0].mxu0
    %8173 = vmatprep.mubr.f32.mxu0 %v7708
    %8174 = vmatmul.mubr.f32.gmra.mrb[0].mxu0 %v7707
    %v8175 = vpop.f32.mrb[0].mxu0
    %v8176 = vadd.f32 0.0, %v8175
    %v8177 = vpop.f32.mrb[0].mxu0
    %8178 = vmatprep.mubr.f32.mxu0 %v7774
    %8179 = vmatmul.mubr.f32.gmra.mrb[0].mxu0 %v7773
    %v8180 = vpop.f32.mrb[0].mxu0
    %v8181 = vadd.f32 0.0, %v8180
    %v8182 = vpop.f32.mrb[0].mxu0
    %8183 = vmatprep.mubr.f32.mxu0 %v7840
    %8184 = vmatmul.mubr.f32.gmra.mrb[0].mxu0 %v7839
    %v8185 = vpop.f32.mrb[0].mxu0
    %v8186 = vadd.f32 0.0, %v8185
    %v8187 = vpop.f32.mrb[0].mxu0
    %8188 = vmatprep.mubr.f32.mxu0 %v7906
    %8189 = vmatmul.mubr.f32.gmra.mrb[0].mxu0 %v7905
    %v8190 = vpop.f32.mrb[0].mxu0
    %v8191 = vadd.f32 0.0, %v8190
    %v8192 = vpop.f32.mrb[0].mxu0
    %8193 = vmatprep.mubr.f32.mxu0 %v7972
    %8194 = vmatmul.mubr.f32.gmra.mrb[0].mxu0 %v7971
    %v8195 = vpop.f32.mrb[0].mxu0
    %v8196 = vadd.f32 0.0, %v8195
    %v8197 = vpop.f32.mrb[0].mxu0
    %8198 = vdwg.mxu0
    %v8222 = vcombine.high %v8086, %v8086
    %v8224 = vunpack.c.l.s4 1966171168
    %v8225 = vunpack.c.0.s8 %v8224
    %v8226 = vlaneseq
    %v8227 = vshrl.u32 %v8226, 7
    %v8228 = vsub.s32 %v8225, %v8227
    %v8229 = vrot.slane %v8086, %v8228
    %v8231 = vunpack.c.l.s4 1966171168
    %v8232 = vunpack.c.0.s8 %v8231
    %v8233 = vlaneseq
    %v8234 = vshrl.u32 %v8233, 7
    %v8235 = vsub.s32 %v8232, %v8234
    %v8236 = vrot.slane %v8222, %v8235
    %v8237 = vcombine.high %v8229, %v8229
    %v8238 = vcombine.high %v8236, %v8236
    %v8240 = vunpack.c.l.s4 1966171168
    %v8241 = vunpack.c.0.s8 %v8240
    %v8242 = vlaneseq
    %v8243 = vshrl.u32 %v8242, 7
    %v8244 = vsub.s32 %v8241, %v8243
    %v8245 = vrot.slane %v8229, %v8244
    %v8247 = vunpack.c.l.s4 1966171168
    %v8248 = vunpack.c.0.s8 %v8247
    %v8249 = vlaneseq
    %v8250 = vshrl.u32 %v8249, 7
    %v8251 = vsub.s32 %v8248, %v8250
    %v8252 = vrot.slane %v8236, %v8251
    %v8254 = vunpack.c.l.s4 1966171168
    %v8255 = vunpack.c.0.s8 %v8254
    %v8256 = vlaneseq
    %v8257 = vshrl.u32 %v8256, 7
    %v8258 = vsub.s32 %v8255, %v8257
    %v8259 = vrot.slane %v8237, %v8258
    %v8261 = vunpack.c.l.s4 1966171168
    %v8262 = vunpack.c.0.s8 %v8261
    %v8263 = vlaneseq
    %v8264 = vshrl.u32 %v8263, 7
    %v8265 = vsub.s32 %v8262, %v8264
    %v8266 = vrot.slane %v8238, %v8265
    %v8267 = vcombine.high %v8245, %v8245
    %v8268 = vcombine.high %v8252, %v8252
    %v8269 = vcombine.high %v8259, %v8259
    %v8270 = vcombine.high %v8266, %v8266
    %v8271 = vcombine.high %v8091, %v8091
    %v8273 = vunpack.c.l.s4 1966171168
    %v8274 = vunpack.c.0.s8 %v8273
    %v8275 = vlaneseq
    %v8276 = vshrl.u32 %v8275, 7
    %v8277 = vsub.s32 %v8274, %v8276
    %v8278 = vrot.slane %v8091, %v8277
    %v8280 = vunpack.c.l.s4 1966171168
    %v8281 = vunpack.c.0.s8 %v8280
    %v8282 = vlaneseq
    %v8283 = vshrl.u32 %v8282, 7
    %v8284 = vsub.s32 %v8281, %v8283
    %v8285 = vrot.slane %v8271, %v8284
    %v8286 = vcombine.high %v8278, %v8278
    %v8287 = vcombine.high %v8285, %v8285
    %v8289 = vunpack.c.l.s4 1966171168
    %v8290 = vunpack.c.0.s8 %v8289
    %v8291 = vlaneseq
    %v8292 = vshrl.u32 %v8291, 7
    %v8293 = vsub.s32 %v8290, %v8292
    %v8294 = vrot.slane %v8278, %v8293
    %v8296 = vunpack.c.l.s4 1966171168
    %v8297 = vunpack.c.0.s8 %v8296
    %v8298 = vlaneseq
    %v8299 = vshrl.u32 %v8298, 7
    %v8300 = vsub.s32 %v8297, %v8299
    %v8301 = vrot.slane %v8285, %v8300
    %v8303 = vunpack.c.l.s4 1966171168
    %v8304 = vunpack.c.0.s8 %v8303
    %v8305 = vlaneseq
    %v8306 = vshrl.u32 %v8305, 7
    %v8307 = vsub.s32 %v8304, %v8306
    %v8308 = vrot.slane %v8286, %v8307
    %v8310 = vunpack.c.l.s4 1966171168
    %v8311 = vunpack.c.0.s8 %v8310
    %v8312 = vlaneseq
    %v8313 = vshrl.u32 %v8312, 7
    %v8314 = vsub.s32 %v8311, %v8313
    %v8315 = vrot.slane %v8287, %v8314
    %v8316 = vcombine.high %v8294, %v8294
    %v8317 = vcombine.high %v8301, %v8301
    %v8318 = vcombine.high %v8308, %v8308
    %v8319 = vcombine.high %v8315, %v8315
    %v8320 = vcombine.high %v8096, %v8096
    %v8322 = vunpack.c.l.s4 1966171168
    %v8323 = vunpack.c.0.s8 %v8322
    %v8324 = vlaneseq
    %v8325 = vshrl.u32 %v8324, 7
    %v8326 = vsub.s32 %v8323, %v8325
    %v8327 = vrot.slane %v8096, %v8326
    %v8329 = vunpack.c.l.s4 1966171168
    %v8330 = vunpack.c.0.s8 %v8329
    %v8331 = vlaneseq
    %v8332 = vshrl.u32 %v8331, 7
    %v8333 = vsub.s32 %v8330, %v8332
    %v8334 = vrot.slane %v8320, %v8333
    %v8335 = vcombine.high %v8327, %v8327
    %v8336 = vcombine.high %v8334, %v8334
    %v8338 = vunpack.c.l.s4 1966171168
    %v8339 = vunpack.c.0.s8 %v8338
    %v8340 = vlaneseq
    %v8341 = vshrl.u32 %v8340, 7
    %v8342 = vsub.s32 %v8339, %v8341
    %v8343 = vrot.slane %v8327, %v8342
    %v8345 = vunpack.c.l.s4 1966171168
    %v8346 = vunpack.c.0.s8 %v8345
    %v8347 = vlaneseq
    %v8348 = vshrl.u32 %v8347, 7
    %v8349 = vsub.s32 %v8346, %v8348
    %v8350 = vrot.slane %v8334, %v8349
    %v8352 = vunpack.c.l.s4 1966171168
    %v8353 = vunpack.c.0.s8 %v8352
    %v8354 = vlaneseq
    %v8355 = vshrl.u32 %v8354, 7
    %v8356 = vsub.s32 %v8353, %v8355
    %v8357 = vrot.slane %v8335, %v8356
    %v8359 = vunpack.c.l.s4 1966171168
    %v8360 = vunpack.c.0.s8 %v8359
    %v8361 = vlaneseq
    %v8362 = vshrl.u32 %v8361, 7
    %v8363 = vsub.s32 %v8360, %v8362
    %v8364 = vrot.slane %v8336, %v8363
    %v8365 = vcombine.high %v8343, %v8343
    %v8366 = vcombine.high %v8350, %v8350
    %v8367 = vcombine.high %v8357, %v8357
    %v8368 = vcombine.high %v8364, %v8364
    %v8369 = vcombine.high %v8101, %v8101
    %v8371 = vunpack.c.l.s4 1966171168
    %v8372 = vunpack.c.0.s8 %v8371
    %v8373 = vlaneseq
    %v8374 = vshrl.u32 %v8373, 7
    %v8375 = vsub.s32 %v8372, %v8374
    %v8376 = vrot.slane %v8101, %v8375
    %v8378 = vunpack.c.l.s4 1966171168
    %v8379 = vunpack.c.0.s8 %v8378
    %v8380 = vlaneseq
    %v8381 = vshrl.u32 %v8380, 7
    %v8382 = vsub.s32 %v8379, %v8381
    %v8383 = vrot.slane %v8369, %v8382
    %v8384 = vcombine.high %v8376, %v8376
    %v8385 = vcombine.high %v8383, %v8383
    %v8387 = vunpack.c.l.s4 1966171168
    %v8388 = vunpack.c.0.s8 %v8387
    %v8389 = vlaneseq
    %v8390 = vshrl.u32 %v8389, 7
    %v8391 = vsub.s32 %v8388, %v8390
    %v8392 = vrot.slane %v8376, %v8391
    %v8394 = vunpack.c.l.s4 1966171168
    %v8395 = vunpack.c.0.s8 %v8394
    %v8396 = vlaneseq
    %v8397 = vshrl.u32 %v8396, 7
    %v8398 = vsub.s32 %v8395, %v8397
    %v8399 = vrot.slane %v8383, %v8398
    %v8401 = vunpack.c.l.s4 1966171168
    %v8402 = vunpack.c.0.s8 %v8401
    %v8403 = vlaneseq
    %v8404 = vshrl.u32 %v8403, 7
    %v8405 = vsub.s32 %v8402, %v8404
    %v8406 = vrot.slane %v8384, %v8405
    %v8408 = vunpack.c.l.s4 1966171168
    %v8409 = vunpack.c.0.s8 %v8408
    %v8410 = vlaneseq
    %v8411 = vshrl.u32 %v8410, 7
    %v8412 = vsub.s32 %v8409, %v8411
    %v8413 = vrot.slane %v8385, %v8412
    %v8414 = vcombine.high %v8392, %v8392
    %v8415 = vcombine.high %v8399, %v8399
    %v8416 = vcombine.high %v8406, %v8406
    %v8417 = vcombine.high %v8413, %v8413
    %v8418 = vcombine.high %v8106, %v8106
    %v8420 = vunpack.c.l.s4 1966171168
    %v8421 = vunpack.c.0.s8 %v8420
    %v8422 = vlaneseq
    %v8423 = vshrl.u32 %v8422, 7
    %v8424 = vsub.s32 %v8421, %v8423
    %v8425 = vrot.slane %v8106, %v8424
    %v8427 = vunpack.c.l.s4 1966171168
    %v8428 = vunpack.c.0.s8 %v8427
    %v8429 = vlaneseq
    %v8430 = vshrl.u32 %v8429, 7
    %v8431 = vsub.s32 %v8428, %v8430
    %v8432 = vrot.slane %v8418, %v8431
    %v8433 = vcombine.high %v8425, %v8425
    %v8434 = vcombine.high %v8432, %v8432
    %v8436 = vunpack.c.l.s4 1966171168
    %v8437 = vunpack.c.0.s8 %v8436
    %v8438 = vlaneseq
    %v8439 = vshrl.u32 %v8438, 7
    %v8440 = vsub.s32 %v8437, %v8439
    %v8441 = vrot.slane %v8425, %v8440
    %v8443 = vunpack.c.l.s4 1966171168
    %v8444 = vunpack.c.0.s8 %v8443
    %v8445 = vlaneseq
    %v8446 = vshrl.u32 %v8445, 7
    %v8447 = vsub.s32 %v8444, %v8446
    %v8448 = vrot.slane %v8432, %v8447
    %v8450 = vunpack.c.l.s4 1966171168
    %v8451 = vunpack.c.0.s8 %v8450
    %v8452 = vlaneseq
    %v8453 = vshrl.u32 %v8452, 7
    %v8454 = vsub.s32 %v8451, %v8453
    %v8455 = vrot.slane %v8433, %v8454
    %v8457 = vunpack.c.l.s4 1966171168
    %v8458 = vunpack.c.0.s8 %v8457
    %v8459 = vlaneseq
    %v8460 = vshrl.u32 %v8459, 7
    %v8461 = vsub.s32 %v8458, %v8460
    %v8462 = vrot.slane %v8434, %v8461
    %v8463 = vcombine.high %v8441, %v8441
    %v8464 = vcombine.high %v8448, %v8448
    %v8465 = vcombine.high %v8455, %v8455
    %v8466 = vcombine.high %v8462, %v8462
    %v8467 = vcombine.high %v8111, %v8111
    %v8469 = vunpack.c.l.s4 1966171168
    %v8470 = vunpack.c.0.s8 %v8469
    %v8471 = vlaneseq
    %v8472 = vshrl.u32 %v8471, 7
    %v8473 = vsub.s32 %v8470, %v8472
    %v8474 = vrot.slane %v8111, %v8473
    %v8476 = vunpack.c.l.s4 1966171168
    %v8477 = vunpack.c.0.s8 %v8476
    %v8478 = vlaneseq
    %v8479 = vshrl.u32 %v8478, 7
    %v8480 = vsub.s32 %v8477, %v8479
    %v8481 = vrot.slane %v8467, %v8480
    %v8482 = vcombine.high %v8474, %v8474
    %v8483 = vcombine.high %v8481, %v8481
    %v8485 = vunpack.c.l.s4 1966171168
    %v8486 = vunpack.c.0.s8 %v8485
    %v8487 = vlaneseq
    %v8488 = vshrl.u32 %v8487, 7
    %v8489 = vsub.s32 %v8486, %v8488
    %v8490 = vrot.slane %v8474, %v8489
    %v8492 = vunpack.c.l.s4 1966171168
    %v8493 = vunpack.c.0.s8 %v8492
    %v8494 = vlaneseq
    %v8495 = vshrl.u32 %v8494, 7
    %v8496 = vsub.s32 %v8493, %v8495
    %v8497 = vrot.slane %v8481, %v8496
    %v8499 = vunpack.c.l.s4 1966171168
    %v8500 = vunpack.c.0.s8 %v8499
    %v8501 = vlaneseq
    %v8502 = vshrl.u32 %v8501, 7
    %v8503 = vsub.s32 %v8500, %v8502
    %v8504 = vrot.slane %v8482, %v8503
    %v8506 = vunpack.c.l.s4 1966171168
    %v8507 = vunpack.c.0.s8 %v8506
    %v8508 = vlaneseq
    %v8509 = vshrl.u32 %v8508, 7
    %v8510 = vsub.s32 %v8507, %v8509
    %v8511 = vrot.slane %v8483, %v8510
    %v8512 = vcombine.high %v8490, %v8490
    %v8513 = vcombine.high %v8497, %v8497
    %v8514 = vcombine.high %v8504, %v8504
    %v8515 = vcombine.high %v8511, %v8511
    %v8516 = vcombine.high %v8116, %v8116
    %v8518 = vunpack.c.l.s4 1966171168
    %v8519 = vunpack.c.0.s8 %v8518
    %v8520 = vlaneseq
    %v8521 = vshrl.u32 %v8520, 7
    %v8522 = vsub.s32 %v8519, %v8521
    %v8523 = vrot.slane %v8116, %v8522
    %v8525 = vunpack.c.l.s4 1966171168
    %v8526 = vunpack.c.0.s8 %v8525
    %v8527 = vlaneseq
    %v8528 = vshrl.u32 %v8527, 7
    %v8529 = vsub.s32 %v8526, %v8528
    %v8530 = vrot.slane %v8516, %v8529
    %v8531 = vcombine.high %v8523, %v8523
    %v8532 = vcombine.high %v8530, %v8530
    %v8534 = vunpack.c.l.s4 1966171168
    %v8535 = vunpack.c.0.s8 %v8534
    %v8536 = vlaneseq
    %v8537 = vshrl.u32 %v8536, 7
    %v8538 = vsub.s32 %v8535, %v8537
    %v8539 = vrot.slane %v8523, %v8538
    %v8541 = vunpack.c.l.s4 1966171168
    %v8542 = vunpack.c.0.s8 %v8541
    %v8543 = vlaneseq
    %v8544 = vshrl.u32 %v8543, 7
    %v8545 = vsub.s32 %v8542, %v8544
    %v8546 = vrot.slane %v8530, %v8545
    %v8548 = vunpack.c.l.s4 1966171168
    %v8549 = vunpack.c.0.s8 %v8548
    %v8550 = vlaneseq
    %v8551 = vshrl.u32 %v8550, 7
    %v8552 = vsub.s32 %v8549, %v8551
    %v8553 = vrot.slane %v8531, %v8552
    %v8555 = vunpack.c.l.s4 1966171168
    %v8556 = vunpack.c.0.s8 %v8555
    %v8557 = vlaneseq
    %v8558 = vshrl.u32 %v8557, 7
    %v8559 = vsub.s32 %v8556, %v8558
    %v8560 = vrot.slane %v8532, %v8559
    %v8561 = vcombine.high %v8539, %v8539
    %v8562 = vcombine.high %v8546, %v8546
    %v8563 = vcombine.high %v8553, %v8553
    %v8564 = vcombine.high %v8560, %v8560
    %v8565 = vcombine.high %v8121, %v8121
    %v8567 = vunpack.c.l.s4 1966171168
    %v8568 = vunpack.c.0.s8 %v8567
    %v8569 = vlaneseq
    %v8570 = vshrl.u32 %v8569, 7
    %v8571 = vsub.s32 %v8568, %v8570
    %v8572 = vrot.slane %v8121, %v8571
    %v8574 = vunpack.c.l.s4 1966171168
    %v8575 = vunpack.c.0.s8 %v8574
    %v8576 = vlaneseq
    %v8577 = vshrl.u32 %v8576, 7
    %v8578 = vsub.s32 %v8575, %v8577
    %v8579 = vrot.slane %v8565, %v8578
    %v8580 = vcombine.high %v8572, %v8572
    %v8581 = vcombine.high %v8579, %v8579
    %v8583 = vunpack.c.l.s4 1966171168
    %v8584 = vunpack.c.0.s8 %v8583
    %v8585 = vlaneseq
    %v8586 = vshrl.u32 %v8585, 7
    %v8587 = vsub.s32 %v8584, %v8586
    %v8588 = vrot.slane %v8572, %v8587
    %v8590 = vunpack.c.l.s4 1966171168
    %v8591 = vunpack.c.0.s8 %v8590
    %v8592 = vlaneseq
    %v8593 = vshrl.u32 %v8592, 7
    %v8594 = vsub.s32 %v8591, %v8593
    %v8595 = vrot.slane %v8579, %v8594
    %v8597 = vunpack.c.l.s4 1966171168
    %v8598 = vunpack.c.0.s8 %v8597
    %v8599 = vlaneseq
    %v8600 = vshrl.u32 %v8599, 7
    %v8601 = vsub.s32 %v8598, %v8600
    %v8602 = vrot.slane %v8580, %v8601
    %v8604 = vunpack.c.l.s4 1966171168
    %v8605 = vunpack.c.0.s8 %v8604
    %v8606 = vlaneseq
    %v8607 = vshrl.u32 %v8606, 7
    %v8608 = vsub.s32 %v8605, %v8607
    %v8609 = vrot.slane %v8581, %v8608
    %v8610 = vcombine.high %v8588, %v8588
    %v8611 = vcombine.high %v8595, %v8595
    %v8612 = vcombine.high %v8602, %v8602
    %v8613 = vcombine.high %v8609, %v8609
    %v8614 = vcombine.high %v8126, %v8126
    %v8616 = vunpack.c.l.s4 1966171168
    %v8617 = vunpack.c.0.s8 %v8616
    %v8618 = vlaneseq
    %v8619 = vshrl.u32 %v8618, 7
    %v8620 = vsub.s32 %v8617, %v8619
    %v8621 = vrot.slane %v8126, %v8620
    %v8623 = vunpack.c.l.s4 1966171168
    %v8624 = vunpack.c.0.s8 %v8623
    %v8625 = vlaneseq
    %v8626 = vshrl.u32 %v8625, 7
    %v8627 = vsub.s32 %v8624, %v8626
    %v8628 = vrot.slane %v8614, %v8627
    %v8629 = vcombine.high %v8621, %v8621
    %v8630 = vcombine.high %v8628, %v8628
    %v8632 = vunpack.c.l.s4 1966171168
    %v8633 = vunpack.c.0.s8 %v8632
    %v8634 = vlaneseq
    %v8635 = vshrl.u32 %v8634, 7
    %v8636 = vsub.s32 %v8633, %v8635
    %v8637 = vrot.slane %v8621, %v8636
    %v8639 = vunpack.c.l.s4 1966171168
    %v8640 = vunpack.c.0.s8 %v8639
    %v8641 = vlaneseq
    %v8642 = vshrl.u32 %v8641, 7
    %v8643 = vsub.s32 %v8640, %v8642
    %v8644 = vrot.slane %v8628, %v8643
    %v8646 = vunpack.c.l.s4 1966171168
    %v8647 = vunpack.c.0.s8 %v8646
    %v8648 = vlaneseq
    %v8649 = vshrl.u32 %v8648, 7
    %v8650 = vsub.s32 %v8647, %v8649
    %v8651 = vrot.slane %v8629, %v8650
    %v8653 = vunpack.c.l.s4 1966171168
    %v8654 = vunpack.c.0.s8 %v8653
    %v8655 = vlaneseq
    %v8656 = vshrl.u32 %v8655, 7
    %v8657 = vsub.s32 %v8654, %v8656
    %v8658 = vrot.slane %v8630, %v8657
    %v8659 = vcombine.high %v8637, %v8637
    %v8660 = vcombine.high %v8644, %v8644
    %v8661 = vcombine.high %v8651, %v8651
    %v8662 = vcombine.high %v8658, %v8658
    %v8663 = vcombine.high %v8131, %v8131
    %v8665 = vunpack.c.l.s4 1966171168
    %v8666 = vunpack.c.0.s8 %v8665
    %v8667 = vlaneseq
    %v8668 = vshrl.u32 %v8667, 7
    %v8669 = vsub.s32 %v8666, %v8668
    %v8670 = vrot.slane %v8131, %v8669
    %v8672 = vunpack.c.l.s4 1966171168
    %v8673 = vunpack.c.0.s8 %v8672
    %v8674 = vlaneseq
    %v8675 = vshrl.u32 %v8674, 7
    %v8676 = vsub.s32 %v8673, %v8675
    %v8677 = vrot.slane %v8663, %v8676
    %v8678 = vcombine.high %v8670, %v8670
    %v8679 = vcombine.high %v8677, %v8677
    %v8681 = vunpack.c.l.s4 1966171168
    %v8682 = vunpack.c.0.s8 %v8681
    %v8683 = vlaneseq
    %v8684 = vshrl.u32 %v8683, 7
    %v8685 = vsub.s32 %v8682, %v8684
    %v8686 = vrot.slane %v8670, %v8685
    %v8688 = vunpack.c.l.s4 1966171168
    %v8689 = vunpack.c.0.s8 %v8688
    %v8690 = vlaneseq
    %v8691 = vshrl.u32 %v8690, 7
    %v8692 = vsub.s32 %v8689, %v8691
    %v8693 = vrot.slane %v8677, %v8692
    %v8695 = vunpack.c.l.s4 1966171168
    %v8696 = vunpack.c.0.s8 %v8695
    %v8697 = vlaneseq
    %v8698 = vshrl.u32 %v8697, 7
    %v8699 = vsub.s32 %v8696, %v8698
    %v8700 = vrot.slane %v8678, %v8699
    %v8702 = vunpack.c.l.s4 1966171168
    %v8703 = vunpack.c.0.s8 %v8702
    %v8704 = vlaneseq
    %v8705 = vshrl.u32 %v8704, 7
    %v8706 = vsub.s32 %v8703, %v8705
    %v8707 = vrot.slane %v8679, %v8706
    %v8708 = vcombine.high %v8686, %v8686
    %v8709 = vcombine.high %v8693, %v8693
    %v8710 = vcombine.high %v8700, %v8700
    %v8711 = vcombine.high %v8707, %v8707
    %v8712 = vcombine.high %v8136, %v8136
    %v8714 = vunpack.c.l.s4 1966171168
    %v8715 = vunpack.c.0.s8 %v8714
    %v8716 = vlaneseq
    %v8717 = vshrl.u32 %v8716, 7
    %v8718 = vsub.s32 %v8715, %v8717
    %v8719 = vrot.slane %v8136, %v8718
    %v8721 = vunpack.c.l.s4 1966171168
    %v8722 = vunpack.c.0.s8 %v8721
    %v8723 = vlaneseq
    %v8724 = vshrl.u32 %v8723, 7
    %v8725 = vsub.s32 %v8722, %v8724
    %v8726 = vrot.slane %v8712, %v8725
    %v8727 = vcombine.high %v8719, %v8719
    %v8728 = vcombine.high %v8726, %v8726
    %v8730 = vunpack.c.l.s4 1966171168
    %v8731 = vunpack.c.0.s8 %v8730
    %v8732 = vlaneseq
    %v8733 = vshrl.u32 %v8732, 7
    %v8734 = vsub.s32 %v8731, %v8733
    %v8735 = vrot.slane %v8719, %v8734
    %v8737 = vunpack.c.l.s4 1966171168
    %v8738 = vunpack.c.0.s8 %v8737
    %v8739 = vlaneseq
    %v8740 = vshrl.u32 %v8739, 7
    %v8741 = vsub.s32 %v8738, %v8740
    %v8742 = vrot.slane %v8726, %v8741
    %v8744 = vunpack.c.l.s4 1966171168
    %v8745 = vunpack.c.0.s8 %v8744
    %v8746 = vlaneseq
    %v8747 = vshrl.u32 %v8746, 7
    %v8748 = vsub.s32 %v8745, %v8747
    %v8749 = vrot.slane %v8727, %v8748
    %v8751 = vunpack.c.l.s4 1966171168
    %v8752 = vunpack.c.0.s8 %v8751
    %v8753 = vlaneseq
    %v8754 = vshrl.u32 %v8753, 7
    %v8755 = vsub.s32 %v8752, %v8754
    %v8756 = vrot.slane %v8728, %v8755
    %v8757 = vcombine.high %v8735, %v8735
    %v8758 = vcombine.high %v8742, %v8742
    %v8759 = vcombine.high %v8749, %v8749
    %v8760 = vcombine.high %v8756, %v8756
    %v8761 = vcombine.high %v8141, %v8141
    %v8763 = vunpack.c.l.s4 1966171168
    %v8764 = vunpack.c.0.s8 %v8763
    %v8765 = vlaneseq
    %v8766 = vshrl.u32 %v8765, 7
    %v8767 = vsub.s32 %v8764, %v8766
    %v8768 = vrot.slane %v8141, %v8767
    %v8770 = vunpack.c.l.s4 1966171168
    %v8771 = vunpack.c.0.s8 %v8770
    %v8772 = vlaneseq
    %v8773 = vshrl.u32 %v8772, 7
    %v8774 = vsub.s32 %v8771, %v8773
    %v8775 = vrot.slane %v8761, %v8774
    %v8776 = vcombine.high %v8768, %v8768
    %v8777 = vcombine.high %v8775, %v8775
    %v8779 = vunpack.c.l.s4 1966171168
    %v8780 = vunpack.c.0.s8 %v8779
    %v8781 = vlaneseq
    %v8782 = vshrl.u32 %v8781, 7
    %v8783 = vsub.s32 %v8780, %v8782
    %v8784 = vrot.slane %v8768, %v8783
    %v8786 = vunpack.c.l.s4 1966171168
    %v8787 = vunpack.c.0.s8 %v8786
    %v8788 = vlaneseq
    %v8789 = vshrl.u32 %v8788, 7
    %v8790 = vsub.s32 %v8787, %v8789
    %v8791 = vrot.slane %v8775, %v8790
    %v8793 = vunpack.c.l.s4 1966171168
    %v8794 = vunpack.c.0.s8 %v8793
    %v8795 = vlaneseq
    %v8796 = vshrl.u32 %v8795, 7
    %v8797 = vsub.s32 %v8794, %v8796
    %v8798 = vrot.slane %v8776, %v8797
    %v8800 = vunpack.c.l.s4 1966171168
    %v8801 = vunpack.c.0.s8 %v8800
    %v8802 = vlaneseq
    %v8803 = vshrl.u32 %v8802, 7
    %v8804 = vsub.s32 %v8801, %v8803
    %v8805 = vrot.slane %v8777, %v8804
    %v8806 = vcombine.high %v8784, %v8784
    %v8807 = vcombine.high %v8791, %v8791
    %v8808 = vcombine.high %v8798, %v8798
    %v8809 = vcombine.high %v8805, %v8805
    %v8810 = vcombine.high %v8146, %v8146
    %v8812 = vunpack.c.l.s4 1966171168
    %v8813 = vunpack.c.0.s8 %v8812
    %v8814 = vlaneseq
    %v8815 = vshrl.u32 %v8814, 7
    %v8816 = vsub.s32 %v8813, %v8815
    %v8817 = vrot.slane %v8146, %v8816
    %v8819 = vunpack.c.l.s4 1966171168
    %v8820 = vunpack.c.0.s8 %v8819
    %v8821 = vlaneseq
    %v8822 = vshrl.u32 %v8821, 7
    %v8823 = vsub.s32 %v8820, %v8822
    %v8824 = vrot.slane %v8810, %v8823
    %v8825 = vcombine.high %v8817, %v8817
    %v8826 = vcombine.high %v8824, %v8824
    %v8828 = vunpack.c.l.s4 1966171168
    %v8829 = vunpack.c.0.s8 %v8828
    %v8830 = vlaneseq
    %v8831 = vshrl.u32 %v8830, 7
    %v8832 = vsub.s32 %v8829, %v8831
    %v8833 = vrot.slane %v8817, %v8832
    %v8835 = vunpack.c.l.s4 1966171168
    %v8836 = vunpack.c.0.s8 %v8835
    %v8837 = vlaneseq
    %v8838 = vshrl.u32 %v8837, 7
    %v8839 = vsub.s32 %v8836, %v8838
    %v8840 = vrot.slane %v8824, %v8839
    %v8842 = vunpack.c.l.s4 1966171168
    %v8843 = vunpack.c.0.s8 %v8842
    %v8844 = vlaneseq
    %v8845 = vshrl.u32 %v8844, 7
    %v8846 = vsub.s32 %v8843, %v8845
    %v8847 = vrot.slane %v8825, %v8846
    %v8849 = vunpack.c.l.s4 1966171168
    %v8850 = vunpack.c.0.s8 %v8849
    %v8851 = vlaneseq
    %v8852 = vshrl.u32 %v8851, 7
    %v8853 = vsub.s32 %v8850, %v8852
    %v8854 = vrot.slane %v8826, %v8853
    %v8855 = vcombine.high %v8833, %v8833
    %v8856 = vcombine.high %v8840, %v8840
    %v8857 = vcombine.high %v8847, %v8847
    %v8858 = vcombine.high %v8854, %v8854
    %v8859 = vcombine.high %v8151, %v8151
    %v8861 = vunpack.c.l.s4 1966171168
    %v8862 = vunpack.c.0.s8 %v8861
    %v8863 = vlaneseq
    %v8864 = vshrl.u32 %v8863, 7
    %v8865 = vsub.s32 %v8862, %v8864
    %v8866 = vrot.slane %v8151, %v8865
    %v8868 = vunpack.c.l.s4 1966171168
    %v8869 = vunpack.c.0.s8 %v8868
    %v8870 = vlaneseq
    %v8871 = vshrl.u32 %v8870, 7
    %v8872 = vsub.s32 %v8869, %v8871
    %v8873 = vrot.slane %v8859, %v8872
    %v8874 = vcombine.high %v8866, %v8866
    %v8875 = vcombine.high %v8873, %v8873
    %v8877 = vunpack.c.l.s4 1966171168
    %v8878 = vunpack.c.0.s8 %v8877
    %v8879 = vlaneseq
    %v8880 = vshrl.u32 %v8879, 7
    %v8881 = vsub.s32 %v8878, %v8880
    %v8882 = vrot.slane %v8866, %v8881
    %v8884 = vunpack.c.l.s4 1966171168
    %v8885 = vunpack.c.0.s8 %v8884
    %v8886 = vlaneseq
    %v8887 = vshrl.u32 %v8886, 7
    %v8888 = vsub.s32 %v8885, %v8887
    %v8889 = vrot.slane %v8873, %v8888
    %v8891 = vunpack.c.l.s4 1966171168
    %v8892 = vunpack.c.0.s8 %v8891
    %v8893 = vlaneseq
    %v8894 = vshrl.u32 %v8893, 7
    %v8895 = vsub.s32 %v8892, %v8894
    %v8896 = vrot.slane %v8874, %v8895
    %v8898 = vunpack.c.l.s4 1966171168
    %v8899 = vunpack.c.0.s8 %v8898
    %v8900 = vlaneseq
    %v8901 = vshrl.u32 %v8900, 7
    %v8902 = vsub.s32 %v8899, %v8901
    %v8903 = vrot.slane %v8875, %v8902
    %v8904 = vcombine.high %v8882, %v8882
    %v8905 = vcombine.high %v8889, %v8889
    %v8906 = vcombine.high %v8896, %v8896
    %v8907 = vcombine.high %v8903, %v8903
    %v8908 = vcombine.high %v8156, %v8156
    %v8910 = vunpack.c.l.s4 1966171168
    %v8911 = vunpack.c.0.s8 %v8910
    %v8912 = vlaneseq
    %v8913 = vshrl.u32 %v8912, 7
    %v8914 = vsub.s32 %v8911, %v8913
    %v8915 = vrot.slane %v8156, %v8914
    %v8917 = vunpack.c.l.s4 1966171168
    %v8918 = vunpack.c.0.s8 %v8917
    %v8919 = vlaneseq
    %v8920 = vshrl.u32 %v8919, 7
    %v8921 = vsub.s32 %v8918, %v8920
    %v8922 = vrot.slane %v8908, %v8921
    %v8923 = vcombine.high %v8915, %v8915
    %v8924 = vcombine.high %v8922, %v8922
    %v8926 = vunpack.c.l.s4 1966171168
    %v8927 = vunpack.c.0.s8 %v8926
    %v8928 = vlaneseq
    %v8929 = vshrl.u32 %v8928, 7
    %v8930 = vsub.s32 %v8927, %v8929
    %v8931 = vrot.slane %v8915, %v8930
    %v8933 = vunpack.c.l.s4 1966171168
    %v8934 = vunpack.c.0.s8 %v8933
    %v8935 = vlaneseq
    %v8936 = vshrl.u32 %v8935, 7
    %v8937 = vsub.s32 %v8934, %v8936
    %v8938 = vrot.slane %v8922, %v8937
    %v8940 = vunpack.c.l.s4 1966171168
    %v8941 = vunpack.c.0.s8 %v8940
    %v8942 = vlaneseq
    %v8943 = vshrl.u32 %v8942, 7
    %v8944 = vsub.s32 %v8941, %v8943
    %v8945 = vrot.slane %v8923, %v8944
    %v8947 = vunpack.c.l.s4 1966171168
    %v8948 = vunpack.c.0.s8 %v8947
    %v8949 = vlaneseq
    %v8950 = vshrl.u32 %v8949, 7
    %v8951 = vsub.s32 %v8948, %v8950
    %v8952 = vrot.slane %v8924, %v8951
    %v8953 = vcombine.high %v8931, %v8931
    %v8954 = vcombine.high %v8938, %v8938
    %v8955 = vcombine.high %v8945, %v8945
    %v8956 = vcombine.high %v8952, %v8952
    %v8957 = vcombine.high %v8161, %v8161
    %v8959 = vunpack.c.l.s4 1966171168
    %v8960 = vunpack.c.0.s8 %v8959
    %v8961 = vlaneseq
    %v8962 = vshrl.u32 %v8961, 7
    %v8963 = vsub.s32 %v8960, %v8962
    %v8964 = vrot.slane %v8161, %v8963
    %v8966 = vunpack.c.l.s4 1966171168
    %v8967 = vunpack.c.0.s8 %v8966
    %v8968 = vlaneseq
    %v8969 = vshrl.u32 %v8968, 7
    %v8970 = vsub.s32 %v8967, %v8969
    %v8971 = vrot.slane %v8957, %v8970
    %v8972 = vcombine.high %v8964, %v8964
    %v8973 = vcombine.high %v8971, %v8971
    %v8975 = vunpack.c.l.s4 1966171168
    %v8976 = vunpack.c.0.s8 %v8975
    %v8977 = vlaneseq
    %v8978 = vshrl.u32 %v8977, 7
    %v8979 = vsub.s32 %v8976, %v8978
    %v8980 = vrot.slane %v8964, %v8979
    %v8982 = vunpack.c.l.s4 1966171168
    %v8983 = vunpack.c.0.s8 %v8982
    %v8984 = vlaneseq
    %v8985 = vshrl.u32 %v8984, 7
    %v8986 = vsub.s32 %v8983, %v8985
    %v8987 = vrot.slane %v8971, %v8986
    %v8989 = vunpack.c.l.s4 1966171168
    %v8990 = vunpack.c.0.s8 %v8989
    %v8991 = vlaneseq
    %v8992 = vshrl.u32 %v8991, 7
    %v8993 = vsub.s32 %v8990, %v8992
    %v8994 = vrot.slane %v8972, %v8993
    %v8996 = vunpack.c.l.s4 1966171168
    %v8997 = vunpack.c.0.s8 %v8996
    %v8998 = vlaneseq
    %v8999 = vshrl.u32 %v8998, 7
    %v9000 = vsub.s32 %v8997, %v8999
    %v9001 = vrot.slane %v8973, %v9000
    %v9002 = vcombine.high %v8980, %v8980
    %v9003 = vcombine.high %v8987, %v8987
    %v9004 = vcombine.high %v8994, %v8994
    %v9005 = vcombine.high %v9001, %v9001
    %v9006 = vcombine.high %v8166, %v8166
    %v9008 = vunpack.c.l.s4 1966171168
    %v9009 = vunpack.c.0.s8 %v9008
    %v9010 = vlaneseq
    %v9011 = vshrl.u32 %v9010, 7
    %v9012 = vsub.s32 %v9009, %v9011
    %v9013 = vrot.slane %v8166, %v9012
    %v9015 = vunpack.c.l.s4 1966171168
    %v9016 = vunpack.c.0.s8 %v9015
    %v9017 = vlaneseq
    %v9018 = vshrl.u32 %v9017, 7
    %v9019 = vsub.s32 %v9016, %v9018
    %v9020 = vrot.slane %v9006, %v9019
    %v9021 = vcombine.high %v9013, %v9013
    %v9022 = vcombine.high %v9020, %v9020
    %v9024 = vunpack.c.l.s4 1966171168
    %v9025 = vunpack.c.0.s8 %v9024
    %v9026 = vlaneseq
    %v9027 = vshrl.u32 %v9026, 7
    %v9028 = vsub.s32 %v9025, %v9027
    %v9029 = vrot.slane %v9013, %v9028
    %v9031 = vunpack.c.l.s4 1966171168
    %v9032 = vunpack.c.0.s8 %v9031
    %v9033 = vlaneseq
    %v9034 = vshrl.u32 %v9033, 7
    %v9035 = vsub.s32 %v9032, %v9034
    %v9036 = vrot.slane %v9020, %v9035
    %v9038 = vunpack.c.l.s4 1966171168
    %v9039 = vunpack.c.0.s8 %v9038
    %v9040 = vlaneseq
    %v9041 = vshrl.u32 %v9040, 7
    %v9042 = vsub.s32 %v9039, %v9041
    %v9043 = vrot.slane %v9021, %v9042
    %v9045 = vunpack.c.l.s4 1966171168
    %v9046 = vunpack.c.0.s8 %v9045
    %v9047 = vlaneseq
    %v9048 = vshrl.u32 %v9047, 7
    %v9049 = vsub.s32 %v9046, %v9048
    %v9050 = vrot.slane %v9022, %v9049
    %v9051 = vcombine.high %v9029, %v9029
    %v9052 = vcombine.high %v9036, %v9036
    %v9053 = vcombine.high %v9043, %v9043
    %v9054 = vcombine.high %v9050, %v9050
    %v9055 = vcombine.high %v8171, %v8171
    %v9057 = vunpack.c.l.s4 1966171168
    %v9058 = vunpack.c.0.s8 %v9057
    %v9059 = vlaneseq
    %v9060 = vshrl.u32 %v9059, 7
    %v9061 = vsub.s32 %v9058, %v9060
    %v9062 = vrot.slane %v8171, %v9061
    %v9064 = vunpack.c.l.s4 1966171168
    %v9065 = vunpack.c.0.s8 %v9064
    %v9066 = vlaneseq
    %v9067 = vshrl.u32 %v9066, 7
    %v9068 = vsub.s32 %v9065, %v9067
    %v9069 = vrot.slane %v9055, %v9068
    %v9070 = vcombine.high %v9062, %v9062
    %v9071 = vcombine.high %v9069, %v9069
    %v9073 = vunpack.c.l.s4 1966171168
    %v9074 = vunpack.c.0.s8 %v9073
    %v9075 = vlaneseq
    %v9076 = vshrl.u32 %v9075, 7
    %v9077 = vsub.s32 %v9074, %v9076
    %v9078 = vrot.slane %v9062, %v9077
    %v9080 = vunpack.c.l.s4 1966171168
    %v9081 = vunpack.c.0.s8 %v9080
    %v9082 = vlaneseq
    %v9083 = vshrl.u32 %v9082, 7
    %v9084 = vsub.s32 %v9081, %v9083
    %v9085 = vrot.slane %v9069, %v9084
    %v9087 = vunpack.c.l.s4 1966171168
    %v9088 = vunpack.c.0.s8 %v9087
    %v9089 = vlaneseq
    %v9090 = vshrl.u32 %v9089, 7
    %v9091 = vsub.s32 %v9088, %v9090
    %v9092 = vrot.slane %v9070, %v9091
    %v9094 = vunpack.c.l.s4 1966171168
    %v9095 = vunpack.c.0.s8 %v9094
    %v9096 = vlaneseq
    %v9097 = vshrl.u32 %v9096, 7
    %v9098 = vsub.s32 %v9095, %v9097
    %v9099 = vrot.slane %v9071, %v9098
    %v9100 = vcombine.high %v9078, %v9078
    %v9101 = vcombine.high %v9085, %v9085
    %v9102 = vcombine.high %v9092, %v9092
    %v9103 = vcombine.high %v9099, %v9099
    %v9104 = vcombine.high %v8176, %v8176
    %v9106 = vunpack.c.l.s4 1966171168
    %v9107 = vunpack.c.0.s8 %v9106
    %v9108 = vlaneseq
    %v9109 = vshrl.u32 %v9108, 7
    %v9110 = vsub.s32 %v9107, %v9109
    %v9111 = vrot.slane %v8176, %v9110
    %v9113 = vunpack.c.l.s4 1966171168
    %v9114 = vunpack.c.0.s8 %v9113
    %v9115 = vlaneseq
    %v9116 = vshrl.u32 %v9115, 7
    %v9117 = vsub.s32 %v9114, %v9116
    %v9118 = vrot.slane %v9104, %v9117
    %v9119 = vcombine.high %v9111, %v9111
    %v9120 = vcombine.high %v9118, %v9118
    %v9122 = vunpack.c.l.s4 1966171168
    %v9123 = vunpack.c.0.s8 %v9122
    %v9124 = vlaneseq
    %v9125 = vshrl.u32 %v9124, 7
    %v9126 = vsub.s32 %v9123, %v9125
    %v9127 = vrot.slane %v9111, %v9126
    %v9129 = vunpack.c.l.s4 1966171168
    %v9130 = vunpack.c.0.s8 %v9129
    %v9131 = vlaneseq
    %v9132 = vshrl.u32 %v9131, 7
    %v9133 = vsub.s32 %v9130, %v9132
    %v9134 = vrot.slane %v9118, %v9133
    %v9136 = vunpack.c.l.s4 1966171168
    %v9137 = vunpack.c.0.s8 %v9136
    %v9138 = vlaneseq
    %v9139 = vshrl.u32 %v9138, 7
    %v9140 = vsub.s32 %v9137, %v9139
    %v9141 = vrot.slane %v9119, %v9140
    %v9143 = vunpack.c.l.s4 1966171168
    %v9144 = vunpack.c.0.s8 %v9143
    %v9145 = vlaneseq
    %v9146 = vshrl.u32 %v9145, 7
    %v9147 = vsub.s32 %v9144, %v9146
    %v9148 = vrot.slane %v9120, %v9147
    %v9149 = vcombine.high %v9127, %v9127
    %v9150 = vcombine.high %v9134, %v9134
    %v9151 = vcombine.high %v9141, %v9141
    %v9152 = vcombine.high %v9148, %v9148
    %v9153 = vcombine.high %v8181, %v8181
    %v9155 = vunpack.c.l.s4 1966171168
    %v9156 = vunpack.c.0.s8 %v9155
    %v9157 = vlaneseq
    %v9158 = vshrl.u32 %v9157, 7
    %v9159 = vsub.s32 %v9156, %v9158
    %v9160 = vrot.slane %v8181, %v9159
    %v9162 = vunpack.c.l.s4 1966171168
    %v9163 = vunpack.c.0.s8 %v9162
    %v9164 = vlaneseq
    %v9165 = vshrl.u32 %v9164, 7
    %v9166 = vsub.s32 %v9163, %v9165
    %v9167 = vrot.slane %v9153, %v9166
    %v9168 = vcombine.high %v9160, %v9160
    %v9169 = vcombine.high %v9167, %v9167
    %v9171 = vunpack.c.l.s4 1966171168
    %v9172 = vunpack.c.0.s8 %v9171
    %v9173 = vlaneseq
    %v9174 = vshrl.u32 %v9173, 7
    %v9175 = vsub.s32 %v9172, %v9174
    %v9176 = vrot.slane %v9160, %v9175
    %v9178 = vunpack.c.l.s4 1966171168
    %v9179 = vunpack.c.0.s8 %v9178
    %v9180 = vlaneseq
    %v9181 = vshrl.u32 %v9180, 7
    %v9182 = vsub.s32 %v9179, %v9181
    %v9183 = vrot.slane %v9167, %v9182
    %v9185 = vunpack.c.l.s4 1966171168
    %v9186 = vunpack.c.0.s8 %v9185
    %v9187 = vlaneseq
    %v9188 = vshrl.u32 %v9187, 7
    %v9189 = vsub.s32 %v9186, %v9188
    %v9190 = vrot.slane %v9168, %v9189
    %v9192 = vunpack.c.l.s4 1966171168
    %v9193 = vunpack.c.0.s8 %v9192
    %v9194 = vlaneseq
    %v9195 = vshrl.u32 %v9194, 7
    %v9196 = vsub.s32 %v9193, %v9195
    %v9197 = vrot.slane %v9169, %v9196
    %v9198 = vcombine.high %v9176, %v9176
    %v9199 = vcombine.high %v9183, %v9183
    %v9200 = vcombine.high %v9190, %v9190
    %v9201 = vcombine.high %v9197, %v9197
    %v9202 = vcombine.high %v8186, %v8186
    %v9204 = vunpack.c.l.s4 1966171168
    %v9205 = vunpack.c.0.s8 %v9204
    %v9206 = vlaneseq
    %v9207 = vshrl.u32 %v9206, 7
    %v9208 = vsub.s32 %v9205, %v9207
    %v9209 = vrot.slane %v8186, %v9208
    %v9211 = vunpack.c.l.s4 1966171168
    %v9212 = vunpack.c.0.s8 %v9211
    %v9213 = vlaneseq
    %v9214 = vshrl.u32 %v9213, 7
    %v9215 = vsub.s32 %v9212, %v9214
    %v9216 = vrot.slane %v9202, %v9215
    %v9217 = vcombine.high %v9209, %v9209
    %v9218 = vcombine.high %v9216, %v9216
    %v9220 = vunpack.c.l.s4 1966171168
    %v9221 = vunpack.c.0.s8 %v9220
    %v9222 = vlaneseq
    %v9223 = vshrl.u32 %v9222, 7
    %v9224 = vsub.s32 %v9221, %v9223
    %v9225 = vrot.slane %v9209, %v9224
    %v9227 = vunpack.c.l.s4 1966171168
    %v9228 = vunpack.c.0.s8 %v9227
    %v9229 = vlaneseq
    %v9230 = vshrl.u32 %v9229, 7
    %v9231 = vsub.s32 %v9228, %v9230
    %v9232 = vrot.slane %v9216, %v9231
    %v9234 = vunpack.c.l.s4 1966171168
    %v9235 = vunpack.c.0.s8 %v9234
    %v9236 = vlaneseq
    %v9237 = vshrl.u32 %v9236, 7
    %v9238 = vsub.s32 %v9235, %v9237
    %v9239 = vrot.slane %v9217, %v9238
    %v9241 = vunpack.c.l.s4 1966171168
    %v9242 = vunpack.c.0.s8 %v9241
    %v9243 = vlaneseq
    %v9244 = vshrl.u32 %v9243, 7
    %v9245 = vsub.s32 %v9242, %v9244
    %v9246 = vrot.slane %v9218, %v9245
    %v9247 = vcombine.high %v9225, %v9225
    %v9248 = vcombine.high %v9232, %v9232
    %v9249 = vcombine.high %v9239, %v9239
    %v9250 = vcombine.high %v9246, %v9246
    %v9251 = vcombine.high %v8191, %v8191
    %v9253 = vunpack.c.l.s4 1966171168
    %v9254 = vunpack.c.0.s8 %v9253
    %v9255 = vlaneseq
    %v9256 = vshrl.u32 %v9255, 7
    %v9257 = vsub.s32 %v9254, %v9256
    %v9258 = vrot.slane %v8191, %v9257
    %v9260 = vunpack.c.l.s4 1966171168
    %v9261 = vunpack.c.0.s8 %v9260
    %v9262 = vlaneseq
    %v9263 = vshrl.u32 %v9262, 7
    %v9264 = vsub.s32 %v9261, %v9263
    %v9265 = vrot.slane %v9251, %v9264
    %v9266 = vcombine.high %v9258, %v9258
    %v9267 = vcombine.high %v9265, %v9265
    %v9269 = vunpack.c.l.s4 1966171168
    %v9270 = vunpack.c.0.s8 %v9269
    %v9271 = vlaneseq
    %v9272 = vshrl.u32 %v9271, 7
    %v9273 = vsub.s32 %v9270, %v9272
    %v9274 = vrot.slane %v9258, %v9273
    %v9276 = vunpack.c.l.s4 1966171168
    %v9277 = vunpack.c.0.s8 %v9276
    %v9278 = vlaneseq
    %v9279 = vshrl.u32 %v9278, 7
    %v9280 = vsub.s32 %v9277, %v9279
    %v9281 = vrot.slane %v9265, %v9280
    %v9283 = vunpack.c.l.s4 1966171168
    %v9284 = vunpack.c.0.s8 %v9283
    %v9285 = vlaneseq
    %v9286 = vshrl.u32 %v9285, 7
    %v9287 = vsub.s32 %v9284, %v9286
    %v9288 = vrot.slane %v9266, %v9287
    %v9290 = vunpack.c.l.s4 1966171168
    %v9291 = vunpack.c.0.s8 %v9290
    %v9292 = vlaneseq
    %v9293 = vshrl.u32 %v9292, 7
    %v9294 = vsub.s32 %v9291, %v9293
    %v9295 = vrot.slane %v9267, %v9294
    %v9296 = vcombine.high %v9274, %v9274
    %v9297 = vcombine.high %v9281, %v9281
    %v9298 = vcombine.high %v9288, %v9288
    %v9299 = vcombine.high %v9295, %v9295
    %v9300 = vcombine.high %v8196, %v8196
    %v9302 = vunpack.c.l.s4 1966171168
    %v9303 = vunpack.c.0.s8 %v9302
    %v9304 = vlaneseq
    %v9305 = vshrl.u32 %v9304, 7
    %v9306 = vsub.s32 %v9303, %v9305
    %v9307 = vrot.slane %v8196, %v9306
    %v9309 = vunpack.c.l.s4 1966171168
    %v9310 = vunpack.c.0.s8 %v9309
    %v9311 = vlaneseq
    %v9312 = vshrl.u32 %v9311, 7
    %v9313 = vsub.s32 %v9310, %v9312
    %v9314 = vrot.slane %v9300, %v9313
    %v9315 = vcombine.high %v9307, %v9307
    %v9316 = vcombine.high %v9314, %v9314
    %v9318 = vunpack.c.l.s4 1966171168
    %v9319 = vunpack.c.0.s8 %v9318
    %v9320 = vlaneseq
    %v9321 = vshrl.u32 %v9320, 7
    %v9322 = vsub.s32 %v9319, %v9321
    %v9323 = vrot.slane %v9307, %v9322
    %v9325 = vunpack.c.l.s4 1966171168
    %v9326 = vunpack.c.0.s8 %v9325
    %v9327 = vlaneseq
    %v9328 = vshrl.u32 %v9327, 7
    %v9329 = vsub.s32 %v9326, %v9328
    %v9330 = vrot.slane %v9314, %v9329
    %v9332 = vunpack.c.l.s4 1966171168
    %v9333 = vunpack.c.0.s8 %v9332
    %v9334 = vlaneseq
    %v9335 = vshrl.u32 %v9334, 7
    %v9336 = vsub.s32 %v9333, %v9335
    %v9337 = vrot.slane %v9315, %v9336
    %v9339 = vunpack.c.l.s4 1966171168
    %v9340 = vunpack.c.0.s8 %v9339
    %v9341 = vlaneseq
    %v9342 = vshrl.u32 %v9341, 7
    %v9343 = vsub.s32 %v9340, %v9342
    %v9344 = vrot.slane %v9316, %v9343
    %v9345 = vcombine.high %v9323, %v9323
    %v9346 = vcombine.high %v9330, %v9330
    %v9347 = vcombine.high %v9337, %v9337
    %v9348 = vcombine.high %v9344, %v9344
    %v9349 = vcombine.low %v8245, %v8259
    %v9350 = vcombine.low %v8267, %v8269
    %v9351 = vcombine.low %v8252, %v8266
    %v9352 = vcombine.low %v8268, %v8270
    %v9354 = vunpack.c.l.s4 1966171168
    %v9355 = vunpack.c.0.s8 %v9354
    %v9356 = vlaneseq
    %v9357 = vshrl.u32 %v9356, 7
    %v9358 = vsub.s32 %v9355, %v9357
    %v9359 = vrot.slane %v9349, %v9358
    %v9361 = vunpack.c.l.s4 1966171168
    %v9362 = vunpack.c.0.s8 %v9361
    %v9363 = vlaneseq
    %v9364 = vshrl.u32 %v9363, 7
    %v9365 = vsub.s32 %v9362, %v9364
    %v9366 = vrot.slane %v9350, %v9365
    %v9368 = vunpack.c.l.s4 1966171168
    %v9369 = vunpack.c.0.s8 %v9368
    %v9370 = vlaneseq
    %v9371 = vshrl.u32 %v9370, 7
    %v9372 = vsub.s32 %v9369, %v9371
    %v9373 = vrot.slane %v9351, %v9372
    %v9375 = vunpack.c.l.s4 1966171168
    %v9376 = vunpack.c.0.s8 %v9375
    %v9377 = vlaneseq
    %v9378 = vshrl.u32 %v9377, 7
    %v9379 = vsub.s32 %v9376, %v9378
    %v9380 = vrot.slane %v9352, %v9379
    %v9381 = vcombine.low %v9359, %v9366
    %v9382 = vcombine.low %v9373, %v9380
    %v9384 = vunpack.c.l.s4 1966171168
    %v9385 = vunpack.c.0.s8 %v9384
    %v9386 = vlaneseq
    %v9387 = vshrl.u32 %v9386, 7
    %v9388 = vsub.s32 %v9385, %v9387
    %v9389 = vrot.slane %v9381, %v9388
    %v9391 = vunpack.c.l.s4 1966171168
    %v9392 = vunpack.c.0.s8 %v9391
    %v9393 = vlaneseq
    %v9394 = vshrl.u32 %v9393, 7
    %v9395 = vsub.s32 %v9392, %v9394
    %v9396 = vrot.slane %v9382, %v9395
    %v9397 = vcombine.low %v9389, %v9396
    %v9398 = vcombine.low %v8294, %v8308
    %v9399 = vcombine.low %v8316, %v8318
    %v9400 = vcombine.low %v8301, %v8315
    %v9401 = vcombine.low %v8317, %v8319
    %v9403 = vunpack.c.l.s4 1966171168
    %v9404 = vunpack.c.0.s8 %v9403
    %v9405 = vlaneseq
    %v9406 = vshrl.u32 %v9405, 7
    %v9407 = vsub.s32 %v9404, %v9406
    %v9408 = vrot.slane %v9398, %v9407
    %v9410 = vunpack.c.l.s4 1966171168
    %v9411 = vunpack.c.0.s8 %v9410
    %v9412 = vlaneseq
    %v9413 = vshrl.u32 %v9412, 7
    %v9414 = vsub.s32 %v9411, %v9413
    %v9415 = vrot.slane %v9399, %v9414
    %v9417 = vunpack.c.l.s4 1966171168
    %v9418 = vunpack.c.0.s8 %v9417
    %v9419 = vlaneseq
    %v9420 = vshrl.u32 %v9419, 7
    %v9421 = vsub.s32 %v9418, %v9420
    %v9422 = vrot.slane %v9400, %v9421
    %v9424 = vunpack.c.l.s4 1966171168
    %v9425 = vunpack.c.0.s8 %v9424
    %v9426 = vlaneseq
    %v9427 = vshrl.u32 %v9426, 7
    %v9428 = vsub.s32 %v9425, %v9427
    %v9429 = vrot.slane %v9401, %v9428
    %v9430 = vcombine.low %v9408, %v9415
    %v9431 = vcombine.low %v9422, %v9429
    %v9433 = vunpack.c.l.s4 1966171168
    %v9434 = vunpack.c.0.s8 %v9433
    %v9435 = vlaneseq
    %v9436 = vshrl.u32 %v9435, 7
    %v9437 = vsub.s32 %v9434, %v9436
    %v9438 = vrot.slane %v9430, %v9437
    %v9440 = vunpack.c.l.s4 1966171168
    %v9441 = vunpack.c.0.s8 %v9440
    %v9442 = vlaneseq
    %v9443 = vshrl.u32 %v9442, 7
    %v9444 = vsub.s32 %v9441, %v9443
    %v9445 = vrot.slane %v9431, %v9444
    %v9446 = vcombine.low %v9438, %v9445
    %v9447 = vcombine.low %v8343, %v8357
    %v9448 = vcombine.low %v8365, %v8367
    %v9449 = vcombine.low %v8350, %v8364
    %v9451 = vunpack.c.l.s4 1966171168
    %v9452 = vunpack.c.0.s8 %v9451
    %v9453 = vlaneseq
    %v9454 = vshrl.u32 %v9453, 7
    %v9455 = vsub.s32 %v9452, %v9454
    %v9456 = vrot.slane %v9447, %v9455
    %v9458 = vunpack.c.l.s4 1966171168
    %v9459 = vunpack.c.0.s8 %v9458
    %v9460 = vlaneseq
    %v9461 = vshrl.u32 %v9460, 7
    %v9462 = vsub.s32 %v9459, %v9461
    %v9463 = vrot.slane %v9448, %v9462
    %v9465 = vunpack.c.l.s4 1966171168
    %v9466 = vunpack.c.0.s8 %v9465
    %v9467 = vlaneseq
    %v9468 = vshrl.u32 %v9467, 7
    %v9469 = vsub.s32 %v9466, %v9468
    %v9470 = vrot.slane %v9449, %v9469
    %v9472 = vunpack.c.l.s4 1966171168
    %v9473 = vunpack.c.0.s8 %v9472
    %v9474 = vlaneseq
    %v9475 = vshrl.u32 %v9474, 7
    %v9476 = vsub.s32 %v9473, %v9475
    %v9477 = vrot.slane %v8366, %v9476
    %v9478 = vcombine.low %v9456, %v9463
    %v9479 = vcombine.low %v9470, %v9477
    %v9481 = vunpack.c.l.s4 1966171168
    %v9482 = vunpack.c.0.s8 %v9481
    %v9483 = vlaneseq
    %v9484 = vshrl.u32 %v9483, 7
    %v9485 = vsub.s32 %v9482, %v9484
    %v9486 = vrot.slane %v9478, %v9485
    %v9488 = vunpack.c.l.s4 1966171168
    %v9489 = vunpack.c.0.s8 %v9488
    %v9490 = vlaneseq
    %v9491 = vshrl.u32 %v9490, 7
    %v9492 = vsub.s32 %v9489, %v9491
    %v9493 = vrot.slane %v9479, %v9492
    %v9494 = vcombine.low %v9486, %v9493
    %v9495 = vcombine.low %v8368, %v8392
    %v9496 = vcombine.low %v8406, %v8414
    %v9497 = vcombine.low %v8416, %v8399
    %v9498 = vcombine.low %v8413, %v8415
    %v9500 = vunpack.c.l.s4 1966171168
    %v9501 = vunpack.c.0.s8 %v9500
    %v9502 = vlaneseq
    %v9503 = vshrl.u32 %v9502, 7
    %v9504 = vsub.s32 %v9501, %v9503
    %v9505 = vrot.slane %v9495, %v9504
    %v9507 = vunpack.c.l.s4 1966171168
    %v9508 = vunpack.c.0.s8 %v9507
    %v9509 = vlaneseq
    %v9510 = vshrl.u32 %v9509, 7
    %v9511 = vsub.s32 %v9508, %v9510
    %v9512 = vrot.slane %v9496, %v9511
    %v9514 = vunpack.c.l.s4 1966171168
    %v9515 = vunpack.c.0.s8 %v9514
    %v9516 = vlaneseq
    %v9517 = vshrl.u32 %v9516, 7
    %v9518 = vsub.s32 %v9515, %v9517
    %v9519 = vrot.slane %v9497, %v9518
    %v9521 = vunpack.c.l.s4 1966171168
    %v9522 = vunpack.c.0.s8 %v9521
    %v9523 = vlaneseq
    %v9524 = vshrl.u32 %v9523, 7
    %v9525 = vsub.s32 %v9522, %v9524
    %v9526 = vrot.slane %v9498, %v9525
    %v9527 = vcombine.low %v9505, %v9512
    %v9528 = vcombine.low %v9519, %v9526
    %v9530 = vunpack.c.l.s4 1966171168
    %v9531 = vunpack.c.0.s8 %v9530
    %v9532 = vlaneseq
    %v9533 = vshrl.u32 %v9532, 7
    %v9534 = vsub.s32 %v9531, %v9533
    %v9535 = vrot.slane %v9527, %v9534
    %v9537 = vunpack.c.l.s4 1966171168
    %v9538 = vunpack.c.0.s8 %v9537
    %v9539 = vlaneseq
    %v9540 = vshrl.u32 %v9539, 7
    %v9541 = vsub.s32 %v9538, %v9540
    %v9542 = vrot.slane %v9528, %v9541
    %v9543 = vcombine.low %v9535, %v9542
    %v9544 = vcombine.low %v8417, %v8441
    %v9545 = vcombine.low %v8455, %v8463
    %v9546 = vcombine.low %v8465, %v8448
    %v9547 = vcombine.low %v8462, %v8464
    %v9549 = vunpack.c.l.s4 1966171168
    %v9550 = vunpack.c.0.s8 %v9549
    %v9551 = vlaneseq
    %v9552 = vshrl.u32 %v9551, 7
    %v9553 = vsub.s32 %v9550, %v9552
    %v9554 = vrot.slane %v9544, %v9553
    %v9556 = vunpack.c.l.s4 1966171168
    %v9557 = vunpack.c.0.s8 %v9556
    %v9558 = vlaneseq
    %v9559 = vshrl.u32 %v9558, 7
    %v9560 = vsub.s32 %v9557, %v9559
    %v9561 = vrot.slane %v9545, %v9560
    %v9563 = vunpack.c.l.s4 1966171168
    %v9564 = vunpack.c.0.s8 %v9563
    %v9565 = vlaneseq
    %v9566 = vshrl.u32 %v9565, 7
    %v9567 = vsub.s32 %v9564, %v9566
    %v9568 = vrot.slane %v9546, %v9567
    %v9570 = vunpack.c.l.s4 1966171168
    %v9571 = vunpack.c.0.s8 %v9570
    %v9572 = vlaneseq
    %v9573 = vshrl.u32 %v9572, 7
    %v9574 = vsub.s32 %v9571, %v9573
    %v9575 = vrot.slane %v9547, %v9574
    %v9576 = vcombine.low %v9554, %v9561
    %v9577 = vcombine.low %v9568, %v9575
    %v9579 = vunpack.c.l.s4 1966171168
    %v9580 = vunpack.c.0.s8 %v9579
    %v9581 = vlaneseq
    %v9582 = vshrl.u32 %v9581, 7
    %v9583 = vsub.s32 %v9580, %v9582
    %v9584 = vrot.slane %v9576, %v9583
    %v9586 = vunpack.c.l.s4 1966171168
    %v9587 = vunpack.c.0.s8 %v9586
    %v9588 = vlaneseq
    %v9589 = vshrl.u32 %v9588, 7
    %v9590 = vsub.s32 %v9587, %v9589
    %v9591 = vrot.slane %v9577, %v9590
    %v9592 = vcombine.low %v9584, %v9591
    %v9593 = vcombine.low %v8466, %v8490
    %v9594 = vcombine.low %v8504, %v8512
    %v9595 = vcombine.low %v8514, %v8497
    %v9597 = vunpack.c.l.s4 1966171168
    %v9598 = vunpack.c.0.s8 %v9597
    %v9599 = vlaneseq
    %v9600 = vshrl.u32 %v9599, 7
    %v9601 = vsub.s32 %v9598, %v9600
    %v9602 = vrot.slane %v9593, %v9601
    %v9604 = vunpack.c.l.s4 1966171168
    %v9605 = vunpack.c.0.s8 %v9604
    %v9606 = vlaneseq
    %v9607 = vshrl.u32 %v9606, 7
    %v9608 = vsub.s32 %v9605, %v9607
    %v9609 = vrot.slane %v9594, %v9608
    %v9611 = vunpack.c.l.s4 1966171168
    %v9612 = vunpack.c.0.s8 %v9611
    %v9613 = vlaneseq
    %v9614 = vshrl.u32 %v9613, 7
    %v9615 = vsub.s32 %v9612, %v9614
    %v9616 = vrot.slane %v9595, %v9615
    %v9618 = vunpack.c.l.s4 1966171168
    %v9619 = vunpack.c.0.s8 %v9618
    %v9620 = vlaneseq
    %v9621 = vshrl.u32 %v9620, 7
    %v9622 = vsub.s32 %v9619, %v9621
    %v9623 = vrot.slane %v8511, %v9622
    %v9624 = vcombine.low %v9602, %v9609
    %v9625 = vcombine.low %v9616, %v9623
    %v9627 = vunpack.c.l.s4 1966171168
    %v9628 = vunpack.c.0.s8 %v9627
    %v9629 = vlaneseq
    %v9630 = vshrl.u32 %v9629, 7
    %v9631 = vsub.s32 %v9628, %v9630
    %v9632 = vrot.slane %v9624, %v9631
    %v9634 = vunpack.c.l.s4 1966171168
    %v9635 = vunpack.c.0.s8 %v9634
    %v9636 = vlaneseq
    %v9637 = vshrl.u32 %v9636, 7
    %v9638 = vsub.s32 %v9635, %v9637
    %v9639 = vrot.slane %v9625, %v9638
    %v9640 = vcombine.low %v9632, %v9639
    %v9641 = vcombine.low %v8513, %v8515
    %v9642 = vcombine.low %v8539, %v8553
    %v9643 = vcombine.low %v8561, %v8563
    %v9644 = vcombine.low %v8546, %v8560
    %v9646 = vunpack.c.l.s4 1966171168
    %v9647 = vunpack.c.0.s8 %v9646
    %v9648 = vlaneseq
    %v9649 = vshrl.u32 %v9648, 7
    %v9650 = vsub.s32 %v9647, %v9649
    %v9651 = vrot.slane %v9641, %v9650
    %v9653 = vunpack.c.l.s4 1966171168
    %v9654 = vunpack.c.0.s8 %v9653
    %v9655 = vlaneseq
    %v9656 = vshrl.u32 %v9655, 7
    %v9657 = vsub.s32 %v9654, %v9656
    %v9658 = vrot.slane %v9642, %v9657
    %v9660 = vunpack.c.l.s4 1966171168
    %v9661 = vunpack.c.0.s8 %v9660
    %v9662 = vlaneseq
    %v9663 = vshrl.u32 %v9662, 7
    %v9664 = vsub.s32 %v9661, %v9663
    %v9665 = vrot.slane %v9643, %v9664
    %v9667 = vunpack.c.l.s4 1966171168
    %v9668 = vunpack.c.0.s8 %v9667
    %v9669 = vlaneseq
    %v9670 = vshrl.u32 %v9669, 7
    %v9671 = vsub.s32 %v9668, %v9670
    %v9672 = vrot.slane %v9644, %v9671
    %v9673 = vcombine.low %v9651, %v9658
    %v9674 = vcombine.low %v9665, %v9672
    %v9676 = vunpack.c.l.s4 1966171168
    %v9677 = vunpack.c.0.s8 %v9676
    %v9678 = vlaneseq
    %v9679 = vshrl.u32 %v9678, 7
    %v9680 = vsub.s32 %v9677, %v9679
    %v9681 = vrot.slane %v9673, %v9680
    %v9683 = vunpack.c.l.s4 1966171168
    %v9684 = vunpack.c.0.s8 %v9683
    %v9685 = vlaneseq
    %v9686 = vshrl.u32 %v9685, 7
    %v9687 = vsub.s32 %v9684, %v9686
    %v9688 = vrot.slane %v9674, %v9687
    %v9689 = vcombine.low %v9681, %v9688
    %v9690 = vcombine.low %v8562, %v8564
    %v9691 = vcombine.low %v8588, %v8602
    %v9692 = vcombine.low %v8610, %v8612
    %v9693 = vcombine.low %v8595, %v8609
    %v9695 = vunpack.c.l.s4 1966171168
    %v9696 = vunpack.c.0.s8 %v9695
    %v9697 = vlaneseq
    %v9698 = vshrl.u32 %v9697, 7
    %v9699 = vsub.s32 %v9696, %v9698
    %v9700 = vrot.slane %v9690, %v9699
    %v9702 = vunpack.c.l.s4 1966171168
    %v9703 = vunpack.c.0.s8 %v9702
    %v9704 = vlaneseq
    %v9705 = vshrl.u32 %v9704, 7
    %v9706 = vsub.s32 %v9703, %v9705
    %v9707 = vrot.slane %v9691, %v9706
    %v9709 = vunpack.c.l.s4 1966171168
    %v9710 = vunpack.c.0.s8 %v9709
    %v9711 = vlaneseq
    %v9712 = vshrl.u32 %v9711, 7
    %v9713 = vsub.s32 %v9710, %v9712
    %v9714 = vrot.slane %v9692, %v9713
    %v9716 = vunpack.c.l.s4 1966171168
    %v9717 = vunpack.c.0.s8 %v9716
    %v9718 = vlaneseq
    %v9719 = vshrl.u32 %v9718, 7
    %v9720 = vsub.s32 %v9717, %v9719
    %v9721 = vrot.slane %v9693, %v9720
    %v9722 = vcombine.low %v9700, %v9707
    %v9723 = vcombine.low %v9714, %v9721
    %v9725 = vunpack.c.l.s4 1966171168
    %v9726 = vunpack.c.0.s8 %v9725
    %v9727 = vlaneseq
    %v9728 = vshrl.u32 %v9727, 7
    %v9729 = vsub.s32 %v9726, %v9728
    %v9730 = vrot.slane %v9722, %v9729
    %v9732 = vunpack.c.l.s4 1966171168
    %v9733 = vunpack.c.0.s8 %v9732
    %v9734 = vlaneseq
    %v9735 = vshrl.u32 %v9734, 7
    %v9736 = vsub.s32 %v9733, %v9735
    %v9737 = vrot.slane %v9723, %v9736
    %v9738 = vcombine.low %v9730, %v9737
    %v9739 = vcombine.low %v8611, %v8613
    %v9740 = vcombine.low %v8637, %v8651
    %v9741 = vcombine.low %v8659, %v8661
    %v9743 = vunpack.c.l.s4 1966171168
    %v9744 = vunpack.c.0.s8 %v9743
    %v9745 = vlaneseq
    %v9746 = vshrl.u32 %v9745, 7
    %v9747 = vsub.s32 %v9744, %v9746
    %v9748 = vrot.slane %v9739, %v9747
    %v9750 = vunpack.c.l.s4 1966171168
    %v9751 = vunpack.c.0.s8 %v9750
    %v9752 = vlaneseq
    %v9753 = vshrl.u32 %v9752, 7
    %v9754 = vsub.s32 %v9751, %v9753
    %v9755 = vrot.slane %v9740, %v9754
    %v9757 = vunpack.c.l.s4 1966171168
    %v9758 = vunpack.c.0.s8 %v9757
    %v9759 = vlaneseq
    %v9760 = vshrl.u32 %v9759, 7
    %v9761 = vsub.s32 %v9758, %v9760
    %v9762 = vrot.slane %v9741, %v9761
    %v9764 = vunpack.c.l.s4 1966171168
    %v9765 = vunpack.c.0.s8 %v9764
    %v9766 = vlaneseq
    %v9767 = vshrl.u32 %v9766, 7
    %v9768 = vsub.s32 %v9765, %v9767
    %v9769 = vrot.slane %v8644, %v9768
    %v9770 = vcombine.low %v9748, %v9755
    %v9771 = vcombine.low %v9762, %v9769
    %v9773 = vunpack.c.l.s4 1966171168
    %v9774 = vunpack.c.0.s8 %v9773
    %v9775 = vlaneseq
    %v9776 = vshrl.u32 %v9775, 7
    %v9777 = vsub.s32 %v9774, %v9776
    %v9778 = vrot.slane %v9770, %v9777
    %v9780 = vunpack.c.l.s4 1966171168
    %v9781 = vunpack.c.0.s8 %v9780
    %v9782 = vlaneseq
    %v9783 = vshrl.u32 %v9782, 7
    %v9784 = vsub.s32 %v9781, %v9783
    %v9785 = vrot.slane %v9771, %v9784
    %v9786 = vcombine.low %v9778, %v9785
    %v9787 = vcombine.low %v8658, %v8660
    %v9788 = vcombine.low %v8662, %v8686
    %v9789 = vcombine.low %v8700, %v8708
    %v9790 = vcombine.low %v8710, %v8693
    %v9792 = vunpack.c.l.s4 1966171168
    %v9793 = vunpack.c.0.s8 %v9792
    %v9794 = vlaneseq
    %v9795 = vshrl.u32 %v9794, 7
    %v9796 = vsub.s32 %v9793, %v9795
    %v9797 = vrot.slane %v9787, %v9796
    %v9799 = vunpack.c.l.s4 1966171168
    %v9800 = vunpack.c.0.s8 %v9799
    %v9801 = vlaneseq
    %v9802 = vshrl.u32 %v9801, 7
    %v9803 = vsub.s32 %v9800, %v9802
    %v9804 = vrot.slane %v9788, %v9803
    %v9806 = vunpack.c.l.s4 1966171168
    %v9807 = vunpack.c.0.s8 %v9806
    %v9808 = vlaneseq
    %v9809 = vshrl.u32 %v9808, 7
    %v9810 = vsub.s32 %v9807, %v9809
    %v9811 = vrot.slane %v9789, %v9810
    %v9813 = vunpack.c.l.s4 1966171168
    %v9814 = vunpack.c.0.s8 %v9813
    %v9815 = vlaneseq
    %v9816 = vshrl.u32 %v9815, 7
    %v9817 = vsub.s32 %v9814, %v9816
    %v9818 = vrot.slane %v9790, %v9817
    %v9819 = vcombine.low %v9797, %v9804
    %v9820 = vcombine.low %v9811, %v9818
    %v9822 = vunpack.c.l.s4 1966171168
    %v9823 = vunpack.c.0.s8 %v9822
    %v9824 = vlaneseq
    %v9825 = vshrl.u32 %v9824, 7
    %v9826 = vsub.s32 %v9823, %v9825
    %v9827 = vrot.slane %v9819, %v9826
    %v9829 = vunpack.c.l.s4 1966171168
    %v9830 = vunpack.c.0.s8 %v9829
    %v9831 = vlaneseq
    %v9832 = vshrl.u32 %v9831, 7
    %v9833 = vsub.s32 %v9830, %v9832
    %v9834 = vrot.slane %v9820, %v9833
    %v9835 = vcombine.low %v9827, %v9834
    %v9836 = vcombine.low %v8707, %v8709
    %v9837 = vcombine.low %v8711, %v8735
    %v9838 = vcombine.low %v8749, %v8757
    %v9839 = vcombine.low %v8759, %v8742
    %v9841 = vunpack.c.l.s4 1966171168
    %v9842 = vunpack.c.0.s8 %v9841
    %v9843 = vlaneseq
    %v9844 = vshrl.u32 %v9843, 7
    %v9845 = vsub.s32 %v9842, %v9844
    %v9846 = vrot.slane %v9836, %v9845
    %v9848 = vunpack.c.l.s4 1966171168
    %v9849 = vunpack.c.0.s8 %v9848
    %v9850 = vlaneseq
    %v9851 = vshrl.u32 %v9850, 7
    %v9852 = vsub.s32 %v9849, %v9851
    %v9853 = vrot.slane %v9837, %v9852
    %v9855 = vunpack.c.l.s4 1966171168
    %v9856 = vunpack.c.0.s8 %v9855
    %v9857 = vlaneseq
    %v9858 = vshrl.u32 %v9857, 7
    %v9859 = vsub.s32 %v9856, %v9858
    %v9860 = vrot.slane %v9838, %v9859
    %v9862 = vunpack.c.l.s4 1966171168
    %v9863 = vunpack.c.0.s8 %v9862
    %v9864 = vlaneseq
    %v9865 = vshrl.u32 %v9864, 7
    %v9866 = vsub.s32 %v9863, %v9865
    %v9867 = vrot.slane %v9839, %v9866
    %v9868 = vcombine.low %v9846, %v9853
    %v9869 = vcombine.low %v9860, %v9867
    %v9871 = vunpack.c.l.s4 1966171168
    %v9872 = vunpack.c.0.s8 %v9871
    %v9873 = vlaneseq
    %v9874 = vshrl.u32 %v9873, 7
    %v9875 = vsub.s32 %v9872, %v9874
    %v9876 = vrot.slane %v9868, %v9875
    %v9878 = vunpack.c.l.s4 1966171168
    %v9879 = vunpack.c.0.s8 %v9878
    %v9880 = vlaneseq
    %v9881 = vshrl.u32 %v9880, 7
    %v9882 = vsub.s32 %v9879, %v9881
    %v9883 = vrot.slane %v9869, %v9882
    %v9884 = vcombine.low %v9876, %v9883
    %v9885 = vcombine.low %v8756, %v8758
    %v9886 = vcombine.low %v8760, %v8784
    %v9887 = vcombine.low %v8798, %v8806
    %v9889 = vunpack.c.l.s4 1966171168
    %v9890 = vunpack.c.0.s8 %v9889
    %v9891 = vlaneseq
    %v9892 = vshrl.u32 %v9891, 7
    %v9893 = vsub.s32 %v9890, %v9892
    %v9894 = vrot.slane %v9885, %v9893
    %v9896 = vunpack.c.l.s4 1966171168
    %v9897 = vunpack.c.0.s8 %v9896
    %v9898 = vlaneseq
    %v9899 = vshrl.u32 %v9898, 7
    %v9900 = vsub.s32 %v9897, %v9899
    %v9901 = vrot.slane %v9886, %v9900
    %v9903 = vunpack.c.l.s4 1966171168
    %v9904 = vunpack.c.0.s8 %v9903
    %v9905 = vlaneseq
    %v9906 = vshrl.u32 %v9905, 7
    %v9907 = vsub.s32 %v9904, %v9906
    %v9908 = vrot.slane %v9887, %v9907
    %v9910 = vunpack.c.l.s4 1966171168
    %v9911 = vunpack.c.0.s8 %v9910
    %v9912 = vlaneseq
    %v9913 = vshrl.u32 %v9912, 7
    %v9914 = vsub.s32 %v9911, %v9913
    %v9915 = vrot.slane %v8808, %v9914
    %v9916 = vcombine.low %v9894, %v9901
    %v9917 = vcombine.low %v9908, %v9915
    %v9919 = vunpack.c.l.s4 1966171168
    %v9920 = vunpack.c.0.s8 %v9919
    %v9921 = vlaneseq
    %v9922 = vshrl.u32 %v9921, 7
    %v9923 = vsub.s32 %v9920, %v9922
    %v9924 = vrot.slane %v9916, %v9923
    %v9926 = vunpack.c.l.s4 1966171168
    %v9927 = vunpack.c.0.s8 %v9926
    %v9928 = vlaneseq
    %v9929 = vshrl.u32 %v9928, 7
    %v9930 = vsub.s32 %v9927, %v9929
    %v9931 = vrot.slane %v9917, %v9930
    %v9932 = vcombine.low %v9924, %v9931
    %v9933 = vcombine.low %v8791, %v8805
    %v9934 = vcombine.low %v8807, %v8809
    %v9935 = vcombine.low %v8833, %v8847
    %v9936 = vcombine.low %v8855, %v8857
    %v9938 = vunpack.c.l.s4 1966171168
    %v9939 = vunpack.c.0.s8 %v9938
    %v9940 = vlaneseq
    %v9941 = vshrl.u32 %v9940, 7
    %v9942 = vsub.s32 %v9939, %v9941
    %v9943 = vrot.slane %v9933, %v9942
    %v9945 = vunpack.c.l.s4 1966171168
    %v9946 = vunpack.c.0.s8 %v9945
    %v9947 = vlaneseq
    %v9948 = vshrl.u32 %v9947, 7
    %v9949 = vsub.s32 %v9946, %v9948
    %v9950 = vrot.slane %v9934, %v9949
    %v9952 = vunpack.c.l.s4 1966171168
    %v9953 = vunpack.c.0.s8 %v9952
    %v9954 = vlaneseq
    %v9955 = vshrl.u32 %v9954, 7
    %v9956 = vsub.s32 %v9953, %v9955
    %v9957 = vrot.slane %v9935, %v9956
    %v9959 = vunpack.c.l.s4 1966171168
    %v9960 = vunpack.c.0.s8 %v9959
    %v9961 = vlaneseq
    %v9962 = vshrl.u32 %v9961, 7
    %v9963 = vsub.s32 %v9960, %v9962
    %v9964 = vrot.slane %v9936, %v9963
    %v9965 = vcombine.low %v9943, %v9950
    %v9966 = vcombine.low %v9957, %v9964
    %v9968 = vunpack.c.l.s4 1966171168
    %v9969 = vunpack.c.0.s8 %v9968
    %v9970 = vlaneseq
    %v9971 = vshrl.u32 %v9970, 7
    %v9972 = vsub.s32 %v9969, %v9971
    %v9973 = vrot.slane %v9965, %v9972
    %v9975 = vunpack.c.l.s4 1966171168
    %v9976 = vunpack.c.0.s8 %v9975
    %v9977 = vlaneseq
    %v9978 = vshrl.u32 %v9977, 7
    %v9979 = vsub.s32 %v9976, %v9978
    %v9980 = vrot.slane %v9966, %v9979
    %v9981 = vcombine.low %v9973, %v9980
    %v9982 = vcombine.low %v8840, %v8854
    %v9983 = vcombine.low %v8856, %v8858
    %v9984 = vcombine.low %v8882, %v8896
    %v9985 = vcombine.low %v8904, %v8906
    %v9987 = vunpack.c.l.s4 1966171168
    %v9988 = vunpack.c.0.s8 %v9987
    %v9989 = vlaneseq
    %v9990 = vshrl.u32 %v9989, 7
    %v9991 = vsub.s32 %v9988, %v9990
    %v9992 = vrot.slane %v9982, %v9991
    %v9994 = vunpack.c.l.s4 1966171168
    %v9995 = vunpack.c.0.s8 %v9994
    %v9996 = vlaneseq
    %v9997 = vshrl.u32 %v9996, 7
    %v9998 = vsub.s32 %v9995, %v9997
    %v9999 = vrot.slane %v9983, %v9998
    %v10001 = vunpack.c.l.s4 1966171168
    %v10002 = vunpack.c.0.s8 %v10001
    %v10003 = vlaneseq
    %v10004 = vshrl.u32 %v10003, 7
    %v10005 = vsub.s32 %v10002, %v10004
    %v10006 = vrot.slane %v9984, %v10005
    %v10008 = vunpack.c.l.s4 1966171168
    %v10009 = vunpack.c.0.s8 %v10008
    %v10010 = vlaneseq
    %v10011 = vshrl.u32 %v10010, 7
    %v10012 = vsub.s32 %v10009, %v10011
    %v10013 = vrot.slane %v9985, %v10012
    %v10014 = vcombine.low %v9992, %v9999
    %v10015 = vcombine.low %v10006, %v10013
    %v10017 = vunpack.c.l.s4 1966171168
    %v10018 = vunpack.c.0.s8 %v10017
    %v10019 = vlaneseq
    %v10020 = vshrl.u32 %v10019, 7
    %v10021 = vsub.s32 %v10018, %v10020
    %v10022 = vrot.slane %v10014, %v10021
    %v10024 = vunpack.c.l.s4 1966171168
    %v10025 = vunpack.c.0.s8 %v10024
    %v10026 = vlaneseq
    %v10027 = vshrl.u32 %v10026, 7
    %v10028 = vsub.s32 %v10025, %v10027
    %v10029 = vrot.slane %v10015, %v10028
    %v10030 = vcombine.low %v10022, %v10029
    %v10031 = vcombine.low %v8889, %v8903
    %v10032 = vcombine.low %v8905, %v8907
    %v10033 = vcombine.low %v8931, %v8945
    %v10035 = vunpack.c.l.s4 1966171168
    %v10036 = vunpack.c.0.s8 %v10035
    %v10037 = vlaneseq
    %v10038 = vshrl.u32 %v10037, 7
    %v10039 = vsub.s32 %v10036, %v10038
    %v10040 = vrot.slane %v10031, %v10039
    %v10042 = vunpack.c.l.s4 1966171168
    %v10043 = vunpack.c.0.s8 %v10042
    %v10044 = vlaneseq
    %v10045 = vshrl.u32 %v10044, 7
    %v10046 = vsub.s32 %v10043, %v10045
    %v10047 = vrot.slane %v10032, %v10046
    %v10049 = vunpack.c.l.s4 1966171168
    %v10050 = vunpack.c.0.s8 %v10049
    %v10051 = vlaneseq
    %v10052 = vshrl.u32 %v10051, 7
    %v10053 = vsub.s32 %v10050, %v10052
    %v10054 = vrot.slane %v10033, %v10053
    %v10056 = vunpack.c.l.s4 1966171168
    %v10057 = vunpack.c.0.s8 %v10056
    %v10058 = vlaneseq
    %v10059 = vshrl.u32 %v10058, 7
    %v10060 = vsub.s32 %v10057, %v10059
    %v10061 = vrot.slane %v8953, %v10060
    %v10062 = vcombine.low %v10040, %v10047
    %v10063 = vcombine.low %v10054, %v10061
    %v10065 = vunpack.c.l.s4 1966171168
    %v10066 = vunpack.c.0.s8 %v10065
    %v10067 = vlaneseq
    %v10068 = vshrl.u32 %v10067, 7
    %v10069 = vsub.s32 %v10066, %v10068
    %v10070 = vrot.slane %v10062, %v10069
    %v10072 = vunpack.c.l.s4 1966171168
    %v10073 = vunpack.c.0.s8 %v10072
    %v10074 = vlaneseq
    %v10075 = vshrl.u32 %v10074, 7
    %v10076 = vsub.s32 %v10073, %v10075
    %v10077 = vrot.slane %v10063, %v10076
    %v10078 = vcombine.low %v10070, %v10077
    %v10079 = vcombine.low %v8955, %v8938
    %v10080 = vcombine.low %v8952, %v8954
    %v10081 = vcombine.low %v8956, %v8980
    %v10082 = vcombine.low %v8994, %v9002
    %v10084 = vunpack.c.l.s4 1966171168
    %v10085 = vunpack.c.0.s8 %v10084
    %v10086 = vlaneseq
    %v10087 = vshrl.u32 %v10086, 7
    %v10088 = vsub.s32 %v10085, %v10087
    %v10089 = vrot.slane %v10079, %v10088
    %v10091 = vunpack.c.l.s4 1966171168
    %v10092 = vunpack.c.0.s8 %v10091
    %v10093 = vlaneseq
    %v10094 = vshrl.u32 %v10093, 7
    %v10095 = vsub.s32 %v10092, %v10094
    %v10096 = vrot.slane %v10080, %v10095
    %v10098 = vunpack.c.l.s4 1966171168
    %v10099 = vunpack.c.0.s8 %v10098
    %v10100 = vlaneseq
    %v10101 = vshrl.u32 %v10100, 7
    %v10102 = vsub.s32 %v10099, %v10101
    %v10103 = vrot.slane %v10081, %v10102
    %v10105 = vunpack.c.l.s4 1966171168
    %v10106 = vunpack.c.0.s8 %v10105
    %v10107 = vlaneseq
    %v10108 = vshrl.u32 %v10107, 7
    %v10109 = vsub.s32 %v10106, %v10108
    %v10110 = vrot.slane %v10082, %v10109
    %v10111 = vcombine.low %v10089, %v10096
    %v10112 = vcombine.low %v10103, %v10110
    %v10114 = vunpack.c.l.s4 1966171168
    %v10115 = vunpack.c.0.s8 %v10114
    %v10116 = vlaneseq
    %v10117 = vshrl.u32 %v10116, 7
    %v10118 = vsub.s32 %v10115, %v10117
    %v10119 = vrot.slane %v10111, %v10118
    %v10121 = vunpack.c.l.s4 1966171168
    %v10122 = vunpack.c.0.s8 %v10121
    %v10123 = vlaneseq
    %v10124 = vshrl.u32 %v10123, 7
    %v10125 = vsub.s32 %v10122, %v10124
    %v10126 = vrot.slane %v10112, %v10125
    %v10127 = vcombine.low %v10119, %v10126
    %v10128 = vcombine.low %v9004, %v8987
    %v10129 = vcombine.low %v9001, %v9003
    %v10130 = vcombine.low %v9005, %v9029
    %v10131 = vcombine.low %v9043, %v9051
    %v10133 = vunpack.c.l.s4 1966171168
    %v10134 = vunpack.c.0.s8 %v10133
    %v10135 = vlaneseq
    %v10136 = vshrl.u32 %v10135, 7
    %v10137 = vsub.s32 %v10134, %v10136
    %v10138 = vrot.slane %v10128, %v10137
    %v10140 = vunpack.c.l.s4 1966171168
    %v10141 = vunpack.c.0.s8 %v10140
    %v10142 = vlaneseq
    %v10143 = vshrl.u32 %v10142, 7
    %v10144 = vsub.s32 %v10141, %v10143
    %v10145 = vrot.slane %v10129, %v10144
    %v10147 = vunpack.c.l.s4 1966171168
    %v10148 = vunpack.c.0.s8 %v10147
    %v10149 = vlaneseq
    %v10150 = vshrl.u32 %v10149, 7
    %v10151 = vsub.s32 %v10148, %v10150
    %v10152 = vrot.slane %v10130, %v10151
    %v10154 = vunpack.c.l.s4 1966171168
    %v10155 = vunpack.c.0.s8 %v10154
    %v10156 = vlaneseq
    %v10157 = vshrl.u32 %v10156, 7
    %v10158 = vsub.s32 %v10155, %v10157
    %v10159 = vrot.slane %v10131, %v10158
    %v10160 = vcombine.low %v10138, %v10145
    %v10161 = vcombine.low %v10152, %v10159
    %v10163 = vunpack.c.l.s4 1966171168
    %v10164 = vunpack.c.0.s8 %v10163
    %v10165 = vlaneseq
    %v10166 = vshrl.u32 %v10165, 7
    %v10167 = vsub.s32 %v10164, %v10166
    %v10168 = vrot.slane %v10160, %v10167
    %v10170 = vunpack.c.l.s4 1966171168
    %v10171 = vunpack.c.0.s8 %v10170
    %v10172 = vlaneseq
    %v10173 = vshrl.u32 %v10172, 7
    %v10174 = vsub.s32 %v10171, %v10173
    %v10175 = vrot.slane %v10161, %v10174
    %v10176 = vcombine.low %v10168, %v10175
    %v10177 = vcombine.low %v9053, %v9036
    %v10178 = vcombine.low %v9050, %v9052
    %v10179 = vcombine.low %v9054, %v9078
    %v10181 = vunpack.c.l.s4 1966171168
    %v10182 = vunpack.c.0.s8 %v10181
    %v10183 = vlaneseq
    %v10184 = vshrl.u32 %v10183, 7
    %v10185 = vsub.s32 %v10182, %v10184
    %v10186 = vrot.slane %v10177, %v10185
    %v10188 = vunpack.c.l.s4 1966171168
    %v10189 = vunpack.c.0.s8 %v10188
    %v10190 = vlaneseq
    %v10191 = vshrl.u32 %v10190, 7
    %v10192 = vsub.s32 %v10189, %v10191
    %v10193 = vrot.slane %v10178, %v10192
    %v10195 = vunpack.c.l.s4 1966171168
    %v10196 = vunpack.c.0.s8 %v10195
    %v10197 = vlaneseq
    %v10198 = vshrl.u32 %v10197, 7
    %v10199 = vsub.s32 %v10196, %v10198
    %v10200 = vrot.slane %v10179, %v10199
    %v10202 = vunpack.c.l.s4 1966171168
    %v10203 = vunpack.c.0.s8 %v10202
    %v10204 = vlaneseq
    %v10205 = vshrl.u32 %v10204, 7
    %v10206 = vsub.s32 %v10203, %v10205
    %v10207 = vrot.slane %v9092, %v10206
    %v10208 = vcombine.low %v10186, %v10193
    %v10209 = vcombine.low %v10200, %v10207
    %v10211 = vunpack.c.l.s4 1966171168
    %v10212 = vunpack.c.0.s8 %v10211
    %v10213 = vlaneseq
    %v10214 = vshrl.u32 %v10213, 7
    %v10215 = vsub.s32 %v10212, %v10214
    %v10216 = vrot.slane %v10208, %v10215
    %v10218 = vunpack.c.l.s4 1966171168
    %v10219 = vunpack.c.0.s8 %v10218
    %v10220 = vlaneseq
    %v10221 = vshrl.u32 %v10220, 7
    %v10222 = vsub.s32 %v10219, %v10221
    %v10223 = vrot.slane %v10209, %v10222
    %v10224 = vcombine.low %v10216, %v10223
    %v10225 = vcombine.low %v9100, %v9102
    %v10226 = vcombine.low %v9085, %v9099
    %v10227 = vcombine.low %v9101, %v9103
    %v10228 = vcombine.low %v9127, %v9141
    %v10230 = vunpack.c.l.s4 1966171168
    %v10231 = vunpack.c.0.s8 %v10230
    %v10232 = vlaneseq
    %v10233 = vshrl.u32 %v10232, 7
    %v10234 = vsub.s32 %v10231, %v10233
    %v10235 = vrot.slane %v10225, %v10234
    %v10237 = vunpack.c.l.s4 1966171168
    %v10238 = vunpack.c.0.s8 %v10237
    %v10239 = vlaneseq
    %v10240 = vshrl.u32 %v10239, 7
    %v10241 = vsub.s32 %v10238, %v10240
    %v10242 = vrot.slane %v10226, %v10241
    %v10244 = vunpack.c.l.s4 1966171168
    %v10245 = vunpack.c.0.s8 %v10244
    %v10246 = vlaneseq
    %v10247 = vshrl.u32 %v10246, 7
    %v10248 = vsub.s32 %v10245, %v10247
    %v10249 = vrot.slane %v10227, %v10248
    %v10251 = vunpack.c.l.s4 1966171168
    %v10252 = vunpack.c.0.s8 %v10251
    %v10253 = vlaneseq
    %v10254 = vshrl.u32 %v10253, 7
    %v10255 = vsub.s32 %v10252, %v10254
    %v10256 = vrot.slane %v10228, %v10255
    %v10257 = vcombine.low %v10235, %v10242
    %v10258 = vcombine.low %v10249, %v10256
    %v10260 = vunpack.c.l.s4 1966171168
    %v10261 = vunpack.c.0.s8 %v10260
    %v10262 = vlaneseq
    %v10263 = vshrl.u32 %v10262, 7
    %v10264 = vsub.s32 %v10261, %v10263
    %v10265 = vrot.slane %v10257, %v10264
    %v10267 = vunpack.c.l.s4 1966171168
    %v10268 = vunpack.c.0.s8 %v10267
    %v10269 = vlaneseq
    %v10270 = vshrl.u32 %v10269, 7
    %v10271 = vsub.s32 %v10268, %v10270
    %v10272 = vrot.slane %v10258, %v10271
    %v10273 = vcombine.low %v10265, %v10272
    %v10274 = vcombine.low %v9149, %v9151
    %v10275 = vcombine.low %v9134, %v9148
    %v10276 = vcombine.low %v9150, %v9152
    %v10277 = vcombine.low %v9176, %v9190
    %v10279 = vunpack.c.l.s4 1966171168
    %v10280 = vunpack.c.0.s8 %v10279
    %v10281 = vlaneseq
    %v10282 = vshrl.u32 %v10281, 7
    %v10283 = vsub.s32 %v10280, %v10282
    %v10284 = vrot.slane %v10274, %v10283
    %v10286 = vunpack.c.l.s4 1966171168
    %v10287 = vunpack.c.0.s8 %v10286
    %v10288 = vlaneseq
    %v10289 = vshrl.u32 %v10288, 7
    %v10290 = vsub.s32 %v10287, %v10289
    %v10291 = vrot.slane %v10275, %v10290
    %v10293 = vunpack.c.l.s4 1966171168
    %v10294 = vunpack.c.0.s8 %v10293
    %v10295 = vlaneseq
    %v10296 = vshrl.u32 %v10295, 7
    %v10297 = vsub.s32 %v10294, %v10296
    %v10298 = vrot.slane %v10276, %v10297
    %v10300 = vunpack.c.l.s4 1966171168
    %v10301 = vunpack.c.0.s8 %v10300
    %v10302 = vlaneseq
    %v10303 = vshrl.u32 %v10302, 7
    %v10304 = vsub.s32 %v10301, %v10303
    %v10305 = vrot.slane %v10277, %v10304
    %v10306 = vcombine.low %v10284, %v10291
    %v10307 = vcombine.low %v10298, %v10305
    %v10309 = vunpack.c.l.s4 1966171168
    %v10310 = vunpack.c.0.s8 %v10309
    %v10311 = vlaneseq
    %v10312 = vshrl.u32 %v10311, 7
    %v10313 = vsub.s32 %v10310, %v10312
    %v10314 = vrot.slane %v10306, %v10313
    %v10316 = vunpack.c.l.s4 1966171168
    %v10317 = vunpack.c.0.s8 %v10316
    %v10318 = vlaneseq
    %v10319 = vshrl.u32 %v10318, 7
    %v10320 = vsub.s32 %v10317, %v10319
    %v10321 = vrot.slane %v10307, %v10320
    %v10322 = vcombine.low %v10314, %v10321
    %v10323 = vcombine.low %v9198, %v9200
    %v10324 = vcombine.low %v9183, %v9197
    %v10325 = vcombine.low %v9199, %v9201
    %v10327 = vunpack.c.l.s4 1966171168
    %v10328 = vunpack.c.0.s8 %v10327
    %v10329 = vlaneseq
    %v10330 = vshrl.u32 %v10329, 7
    %v10331 = vsub.s32 %v10328, %v10330
    %v10332 = vrot.slane %v10323, %v10331
    %v10334 = vunpack.c.l.s4 1966171168
    %v10335 = vunpack.c.0.s8 %v10334
    %v10336 = vlaneseq
    %v10337 = vshrl.u32 %v10336, 7
    %v10338 = vsub.s32 %v10335, %v10337
    %v10339 = vrot.slane %v10324, %v10338
    %v10341 = vunpack.c.l.s4 1966171168
    %v10342 = vunpack.c.0.s8 %v10341
    %v10343 = vlaneseq
    %v10344 = vshrl.u32 %v10343, 7
    %v10345 = vsub.s32 %v10342, %v10344
    %v10346 = vrot.slane %v10325, %v10345
    %v10348 = vunpack.c.l.s4 1966171168
    %v10349 = vunpack.c.0.s8 %v10348
    %v10350 = vlaneseq
    %v10351 = vshrl.u32 %v10350, 7
    %v10352 = vsub.s32 %v10349, %v10351
    %v10353 = vrot.slane %v9225, %v10352
    %v10354 = vcombine.low %v10332, %v10339
    %v10355 = vcombine.low %v10346, %v10353
    %v10357 = vunpack.c.l.s4 1966171168
    %v10358 = vunpack.c.0.s8 %v10357
    %v10359 = vlaneseq
    %v10360 = vshrl.u32 %v10359, 7
    %v10361 = vsub.s32 %v10358, %v10360
    %v10362 = vrot.slane %v10354, %v10361
    %v10364 = vunpack.c.l.s4 1966171168
    %v10365 = vunpack.c.0.s8 %v10364
    %v10366 = vlaneseq
    %v10367 = vshrl.u32 %v10366, 7
    %v10368 = vsub.s32 %v10365, %v10367
    %v10369 = vrot.slane %v10355, %v10368
    %v10370 = vcombine.low %v10362, %v10369
    %v10371 = vcombine.low %v9239, %v9247
    %v10372 = vcombine.low %v9249, %v9232
    %v10373 = vcombine.low %v9246, %v9248
    %v10374 = vcombine.low %v9250, %v9274
    %v10376 = vunpack.c.l.s4 1966171168
    %v10377 = vunpack.c.0.s8 %v10376
    %v10378 = vlaneseq
    %v10379 = vshrl.u32 %v10378, 7
    %v10380 = vsub.s32 %v10377, %v10379
    %v10381 = vrot.slane %v10371, %v10380
    %v10383 = vunpack.c.l.s4 1966171168
    %v10384 = vunpack.c.0.s8 %v10383
    %v10385 = vlaneseq
    %v10386 = vshrl.u32 %v10385, 7
    %v10387 = vsub.s32 %v10384, %v10386
    %v10388 = vrot.slane %v10372, %v10387
    %v10390 = vunpack.c.l.s4 1966171168
    %v10391 = vunpack.c.0.s8 %v10390
    %v10392 = vlaneseq
    %v10393 = vshrl.u32 %v10392, 7
    %v10394 = vsub.s32 %v10391, %v10393
    %v10395 = vrot.slane %v10373, %v10394
    %v10397 = vunpack.c.l.s4 1966171168
    %v10398 = vunpack.c.0.s8 %v10397
    %v10399 = vlaneseq
    %v10400 = vshrl.u32 %v10399, 7
    %v10401 = vsub.s32 %v10398, %v10400
    %v10402 = vrot.slane %v10374, %v10401
    %v10403 = vcombine.low %v10381, %v10388
    %v10404 = vcombine.low %v10395, %v10402
    %v10406 = vunpack.c.l.s4 1966171168
    %v10407 = vunpack.c.0.s8 %v10406
    %v10408 = vlaneseq
    %v10409 = vshrl.u32 %v10408, 7
    %v10410 = vsub.s32 %v10407, %v10409
    %v10411 = vrot.slane %v10403, %v10410
    %v10413 = vunpack.c.l.s4 1966171168
    %v10414 = vunpack.c.0.s8 %v10413
    %v10415 = vlaneseq
    %v10416 = vshrl.u32 %v10415, 7
    %v10417 = vsub.s32 %v10414, %v10416
    %v10418 = vrot.slane %v10404, %v10417
    %v10419 = vcombine.low %v10411, %v10418
    %v10420 = vcombine.low %v9288, %v9296
    %v10421 = vcombine.low %v9298, %v9281
    %v10422 = vcombine.low %v9295, %v9297
    %v10423 = vcombine.low %v9299, %v9323
    %v10425 = vunpack.c.l.s4 1966171168
    %v10426 = vunpack.c.0.s8 %v10425
    %v10427 = vlaneseq
    %v10428 = vshrl.u32 %v10427, 7
    %v10429 = vsub.s32 %v10426, %v10428
    %v10430 = vrot.slane %v10420, %v10429
    %v10432 = vunpack.c.l.s4 1966171168
    %v10433 = vunpack.c.0.s8 %v10432
    %v10434 = vlaneseq
    %v10435 = vshrl.u32 %v10434, 7
    %v10436 = vsub.s32 %v10433, %v10435
    %v10437 = vrot.slane %v10421, %v10436
    %v10439 = vunpack.c.l.s4 1966171168
    %v10440 = vunpack.c.0.s8 %v10439
    %v10441 = vlaneseq
    %v10442 = vshrl.u32 %v10441, 7
    %v10443 = vsub.s32 %v10440, %v10442
    %v10444 = vrot.slane %v10422, %v10443
    %v10446 = vunpack.c.l.s4 1966171168
    %v10447 = vunpack.c.0.s8 %v10446
    %v10448 = vlaneseq
    %v10449 = vshrl.u32 %v10448, 7
    %v10450 = vsub.s32 %v10447, %v10449
    %v10451 = vrot.slane %v10423, %v10450
    %v10452 = vcombine.low %v10430, %v10437
    %v10453 = vcombine.low %v10444, %v10451
    %v10455 = vunpack.c.l.s4 1966171168
    %v10456 = vunpack.c.0.s8 %v10455
    %v10457 = vlaneseq
    %v10458 = vshrl.u32 %v10457, 7
    %v10459 = vsub.s32 %v10456, %v10458
    %v10460 = vrot.slane %v10452, %v10459
    %v10462 = vunpack.c.l.s4 1966171168
    %v10463 = vunpack.c.0.s8 %v10462
    %v10464 = vlaneseq
    %v10465 = vshrl.u32 %v10464, 7
    %v10466 = vsub.s32 %v10463, %v10465
    %v10467 = vrot.slane %v10453, %v10466
    %v10468 = vcombine.low %v10460, %v10467
    %v10469 = vcombine.low %v9337, %v9345
    %v10470 = vcombine.low %v9347, %v9330
    %v10471 = vcombine.low %v9344, %v9346
    %v10473 = vunpack.c.l.s4 1966171168
    %v10474 = vunpack.c.0.s8 %v10473
    %v10475 = vlaneseq
    %v10476 = vshrl.u32 %v10475, 7
    %v10477 = vsub.s32 %v10474, %v10476
    %v10478 = vrot.slane %v10469, %v10477
    %v10480 = vunpack.c.l.s4 1966171168
    %v10481 = vunpack.c.0.s8 %v10480
    %v10482 = vlaneseq
    %v10483 = vshrl.u32 %v10482, 7
    %v10484 = vsub.s32 %v10481, %v10483
    %v10485 = vrot.slane %v10470, %v10484
    %v10487 = vunpack.c.l.s4 1966171168
    %v10488 = vunpack.c.0.s8 %v10487
    %v10489 = vlaneseq
    %v10490 = vshrl.u32 %v10489, 7
    %v10491 = vsub.s32 %v10488, %v10490
    %v10492 = vrot.slane %v10471, %v10491
    %v10494 = vunpack.c.l.s4 1966171168
    %v10495 = vunpack.c.0.s8 %v10494
    %v10496 = vlaneseq
    %v10497 = vshrl.u32 %v10496, 7
    %v10498 = vsub.s32 %v10495, %v10497
    %v10499 = vrot.slane %v9348, %v10498
    %v10500 = vcombine.low %v10478, %v10485
    %v10501 = vcombine.low %v10492, %v10499
    %v10503 = vunpack.c.l.s4 1966171168
    %v10504 = vunpack.c.0.s8 %v10503
    %v10505 = vlaneseq
    %v10506 = vshrl.u32 %v10505, 7
    %v10507 = vsub.s32 %v10504, %v10506
    %v10508 = vrot.slane %v10500, %v10507
    %v10510 = vunpack.c.l.s4 1966171168
    %v10511 = vunpack.c.0.s8 %v10510
    %v10512 = vlaneseq
    %v10513 = vshrl.u32 %v10512, 7
    %v10514 = vsub.s32 %v10511, %v10513
    %v10515 = vrot.slane %v10501, %v10514
    %v10516 = vcombine.low %v10508, %v10515
    %10541 = vxpose.xlu0.b32.start [1/16] %v9397, 128
    %10542 = vxpose.xlu0.b32.cont [2/16] %v9446, 128
    %10543 = vxpose.xlu0.b32.cont [3/16] %v9494, 128
    %10544 = vxpose.xlu0.b32.cont [4/16] 0.0, 128
    %10545 = vxpose.xlu0.b32.cont [5/16] 0.0, 128
    %10546 = vxpose.xlu0.b32.cont [6/16] 0.0, 128
    %10547 = vxpose.xlu0.b32.cont [7/16] 0.0, 128
    %10548 = vxpose.xlu0.b32.cont [8/16] 0.0, 128
    %10549 = vxpose.xlu0.b32.cont [9/16] 0.0, 128
    %10550 = vxpose.xlu0.b32.cont [10/16] 0.0, 128
    %10551 = vxpose.xlu0.b32.cont [11/16] 0.0, 128
    %10552 = vxpose.xlu0.b32.cont [12/16] 0.0, 128
    %10553 = vxpose.xlu0.b32.cont [13/16] 0.0, 128
    %10554 = vxpose.xlu0.b32.cont [14/16] 0.0, 128
    %10555 = vxpose.xlu0.b32.cont [15/16] 0.0, 128
    %10556 = vxpose.xlu0.b32.end [16/16] 0.0, 128
    %v10557 = vpop.trf.xlu0
    %v10558 = vpop.trf.xlu0
    %v10559 = vpop.trf.xlu0
    %v10560 = vpop.trf.xlu0
    %v10561 = vpop.trf.xlu0
    %v10562 = vpop.trf.xlu0
    %v10563 = vpop.trf.xlu0
    %v10564 = vpop.trf.xlu0
    %v10565 = vpop.trf.xlu0
    %v10566 = vpop.trf.xlu0
    %v10567 = vpop.trf.xlu0
    %v10568 = vpop.trf.xlu0
    %v10569 = vpop.trf.xlu0
    %v10570 = vpop.trf.xlu0
    %v10571 = vpop.trf.xlu0
    %v10572 = vpop.trf.xlu0
    %10573 = vxpose.xlu0.b32.start [1/16] %v9543, 128
    %10574 = vxpose.xlu0.b32.cont [2/16] %v9592, 128
    %10575 = vxpose.xlu0.b32.cont [3/16] %v9640, 128
    %10576 = vxpose.xlu0.b32.cont [4/16] 0.0, 128
    %10577 = vxpose.xlu0.b32.cont [5/16] 0.0, 128
    %10578 = vxpose.xlu0.b32.cont [6/16] 0.0, 128
    %10579 = vxpose.xlu0.b32.cont [7/16] 0.0, 128
    %10580 = vxpose.xlu0.b32.cont [8/16] 0.0, 128
    %10581 = vxpose.xlu0.b32.cont [9/16] 0.0, 128
    %10582 = vxpose.xlu0.b32.cont [10/16] 0.0, 128
    %10583 = vxpose.xlu0.b32.cont [11/16] 0.0, 128
    %10584 = vxpose.xlu0.b32.cont [12/16] 0.0, 128
    %10585 = vxpose.xlu0.b32.cont [13/16] 0.0, 128
    %10586 = vxpose.xlu0.b32.cont [14/16] 0.0, 128
    %10587 = vxpose.xlu0.b32.cont [15/16] 0.0, 128
    %10588 = vxpose.xlu0.b32.end [16/16] 0.0, 128
    %v10589 = vpop.trf.xlu0
    %v10590 = vpop.trf.xlu0
    %v10591 = vpop.trf.xlu0
    %v10592 = vpop.trf.xlu0
    %v10593 = vpop.trf.xlu0
    %v10594 = vpop.trf.xlu0
    %v10595 = vpop.trf.xlu0
    %v10596 = vpop.trf.xlu0
    %v10597 = vpop.trf.xlu0
    %v10598 = vpop.trf.xlu0
    %v10599 = vpop.trf.xlu0
    %v10600 = vpop.trf.xlu0
    %v10601 = vpop.trf.xlu0
    %v10602 = vpop.trf.xlu0
    %v10603 = vpop.trf.xlu0
    %v10604 = vpop.trf.xlu0
    %10605 = vxpose.xlu0.b32.start [1/16] %v9689, 128
    %10606 = vxpose.xlu0.b32.cont [2/16] %v9738, 128
    %10607 = vxpose.xlu0.b32.cont [3/16] %v9786, 128
    %10608 = vxpose.xlu0.b32.cont [4/16] 0.0, 128
    %10609 = vxpose.xlu0.b32.cont [5/16] 0.0, 128
    %10610 = vxpose.xlu0.b32.cont [6/16] 0.0, 128
    %10611 = vxpose.xlu0.b32.cont [7/16] 0.0, 128
    %10612 = vxpose.xlu0.b32.cont [8/16] 0.0, 128
    %10613 = vxpose.xlu0.b32.cont [9/16] 0.0, 128
    %10614 = vxpose.xlu0.b32.cont [10/16] 0.0, 128
    %10615 = vxpose.xlu0.b32.cont [11/16] 0.0, 128
    %10616 = vxpose.xlu0.b32.cont [12/16] 0.0, 128
    %10617 = vxpose.xlu0.b32.cont [13/16] 0.0, 128
    %10618 = vxpose.xlu0.b32.cont [14/16] 0.0, 128
    %10619 = vxpose.xlu0.b32.cont [15/16] 0.0, 128
    %10620 = vxpose.xlu0.b32.end [16/16] 0.0, 128
    %v10621 = vpop.trf.xlu0
    %v10622 = vpop.trf.xlu0
    %v10623 = vpop.trf.xlu0
    %v10624 = vpop.trf.xlu0
    %v10625 = vpop.trf.xlu0
    %v10626 = vpop.trf.xlu0
    %v10627 = vpop.trf.xlu0
    %v10628 = vpop.trf.xlu0
    %v10629 = vpop.trf.xlu0
    %v10630 = vpop.trf.xlu0
    %v10631 = vpop.trf.xlu0
    %v10632 = vpop.trf.xlu0
    %v10633 = vpop.trf.xlu0
    %v10634 = vpop.trf.xlu0
    %v10635 = vpop.trf.xlu0
    %v10636 = vpop.trf.xlu0
    %10637 = vxpose.xlu0.b32.start [1/16] %v9835, 128
    %10638 = vxpose.xlu0.b32.cont [2/16] %v9884, 128
    %10639 = vxpose.xlu0.b32.cont [3/16] %v9932, 128
    %10640 = vxpose.xlu0.b32.cont [4/16] 0.0, 128
    %10641 = vxpose.xlu0.b32.cont [5/16] 0.0, 128
    %10642 = vxpose.xlu0.b32.cont [6/16] 0.0, 128
    %10643 = vxpose.xlu0.b32.cont [7/16] 0.0, 128
    %10644 = vxpose.xlu0.b32.cont [8/16] 0.0, 128
    %10645 = vxpose.xlu0.b32.cont [9/16] 0.0, 128
    %10646 = vxpose.xlu0.b32.cont [10/16] 0.0, 128
    %10647 = vxpose.xlu0.b32.cont [11/16] 0.0, 128
    %10648 = vxpose.xlu0.b32.cont [12/16] 0.0, 128
    %10649 = vxpose.xlu0.b32.cont [13/16] 0.0, 128
    %10650 = vxpose.xlu0.b32.cont [14/16] 0.0, 128
    %10651 = vxpose.xlu0.b32.cont [15/16] 0.0, 128
    %10652 = vxpose.xlu0.b32.end [16/16] 0.0, 128
    %v10653 = vpop.trf.xlu0
    %v10654 = vpop.trf.xlu0
    %v10655 = vpop.trf.xlu0
    %v10656 = vpop.trf.xlu0
    %v10657 = vpop.trf.xlu0
    %v10658 = vpop.trf.xlu0
    %v10659 = vpop.trf.xlu0
    %v10660 = vpop.trf.xlu0
    %v10661 = vpop.trf.xlu0
    %v10662 = vpop.trf.xlu0
    %v10663 = vpop.trf.xlu0
    %v10664 = vpop.trf.xlu0
    %v10665 = vpop.trf.xlu0
    %v10666 = vpop.trf.xlu0
    %v10667 = vpop.trf.xlu0
    %v10668 = vpop.trf.xlu0
    %10669 = vxpose.xlu0.b32.start [1/16] %v9981, 128
    %10670 = vxpose.xlu0.b32.cont [2/16] %v10030, 128
    %10671 = vxpose.xlu0.b32.cont [3/16] %v10078, 128
    %10672 = vxpose.xlu0.b32.cont [4/16] 0.0, 128
    %10673 = vxpose.xlu0.b32.cont [5/16] 0.0, 128
    %10674 = vxpose.xlu0.b32.cont [6/16] 0.0, 128
    %10675 = vxpose.xlu0.b32.cont [7/16] 0.0, 128
    %10676 = vxpose.xlu0.b32.cont [8/16] 0.0, 128
    %10677 = vxpose.xlu0.b32.cont [9/16] 0.0, 128
    %10678 = vxpose.xlu0.b32.cont [10/16] 0.0, 128
    %10679 = vxpose.xlu0.b32.cont [11/16] 0.0, 128
    %10680 = vxpose.xlu0.b32.cont [12/16] 0.0, 128
    %10681 = vxpose.xlu0.b32.cont [13/16] 0.0, 128
    %10682 = vxpose.xlu0.b32.cont [14/16] 0.0, 128
    %10683 = vxpose.xlu0.b32.cont [15/16] 0.0, 128
    %10684 = vxpose.xlu0.b32.end [16/16] 0.0, 128
    %v10685 = vpop.trf.xlu0
    %v10686 = vpop.trf.xlu0
    %v10687 = vpop.trf.xlu0
    %v10688 = vpop.trf.xlu0
    %v10689 = vpop.trf.xlu0
    %v10690 = vpop.trf.xlu0
    %v10691 = vpop.trf.xlu0
    %v10692 = vpop.trf.xlu0
    %v10693 = vpop.trf.xlu0
    %v10694 = vpop.trf.xlu0
    %v10695 = vpop.trf.xlu0
    %v10696 = vpop.trf.xlu0
    %v10697 = vpop.trf.xlu0
    %v10698 = vpop.trf.xlu0
    %v10699 = vpop.trf.xlu0
    %v10700 = vpop.trf.xlu0
    %10701 = vxpose.xlu0.b32.start [1/16] %v10127, 128
    %10702 = vxpose.xlu0.b32.cont [2/16] %v10176, 128
    %10703 = vxpose.xlu0.b32.cont [3/16] %v10224, 128
    %10704 = vxpose.xlu0.b32.cont [4/16] 0.0, 128
    %10705 = vxpose.xlu0.b32.cont [5/16] 0.0, 128
    %10706 = vxpose.xlu0.b32.cont [6/16] 0.0, 128
    %10707 = vxpose.xlu0.b32.cont [7/16] 0.0, 128
    %10708 = vxpose.xlu0.b32.cont [8/16] 0.0, 128
    %10709 = vxpose.xlu0.b32.cont [9/16] 0.0, 128
    %10710 = vxpose.xlu0.b32.cont [10/16] 0.0, 128
    %10711 = vxpose.xlu0.b32.cont [11/16] 0.0, 128
    %10712 = vxpose.xlu0.b32.cont [12/16] 0.0, 128
    %10713 = vxpose.xlu0.b32.cont [13/16] 0.0, 128
    %10714 = vxpose.xlu0.b32.cont [14/16] 0.0, 128
    %10715 = vxpose.xlu0.b32.cont [15/16] 0.0, 128
    %10716 = vxpose.xlu0.b32.end [16/16] 0.0, 128
    %v10717 = vpop.trf.xlu0
    %v10718 = vpop.trf.xlu0
    %v10719 = vpop.trf.xlu0
    %v10720 = vpop.trf.xlu0
    %v10721 = vpop.trf.xlu0
    %v10722 = vpop.trf.xlu0
    %v10723 = vpop.trf.xlu0
    %v10724 = vpop.trf.xlu0
    %v10725 = vpop.trf.xlu0
    %v10726 = vpop.trf.xlu0
    %v10727 = vpop.trf.xlu0
    %v10728 = vpop.trf.xlu0
    %v10729 = vpop.trf.xlu0
    %v10730 = vpop.trf.xlu0
    %v10731 = vpop.trf.xlu0
    %v10732 = vpop.trf.xlu0
    %10733 = vxpose.xlu0.b32.start [1/16] %v10273, 128
    %10734 = vxpose.xlu0.b32.cont [2/16] %v10322, 128
    %10735 = vxpose.xlu0.b32.cont [3/16] %v10370, 128
    %10736 = vxpose.xlu0.b32.cont [4/16] 0.0, 128
    %10737 = vxpose.xlu0.b32.cont [5/16] 0.0, 128
    %10738 = vxpose.xlu0.b32.cont [6/16] 0.0, 128
    %10739 = vxpose.xlu0.b32.cont [7/16] 0.0, 128
    %10740 = vxpose.xlu0.b32.cont [8/16] 0.0, 128
    %10741 = vxpose.xlu0.b32.cont [9/16] 0.0, 128
    %10742 = vxpose.xlu0.b32.cont [10/16] 0.0, 128
    %10743 = vxpose.xlu0.b32.cont [11/16] 0.0, 128
    %10744 = vxpose.xlu0.b32.cont [12/16] 0.0, 128
    %10745 = vxpose.xlu0.b32.cont [13/16] 0.0, 128
    %10746 = vxpose.xlu0.b32.cont [14/16] 0.0, 128
    %10747 = vxpose.xlu0.b32.cont [15/16] 0.0, 128
    %10748 = vxpose.xlu0.b32.end [16/16] 0.0, 128
    %v10749 = vpop.trf.xlu0
    %v10750 = vpop.trf.xlu0
    %v10751 = vpop.trf.xlu0
    %v10752 = vpop.trf.xlu0
    %v10753 = vpop.trf.xlu0
    %v10754 = vpop.trf.xlu0
    %v10755 = vpop.trf.xlu0
    %v10756 = vpop.trf.xlu0
    %v10757 = vpop.trf.xlu0
    %v10758 = vpop.trf.xlu0
    %v10759 = vpop.trf.xlu0
    %v10760 = vpop.trf.xlu0
    %v10761 = vpop.trf.xlu0
    %v10762 = vpop.trf.xlu0
    %v10763 = vpop.trf.xlu0
    %v10764 = vpop.trf.xlu0
    %10765 = vxpose.xlu0.b32.start [1/16] %v10419, 128
    %10766 = vxpose.xlu0.b32.cont [2/16] %v10468, 128
    %10767 = vxpose.xlu0.b32.cont [3/16] %v10516, 128
    %10768 = vxpose.xlu0.b32.cont [4/16] 0.0, 128
    %10769 = vxpose.xlu0.b32.cont [5/16] 0.0, 128
    %10770 = vxpose.xlu0.b32.cont [6/16] 0.0, 128
    %10771 = vxpose.xlu0.b32.cont [7/16] 0.0, 128
    %10772 = vxpose.xlu0.b32.cont [8/16] 0.0, 128
    %10773 = vxpose.xlu0.b32.cont [9/16] 0.0, 128
    %10774 = vxpose.xlu0.b32.cont [10/16] 0.0, 128
    %10775 = vxpose.xlu0.b32.cont [11/16] 0.0, 128
    %10776 = vxpose.xlu0.b32.cont [12/16] 0.0, 128
    %10777 = vxpose.xlu0.b32.cont [13/16] 0.0, 128
    %10778 = vxpose.xlu0.b32.cont [14/16] 0.0, 128
    %10779 = vxpose.xlu0.b32.cont [15/16] 0.0, 128
    %10780 = vxpose.xlu0.b32.end [16/16] 0.0, 128
    %v10781 = vpop.trf.xlu0
    %v10782 = vpop.trf.xlu0
    %v10783 = vpop.trf.xlu0
    %v10784 = vpop.trf.xlu0
    %v10785 = vpop.trf.xlu0
    %v10786 = vpop.trf.xlu0
    %v10787 = vpop.trf.xlu0
    %v10788 = vpop.trf.xlu0
    %v10789 = vpop.trf.xlu0
    %v10790 = vpop.trf.xlu0
    %v10791 = vpop.trf.xlu0
    %v10792 = vpop.trf.xlu0
    %v10793 = vpop.trf.xlu0
    %v10794 = vpop.trf.xlu0
    %v10795 = vpop.trf.xlu0
    %v10796 = vpop.trf.xlu0
    %v10797 = vld [vmem:[%s6] sm:$0xff]
    %v10798 = vld [vmem:[%s6 + $0x8] sm:$0xff]
    %v10799 = vld [vmem:[%s6 + $0x10] sm:$0xff]
    %v10800 = vld [vmem:[%s6 + $0x18] sm:$0xff]
    %v10801 = vld [vmem:[%s6 + $0x20] sm:$0xff]
    %v10802 = vld [vmem:[%s6 + $0x28] sm:$0xff]
    %v10803 = vld [vmem:[%s6 + $0x30] sm:$0xff]
    %v10804 = vld [vmem:[%s6 + $0x38] sm:$0xff]
    %v10805 = vld [vmem:[%s6 + $0x40] sm:$0xff]
    %v10806 = vld [vmem:[%s6 + $0x48] sm:$0xff]
    %v10807 = vld [vmem:[%s6 + $0x50] sm:$0xff]
    %v10808 = vld [vmem:[%s6 + $0x58] sm:$0xff]
    %10810 = vset.pattern.permute.xlu0 0
    %10811 = vperm.xlu0 %10810, %v10797
    %v10812 = vpop.permute.xlu0 %10811
    %10815 = vset.pattern.permute.xlu0 0
    %10816 = vperm.xlu0 %10815, %v10798
    %v10817 = vpop.permute.xlu0 %10816
    %10820 = vset.pattern.permute.xlu0 0
    %10821 = vperm.xlu0 %10820, %v10799
    %v10822 = vpop.permute.xlu0 %10821
    %10825 = vset.pattern.permute.xlu0 0
    %10826 = vperm.xlu0 %10825, %v10800
    %v10827 = vpop.permute.xlu0 %10826
    %10830 = vset.pattern.permute.xlu0 0
    %10831 = vperm.xlu0 %10830, %v10801
    %v10832 = vpop.permute.xlu0 %10831
    %10835 = vset.pattern.permute.xlu0 0
    %10836 = vperm.xlu0 %10835, %v10802
    %v10837 = vpop.permute.xlu0 %10836
    %10840 = vset.pattern.permute.xlu0 0
    %10841 = vperm.xlu0 %10840, %v10803
    %v10842 = vpop.permute.xlu0 %10841
    %10845 = vset.pattern.permute.xlu0 0
    %10846 = vperm.xlu0 %10845, %v10804
    %v10847 = vpop.permute.xlu0 %10846
    %10850 = vset.pattern.permute.xlu0 0
    %10851 = vperm.xlu0 %10850, %v10805
    %v10852 = vpop.permute.xlu0 %10851
    %10855 = vset.pattern.permute.xlu0 0
    %10856 = vperm.xlu0 %10855, %v10806
    %v10857 = vpop.permute.xlu0 %10856
    %10860 = vset.pattern.permute.xlu0 0
    %10861 = vperm.xlu0 %10860, %v10807
    %v10862 = vpop.permute.xlu0 %10861
    %10865 = vset.pattern.permute.xlu0 0
    %10866 = vperm.xlu0 %10865, %v10808
    %v10867 = vpop.permute.xlu0 %10866
    %v10869 = vadd.f32 %v10557, %v10812
    %v10870 = vadd.f32 %v10558, %v10817
    %v10871 = vadd.f32 %v10559, %v10822
    %v10872 = vadd.f32 %v10560, %v10827
    %v10873 = vadd.f32 %v10561, %v10832
    %v10874 = vadd.f32 %v10562, %v10837
    %v10875 = vadd.f32 %v10563, %v10842
    %v10876 = vadd.f32 %v10564, %v10847
    %v10877 = vadd.f32 %v10565, %v10852
    %v10878 = vadd.f32 %v10566, %v10857
    %v10879 = vadd.f32 %v10567, %v10862
    %v10880 = vadd.f32 %v10568, %v10867
    %v10881 = vadd.f32 %v10589, %v10812
    %v10882 = vadd.f32 %v10590, %v10817
    %v10883 = vadd.f32 %v10591, %v10822
    %v10884 = vadd.f32 %v10592, %v10827
    %v10885 = vadd.f32 %v10593, %v10832
    %v10886 = vadd.f32 %v10594, %v10837
    %v10887 = vadd.f32 %v10595, %v10842
    %v10888 = vadd.f32 %v10596, %v10847
    %v10889 = vadd.f32 %v10597, %v10852
    %v10890 = vadd.f32 %v10598, %v10857
    %v10891 = vadd.f32 %v10599, %v10862
    %v10892 = vadd.f32 %v10600, %v10867
    %v10893 = vadd.f32 %v10621, %v10812
    %v10894 = vadd.f32 %v10622, %v10817
    %v10895 = vadd.f32 %v10623, %v10822
    %v10896 = vadd.f32 %v10624, %v10827
    %v10897 = vadd.f32 %v10625, %v10832
    %v10898 = vadd.f32 %v10626, %v10837
    %v10899 = vadd.f32 %v10627, %v10842
    %v10900 = vadd.f32 %v10628, %v10847
    %v10901 = vadd.f32 %v10629, %v10852
    %v10902 = vadd.f32 %v10630, %v10857
    %v10903 = vadd.f32 %v10631, %v10862
    %v10904 = vadd.f32 %v10632, %v10867
    %v10905 = vadd.f32 %v10653, %v10812
    %v10906 = vadd.f32 %v10654, %v10817
    %v10907 = vadd.f32 %v10655, %v10822
    %v10908 = vadd.f32 %v10656, %v10827
    %v10909 = vadd.f32 %v10657, %v10832
    %v10910 = vadd.f32 %v10658, %v10837
    %v10911 = vadd.f32 %v10659, %v10842
    %v10912 = vadd.f32 %v10660, %v10847
    %v10913 = vadd.f32 %v10661, %v10852
    %v10914 = vadd.f32 %v10662, %v10857
    %v10915 = vadd.f32 %v10663, %v10862
    %v10916 = vadd.f32 %v10664, %v10867
    %v10917 = vadd.f32 %v10685, %v10812
    %v10918 = vadd.f32 %v10686, %v10817
    %v10919 = vadd.f32 %v10687, %v10822
    %v10920 = vadd.f32 %v10688, %v10827
    %v10921 = vadd.f32 %v10689, %v10832
    %v10922 = vadd.f32 %v10690, %v10837
    %v10923 = vadd.f32 %v10691, %v10842
    %v10924 = vadd.f32 %v10692, %v10847
    %v10925 = vadd.f32 %v10693, %v10852
    %v10926 = vadd.f32 %v10694, %v10857
    %v10927 = vadd.f32 %v10695, %v10862
    %v10928 = vadd.f32 %v10696, %v10867
    %v10929 = vadd.f32 %v10717, %v10812
    %v10930 = vadd.f32 %v10718, %v10817
    %v10931 = vadd.f32 %v10719, %v10822
    %v10932 = vadd.f32 %v10720, %v10827
    %v10933 = vadd.f32 %v10721, %v10832
    %v10934 = vadd.f32 %v10722, %v10837
    %v10935 = vadd.f32 %v10723, %v10842
    %v10936 = vadd.f32 %v10724, %v10847
    %v10937 = vadd.f32 %v10725, %v10852
    %v10938 = vadd.f32 %v10726, %v10857
    %v10939 = vadd.f32 %v10727, %v10862
    %v10940 = vadd.f32 %v10728, %v10867
    %v10941 = vadd.f32 %v10749, %v10812
    %v10942 = vadd.f32 %v10750, %v10817
    %v10943 = vadd.f32 %v10751, %v10822
    %v10944 = vadd.f32 %v10752, %v10827
    %v10945 = vadd.f32 %v10753, %v10832
    %v10946 = vadd.f32 %v10754, %v10837
    %v10947 = vadd.f32 %v10755, %v10842
    %v10948 = vadd.f32 %v10756, %v10847
    %v10949 = vadd.f32 %v10757, %v10852
    %v10950 = vadd.f32 %v10758, %v10857
    %v10951 = vadd.f32 %v10759, %v10862
    %v10952 = vadd.f32 %v10760, %v10867
    %v10953 = vadd.f32 %v10781, %v10812
    %v10954 = vadd.f32 %v10782, %v10817
    %v10955 = vadd.f32 %v10783, %v10822
    %v10956 = vadd.f32 %v10784, %v10827
    %v10957 = vadd.f32 %v10785, %v10832
    %v10958 = vadd.f32 %v10786, %v10837
    %v10959 = vadd.f32 %v10787, %v10842
    %v10960 = vadd.f32 %v10788, %v10847
    %v10961 = vadd.f32 %v10789, %v10852
    %v10962 = vadd.f32 %v10790, %v10857
    %v10963 = vadd.f32 %v10791, %v10862
    %v10964 = vadd.f32 %v10792, %v10867
    %v10965 = vmax.f32 %v10869, 0.0
    %v10966 = vmax.f32 %v10870, 0.0
    %v10967 = vmax.f32 %v10871, 0.0
    %v10968 = vmax.f32 %v10872, 0.0
    %v10969 = vmax.f32 %v10873, 0.0
    %v10970 = vmax.f32 %v10874, 0.0
    %v10971 = vmax.f32 %v10875, 0.0
    %v10972 = vmax.f32 %v10876, 0.0
    %v10973 = vmax.f32 %v10877, 0.0
    %v10974 = vmax.f32 %v10878, 0.0
    %v10975 = vmax.f32 %v10879, 0.0
    %v10976 = vmax.f32 %v10880, 0.0
    %v10977 = vmax.f32 %v10881, 0.0
    %v10978 = vmax.f32 %v10882, 0.0
    %v10979 = vmax.f32 %v10883, 0.0
    %v10980 = vmax.f32 %v10884, 0.0
    %v10981 = vmax.f32 %v10885, 0.0
    %v10982 = vmax.f32 %v10886, 0.0
    %v10983 = vmax.f32 %v10887, 0.0
    %v10984 = vmax.f32 %v10888, 0.0
    %v10985 = vmax.f32 %v10889, 0.0
    %v10986 = vmax.f32 %v10890, 0.0
    %v10987 = vmax.f32 %v10891, 0.0
    %v10988 = vmax.f32 %v10892, 0.0
    %v10989 = vmax.f32 %v10893, 0.0
    %v10990 = vmax.f32 %v10894, 0.0
    %v10991 = vmax.f32 %v10895, 0.0
    %v10992 = vmax.f32 %v10896, 0.0
    %v10993 = vmax.f32 %v10897, 0.0
    %v10994 = vmax.f32 %v10898, 0.0
    %v10995 = vmax.f32 %v10899, 0.0
    %v10996 = vmax.f32 %v10900, 0.0
    %v10997 = vmax.f32 %v10901, 0.0
    %v10998 = vmax.f32 %v10902, 0.0
    %v10999 = vmax.f32 %v10903, 0.0
    %v11000 = vmax.f32 %v10904, 0.0
    %v11001 = vmax.f32 %v10905, 0.0
    %v11002 = vmax.f32 %v10906, 0.0
    %v11003 = vmax.f32 %v10907, 0.0
    %v11004 = vmax.f32 %v10908, 0.0
    %v11005 = vmax.f32 %v10909, 0.0
    %v11006 = vmax.f32 %v10910, 0.0
    %v11007 = vmax.f32 %v10911, 0.0
    %v11008 = vmax.f32 %v10912, 0.0
    %v11009 = vmax.f32 %v10913, 0.0
    %v11010 = vmax.f32 %v10914, 0.0
    %v11011 = vmax.f32 %v10915, 0.0
    %v11012 = vmax.f32 %v10916, 0.0
    %v11013 = vmax.f32 %v10917, 0.0
    %v11014 = vmax.f32 %v10918, 0.0
    %v11015 = vmax.f32 %v10919, 0.0
    %v11016 = vmax.f32 %v10920, 0.0
    %v11017 = vmax.f32 %v10921, 0.0
    %v11018 = vmax.f32 %v10922, 0.0
    %v11019 = vmax.f32 %v10923, 0.0
    %v11020 = vmax.f32 %v10924, 0.0
    %v11021 = vmax.f32 %v10925, 0.0
    %v11022 = vmax.f32 %v10926, 0.0
    %v11023 = vmax.f32 %v10927, 0.0
    %v11024 = vmax.f32 %v10928, 0.0
    %v11025 = vmax.f32 %v10929, 0.0
    %v11026 = vmax.f32 %v10930, 0.0
    %v11027 = vmax.f32 %v10931, 0.0
    %v11028 = vmax.f32 %v10932, 0.0
    %v11029 = vmax.f32 %v10933, 0.0
    %v11030 = vmax.f32 %v10934, 0.0
    %v11031 = vmax.f32 %v10935, 0.0
    %v11032 = vmax.f32 %v10936, 0.0
    %v11033 = vmax.f32 %v10937, 0.0
    %v11034 = vmax.f32 %v10938, 0.0
    %v11035 = vmax.f32 %v10939, 0.0
    %v11036 = vmax.f32 %v10940, 0.0
    %v11037 = vmax.f32 %v10941, 0.0
    %v11038 = vmax.f32 %v10942, 0.0
    %v11039 = vmax.f32 %v10943, 0.0
    %v11040 = vmax.f32 %v10944, 0.0
    %v11041 = vmax.f32 %v10945, 0.0
    %v11042 = vmax.f32 %v10946, 0.0
    %v11043 = vmax.f32 %v10947, 0.0
    %v11044 = vmax.f32 %v10948, 0.0
    %v11045 = vmax.f32 %v10949, 0.0
    %v11046 = vmax.f32 %v10950, 0.0
    %v11047 = vmax.f32 %v10951, 0.0
    %v11048 = vmax.f32 %v10952, 0.0
    %v11049 = vmax.f32 %v10953, 0.0
    %v11050 = vmax.f32 %v10954, 0.0
    %v11051 = vmax.f32 %v10955, 0.0
    %v11052 = vmax.f32 %v10956, 0.0
    %v11053 = vmax.f32 %v10957, 0.0
    %v11054 = vmax.f32 %v10958, 0.0
    %v11055 = vmax.f32 %v10959, 0.0
    %v11056 = vmax.f32 %v10960, 0.0
    %v11057 = vmax.f32 %v10961, 0.0
    %v11058 = vmax.f32 %v10962, 0.0
    %v11059 = vmax.f32 %v10963, 0.0
    %v11060 = vmax.f32 %v10964, 0.0
    %vm11061 = vcmask 187392
    %v11062 = vsel %vm11061, %v10965, -inf
    %11063 = vmax.xlane.f32.xlu0 %v11062
    %v11064 = vpop.xlane.xlu0 %11063
    %v11065 = vsel %vm11061, %v10966, -inf
    %11066 = vmax.xlane.f32.xlu0 %v11065
    %v11067 = vpop.xlane.xlu0 %11066
    %v11068 = vsel %vm11061, %v10967, -inf
    %11069 = vmax.xlane.f32.xlu0 %v11068
    %v11070 = vpop.xlane.xlu0 %11069
    %v11071 = vsel %vm11061, %v10968, -inf
    %11072 = vmax.xlane.f32.xlu0 %v11071
    %v11073 = vpop.xlane.xlu0 %11072
    %v11074 = vsel %vm11061, %v10969, -inf
    %11075 = vmax.xlane.f32.xlu0 %v11074
    %v11076 = vpop.xlane.xlu0 %11075
    %v11077 = vsel %vm11061, %v10970, -inf
    %11078 = vmax.xlane.f32.xlu0 %v11077
    %v11079 = vpop.xlane.xlu0 %11078
    %v11080 = vsel %vm11061, %v10971, -inf
    %11081 = vmax.xlane.f32.xlu0 %v11080
    %v11082 = vpop.xlane.xlu0 %11081
    %v11083 = vsel %vm11061, %v10972, -inf
    %11084 = vmax.xlane.f32.xlu0 %v11083
    %v11085 = vpop.xlane.xlu0 %11084
    %v11086 = vsel %vm11061, %v10973, -inf
    %11087 = vmax.xlane.f32.xlu0 %v11086
    %v11088 = vpop.xlane.xlu0 %11087
    %v11089 = vsel %vm11061, %v10974, -inf
    %11090 = vmax.xlane.f32.xlu0 %v11089
    %v11091 = vpop.xlane.xlu0 %11090
    %v11092 = vsel %vm11061, %v10975, -inf
    %11093 = vmax.xlane.f32.xlu0 %v11092
    %v11094 = vpop.xlane.xlu0 %11093
    %v11095 = vsel %vm11061, %v10976, -inf
    %11096 = vmax.xlane.f32.xlu0 %v11095
    %v11097 = vpop.xlane.xlu0 %11096
    %v11098 = vsel %vm11061, %v10977, -inf
    %11099 = vmax.xlane.f32.xlu0 %v11098
    %v11100 = vpop.xlane.xlu0 %11099
    %v11101 = vsel %vm11061, %v10978, -inf
    %11102 = vmax.xlane.f32.xlu0 %v11101
    %v11103 = vpop.xlane.xlu0 %11102
    %v11104 = vsel %vm11061, %v10979, -inf
    %11105 = vmax.xlane.f32.xlu0 %v11104
    %v11106 = vpop.xlane.xlu0 %11105
    %v11107 = vsel %vm11061, %v10980, -inf
    %11108 = vmax.xlane.f32.xlu0 %v11107
    %v11109 = vpop.xlane.xlu0 %11108
    %v11110 = vsel %vm11061, %v10981, -inf
    %11111 = vmax.xlane.f32.xlu0 %v11110
    %v11112 = vpop.xlane.xlu0 %11111
    %v11113 = vsel %vm11061, %v10982, -inf
    %11114 = vmax.xlane.f32.xlu0 %v11113
    %v11115 = vpop.xlane.xlu0 %11114
    %v11116 = vsel %vm11061, %v10983, -inf
    %11117 = vmax.xlane.f32.xlu0 %v11116
    %v11118 = vpop.xlane.xlu0 %11117
    %v11119 = vsel %vm11061, %v10984, -inf
    %11120 = vmax.xlane.f32.xlu0 %v11119
    %v11121 = vpop.xlane.xlu0 %11120
    %v11122 = vsel %vm11061, %v10985, -inf
    %11123 = vmax.xlane.f32.xlu0 %v11122
    %v11124 = vpop.xlane.xlu0 %11123
    %v11125 = vsel %vm11061, %v10986, -inf
    %11126 = vmax.xlane.f32.xlu0 %v11125
    %v11127 = vpop.xlane.xlu0 %11126
    %v11128 = vsel %vm11061, %v10987, -inf
    %11129 = vmax.xlane.f32.xlu0 %v11128
    %v11130 = vpop.xlane.xlu0 %11129
    %v11131 = vsel %vm11061, %v10988, -inf
    %11132 = vmax.xlane.f32.xlu0 %v11131
    %v11133 = vpop.xlane.xlu0 %11132
    %v11134 = vsel %vm11061, %v10989, -inf
    %11135 = vmax.xlane.f32.xlu0 %v11134
    %v11136 = vpop.xlane.xlu0 %11135
    %v11137 = vsel %vm11061, %v10990, -inf
    %11138 = vmax.xlane.f32.xlu0 %v11137
    %v11139 = vpop.xlane.xlu0 %11138
    %v11140 = vsel %vm11061, %v10991, -inf
    %11141 = vmax.xlane.f32.xlu0 %v11140
    %v11142 = vpop.xlane.xlu0 %11141
    %v11143 = vsel %vm11061, %v10992, -inf
    %11144 = vmax.xlane.f32.xlu0 %v11143
    %v11145 = vpop.xlane.xlu0 %11144
    %v11146 = vsel %vm11061, %v10993, -inf
    %11147 = vmax.xlane.f32.xlu0 %v11146
    %v11148 = vpop.xlane.xlu0 %11147
    %v11149 = vsel %vm11061, %v10994, -inf
    %11150 = vmax.xlane.f32.xlu0 %v11149
    %v11151 = vpop.xlane.xlu0 %11150
    %v11152 = vsel %vm11061, %v10995, -inf
    %11153 = vmax.xlane.f32.xlu0 %v11152
    %v11154 = vpop.xlane.xlu0 %11153
    %v11155 = vsel %vm11061, %v10996, -inf
    %11156 = vmax.xlane.f32.xlu0 %v11155
    %v11157 = vpop.xlane.xlu0 %11156
    %v11158 = vsel %vm11061, %v10997, -inf
    %11159 = vmax.xlane.f32.xlu0 %v11158
    %v11160 = vpop.xlane.xlu0 %11159
    %v11161 = vsel %vm11061, %v10998, -inf
    %11162 = vmax.xlane.f32.xlu0 %v11161
    %v11163 = vpop.xlane.xlu0 %11162
    %v11164 = vsel %vm11061, %v10999, -inf
    %11165 = vmax.xlane.f32.xlu0 %v11164
    %v11166 = vpop.xlane.xlu0 %11165
    %v11167 = vsel %vm11061, %v11000, -inf
    %11168 = vmax.xlane.f32.xlu0 %v11167
    %v11169 = vpop.xlane.xlu0 %11168
    %v11170 = vsel %vm11061, %v11001, -inf
    %11171 = vmax.xlane.f32.xlu0 %v11170
    %v11172 = vpop.xlane.xlu0 %11171
    %v11173 = vsel %vm11061, %v11002, -inf
    %11174 = vmax.xlane.f32.xlu0 %v11173
    %v11175 = vpop.xlane.xlu0 %11174
    %v11176 = vsel %vm11061, %v11003, -inf
    %11177 = vmax.xlane.f32.xlu0 %v11176
    %v11178 = vpop.xlane.xlu0 %11177
    %v11179 = vsel %vm11061, %v11004, -inf
    %11180 = vmax.xlane.f32.xlu0 %v11179
    %v11181 = vpop.xlane.xlu0 %11180
    %v11182 = vsel %vm11061, %v11005, -inf
    %11183 = vmax.xlane.f32.xlu0 %v11182
    %v11184 = vpop.xlane.xlu0 %11183
    %v11185 = vsel %vm11061, %v11006, -inf
    %11186 = vmax.xlane.f32.xlu0 %v11185
    %v11187 = vpop.xlane.xlu0 %11186
    %v11188 = vsel %vm11061, %v11007, -inf
    %11189 = vmax.xlane.f32.xlu0 %v11188
    %v11190 = vpop.xlane.xlu0 %11189
    %v11191 = vsel %vm11061, %v11008, -inf
    %11192 = vmax.xlane.f32.xlu0 %v11191
    %v11193 = vpop.xlane.xlu0 %11192
    %v11194 = vsel %vm11061, %v11009, -inf
    %11195 = vmax.xlane.f32.xlu0 %v11194
    %v11196 = vpop.xlane.xlu0 %11195
    %v11197 = vsel %vm11061, %v11010, -inf
    %11198 = vmax.xlane.f32.xlu0 %v11197
    %v11199 = vpop.xlane.xlu0 %11198
    %v11200 = vsel %vm11061, %v11011, -inf
    %11201 = vmax.xlane.f32.xlu0 %v11200
    %v11202 = vpop.xlane.xlu0 %11201
    %v11203 = vsel %vm11061, %v11012, -inf
    %11204 = vmax.xlane.f32.xlu0 %v11203
    %v11205 = vpop.xlane.xlu0 %11204
    %v11206 = vsel %vm11061, %v11013, -inf
    %11207 = vmax.xlane.f32.xlu0 %v11206
    %v11208 = vpop.xlane.xlu0 %11207
    %v11209 = vsel %vm11061, %v11014, -inf
    %11210 = vmax.xlane.f32.xlu0 %v11209
    %v11211 = vpop.xlane.xlu0 %11210
    %v11212 = vsel %vm11061, %v11015, -inf
    %11213 = vmax.xlane.f32.xlu0 %v11212
    %v11214 = vpop.xlane.xlu0 %11213
    %v11215 = vsel %vm11061, %v11016, -inf
    %11216 = vmax.xlane.f32.xlu0 %v11215
    %v11217 = vpop.xlane.xlu0 %11216
    %v11218 = vsel %vm11061, %v11017, -inf
    %11219 = vmax.xlane.f32.xlu0 %v11218
    %v11220 = vpop.xlane.xlu0 %11219
    %v11221 = vsel %vm11061, %v11018, -inf
    %11222 = vmax.xlane.f32.xlu0 %v11221
    %v11223 = vpop.xlane.xlu0 %11222
    %v11224 = vsel %vm11061, %v11019, -inf
    %11225 = vmax.xlane.f32.xlu0 %v11224
    %v11226 = vpop.xlane.xlu0 %11225
    %v11227 = vsel %vm11061, %v11020, -inf
    %11228 = vmax.xlane.f32.xlu0 %v11227
    %v11229 = vpop.xlane.xlu0 %11228
    %v11230 = vsel %vm11061, %v11021, -inf
    %11231 = vmax.xlane.f32.xlu0 %v11230
    %v11232 = vpop.xlane.xlu0 %11231
    %v11233 = vsel %vm11061, %v11022, -inf
    %11234 = vmax.xlane.f32.xlu0 %v11233
    %v11235 = vpop.xlane.xlu0 %11234
    %v11236 = vsel %vm11061, %v11023, -inf
    %11237 = vmax.xlane.f32.xlu0 %v11236
    %v11238 = vpop.xlane.xlu0 %11237
    %v11239 = vsel %vm11061, %v11024, -inf
    %11240 = vmax.xlane.f32.xlu0 %v11239
    %v11241 = vpop.xlane.xlu0 %11240
    %v11242 = vsel %vm11061, %v11025, -inf
    %11243 = vmax.xlane.f32.xlu0 %v11242
    %v11244 = vpop.xlane.xlu0 %11243
    %v11245 = vsel %vm11061, %v11026, -inf
    %11246 = vmax.xlane.f32.xlu0 %v11245
    %v11247 = vpop.xlane.xlu0 %11246
    %v11248 = vsel %vm11061, %v11027, -inf
    %11249 = vmax.xlane.f32.xlu0 %v11248
    %v11250 = vpop.xlane.xlu0 %11249
    %v11251 = vsel %vm11061, %v11028, -inf
    %11252 = vmax.xlane.f32.xlu0 %v11251
    %v11253 = vpop.xlane.xlu0 %11252
    %v11254 = vsel %vm11061, %v11029, -inf
    %11255 = vmax.xlane.f32.xlu0 %v11254
    %v11256 = vpop.xlane.xlu0 %11255
    %v11257 = vsel %vm11061, %v11030, -inf
    %11258 = vmax.xlane.f32.xlu0 %v11257
    %v11259 = vpop.xlane.xlu0 %11258
    %v11260 = vsel %vm11061, %v11031, -inf
    %11261 = vmax.xlane.f32.xlu0 %v11260
    %v11262 = vpop.xlane.xlu0 %11261
    %v11263 = vsel %vm11061, %v11032, -inf
    %11264 = vmax.xlane.f32.xlu0 %v11263
    %v11265 = vpop.xlane.xlu0 %11264
    %v11266 = vsel %vm11061, %v11033, -inf
    %11267 = vmax.xlane.f32.xlu0 %v11266
    %v11268 = vpop.xlane.xlu0 %11267
    %v11269 = vsel %vm11061, %v11034, -inf
    %11270 = vmax.xlane.f32.xlu0 %v11269
    %v11271 = vpop.xlane.xlu0 %11270
    %v11272 = vsel %vm11061, %v11035, -inf
    %11273 = vmax.xlane.f32.xlu0 %v11272
    %v11274 = vpop.xlane.xlu0 %11273
    %v11275 = vsel %vm11061, %v11036, -inf
    %11276 = vmax.xlane.f32.xlu0 %v11275
    %v11277 = vpop.xlane.xlu0 %11276
    %v11278 = vsel %vm11061, %v11037, -inf
    %11279 = vmax.xlane.f32.xlu0 %v11278
    %v11280 = vpop.xlane.xlu0 %11279
    %v11281 = vsel %vm11061, %v11038, -inf
    %11282 = vmax.xlane.f32.xlu0 %v11281
    %v11283 = vpop.xlane.xlu0 %11282
    %v11284 = vsel %vm11061, %v11039, -inf
    %11285 = vmax.xlane.f32.xlu0 %v11284
    %v11286 = vpop.xlane.xlu0 %11285
    %v11287 = vsel %vm11061, %v11040, -inf
    %11288 = vmax.xlane.f32.xlu0 %v11287
    %v11289 = vpop.xlane.xlu0 %11288
    %v11290 = vsel %vm11061, %v11041, -inf
    %11291 = vmax.xlane.f32.xlu0 %v11290
    %v11292 = vpop.xlane.xlu0 %11291
    %v11293 = vsel %vm11061, %v11042, -inf
    %11294 = vmax.xlane.f32.xlu0 %v11293
    %v11295 = vpop.xlane.xlu0 %11294
    %v11296 = vsel %vm11061, %v11043, -inf
    %11297 = vmax.xlane.f32.xlu0 %v11296
    %v11298 = vpop.xlane.xlu0 %11297
    %v11299 = vsel %vm11061, %v11044, -inf
    %11300 = vmax.xlane.f32.xlu0 %v11299
    %v11301 = vpop.xlane.xlu0 %11300
    %v11302 = vsel %vm11061, %v11045, -inf
    %11303 = vmax.xlane.f32.xlu0 %v11302
    %v11304 = vpop.xlane.xlu0 %11303
    %v11305 = vsel %vm11061, %v11046, -inf
    %11306 = vmax.xlane.f32.xlu0 %v11305
    %v11307 = vpop.xlane.xlu0 %11306
    %v11308 = vsel %vm11061, %v11047, -inf
    %11309 = vmax.xlane.f32.xlu0 %v11308
    %v11310 = vpop.xlane.xlu0 %11309
    %v11311 = vsel %vm11061, %v11048, -inf
    %11312 = vmax.xlane.f32.xlu0 %v11311
    %v11313 = vpop.xlane.xlu0 %11312
    %v11314 = vsel %vm11061, %v11049, -inf
    %11315 = vmax.xlane.f32.xlu0 %v11314
    %v11316 = vpop.xlane.xlu0 %11315
    %v11317 = vsel %vm11061, %v11050, -inf
    %11318 = vmax.xlane.f32.xlu0 %v11317
    %v11319 = vpop.xlane.xlu0 %11318
    %v11320 = vsel %vm11061, %v11051, -inf
    %11321 = vmax.xlane.f32.xlu0 %v11320
    %v11322 = vpop.xlane.xlu0 %11321
    %v11323 = vsel %vm11061, %v11052, -inf
    %11324 = vmax.xlane.f32.xlu0 %v11323
    %v11325 = vpop.xlane.xlu0 %11324
    %v11326 = vsel %vm11061, %v11053, -inf
    %11327 = vmax.xlane.f32.xlu0 %v11326
    %v11328 = vpop.xlane.xlu0 %11327
    %v11329 = vsel %vm11061, %v11054, -inf
    %11330 = vmax.xlane.f32.xlu0 %v11329
    %v11331 = vpop.xlane.xlu0 %11330
    %v11332 = vsel %vm11061, %v11055, -inf
    %11333 = vmax.xlane.f32.xlu0 %v11332
    %v11334 = vpop.xlane.xlu0 %11333
    %v11335 = vsel %vm11061, %v11056, -inf
    %11336 = vmax.xlane.f32.xlu0 %v11335
    %v11337 = vpop.xlane.xlu0 %11336
    %v11338 = vsel %vm11061, %v11057, -inf
    %11339 = vmax.xlane.f32.xlu0 %v11338
    %v11340 = vpop.xlane.xlu0 %11339
    %v11341 = vsel %vm11061, %v11058, -inf
    %11342 = vmax.xlane.f32.xlu0 %v11341
    %v11343 = vpop.xlane.xlu0 %11342
    %v11344 = vsel %vm11061, %v11059, -inf
    %11345 = vmax.xlane.f32.xlu0 %v11344
    %v11346 = vpop.xlane.xlu0 %11345
    %v11347 = vsel %vm11061, %v11060, -inf
    %11348 = vmax.xlane.f32.xlu0 %v11347
    %v11349 = vpop.xlane.xlu0 %11348
    %v11446 = vlaneseq
    %v11447 = vand.u32 %v11446, 127
    %v11448 = vlaneseq
    %v11449 = vshrl.u32 %v11448, 7
    %v11450 = vsub.s32 %v11447, %v11449
    %v11451 = vrot.slane %v11064, %v11450
    %v11452 = vadd.s32 %v11447, 4294967288
    %v11453 = vlaneseq
    %v11454 = vshrl.u32 %v11453, 7
    %v11455 = vsub.s32 %v11452, %v11454
    %v11456 = vrot.slane %v11067, %v11455
    %vm11457 = vcmask 130112
    %v11458 = vsel %vm11457, %v11456, %v11451
    %v11459 = vadd.s32 %v11447, 4294967280
    %v11460 = vlaneseq
    %v11461 = vshrl.u32 %v11460, 7
    %v11462 = vsub.s32 %v11459, %v11461
    %v11463 = vrot.slane %v11070, %v11462
    %vm11464 = vcmask 195712
    %v11465 = vsel %vm11464, %v11463, %v11458
    %v11466 = vadd.s32 %v11447, 4294967272
    %v11467 = vlaneseq
    %v11468 = vshrl.u32 %v11467, 7
    %v11469 = vsub.s32 %v11466, %v11468
    %v11470 = vrot.slane %v11073, %v11469
    %vm11471 = vcmask 261312
    %v11472 = vsel %vm11471, %v11470, %v11465
    %v11473 = vadd.s32 %v11447, 4294967264
    %v11474 = vlaneseq
    %v11475 = vshrl.u32 %v11474, 7
    %v11476 = vsub.s32 %v11473, %v11475
    %v11477 = vrot.slane %v11076, %v11476
    %vm11478 = vcmask 326912
    %v11479 = vsel %vm11478, %v11477, %v11472
    %v11480 = vadd.s32 %v11447, 4294967256
    %v11481 = vlaneseq
    %v11482 = vshrl.u32 %v11481, 7
    %v11483 = vsub.s32 %v11480, %v11482
    %v11484 = vrot.slane %v11079, %v11483
    %vm11485 = vcmask 392512
    %v11486 = vsel %vm11485, %v11484, %v11479
    %v11487 = vadd.s32 %v11447, 4294967248
    %v11488 = vlaneseq
    %v11489 = vshrl.u32 %v11488, 7
    %v11490 = vsub.s32 %v11487, %v11489
    %v11491 = vrot.slane %v11082, %v11490
    %vm11492 = vcmask 458112
    %v11493 = vsel %vm11492, %v11491, %v11486
    %v11494 = vadd.s32 %v11447, 4294967240
    %v11495 = vlaneseq
    %v11496 = vshrl.u32 %v11495, 7
    %v11497 = vsub.s32 %v11494, %v11496
    %v11498 = vrot.slane %v11085, %v11497
    %vm11499 = vcmask 523712
    %v11500 = vsel %vm11499, %v11498, %v11493
    %v11501 = vadd.s32 %v11447, 4294967232
    %v11502 = vlaneseq
    %v11503 = vshrl.u32 %v11502, 7
    %v11504 = vsub.s32 %v11501, %v11503
    %v11505 = vrot.slane %v11088, %v11504
    %vm11506 = vcmask 589312
    %v11507 = vsel %vm11506, %v11505, %v11500
    %v11508 = vadd.s32 %v11447, 4294967224
    %v11509 = vlaneseq
    %v11510 = vshrl.u32 %v11509, 7
    %v11511 = vsub.s32 %v11508, %v11510
    %v11512 = vrot.slane %v11091, %v11511
    %vm11513 = vcmask 654912
    %v11514 = vsel %vm11513, %v11512, %v11507
    %v11515 = vadd.s32 %v11447, 4294967216
    %v11516 = vlaneseq
    %v11517 = vshrl.u32 %v11516, 7
    %v11518 = vsub.s32 %v11515, %v11517
    %v11519 = vrot.slane %v11094, %v11518
    %vm11520 = vcmask 720512
    %v11521 = vsel %vm11520, %v11519, %v11514
    %v11522 = vadd.s32 %v11447, 4294967208
    %v11523 = vlaneseq
    %v11524 = vshrl.u32 %v11523, 7
    %v11525 = vsub.s32 %v11522, %v11524
    %v11526 = vrot.slane %v11097, %v11525
    %vm11527 = vcmask 786112
    %v11528 = vsel %vm11527, %v11526, %v11521
    %v11529 = vlaneseq
    %v11530 = vshrl.u32 %v11529, 7
    %v11531 = vsub.s32 %v11447, %v11530
    %v11532 = vrot.slane %v11100, %v11531
    %v11533 = vlaneseq
    %v11534 = vshrl.u32 %v11533, 7
    %v11535 = vsub.s32 %v11452, %v11534
    %v11536 = vrot.slane %v11103, %v11535
    %v11537 = vsel %vm11457, %v11536, %v11532
    %v11538 = vlaneseq
    %v11539 = vshrl.u32 %v11538, 7
    %v11540 = vsub.s32 %v11459, %v11539
    %v11541 = vrot.slane %v11106, %v11540
    %v11542 = vsel %vm11464, %v11541, %v11537
    %v11543 = vlaneseq
    %v11544 = vshrl.u32 %v11543, 7
    %v11545 = vsub.s32 %v11466, %v11544
    %v11546 = vrot.slane %v11109, %v11545
    %v11547 = vsel %vm11471, %v11546, %v11542
    %v11548 = vlaneseq
    %v11549 = vshrl.u32 %v11548, 7
    %v11550 = vsub.s32 %v11473, %v11549
    %v11551 = vrot.slane %v11112, %v11550
    %v11552 = vsel %vm11478, %v11551, %v11547
    %v11553 = vlaneseq
    %v11554 = vshrl.u32 %v11553, 7
    %v11555 = vsub.s32 %v11480, %v11554
    %v11556 = vrot.slane %v11115, %v11555
    %v11557 = vsel %vm11485, %v11556, %v11552
    %v11558 = vlaneseq
    %v11559 = vshrl.u32 %v11558, 7
    %v11560 = vsub.s32 %v11487, %v11559
    %v11561 = vrot.slane %v11118, %v11560
    %v11562 = vsel %vm11492, %v11561, %v11557
    %v11563 = vlaneseq
    %v11564 = vshrl.u32 %v11563, 7
    %v11565 = vsub.s32 %v11494, %v11564
    %v11566 = vrot.slane %v11121, %v11565
    %v11567 = vsel %vm11499, %v11566, %v11562
    %v11568 = vlaneseq
    %v11569 = vshrl.u32 %v11568, 7
    %v11570 = vsub.s32 %v11501, %v11569
    %v11571 = vrot.slane %v11124, %v11570
    %v11572 = vsel %vm11506, %v11571, %v11567
    %v11573 = vlaneseq
    %v11574 = vshrl.u32 %v11573, 7
    %v11575 = vsub.s32 %v11508, %v11574
    %v11576 = vrot.slane %v11127, %v11575
    %v11577 = vsel %vm11513, %v11576, %v11572
    %v11578 = vlaneseq
    %v11579 = vshrl.u32 %v11578, 7
    %v11580 = vsub.s32 %v11515, %v11579
    %v11581 = vrot.slane %v11130, %v11580
    %v11582 = vsel %vm11520, %v11581, %v11577
    %v11583 = vlaneseq
    %v11584 = vshrl.u32 %v11583, 7
    %v11585 = vsub.s32 %v11522, %v11584
    %v11586 = vrot.slane %v11133, %v11585
    %v11587 = vsel %vm11527, %v11586, %v11582
    %v11588 = vlaneseq
    %v11589 = vshrl.u32 %v11588, 7
    %v11590 = vsub.s32 %v11447, %v11589
    %v11591 = vrot.slane %v11136, %v11590
    %v11592 = vlaneseq
    %v11593 = vshrl.u32 %v11592, 7
    %v11594 = vsub.s32 %v11452, %v11593
    %v11595 = vrot.slane %v11139, %v11594
    %v11596 = vsel %vm11457, %v11595, %v11591
    %v11597 = vlaneseq
    %v11598 = vshrl.u32 %v11597, 7
    %v11599 = vsub.s32 %v11459, %v11598
    %v11600 = vrot.slane %v11142, %v11599
    %v11601 = vsel %vm11464, %v11600, %v11596
    %v11602 = vlaneseq
    %v11603 = vshrl.u32 %v11602, 7
    %v11604 = vsub.s32 %v11466, %v11603
    %v11605 = vrot.slane %v11145, %v11604
    %v11606 = vsel %vm11471, %v11605, %v11601
    %v11607 = vlaneseq
    %v11608 = vshrl.u32 %v11607, 7
    %v11609 = vsub.s32 %v11473, %v11608
    %v11610 = vrot.slane %v11148, %v11609
    %v11611 = vsel %vm11478, %v11610, %v11606
    %v11612 = vlaneseq
    %v11613 = vshrl.u32 %v11612, 7
    %v11614 = vsub.s32 %v11480, %v11613
    %v11615 = vrot.slane %v11151, %v11614
    %v11616 = vsel %vm11485, %v11615, %v11611
    %v11617 = vlaneseq
    %v11618 = vshrl.u32 %v11617, 7
    %v11619 = vsub.s32 %v11487, %v11618
    %v11620 = vrot.slane %v11154, %v11619
    %v11621 = vsel %vm11492, %v11620, %v11616
    %v11622 = vlaneseq
    %v11623 = vshrl.u32 %v11622, 7
    %v11624 = vsub.s32 %v11494, %v11623
    %v11625 = vrot.slane %v11157, %v11624
    %v11626 = vsel %vm11499, %v11625, %v11621
    %v11627 = vlaneseq
    %v11628 = vshrl.u32 %v11627, 7
    %v11629 = vsub.s32 %v11501, %v11628
    %v11630 = vrot.slane %v11160, %v11629
    %v11631 = vsel %vm11506, %v11630, %v11626
    %v11632 = vlaneseq
    %v11633 = vshrl.u32 %v11632, 7
    %v11634 = vsub.s32 %v11508, %v11633
    %v11635 = vrot.slane %v11163, %v11634
    %v11636 = vsel %vm11513, %v11635, %v11631
    %v11637 = vlaneseq
    %v11638 = vshrl.u32 %v11637, 7
    %v11639 = vsub.s32 %v11515, %v11638
    %v11640 = vrot.slane %v11166, %v11639
    %v11641 = vsel %vm11520, %v11640, %v11636
    %v11642 = vlaneseq
    %v11643 = vshrl.u32 %v11642, 7
    %v11644 = vsub.s32 %v11522, %v11643
    %v11645 = vrot.slane %v11169, %v11644
    %v11646 = vsel %vm11527, %v11645, %v11641
    %v11647 = vlaneseq
    %v11648 = vshrl.u32 %v11647, 7
    %v11649 = vsub.s32 %v11447, %v11648
    %v11650 = vrot.slane %v11172, %v11649
    %v11651 = vlaneseq
    %v11652 = vshrl.u32 %v11651, 7
    %v11653 = vsub.s32 %v11452, %v11652
    %v11654 = vrot.slane %v11175, %v11653
    %v11655 = vsel %vm11457, %v11654, %v11650
    %v11656 = vlaneseq
    %v11657 = vshrl.u32 %v11656, 7
    %v11658 = vsub.s32 %v11459, %v11657
    %v11659 = vrot.slane %v11178, %v11658
    %v11660 = vsel %vm11464, %v11659, %v11655
    %v11661 = vlaneseq
    %v11662 = vshrl.u32 %v11661, 7
    %v11663 = vsub.s32 %v11466, %v11662
    %v11664 = vrot.slane %v11181, %v11663
    %v11665 = vsel %vm11471, %v11664, %v11660
    %v11666 = vlaneseq
    %v11667 = vshrl.u32 %v11666, 7
    %v11668 = vsub.s32 %v11473, %v11667
    %v11669 = vrot.slane %v11184, %v11668
    %v11670 = vsel %vm11478, %v11669, %v11665
    %v11671 = vlaneseq
    %v11672 = vshrl.u32 %v11671, 7
    %v11673 = vsub.s32 %v11480, %v11672
    %v11674 = vrot.slane %v11187, %v11673
    %v11675 = vsel %vm11485, %v11674, %v11670
    %v11676 = vlaneseq
    %v11677 = vshrl.u32 %v11676, 7
    %v11678 = vsub.s32 %v11487, %v11677
    %v11679 = vrot.slane %v11190, %v11678
    %v11680 = vsel %vm11492, %v11679, %v11675
    %v11681 = vlaneseq
    %v11682 = vshrl.u32 %v11681, 7
    %v11683 = vsub.s32 %v11494, %v11682
    %v11684 = vrot.slane %v11193, %v11683
    %v11685 = vsel %vm11499, %v11684, %v11680
    %v11686 = vlaneseq
    %v11687 = vshrl.u32 %v11686, 7
    %v11688 = vsub.s32 %v11501, %v11687
    %v11689 = vrot.slane %v11196, %v11688
    %v11690 = vsel %vm11506, %v11689, %v11685
    %v11691 = vlaneseq
    %v11692 = vshrl.u32 %v11691, 7
    %v11693 = vsub.s32 %v11508, %v11692
    %v11694 = vrot.slane %v11199, %v11693
    %v11695 = vsel %vm11513, %v11694, %v11690
    %v11696 = vlaneseq
    %v11697 = vshrl.u32 %v11696, 7
    %v11698 = vsub.s32 %v11515, %v11697
    %v11699 = vrot.slane %v11202, %v11698
    %v11700 = vsel %vm11520, %v11699, %v11695
    %v11701 = vlaneseq
    %v11702 = vshrl.u32 %v11701, 7
    %v11703 = vsub.s32 %v11522, %v11702
    %v11704 = vrot.slane %v11205, %v11703
    %v11705 = vsel %vm11527, %v11704, %v11700
    %v11706 = vlaneseq
    %v11707 = vshrl.u32 %v11706, 7
    %v11708 = vsub.s32 %v11447, %v11707
    %v11709 = vrot.slane %v11208, %v11708
    %v11710 = vlaneseq
    %v11711 = vshrl.u32 %v11710, 7
    %v11712 = vsub.s32 %v11452, %v11711
    %v11713 = vrot.slane %v11211, %v11712
    %v11714 = vsel %vm11457, %v11713, %v11709
    %v11715 = vlaneseq
    %v11716 = vshrl.u32 %v11715, 7
    %v11717 = vsub.s32 %v11459, %v11716
    %v11718 = vrot.slane %v11214, %v11717
    %v11719 = vsel %vm11464, %v11718, %v11714
    %v11720 = vlaneseq
    %v11721 = vshrl.u32 %v11720, 7
    %v11722 = vsub.s32 %v11466, %v11721
    %v11723 = vrot.slane %v11217, %v11722
    %v11724 = vsel %vm11471, %v11723, %v11719
    %v11725 = vlaneseq
    %v11726 = vshrl.u32 %v11725, 7
    %v11727 = vsub.s32 %v11473, %v11726
    %v11728 = vrot.slane %v11220, %v11727
    %v11729 = vsel %vm11478, %v11728, %v11724
    %v11730 = vlaneseq
    %v11731 = vshrl.u32 %v11730, 7
    %v11732 = vsub.s32 %v11480, %v11731
    %v11733 = vrot.slane %v11223, %v11732
    %v11734 = vsel %vm11485, %v11733, %v11729
    %v11735 = vlaneseq
    %v11736 = vshrl.u32 %v11735, 7
    %v11737 = vsub.s32 %v11487, %v11736
    %v11738 = vrot.slane %v11226, %v11737
    %v11739 = vsel %vm11492, %v11738, %v11734
    %v11740 = vlaneseq
    %v11741 = vshrl.u32 %v11740, 7
    %v11742 = vsub.s32 %v11494, %v11741
    %v11743 = vrot.slane %v11229, %v11742
    %v11744 = vsel %vm11499, %v11743, %v11739
    %v11745 = vlaneseq
    %v11746 = vshrl.u32 %v11745, 7
    %v11747 = vsub.s32 %v11501, %v11746
    %v11748 = vrot.slane %v11232, %v11747
    %v11749 = vsel %vm11506, %v11748, %v11744
    %v11750 = vlaneseq
    %v11751 = vshrl.u32 %v11750, 7
    %v11752 = vsub.s32 %v11508, %v11751
    %v11753 = vrot.slane %v11235, %v11752
    %v11754 = vsel %vm11513, %v11753, %v11749
    %v11755 = vlaneseq
    %v11756 = vshrl.u32 %v11755, 7
    %v11757 = vsub.s32 %v11515, %v11756
    %v11758 = vrot.slane %v11238, %v11757
    %v11759 = vsel %vm11520, %v11758, %v11754
    %v11760 = vlaneseq
    %v11761 = vshrl.u32 %v11760, 7
    %v11762 = vsub.s32 %v11522, %v11761
    %v11763 = vrot.slane %v11241, %v11762
    %v11764 = vsel %vm11527, %v11763, %v11759
    %v11765 = vlaneseq
    %v11766 = vshrl.u32 %v11765, 7
    %v11767 = vsub.s32 %v11447, %v11766
    %v11768 = vrot.slane %v11244, %v11767
    %v11769 = vlaneseq
    %v11770 = vshrl.u32 %v11769, 7
    %v11771 = vsub.s32 %v11452, %v11770
    %v11772 = vrot.slane %v11247, %v11771
    %v11773 = vsel %vm11457, %v11772, %v11768
    %v11774 = vlaneseq
    %v11775 = vshrl.u32 %v11774, 7
    %v11776 = vsub.s32 %v11459, %v11775
    %v11777 = vrot.slane %v11250, %v11776
    %v11778 = vsel %vm11464, %v11777, %v11773
    %v11779 = vlaneseq
    %v11780 = vshrl.u32 %v11779, 7
    %v11781 = vsub.s32 %v11466, %v11780
    %v11782 = vrot.slane %v11253, %v11781
    %v11783 = vsel %vm11471, %v11782, %v11778
    %v11784 = vlaneseq
    %v11785 = vshrl.u32 %v11784, 7
    %v11786 = vsub.s32 %v11473, %v11785
    %v11787 = vrot.slane %v11256, %v11786
    %v11788 = vsel %vm11478, %v11787, %v11783
    %v11789 = vlaneseq
    %v11790 = vshrl.u32 %v11789, 7
    %v11791 = vsub.s32 %v11480, %v11790
    %v11792 = vrot.slane %v11259, %v11791
    %v11793 = vsel %vm11485, %v11792, %v11788
    %v11794 = vlaneseq
    %v11795 = vshrl.u32 %v11794, 7
    %v11796 = vsub.s32 %v11487, %v11795
    %v11797 = vrot.slane %v11262, %v11796
    %v11798 = vsel %vm11492, %v11797, %v11793
    %v11799 = vlaneseq
    %v11800 = vshrl.u32 %v11799, 7
    %v11801 = vsub.s32 %v11494, %v11800
    %v11802 = vrot.slane %v11265, %v11801
    %v11803 = vsel %vm11499, %v11802, %v11798
    %v11804 = vlaneseq
    %v11805 = vshrl.u32 %v11804, 7
    %v11806 = vsub.s32 %v11501, %v11805
    %v11807 = vrot.slane %v11268, %v11806
    %v11808 = vsel %vm11506, %v11807, %v11803
    %v11809 = vlaneseq
    %v11810 = vshrl.u32 %v11809, 7
    %v11811 = vsub.s32 %v11508, %v11810
    %v11812 = vrot.slane %v11271, %v11811
    %v11813 = vsel %vm11513, %v11812, %v11808
    %v11814 = vlaneseq
    %v11815 = vshrl.u32 %v11814, 7
    %v11816 = vsub.s32 %v11515, %v11815
    %v11817 = vrot.slane %v11274, %v11816
    %v11818 = vsel %vm11520, %v11817, %v11813
    %v11819 = vlaneseq
    %v11820 = vshrl.u32 %v11819, 7
    %v11821 = vsub.s32 %v11522, %v11820
    %v11822 = vrot.slane %v11277, %v11821
    %v11823 = vsel %vm11527, %v11822, %v11818
    %v11824 = vlaneseq
    %v11825 = vshrl.u32 %v11824, 7
    %v11826 = vsub.s32 %v11447, %v11825
    %v11827 = vrot.slane %v11280, %v11826
    %v11828 = vlaneseq
    %v11829 = vshrl.u32 %v11828, 7
    %v11830 = vsub.s32 %v11452, %v11829
    %v11831 = vrot.slane %v11283, %v11830
    %v11832 = vsel %vm11457, %v11831, %v11827
    %v11833 = vlaneseq
    %v11834 = vshrl.u32 %v11833, 7
    %v11835 = vsub.s32 %v11459, %v11834
    %v11836 = vrot.slane %v11286, %v11835
    %v11837 = vsel %vm11464, %v11836, %v11832
    %v11838 = vlaneseq
    %v11839 = vshrl.u32 %v11838, 7
    %v11840 = vsub.s32 %v11466, %v11839
    %v11841 = vrot.slane %v11289, %v11840
    %v11842 = vsel %vm11471, %v11841, %v11837
    %v11843 = vlaneseq
    %v11844 = vshrl.u32 %v11843, 7
    %v11845 = vsub.s32 %v11473, %v11844
    %v11846 = vrot.slane %v11292, %v11845
    %v11847 = vsel %vm11478, %v11846, %v11842
    %v11848 = vlaneseq
    %v11849 = vshrl.u32 %v11848, 7
    %v11850 = vsub.s32 %v11480, %v11849
    %v11851 = vrot.slane %v11295, %v11850
    %v11852 = vsel %vm11485, %v11851, %v11847
    %v11853 = vlaneseq
    %v11854 = vshrl.u32 %v11853, 7
    %v11855 = vsub.s32 %v11487, %v11854
    %v11856 = vrot.slane %v11298, %v11855
    %v11857 = vsel %vm11492, %v11856, %v11852
    %v11858 = vlaneseq
    %v11859 = vshrl.u32 %v11858, 7
    %v11860 = vsub.s32 %v11494, %v11859
    %v11861 = vrot.slane %v11301, %v11860
    %v11862 = vsel %vm11499, %v11861, %v11857
    %v11863 = vlaneseq
    %v11864 = vshrl.u32 %v11863, 7
    %v11865 = vsub.s32 %v11501, %v11864
    %v11866 = vrot.slane %v11304, %v11865
    %v11867 = vsel %vm11506, %v11866, %v11862
    %v11868 = vlaneseq
    %v11869 = vshrl.u32 %v11868, 7
    %v11870 = vsub.s32 %v11508, %v11869
    %v11871 = vrot.slane %v11307, %v11870
    %v11872 = vsel %vm11513, %v11871, %v11867
    %v11873 = vlaneseq
    %v11874 = vshrl.u32 %v11873, 7
    %v11875 = vsub.s32 %v11515, %v11874
    %v11876 = vrot.slane %v11310, %v11875
    %v11877 = vsel %vm11520, %v11876, %v11872
    %v11878 = vlaneseq
    %v11879 = vshrl.u32 %v11878, 7
    %v11880 = vsub.s32 %v11522, %v11879
    %v11881 = vrot.slane %v11313, %v11880
    %v11882 = vsel %vm11527, %v11881, %v11877
    %v11883 = vlaneseq
    %v11884 = vshrl.u32 %v11883, 7
    %v11885 = vsub.s32 %v11447, %v11884
    %v11886 = vrot.slane %v11316, %v11885
    %v11887 = vlaneseq
    %v11888 = vshrl.u32 %v11887, 7
    %v11889 = vsub.s32 %v11452, %v11888
    %v11890 = vrot.slane %v11319, %v11889
    %v11891 = vsel %vm11457, %v11890, %v11886
    %v11892 = vlaneseq
    %v11893 = vshrl.u32 %v11892, 7
    %v11894 = vsub.s32 %v11459, %v11893
    %v11895 = vrot.slane %v11322, %v11894
    %v11896 = vsel %vm11464, %v11895, %v11891
    %v11897 = vlaneseq
    %v11898 = vshrl.u32 %v11897, 7
    %v11899 = vsub.s32 %v11466, %v11898
    %v11900 = vrot.slane %v11325, %v11899
    %v11901 = vsel %vm11471, %v11900, %v11896
    %v11902 = vlaneseq
    %v11903 = vshrl.u32 %v11902, 7
    %v11904 = vsub.s32 %v11473, %v11903
    %v11905 = vrot.slane %v11328, %v11904
    %v11906 = vsel %vm11478, %v11905, %v11901
    %v11907 = vlaneseq
    %v11908 = vshrl.u32 %v11907, 7
    %v11909 = vsub.s32 %v11480, %v11908
    %v11910 = vrot.slane %v11331, %v11909
    %v11911 = vsel %vm11485, %v11910, %v11906
    %v11912 = vlaneseq
    %v11913 = vshrl.u32 %v11912, 7
    %v11914 = vsub.s32 %v11487, %v11913
    %v11915 = vrot.slane %v11334, %v11914
    %v11916 = vsel %vm11492, %v11915, %v11911
    %v11917 = vlaneseq
    %v11918 = vshrl.u32 %v11917, 7
    %v11919 = vsub.s32 %v11494, %v11918
    %v11920 = vrot.slane %v11337, %v11919
    %v11921 = vsel %vm11499, %v11920, %v11916
    %v11922 = vlaneseq
    %v11923 = vshrl.u32 %v11922, 7
    %v11924 = vsub.s32 %v11501, %v11923
    %v11925 = vrot.slane %v11340, %v11924
    %v11926 = vsel %vm11506, %v11925, %v11921
    %v11927 = vlaneseq
    %v11928 = vshrl.u32 %v11927, 7
    %v11929 = vsub.s32 %v11508, %v11928
    %v11930 = vrot.slane %v11343, %v11929
    %v11931 = vsel %vm11513, %v11930, %v11926
    %v11932 = vlaneseq
    %v11933 = vshrl.u32 %v11932, 7
    %v11934 = vsub.s32 %v11515, %v11933
    %v11935 = vrot.slane %v11346, %v11934
    %v11936 = vsel %vm11520, %v11935, %v11931
    %v11937 = vlaneseq
    %v11938 = vshrl.u32 %v11937, 7
    %v11939 = vsub.s32 %v11522, %v11938
    %v11940 = vrot.slane %v11349, %v11939
    %v11941 = vsel %vm11527, %v11940, %v11936
    %vm11942 = vcmask 1041409
    %v11943 = vsel %vm11942, %v11587, %v11528
    %vm11944 = vcmask 1042434
    %v11945 = vsel %vm11944, %v11646, %v11943
    %vm11946 = vcmask 1043459
    %v11947 = vsel %vm11946, %v11705, %v11945
    %vm11948 = vcmask 1044484
    %v11949 = vsel %vm11948, %v11764, %v11947
    %vm11950 = vcmask 1045509
    %v11951 = vsel %vm11950, %v11823, %v11949
    %vm11952 = vcmask 1046534
    %v11953 = vsel %vm11952, %v11882, %v11951
    %vm11954 = vcmask 1047559
    %v11955 = vsel %vm11954, %v11941, %v11953
    %vm11957 = vcmask 785408
    %v11958 = vsel %vm11957, %v11955, 0.0
    %11959 = vst [vmem:[#allocation5] sm:$0xff] %v11958
    // Predicated region
    $region34: #{tpu_custom_call.1} parent=1 // pred_check
      _
    $region35: #{tpu_custom_call.1} parent=1 // pred_check_branch
      %11961 = sbr.rel (0) target = $region37
    $region36: #{tpu_custom_call.1} parent=1 // pred_region
      %s11963 = ssub.s32 128, 128
      %11964 = vsyncadd [#allocation4], %s11963
      %s11966 = sshll.u32 [#allocation5], 4
      %s11967 = int_to_ptr.vmem [resolvable:$true] %s11966
      %11969 = dma.vmem_to_hbm [thread:$0]  %s11967, 128, %s7, [#allocation4]
    $region37: #{tpu_custom_call.1} parent=1 // pred_fallthru
      _
    // Predicated region
    $region38: #{tpu_custom_call.1} parent=1 // pred_check
      _
    $region39: #{tpu_custom_call.1} parent=1 // pred_check_branch
      %11971 = sbr.rel (0) target = $region41
    $region40: #{tpu_custom_call.1} parent=1 // pred_region
      %11972 = dma.done [#allocation4], 128
    $region41: #{tpu_custom_call.1} parent=1 // pred_fallthru
      _
    %11973 = vsyncpa [#allocation3], 1
    %11974 = vsyncpa [#allocation4], 1

</llo_original>
